<compile_context>
chip_gen: v7x
topology: tpu7x:2x2x1
jax: 0.10.0
libtpu: 0.0.40
codegen_flags: <defaults>
</compile_context>

<pallas_src>
import numpy as np
import jax
import jax.numpy as jnp
from jax import lax
from jax.experimental import pallas as pl
from jax.experimental.pallas import tpu as pltpu

WIN = 11
SIGMA = 1.5
_K1, _K2 = 0.01, 0.03
_DATA_RANGE = 1.0
_C1 = (_K1 * _DATA_RANGE) ** 2
_C2 = (_K2 * _DATA_RANGE) ** 2
MS_WEIGHTS = (0.0448, 0.2856, 0.3001, 0.2363, 0.1333)
LEVELS = len(MS_WEIGHTS)
_LANE = 128


def _ceil_lane(n):
    return ((n + _LANE - 1) // _LANE) * _LANE


# ---------------------------------------------------------------------------
# trace-time constant builders (numpy)
# ---------------------------------------------------------------------------
def _gauss_1d(size, sigma):
    coords = np.arange(size, dtype=np.float64) - size // 2
    g = np.exp(-(coords ** 2) / (2.0 * sigma ** 2))
    return (g / g.sum()).astype(np.float32)


def _band_matrix(s, g):
    """(s, s-win+1) matrix M with M[j+t, j] = g[t]; valid 1-D conv == x @ M."""
    win = g.shape[0]
    so = s - win + 1
    m = np.zeros((s, so), np.float32)
    for j in range(so):
        m[j:j + win, j] = g
    return m


def _pool_matrix(s):
    """(s, ceil(s/2)) matrix replicating F.avg_pool2d(kernel=2, stride=2,
    padding=s%2, count_include_pad=True) along one axis."""
    pad = s % 2
    so = (s + 2 * pad - 2) // 2 + 1
    m = np.zeros((s, so), np.float32)
    for j in range(so):
        for t in range(2):
            i = 2 * j + t - pad
            if 0 <= i < s:
                m[i, j] = 0.5
    return m


def _build_level_constants(H, W):
    """Per-level Gaussian / pool matrices.  The column-direction matrices are
    zero-row-padded up to the 128-lane-aligned width so the kernel can feed
    them 128-aligned slices directly.  Order MUST match the kernel's
    consumption order: [khT, kwp, (phT, pwp if not last)] per level."""
    g = _gauss_1d(WIN, SIGMA)
    consts = []
    h, w = H, W
    for lvl in range(LEVELS):
        assert h >= WIN and w >= WIN
        wpad = _ceil_lane(w)
        khT = _band_matrix(h, g).T                                  # (Ho, h)
        kwp = np.pad(_band_matrix(w, g), ((0, wpad - w), (0, 0)))   # (wpad, Wo)
        consts += [khT, kwp]
        if lvl < LEVELS - 1:
            ph = _pool_matrix(h)                                    # (h, Hp)
            pw = _pool_matrix(w)                                    # (w, Wp)
            phT = ph.T                                              # (Hp, h)
            pwp = np.pad(pw, ((0, wpad - w), (0, 0)))               # (wpad, Wp)
            consts += [phT, pwp]
            h, w = ph.shape[1], pw.shape[1]
    return [jnp.asarray(c) for c in consts]


# ---------------------------------------------------------------------------
# fused 5-level kernel (one (b, c) image pair per grid step)
# ---------------------------------------------------------------------------
def _concat_padded(maps, wpad):
    """Concatenate same-shaped maps along lanes, padding each to `wpad` lanes
    so per-map slices of downstream matmul results stay 128-tile aligned."""
    h, w = maps[0].shape
    if w == wpad:
        return jnp.concatenate(maps, axis=1)
    z = jnp.zeros((h, wpad - w), maps[0].dtype)
    pieces = []
    for m in maps:
        pieces.extend((m, z))
    return jnp.concatenate(pieces, axis=1)


def _fused_msssim_kernel(*refs):
    """refs = (*const_refs, x_ref, y_ref, out_ref).

    All 5 MS-SSIM levels are computed here; the pooled images feeding the next
    level never leave the chip.  Output lanes 0..3 = cs(level 0..3),
    lane 4 = ssim(level 4)."""
    out_ref = refs[-1]
    x = refs[-3][...].astype(jnp.float32)
    y = refs[-2][...].astype(jnp.float32)
    crefs = refs[:-3]

    vals = []
    ci = 0
    for lvl in range(LEVELS):
        khT = crefs[ci][...]                       # (Ho, H)
        kwp = crefs[ci + 1][...]                   # (Wpad, Wo), zero rows >= W
        ci += 2
        W = x.shape[1]
        wpad = _ceil_lane(W)

        # lane-batched row (H-direction) Gaussian filter over all 5 maps
        X5 = _concat_padded([x, y, x * x, y * y, x * y], wpad)      # (H, 5*wpad)
        T = jnp.dot(khT, X5, preferred_element_type=jnp.float32)    # (Ho, 5*wpad)

        # column (W-direction) filter per map; 128-aligned static slices,
        # zero rows of kwp annihilate the pad lanes
        filt = [jnp.dot(T[:, i * wpad:(i + 1) * wpad], kwp,
                        preferred_element_type=jnp.float32) for i in range(5)]
        mu1, mu2, fxx, fyy, fxy = filt

        mu1_sq = mu1 * mu1
        mu2_sq = mu2 * mu2
        mu12 = mu1 * mu2
        s1 = fxx - mu1_sq
        s2 = fyy - mu2_sq
        s12 = fxy - mu12

        cs_map = (2.0 * s12 + _C2) * pl.reciprocal(s1 + s2 + _C2, approx=True)
        inv_n = 1.0 / float(cs_map.shape[0] * cs_map.shape[1])

        if lvl < LEVELS - 1:
            vals.append(jnp.sum(cs_map) * inv_n)
            # fused 2x2 avg-pool for the next level (reuses X5's x/y columns)
            phT = crefs[ci][...]                   # (Hp, H)
            pwp = crefs[ci + 1][...]               # (Wpad, Wp)
            ci += 2
            P = jnp.dot(phT, X5[:, :2 * wpad], preferred_element_type=jnp.float32)
            x = jnp.dot(P[:, :wpad], pwp, preferred_element_type=jnp.float32)
            y = jnp.dot(P[:, wpad:2 * wpad], pwp, preferred_element_type=jnp.float32)
        else:
            lum = (2.0 * mu12 + _C1) * pl.reciprocal(mu1_sq + mu2_sq + _C1,
                                                     approx=True)
            vals.append(jnp.sum(lum * cs_map) * inv_n)

    # single lane-dense, unmasked (1, 128) store holding all per-level scalars
    lane = lax.broadcasted_iota(jnp.int32, (1, _LANE), 1)
    out = jnp.zeros((1, _LANE), jnp.float32)
    for i, v in enumerate(vals):
        out = jnp.where(lane == i, jnp.full((1, _LANE), v, jnp.float32), out)
    out_ref[...] = out


# ---------------------------------------------------------------------------
# MS-SSIM driver + loss (mirrors MSSSIMLoss.forward)
# ---------------------------------------------------------------------------
def ms_ssim_pallas(x, y):
    assert x.shape == y.shape and x.ndim == 4
    B, C, H, W = x.shape
    assert min(H, W) > (WIN - 1) * 2 ** (LEVELS - 1), \
        "MS-SSIM with 5 levels / win=11 needs min(H, W) > 160"

    consts = _build_level_constants(H, W)

    in_specs = [pl.BlockSpec(tuple(c.shape), lambda b, ch: (0, 0)) for c in consts]
    in_specs += [pl.BlockSpec((None, None, H, W), lambda b, ch: (b, ch, 0, 0)),
                 pl.BlockSpec((None, None, H, W), lambda b, ch: (b, ch, 0, 0))]

    out_shape = jax.ShapeDtypeStruct((B, C, 1, _LANE), jnp.float32)
    out_spec = pl.BlockSpec((None, None, 1, _LANE), lambda b, ch: (b, ch, 0, 0))

    # advisory cost estimate (includes constants + per-level matmuls / pools)
    flops, trans = 0, 0
    h, w = H, W
    for lvl in range(LEVELS):
        ho, wo = h - WIN + 1, w - WIN + 1
        wpad = _ceil_lane(w)
        flops += 2 * ho * h * 5 * wpad + 5 * 2 * ho * wpad * wo
        flops += 20 * h * w + 16 * ho * wo
        trans += 2 * ho * wo
        if lvl < LEVELS - 1:
            hp = _pool_matrix(h).shape[1]
            wp = _pool_matrix(w).shape[1]
            flops += 2 * hp * h * 2 * wpad + 2 * 2 * hp * wpad * wp
            h, w = hp, wp
    const_bytes = sum(int(np.prod(c.shape)) * 4 for c in consts)
    cost = pl.CostEstimate(
        flops=int(B * C * flops),
        transcendentals=int(B * C * trans),
        bytes_accessed=int(B * C * (2 * 4 * H * W + 4 * _LANE) + const_bytes))

    res = pl.pallas_call(
        _fused_msssim_kernel,
        out_shape=out_shape,
        grid_spec=pltpu.PrefetchScalarGridSpec(
            num_scalar_prefetch=0,
            grid=(B, C),                       # >= 2 parallel steps keeps both
            in_specs=in_specs,                 # v7x TensorCores busy
            out_specs=out_spec),
        compiler_params=pltpu.CompilerParams(
            dimension_semantics=("parallel", "parallel")),
        cost_estimate=cost,
    )(*consts, x, y)

    vals = jnp.maximum(res[:, :, 0, :LEVELS], 0.0)       # (B, C, 5): relu(cs0..3, ssim4)
    weights = jnp.asarray(MS_WEIGHTS, jnp.float32)
    ms_val = jnp.prod(vals ** weights[None, None, :], axis=-1)   # (B, C)
    return jnp.mean(ms_val)                                      # size_average=True


def msssim_loss(x, y):
    """MSSSIMLoss.forward: returns (1 - ms_ssim(x, y), None)."""
    # TODO(synk): eps / lambda_ of the torch module are unused by its forward.
    loss = 1.0 - ms_ssim_pallas(x, y)
    return loss, None


# ---------------------------------------------------------------------------
# pure-JAX reference (independent: lax depthwise convs + reshape pooling)
# ---------------------------------------------------------------------------
def _ref_ms_ssim(x, y):
    g = jnp.asarray(_gauss_1d(WIN, SIGMA))

    def gauss_filter(img):
        c = img.shape[1]
        dn = ("NCHW", "OIHW", "NCHW")
        kh = jnp.tile(g.reshape(1, 1, WIN, 1), (c, 1, 1, 1))
        kw = jnp.tile(g.reshape(1, 1, 1, WIN), (c, 1, 1, 1))
        o = lax.conv_general_dilated(img, kh, (1, 1), "VALID",
                                     feature_group_count=c, dimension_numbers=dn,
                                     precision=lax.Precision.HIGHEST)
        return lax.conv_general_dilated(o, kw, (1, 1), "VALID",
                                        feature_group_count=c, dimension_numbers=dn,
                                        precision=lax.Precision.HIGHEST)

    def ssim_cs(a, b):
        mu1, mu2 = gauss_filter(a), gauss_filter(b)
        mu1_sq, mu2_sq, mu12 = mu1 * mu1, mu2 * mu2, mu1 * mu2
        s1 = gauss_filter(a * a) - mu1_sq
        s2 = gauss_filter(b * b) - mu2_sq
        s12 = gauss_filter(a * b) - mu12
        cs_map = (2 * s12 + _C2) / (s1 + s2 + _C2)
        ssim_map = ((2 * mu12 + _C1) / (mu1_sq + mu2_sq + _C1)) * cs_map
        return ssim_map.mean(axis=(2, 3)), cs_map.mean(axis=(2, 3))

    def avgpool2(img):
        n, c, h, w = img.shape
        return img.reshape(n, c, h // 2, 2, w // 2, 2).mean(axis=(3, 5))

    weights = jnp.asarray(MS_WEIGHTS, jnp.float32)
    mcs = []
    s_pc = None
    for i in range(LEVELS):
        s_pc, c_pc = ssim_cs(x, y)
        if i < LEVELS - 1:
            mcs.append(jnp.maximum(c_pc, 0.0))
            x, y = avgpool2(x), avgpool2(y)
    stack = jnp.stack(mcs + [jnp.maximum(s_pc, 0.0)], axis=0)
    return jnp.prod(stack ** weights[:, None, None], axis=0).mean()


if __name__ == "__main__":
    key = jax.random.PRNGKey(0)
    kx, kn = jax.random.split(key)

    # channel=3 per the module config; 5-level MS-SSIM with win=11 requires
    # min(H, W) > (11 - 1) * 2**4 = 160, so use the small legal size 176.
    B, C, H, W = 2, 3, 176, 176
    x = jax.random.uniform(kx, (B, C, H, W), dtype=jnp.float32)
    noise = jax.random.uniform(kn, (B, C, H, W), dtype=jnp.float32)
    y = jnp.clip(0.75 * x + 0.25 * noise, 0.0, 1.0)     # data_range = 1.0

    loss, aux = jax.jit(msssim_loss)(x, y)
    loss = jax.block_until_ready(loss)
    assert aux is None

    ref_loss = 1.0 - _ref_ms_ssim(x, y)
    assert jnp.allclose(loss, ref_loss, rtol=2e-3, atol=2e-3), (loss, ref_loss)
    print("KERNEL_OK")
</pallas_src>

<mosaic_0001>
module attributes {stable_mosaic.version = 11 : i64} {
  func.func @_fused_msssim_kernel(%arg0: i32, %arg1: i32, %arg2: memref<166x176xf32, #tpu.memory_space<vmem>>, %arg3: memref<256x166xf32, #tpu.memory_space<vmem>>, %arg4: memref<88x176xf32, #tpu.memory_space<vmem>>, %arg5: memref<256x88xf32, #tpu.memory_space<vmem>>, %arg6: memref<78x88xf32, #tpu.memory_space<vmem>>, %arg7: memref<128x78xf32, #tpu.memory_space<vmem>>, %arg8: memref<44x88xf32, #tpu.memory_space<vmem>>, %arg9: memref<128x44xf32, #tpu.memory_space<vmem>>, %arg10: memref<34x44xf32, #tpu.memory_space<vmem>>, %arg11: memref<128x34xf32, #tpu.memory_space<vmem>>, %arg12: memref<22x44xf32, #tpu.memory_space<vmem>>, %arg13: memref<128x22xf32, #tpu.memory_space<vmem>>, %arg14: memref<12x22xf32, #tpu.memory_space<vmem>>, %arg15: memref<128x12xf32, #tpu.memory_space<vmem>>, %arg16: memref<11x22xf32, #tpu.memory_space<vmem>>, %arg17: memref<128x11xf32, #tpu.memory_space<vmem>>, %arg18: memref<1x11xf32, #tpu.memory_space<vmem>>, %arg19: memref<128x1xf32, #tpu.memory_space<vmem>>, %arg20: memref<1x1x176x176xf32, #tpu.memory_space<vmem>>, %arg21: memref<1x1x176x176xf32, #tpu.memory_space<vmem>>, %arg22: memref<1x1x1x128xf32, #tpu.memory_space<vmem>>) attributes {dimension_semantics = [#tpu.dimension_semantics<parallel>, #tpu.dimension_semantics<parallel>], iteration_bounds = array<i64: 2, 3>, scalar_prefetch = 0 : i64, scratch_operands = 0 : i64, tpu.core_type = #tpu.core_type<tc>, window_params = [{pipeline_mode = #tpu.pipeline_mode<synchronous>, transform_indices = @transform_0, window_bounds = array<i64: 166, 176>}, {pipeline_mode = #tpu.pipeline_mode<synchronous>, transform_indices = @transform_1, window_bounds = array<i64: 256, 166>}, {pipeline_mode = #tpu.pipeline_mode<synchronous>, transform_indices = @transform_2, window_bounds = array<i64: 88, 176>}, {pipeline_mode = #tpu.pipeline_mode<synchronous>, transform_indices = @transform_3, window_bounds = array<i64: 256, 88>}, {pipeline_mode = #tpu.pipeline_mode<synchronous>, transform_indices = @transform_4, window_bounds = array<i64: 78, 88>}, {pipeline_mode = #tpu.pipeline_mode<synchronous>, transform_indices = @transform_5, window_bounds = array<i64: 128, 78>}, {pipeline_mode = #tpu.pipeline_mode<synchronous>, transform_indices = @transform_6, window_bounds = array<i64: 44, 88>}, {pipeline_mode = #tpu.pipeline_mode<synchronous>, transform_indices = @transform_7, window_bounds = array<i64: 128, 44>}, {pipeline_mode = #tpu.pipeline_mode<synchronous>, transform_indices = @transform_8, window_bounds = array<i64: 34, 44>}, {pipeline_mode = #tpu.pipeline_mode<synchronous>, transform_indices = @transform_9, window_bounds = array<i64: 128, 34>}, {pipeline_mode = #tpu.pipeline_mode<synchronous>, transform_indices = @transform_10, window_bounds = array<i64: 22, 44>}, {pipeline_mode = #tpu.pipeline_mode<synchronous>, transform_indices = @transform_11, window_bounds = array<i64: 128, 22>}, {pipeline_mode = #tpu.pipeline_mode<synchronous>, transform_indices = @transform_12, window_bounds = array<i64: 12, 22>}, {pipeline_mode = #tpu.pipeline_mode<synchronous>, transform_indices = @transform_13, window_bounds = array<i64: 128, 12>}, {pipeline_mode = #tpu.pipeline_mode<synchronous>, transform_indices = @transform_14, window_bounds = array<i64: 11, 22>}, {pipeline_mode = #tpu.pipeline_mode<synchronous>, transform_indices = @transform_15, window_bounds = array<i64: 128, 11>}, {pipeline_mode = #tpu.pipeline_mode<synchronous>, transform_indices = @transform_16, window_bounds = array<i64: 1, 11>}, {pipeline_mode = #tpu.pipeline_mode<synchronous>, transform_indices = @transform_17, window_bounds = array<i64: 128, 1>}, {transform_indices = @transform_18, window_bounds = array<i64: 1, 1, 176, 176>}, {transform_indices = @transform_19, window_bounds = array<i64: 1, 1, 176, 176>}, {transform_indices = @transform_20, window_bounds = array<i64: 1, 1, 1, 128>}]} {
    %c0 = arith.constant 0 : index
    %c0_0 = arith.constant 0 : index
    %c0_1 = arith.constant 0 : index
    %c0_2 = arith.constant 0 : index
    %0 = vector.load %arg20[%c0, %c0_0, %c0_1, %c0_2] : memref<1x1x176x176xf32, #tpu.memory_space<vmem>>, vector<1x1x176x176xf32>
    %1 = vector.shape_cast %0 : vector<1x1x176x176xf32> to vector<176x176xf32>
    %c0_3 = arith.constant 0 : index
    %c0_4 = arith.constant 0 : index
    %c0_5 = arith.constant 0 : index
    %c0_6 = arith.constant 0 : index
    %2 = vector.load %arg21[%c0_3, %c0_4, %c0_5, %c0_6] : memref<1x1x176x176xf32, #tpu.memory_space<vmem>>, vector<1x1x176x176xf32>
    %3 = vector.shape_cast %2 : vector<1x1x176x176xf32> to vector<176x176xf32>
    %c0_7 = arith.constant 0 : index
    %c0_8 = arith.constant 0 : index
    %4 = vector.load %arg2[%c0_7, %c0_8] : memref<166x176xf32, #tpu.memory_space<vmem>>, vector<166x176xf32>
    %c0_9 = arith.constant 0 : index
    %c0_10 = arith.constant 0 : index
    %5 = vector.load %arg3[%c0_9, %c0_10] : memref<256x166xf32, #tpu.memory_space<vmem>>, vector<256x166xf32>
    %6 = arith.mulf %1, %1 : vector<176x176xf32>
    %7 = arith.mulf %3, %3 : vector<176x176xf32>
    %8 = arith.mulf %1, %3 : vector<176x176xf32>
    %cst = arith.constant 0.000000e+00 : f32
    %9 = vector.broadcast %cst : f32 to vector<176x80xf32>
    %10 = tpu.concatenate %1, %9, %3, %9, %6, %9, %7, %9, %8, %9 in 1 : vector<176x176xf32>, vector<176x80xf32>, vector<176x176xf32>, vector<176x80xf32>, vector<176x176xf32>, vector<176x80xf32>, vector<176x176xf32>, vector<176x80xf32>, vector<176x176xf32>, vector<176x80xf32> -> vector<176x1280xf32>
    %cst_11 = arith.constant dense<0.000000e+00> : vector<166x1280xf32>
    %11 = tpu.matmul %4, %10, %cst_11 {dimension_numbers = #tpu.dot_dimension_numbers<[1], [0], [0], [1], [0, 0, 1, 1], [], []>} : vector<166x176xf32>, vector<176x1280xf32>, vector<166x1280xf32> -> vector<166x1280xf32>
    %12 = vector.extract_strided_slice %11 {offsets = [0, 0], sizes = [166, 256], strides = [1, 1]} : vector<166x1280xf32> to vector<166x256xf32>
    %cst_12 = arith.constant dense<0.000000e+00> : vector<166x166xf32>
    %13 = tpu.matmul %12, %5, %cst_12 {dimension_numbers = #tpu.dot_dimension_numbers<[1], [0], [0], [1], [0, 0, 1, 1], [], []>} : vector<166x256xf32>, vector<256x166xf32>, vector<166x166xf32> -> vector<166x166xf32>
    %14 = vector.extract_strided_slice %11 {offsets = [0, 256], sizes = [166, 256], strides = [1, 1]} : vector<166x1280xf32> to vector<166x256xf32>
    %cst_13 = arith.constant dense<0.000000e+00> : vector<166x166xf32>
    %15 = tpu.matmul %14, %5, %cst_13 {dimension_numbers = #tpu.dot_dimension_numbers<[1], [0], [0], [1], [0, 0, 1, 1], [], []>} : vector<166x256xf32>, vector<256x166xf32>, vector<166x166xf32> -> vector<166x166xf32>
    %16 = vector.extract_strided_slice %11 {offsets = [0, 512], sizes = [166, 256], strides = [1, 1]} : vector<166x1280xf32> to vector<166x256xf32>
    %cst_14 = arith.constant dense<0.000000e+00> : vector<166x166xf32>
    %17 = tpu.matmul %16, %5, %cst_14 {dimension_numbers = #tpu.dot_dimension_numbers<[1], [0], [0], [1], [0, 0, 1, 1], [], []>} : vector<166x256xf32>, vector<256x166xf32>, vector<166x166xf32> -> vector<166x166xf32>
    %18 = vector.extract_strided_slice %11 {offsets = [0, 768], sizes = [166, 256], strides = [1, 1]} : vector<166x1280xf32> to vector<166x256xf32>
    %cst_15 = arith.constant dense<0.000000e+00> : vector<166x166xf32>
    %19 = tpu.matmul %18, %5, %cst_15 {dimension_numbers = #tpu.dot_dimension_numbers<[1], [0], [0], [1], [0, 0, 1, 1], [], []>} : vector<166x256xf32>, vector<256x166xf32>, vector<166x166xf32> -> vector<166x166xf32>
    %20 = vector.extract_strided_slice %11 {offsets = [0, 1024], sizes = [166, 256], strides = [1, 1]} : vector<166x1280xf32> to vector<166x256xf32>
    %cst_16 = arith.constant dense<0.000000e+00> : vector<166x166xf32>
    %21 = tpu.matmul %20, %5, %cst_16 {dimension_numbers = #tpu.dot_dimension_numbers<[1], [0], [0], [1], [0, 0, 1, 1], [], []>} : vector<166x256xf32>, vector<256x166xf32>, vector<166x166xf32> -> vector<166x166xf32>
    %22 = arith.mulf %13, %13 : vector<166x166xf32>
    %23 = arith.mulf %15, %15 : vector<166x166xf32>
    %24 = arith.mulf %13, %15 : vector<166x166xf32>
    %25 = arith.subf %17, %22 : vector<166x166xf32>
    %26 = arith.subf %19, %23 : vector<166x166xf32>
    %27 = arith.subf %21, %24 : vector<166x166xf32>
    %cst_17 = arith.constant 2.000000e+00 : f32
    %28 = vector.broadcast %cst_17 : f32 to vector<166x166xf32>
    %29 = arith.mulf %28, %27 : vector<166x166xf32>
    %cst_18 = arith.constant 8.99999984E-4 : f32
    %30 = vector.broadcast %cst_18 : f32 to vector<166x166xf32>
    %31 = arith.addf %29, %30 : vector<166x166xf32>
    %32 = arith.addf %25, %26 : vector<166x166xf32>
    %cst_19 = arith.constant 8.99999984E-4 : f32
    %33 = vector.broadcast %cst_19 : f32 to vector<166x166xf32>
    %34 = arith.addf %32, %33 : vector<166x166xf32>
    %35 = tpu.reciprocal %34 {approx = true} : vector<166x166xf32> -> vector<166x166xf32>
    %36 = arith.mulf %31, %35 : vector<166x166xf32>
    %37 = vector.shape_cast %36 : vector<166x166xf32> to vector<1x166x166xf32>
    %cst_20 = arith.constant dense<0.000000e+00> : vector<1xf32>
    %38 = vector.multi_reduction <add>, %37, %cst_20 [1, 2] : vector<1x166x166xf32> to vector<1xf32>
    %39 = vector.shape_cast %38 : vector<1xf32> to vector<1x1x1xf32>
    %40 = vector.extract %39[0, 0, 0] : f32 from vector<1x1x1xf32>
    %cst_21 = arith.constant 3.62897372E-5 : f32
    %41 = arith.mulf %40, %cst_21 : f32
    %c0_22 = arith.constant 0 : index
    %c0_23 = arith.constant 0 : index
    %42 = vector.load %arg4[%c0_22, %c0_23] : memref<88x176xf32, #tpu.memory_space<vmem>>, vector<88x176xf32>
    %c0_24 = arith.constant 0 : index
    %c0_25 = arith.constant 0 : index
    %43 = vector.load %arg5[%c0_24, %c0_25] : memref<256x88xf32, #tpu.memory_space<vmem>>, vector<256x88xf32>
    %44 = vector.extract_strided_slice %10 {offsets = [0, 0], sizes = [176, 512], strides = [1, 1]} : vector<176x1280xf32> to vector<176x512xf32>
    %cst_26 = arith.constant dense<0.000000e+00> : vector<88x512xf32>
    %45 = tpu.matmul %42, %44, %cst_26 {dimension_numbers = #tpu.dot_dimension_numbers<[1], [0], [0], [1], [0, 0, 1, 1], [], []>} : vector<88x176xf32>, vector<176x512xf32>, vector<88x512xf32> -> vector<88x512xf32>
    %46 = vector.extract_strided_slice %45 {offsets = [0, 0], sizes = [88, 256], strides = [1, 1]} : vector<88x512xf32> to vector<88x256xf32>
    %cst_27 = arith.constant dense<0.000000e+00> : vector<88x88xf32>
    %47 = tpu.matmul %46, %43, %cst_27 {dimension_numbers = #tpu.dot_dimension_numbers<[1], [0], [0], [1], [0, 0, 1, 1], [], []>} : vector<88x256xf32>, vector<256x88xf32>, vector<88x88xf32> -> vector<88x88xf32>
    %48 = vector.extract_strided_slice %45 {offsets = [0, 256], sizes = [88, 256], strides = [1, 1]} : vector<88x512xf32> to vector<88x256xf32>
    %cst_28 = arith.constant dense<0.000000e+00> : vector<88x88xf32>
    %49 = tpu.matmul %48, %43, %cst_28 {dimension_numbers = #tpu.dot_dimension_numbers<[1], [0], [0], [1], [0, 0, 1, 1], [], []>} : vector<88x256xf32>, vector<256x88xf32>, vector<88x88xf32> -> vector<88x88xf32>
    %c0_29 = arith.constant 0 : index
    %c0_30 = arith.constant 0 : index
    %50 = vector.load %arg6[%c0_29, %c0_30] : memref<78x88xf32, #tpu.memory_space<vmem>>, vector<78x88xf32>
    %c0_31 = arith.constant 0 : index
    %c0_32 = arith.constant 0 : index
    %51 = vector.load %arg7[%c0_31, %c0_32] : memref<128x78xf32, #tpu.memory_space<vmem>>, vector<128x78xf32>
    %52 = arith.mulf %47, %47 : vector<88x88xf32>
    %53 = arith.mulf %49, %49 : vector<88x88xf32>
    %54 = arith.mulf %47, %49 : vector<88x88xf32>
    %cst_33 = arith.constant 0.000000e+00 : f32
    %55 = vector.broadcast %cst_33 : f32 to vector<88x40xf32>
    %56 = tpu.concatenate %47, %55, %49, %55, %52, %55, %53, %55, %54, %55 in 1 : vector<88x88xf32>, vector<88x40xf32>, vector<88x88xf32>, vector<88x40xf32>, vector<88x88xf32>, vector<88x40xf32>, vector<88x88xf32>, vector<88x40xf32>, vector<88x88xf32>, vector<88x40xf32> -> vector<88x640xf32>
    %cst_34 = arith.constant dense<0.000000e+00> : vector<78x640xf32>
    %57 = tpu.matmul %50, %56, %cst_34 {dimension_numbers = #tpu.dot_dimension_numbers<[1], [0], [0], [1], [0, 0, 1, 1], [], []>} : vector<78x88xf32>, vector<88x640xf32>, vector<78x640xf32> -> vector<78x640xf32>
    %58 = vector.extract_strided_slice %57 {offsets = [0, 0], sizes = [78, 128], strides = [1, 1]} : vector<78x640xf32> to vector<78x128xf32>
    %cst_35 = arith.constant dense<0.000000e+00> : vector<78x78xf32>
    %59 = tpu.matmul %58, %51, %cst_35 {dimension_numbers = #tpu.dot_dimension_numbers<[1], [0], [0], [1], [0, 0, 1, 1], [], []>} : vector<78x128xf32>, vector<128x78xf32>, vector<78x78xf32> -> vector<78x78xf32>
    %60 = vector.extract_strided_slice %57 {offsets = [0, 128], sizes = [78, 128], strides = [1, 1]} : vector<78x640xf32> to vector<78x128xf32>
    %cst_36 = arith.constant dense<0.000000e+00> : vector<78x78xf32>
    %61 = tpu.matmul %60, %51, %cst_36 {dimension_numbers = #tpu.dot_dimension_numbers<[1], [0], [0], [1], [0, 0, 1, 1], [], []>} : vector<78x128xf32>, vector<128x78xf32>, vector<78x78xf32> -> vector<78x78xf32>
    %62 = vector.extract_strided_slice %57 {offsets = [0, 256], sizes = [78, 128], strides = [1, 1]} : vector<78x640xf32> to vector<78x128xf32>
    %cst_37 = arith.constant dense<0.000000e+00> : vector<78x78xf32>
    %63 = tpu.matmul %62, %51, %cst_37 {dimension_numbers = #tpu.dot_dimension_numbers<[1], [0], [0], [1], [0, 0, 1, 1], [], []>} : vector<78x128xf32>, vector<128x78xf32>, vector<78x78xf32> -> vector<78x78xf32>
    %64 = vector.extract_strided_slice %57 {offsets = [0, 384], sizes = [78, 128], strides = [1, 1]} : vector<78x640xf32> to vector<78x128xf32>
    %cst_38 = arith.constant dense<0.000000e+00> : vector<78x78xf32>
    %65 = tpu.matmul %64, %51, %cst_38 {dimension_numbers = #tpu.dot_dimension_numbers<[1], [0], [0], [1], [0, 0, 1, 1], [], []>} : vector<78x128xf32>, vector<128x78xf32>, vector<78x78xf32> -> vector<78x78xf32>
    %66 = vector.extract_strided_slice %57 {offsets = [0, 512], sizes = [78, 128], strides = [1, 1]} : vector<78x640xf32> to vector<78x128xf32>
    %cst_39 = arith.constant dense<0.000000e+00> : vector<78x78xf32>
    %67 = tpu.matmul %66, %51, %cst_39 {dimension_numbers = #tpu.dot_dimension_numbers<[1], [0], [0], [1], [0, 0, 1, 1], [], []>} : vector<78x128xf32>, vector<128x78xf32>, vector<78x78xf32> -> vector<78x78xf32>
    %68 = arith.mulf %59, %59 : vector<78x78xf32>
    %69 = arith.mulf %61, %61 : vector<78x78xf32>
    %70 = arith.mulf %59, %61 : vector<78x78xf32>
    %71 = arith.subf %63, %68 : vector<78x78xf32>
    %72 = arith.subf %65, %69 : vector<78x78xf32>
    %73 = arith.subf %67, %70 : vector<78x78xf32>
    %cst_40 = arith.constant 2.000000e+00 : f32
    %74 = vector.broadcast %cst_40 : f32 to vector<78x78xf32>
    %75 = arith.mulf %74, %73 : vector<78x78xf32>
    %cst_41 = arith.constant 8.99999984E-4 : f32
    %76 = vector.broadcast %cst_41 : f32 to vector<78x78xf32>
    %77 = arith.addf %75, %76 : vector<78x78xf32>
    %78 = arith.addf %71, %72 : vector<78x78xf32>
    %cst_42 = arith.constant 8.99999984E-4 : f32
    %79 = vector.broadcast %cst_42 : f32 to vector<78x78xf32>
    %80 = arith.addf %78, %79 : vector<78x78xf32>
    %81 = tpu.reciprocal %80 {approx = true} : vector<78x78xf32> -> vector<78x78xf32>
    %82 = arith.mulf %77, %81 : vector<78x78xf32>
    %83 = vector.shape_cast %82 : vector<78x78xf32> to vector<1x78x78xf32>
    %cst_43 = arith.constant dense<0.000000e+00> : vector<1xf32>
    %84 = vector.multi_reduction <add>, %83, %cst_43 [1, 2] : vector<1x78x78xf32> to vector<1xf32>
    %85 = vector.shape_cast %84 : vector<1xf32> to vector<1x1x1xf32>
    %86 = vector.extract %85[0, 0, 0] : f32 from vector<1x1x1xf32>
    %cst_44 = arith.constant 1.64365556E-4 : f32
    %87 = arith.mulf %86, %cst_44 : f32
    %c0_45 = arith.constant 0 : index
    %c0_46 = arith.constant 0 : index
    %88 = vector.load %arg8[%c0_45, %c0_46] : memref<44x88xf32, #tpu.memory_space<vmem>>, vector<44x88xf32>
    %c0_47 = arith.constant 0 : index
    %c0_48 = arith.constant 0 : index
    %89 = vector.load %arg9[%c0_47, %c0_48] : memref<128x44xf32, #tpu.memory_space<vmem>>, vector<128x44xf32>
    %90 = vector.extract_strided_slice %56 {offsets = [0, 0], sizes = [88, 256], strides = [1, 1]} : vector<88x640xf32> to vector<88x256xf32>
    %cst_49 = arith.constant dense<0.000000e+00> : vector<44x256xf32>
    %91 = tpu.matmul %88, %90, %cst_49 {dimension_numbers = #tpu.dot_dimension_numbers<[1], [0], [0], [1], [0, 0, 1, 1], [], []>} : vector<44x88xf32>, vector<88x256xf32>, vector<44x256xf32> -> vector<44x256xf32>
    %92 = vector.extract_strided_slice %91 {offsets = [0, 0], sizes = [44, 128], strides = [1, 1]} : vector<44x256xf32> to vector<44x128xf32>
    %cst_50 = arith.constant dense<0.000000e+00> : vector<44x44xf32>
    %93 = tpu.matmul %92, %89, %cst_50 {dimension_numbers = #tpu.dot_dimension_numbers<[1], [0], [0], [1], [0, 0, 1, 1], [], []>} : vector<44x128xf32>, vector<128x44xf32>, vector<44x44xf32> -> vector<44x44xf32>
    %94 = vector.extract_strided_slice %91 {offsets = [0, 128], sizes = [44, 128], strides = [1, 1]} : vector<44x256xf32> to vector<44x128xf32>
    %cst_51 = arith.constant dense<0.000000e+00> : vector<44x44xf32>
    %95 = tpu.matmul %94, %89, %cst_51 {dimension_numbers = #tpu.dot_dimension_numbers<[1], [0], [0], [1], [0, 0, 1, 1], [], []>} : vector<44x128xf32>, vector<128x44xf32>, vector<44x44xf32> -> vector<44x44xf32>
    %c0_52 = arith.constant 0 : index
    %c0_53 = arith.constant 0 : index
    %96 = vector.load %arg10[%c0_52, %c0_53] : memref<34x44xf32, #tpu.memory_space<vmem>>, vector<34x44xf32>
    %c0_54 = arith.constant 0 : index
    %c0_55 = arith.constant 0 : index
    %97 = vector.load %arg11[%c0_54, %c0_55] : memref<128x34xf32, #tpu.memory_space<vmem>>, vector<128x34xf32>
    %98 = arith.mulf %93, %93 : vector<44x44xf32>
    %99 = arith.mulf %95, %95 : vector<44x44xf32>
    %100 = arith.mulf %93, %95 : vector<44x44xf32>
    %cst_56 = arith.constant 0.000000e+00 : f32
    %101 = vector.broadcast %cst_56 : f32 to vector<44x84xf32>
    %102 = tpu.concatenate %93, %101, %95, %101, %98, %101, %99, %101, %100, %101 in 1 : vector<44x44xf32>, vector<44x84xf32>, vector<44x44xf32>, vector<44x84xf32>, vector<44x44xf32>, vector<44x84xf32>, vector<44x44xf32>, vector<44x84xf32>, vector<44x44xf32>, vector<44x84xf32> -> vector<44x640xf32>
    %cst_57 = arith.constant dense<0.000000e+00> : vector<34x640xf32>
    %103 = tpu.matmul %96, %102, %cst_57 {dimension_numbers = #tpu.dot_dimension_numbers<[1], [0], [0], [1], [0, 0, 1, 1], [], []>} : vector<34x44xf32>, vector<44x640xf32>, vector<34x640xf32> -> vector<34x640xf32>
    %104 = vector.extract_strided_slice %103 {offsets = [0, 0], sizes = [34, 128], strides = [1, 1]} : vector<34x640xf32> to vector<34x128xf32>
    %cst_58 = arith.constant dense<0.000000e+00> : vector<34x34xf32>
    %105 = tpu.matmul %104, %97, %cst_58 {dimension_numbers = #tpu.dot_dimension_numbers<[1], [0], [0], [1], [0, 0, 1, 1], [], []>} : vector<34x128xf32>, vector<128x34xf32>, vector<34x34xf32> -> vector<34x34xf32>
    %106 = vector.extract_strided_slice %103 {offsets = [0, 128], sizes = [34, 128], strides = [1, 1]} : vector<34x640xf32> to vector<34x128xf32>
    %cst_59 = arith.constant dense<0.000000e+00> : vector<34x34xf32>
    %107 = tpu.matmul %106, %97, %cst_59 {dimension_numbers = #tpu.dot_dimension_numbers<[1], [0], [0], [1], [0, 0, 1, 1], [], []>} : vector<34x128xf32>, vector<128x34xf32>, vector<34x34xf32> -> vector<34x34xf32>
    %108 = vector.extract_strided_slice %103 {offsets = [0, 256], sizes = [34, 128], strides = [1, 1]} : vector<34x640xf32> to vector<34x128xf32>
    %cst_60 = arith.constant dense<0.000000e+00> : vector<34x34xf32>
    %109 = tpu.matmul %108, %97, %cst_60 {dimension_numbers = #tpu.dot_dimension_numbers<[1], [0], [0], [1], [0, 0, 1, 1], [], []>} : vector<34x128xf32>, vector<128x34xf32>, vector<34x34xf32> -> vector<34x34xf32>
    %110 = vector.extract_strided_slice %103 {offsets = [0, 384], sizes = [34, 128], strides = [1, 1]} : vector<34x640xf32> to vector<34x128xf32>
    %cst_61 = arith.constant dense<0.000000e+00> : vector<34x34xf32>
    %111 = tpu.matmul %110, %97, %cst_61 {dimension_numbers = #tpu.dot_dimension_numbers<[1], [0], [0], [1], [0, 0, 1, 1], [], []>} : vector<34x128xf32>, vector<128x34xf32>, vector<34x34xf32> -> vector<34x34xf32>
    %112 = vector.extract_strided_slice %103 {offsets = [0, 512], sizes = [34, 128], strides = [1, 1]} : vector<34x640xf32> to vector<34x128xf32>
    %cst_62 = arith.constant dense<0.000000e+00> : vector<34x34xf32>
    %113 = tpu.matmul %112, %97, %cst_62 {dimension_numbers = #tpu.dot_dimension_numbers<[1], [0], [0], [1], [0, 0, 1, 1], [], []>} : vector<34x128xf32>, vector<128x34xf32>, vector<34x34xf32> -> vector<34x34xf32>
    %114 = arith.mulf %105, %105 : vector<34x34xf32>
    %115 = arith.mulf %107, %107 : vector<34x34xf32>
    %116 = arith.mulf %105, %107 : vector<34x34xf32>
    %117 = arith.subf %109, %114 : vector<34x34xf32>
    %118 = arith.subf %111, %115 : vector<34x34xf32>
    %119 = arith.subf %113, %116 : vector<34x34xf32>
    %cst_63 = arith.constant 2.000000e+00 : f32
    %120 = vector.broadcast %cst_63 : f32 to vector<34x34xf32>
    %121 = arith.mulf %120, %119 : vector<34x34xf32>
    %cst_64 = arith.constant 8.99999984E-4 : f32
    %122 = vector.broadcast %cst_64 : f32 to vector<34x34xf32>
    %123 = arith.addf %121, %122 : vector<34x34xf32>
    %124 = arith.addf %117, %118 : vector<34x34xf32>
    %cst_65 = arith.constant 8.99999984E-4 : f32
    %125 = vector.broadcast %cst_65 : f32 to vector<34x34xf32>
    %126 = arith.addf %124, %125 : vector<34x34xf32>
    %127 = tpu.reciprocal %126 {approx = true} : vector<34x34xf32> -> vector<34x34xf32>
    %128 = arith.mulf %123, %127 : vector<34x34xf32>
    %129 = vector.shape_cast %128 : vector<34x34xf32> to vector<1x34x34xf32>
    %cst_66 = arith.constant dense<0.000000e+00> : vector<1xf32>
    %130 = vector.multi_reduction <add>, %129, %cst_66 [1, 2] : vector<1x34x34xf32> to vector<1xf32>
    %131 = vector.shape_cast %130 : vector<1xf32> to vector<1x1x1xf32>
    %132 = vector.extract %131[0, 0, 0] : f32 from vector<1x1x1xf32>
    %cst_67 = arith.constant 8.6505193E-4 : f32
    %133 = arith.mulf %132, %cst_67 : f32
    %c0_68 = arith.constant 0 : index
    %c0_69 = arith.constant 0 : index
    %134 = vector.load %arg12[%c0_68, %c0_69] : memref<22x44xf32, #tpu.memory_space<vmem>>, vector<22x44xf32>
    %c0_70 = arith.constant 0 : index
    %c0_71 = arith.constant 0 : index
    %135 = vector.load %arg13[%c0_70, %c0_71] : memref<128x22xf32, #tpu.memory_space<vmem>>, vector<128x22xf32>
    %136 = vector.extract_strided_slice %102 {offsets = [0, 0], sizes = [44, 256], strides = [1, 1]} : vector<44x640xf32> to vector<44x256xf32>
    %cst_72 = arith.constant dense<0.000000e+00> : vector<22x256xf32>
    %137 = tpu.matmul %134, %136, %cst_72 {dimension_numbers = #tpu.dot_dimension_numbers<[1], [0], [0], [1], [0, 0, 1, 1], [], []>} : vector<22x44xf32>, vector<44x256xf32>, vector<22x256xf32> -> vector<22x256xf32>
    %138 = vector.extract_strided_slice %137 {offsets = [0, 0], sizes = [22, 128], strides = [1, 1]} : vector<22x256xf32> to vector<22x128xf32>
    %cst_73 = arith.constant dense<0.000000e+00> : vector<22x22xf32>
    %139 = tpu.matmul %138, %135, %cst_73 {dimension_numbers = #tpu.dot_dimension_numbers<[1], [0], [0], [1], [0, 0, 1, 1], [], []>} : vector<22x128xf32>, vector<128x22xf32>, vector<22x22xf32> -> vector<22x22xf32>
    %140 = vector.extract_strided_slice %137 {offsets = [0, 128], sizes = [22, 128], strides = [1, 1]} : vector<22x256xf32> to vector<22x128xf32>
    %cst_74 = arith.constant dense<0.000000e+00> : vector<22x22xf32>
    %141 = tpu.matmul %140, %135, %cst_74 {dimension_numbers = #tpu.dot_dimension_numbers<[1], [0], [0], [1], [0, 0, 1, 1], [], []>} : vector<22x128xf32>, vector<128x22xf32>, vector<22x22xf32> -> vector<22x22xf32>
    %c0_75 = arith.constant 0 : index
    %c0_76 = arith.constant 0 : index
    %142 = vector.load %arg14[%c0_75, %c0_76] : memref<12x22xf32, #tpu.memory_space<vmem>>, vector<12x22xf32>
    %c0_77 = arith.constant 0 : index
    %c0_78 = arith.constant 0 : index
    %143 = vector.load %arg15[%c0_77, %c0_78] : memref<128x12xf32, #tpu.memory_space<vmem>>, vector<128x12xf32>
    %144 = arith.mulf %139, %139 : vector<22x22xf32>
    %145 = arith.mulf %141, %141 : vector<22x22xf32>
    %146 = arith.mulf %139, %141 : vector<22x22xf32>
    %cst_79 = arith.constant 0.000000e+00 : f32
    %147 = vector.broadcast %cst_79 : f32 to vector<22x106xf32>
    %148 = tpu.concatenate %139, %147, %141, %147, %144, %147, %145, %147, %146, %147 in 1 : vector<22x22xf32>, vector<22x106xf32>, vector<22x22xf32>, vector<22x106xf32>, vector<22x22xf32>, vector<22x106xf32>, vector<22x22xf32>, vector<22x106xf32>, vector<22x22xf32>, vector<22x106xf32> -> vector<22x640xf32>
    %cst_80 = arith.constant dense<0.000000e+00> : vector<12x640xf32>
    %149 = tpu.matmul %142, %148, %cst_80 {dimension_numbers = #tpu.dot_dimension_numbers<[1], [0], [0], [1], [0, 0, 1, 1], [], []>} : vector<12x22xf32>, vector<22x640xf32>, vector<12x640xf32> -> vector<12x640xf32>
    %150 = vector.extract_strided_slice %149 {offsets = [0, 0], sizes = [12, 128], strides = [1, 1]} : vector<12x640xf32> to vector<12x128xf32>
    %cst_81 = arith.constant dense<0.000000e+00> : vector<12x12xf32>
    %151 = tpu.matmul %150, %143, %cst_81 {dimension_numbers = #tpu.dot_dimension_numbers<[1], [0], [0], [1], [0, 0, 1, 1], [], []>} : vector<12x128xf32>, vector<128x12xf32>, vector<12x12xf32> -> vector<12x12xf32>
    %152 = vector.extract_strided_slice %149 {offsets = [0, 128], sizes = [12, 128], strides = [1, 1]} : vector<12x640xf32> to vector<12x128xf32>
    %cst_82 = arith.constant dense<0.000000e+00> : vector<12x12xf32>
    %153 = tpu.matmul %152, %143, %cst_82 {dimension_numbers = #tpu.dot_dimension_numbers<[1], [0], [0], [1], [0, 0, 1, 1], [], []>} : vector<12x128xf32>, vector<128x12xf32>, vector<12x12xf32> -> vector<12x12xf32>
    %154 = vector.extract_strided_slice %149 {offsets = [0, 256], sizes = [12, 128], strides = [1, 1]} : vector<12x640xf32> to vector<12x128xf32>
    %cst_83 = arith.constant dense<0.000000e+00> : vector<12x12xf32>
    %155 = tpu.matmul %154, %143, %cst_83 {dimension_numbers = #tpu.dot_dimension_numbers<[1], [0], [0], [1], [0, 0, 1, 1], [], []>} : vector<12x128xf32>, vector<128x12xf32>, vector<12x12xf32> -> vector<12x12xf32>
    %156 = vector.extract_strided_slice %149 {offsets = [0, 384], sizes = [12, 128], strides = [1, 1]} : vector<12x640xf32> to vector<12x128xf32>
    %cst_84 = arith.constant dense<0.000000e+00> : vector<12x12xf32>
    %157 = tpu.matmul %156, %143, %cst_84 {dimension_numbers = #tpu.dot_dimension_numbers<[1], [0], [0], [1], [0, 0, 1, 1], [], []>} : vector<12x128xf32>, vector<128x12xf32>, vector<12x12xf32> -> vector<12x12xf32>
    %158 = vector.extract_strided_slice %149 {offsets = [0, 512], sizes = [12, 128], strides = [1, 1]} : vector<12x640xf32> to vector<12x128xf32>
    %cst_85 = arith.constant dense<0.000000e+00> : vector<12x12xf32>
    %159 = tpu.matmul %158, %143, %cst_85 {dimension_numbers = #tpu.dot_dimension_numbers<[1], [0], [0], [1], [0, 0, 1, 1], [], []>} : vector<12x128xf32>, vector<128x12xf32>, vector<12x12xf32> -> vector<12x12xf32>
    %160 = arith.mulf %151, %151 : vector<12x12xf32>
    %161 = arith.mulf %153, %153 : vector<12x12xf32>
    %162 = arith.mulf %151, %153 : vector<12x12xf32>
    %163 = arith.subf %155, %160 : vector<12x12xf32>
    %164 = arith.subf %157, %161 : vector<12x12xf32>
    %165 = arith.subf %159, %162 : vector<12x12xf32>
    %cst_86 = arith.constant 2.000000e+00 : f32
    %166 = vector.broadcast %cst_86 : f32 to vector<12x12xf32>
    %167 = arith.mulf %166, %165 : vector<12x12xf32>
    %cst_87 = arith.constant 8.99999984E-4 : f32
    %168 = vector.broadcast %cst_87 : f32 to vector<12x12xf32>
    %169 = arith.addf %167, %168 : vector<12x12xf32>
    %170 = arith.addf %163, %164 : vector<12x12xf32>
    %cst_88 = arith.constant 8.99999984E-4 : f32
    %171 = vector.broadcast %cst_88 : f32 to vector<12x12xf32>
    %172 = arith.addf %170, %171 : vector<12x12xf32>
    %173 = tpu.reciprocal %172 {approx = true} : vector<12x12xf32> -> vector<12x12xf32>
    %174 = arith.mulf %169, %173 : vector<12x12xf32>
    %175 = vector.shape_cast %174 : vector<12x12xf32> to vector<1x12x12xf32>
    %cst_89 = arith.constant dense<0.000000e+00> : vector<1xf32>
    %176 = vector.multi_reduction <add>, %175, %cst_89 [1, 2] : vector<1x12x12xf32> to vector<1xf32>
    %177 = vector.shape_cast %176 : vector<1xf32> to vector<1x1x1xf32>
    %178 = vector.extract %177[0, 0, 0] : f32 from vector<1x1x1xf32>
    %cst_90 = arith.constant 0.0069444445 : f32
    %179 = arith.mulf %178, %cst_90 : f32
    %c0_91 = arith.constant 0 : index
    %c0_92 = arith.constant 0 : index
    %180 = vector.load %arg16[%c0_91, %c0_92] : memref<11x22xf32, #tpu.memory_space<vmem>>, vector<11x22xf32>
    %c0_93 = arith.constant 0 : index
    %c0_94 = arith.constant 0 : index
    %181 = vector.load %arg17[%c0_93, %c0_94] : memref<128x11xf32, #tpu.memory_space<vmem>>, vector<128x11xf32>
    %182 = vector.extract_strided_slice %148 {offsets = [0, 0], sizes = [22, 256], strides = [1, 1]} : vector<22x640xf32> to vector<22x256xf32>
    %cst_95 = arith.constant dense<0.000000e+00> : vector<11x256xf32>
    %183 = tpu.matmul %180, %182, %cst_95 {dimension_numbers = #tpu.dot_dimension_numbers<[1], [0], [0], [1], [0, 0, 1, 1], [], []>} : vector<11x22xf32>, vector<22x256xf32>, vector<11x256xf32> -> vector<11x256xf32>
    %184 = vector.extract_strided_slice %183 {offsets = [0, 0], sizes = [11, 128], strides = [1, 1]} : vector<11x256xf32> to vector<11x128xf32>
    %cst_96 = arith.constant dense<0.000000e+00> : vector<11x11xf32>
    %185 = tpu.matmul %184, %181, %cst_96 {dimension_numbers = #tpu.dot_dimension_numbers<[1], [0], [0], [1], [0, 0, 1, 1], [], []>} : vector<11x128xf32>, vector<128x11xf32>, vector<11x11xf32> -> vector<11x11xf32>
    %186 = vector.extract_strided_slice %183 {offsets = [0, 128], sizes = [11, 128], strides = [1, 1]} : vector<11x256xf32> to vector<11x128xf32>
    %cst_97 = arith.constant dense<0.000000e+00> : vector<11x11xf32>
    %187 = tpu.matmul %186, %181, %cst_97 {dimension_numbers = #tpu.dot_dimension_numbers<[1], [0], [0], [1], [0, 0, 1, 1], [], []>} : vector<11x128xf32>, vector<128x11xf32>, vector<11x11xf32> -> vector<11x11xf32>
    %c0_98 = arith.constant 0 : index
    %c0_99 = arith.constant 0 : index
    %188 = vector.load %arg18[%c0_98, %c0_99] : memref<1x11xf32, #tpu.memory_space<vmem>>, vector<1x11xf32>
    %c0_100 = arith.constant 0 : index
    %c0_101 = arith.constant 0 : index
    %189 = vector.load %arg19[%c0_100, %c0_101] : memref<128x1xf32, #tpu.memory_space<vmem>>, vector<128x1xf32>
    %190 = arith.mulf %185, %185 : vector<11x11xf32>
    %191 = arith.mulf %187, %187 : vector<11x11xf32>
    %192 = arith.mulf %185, %187 : vector<11x11xf32>
    %cst_102 = arith.constant 0.000000e+00 : f32
    %193 = vector.broadcast %cst_102 : f32 to vector<11x117xf32>
    %194 = tpu.concatenate %185, %193, %187, %193, %190, %193, %191, %193, %192, %193 in 1 : vector<11x11xf32>, vector<11x117xf32>, vector<11x11xf32>, vector<11x117xf32>, vector<11x11xf32>, vector<11x117xf32>, vector<11x11xf32>, vector<11x117xf32>, vector<11x11xf32>, vector<11x117xf32> -> vector<11x640xf32>
    %cst_103 = arith.constant dense<0.000000e+00> : vector<1x640xf32>
    %195 = tpu.matmul %188, %194, %cst_103 {dimension_numbers = #tpu.dot_dimension_numbers<[1], [0], [0], [1], [0, 0, 1, 1], [], []>} : vector<1x11xf32>, vector<11x640xf32>, vector<1x640xf32> -> vector<1x640xf32>
    %196 = vector.extract_strided_slice %195 {offsets = [0, 0], sizes = [1, 128], strides = [1, 1]} : vector<1x640xf32> to vector<1x128xf32>
    %cst_104 = arith.constant dense<0.000000e+00> : vector<1x1xf32>
    %197 = tpu.matmul %196, %189, %cst_104 {dimension_numbers = #tpu.dot_dimension_numbers<[1], [0], [0], [1], [0, 0, 1, 1], [], []>} : vector<1x128xf32>, vector<128x1xf32>, vector<1x1xf32> -> vector<1x1xf32>
    %198 = vector.extract_strided_slice %195 {offsets = [0, 128], sizes = [1, 128], strides = [1, 1]} : vector<1x640xf32> to vector<1x128xf32>
    %cst_105 = arith.constant dense<0.000000e+00> : vector<1x1xf32>
    %199 = tpu.matmul %198, %189, %cst_105 {dimension_numbers = #tpu.dot_dimension_numbers<[1], [0], [0], [1], [0, 0, 1, 1], [], []>} : vector<1x128xf32>, vector<128x1xf32>, vector<1x1xf32> -> vector<1x1xf32>
    %200 = vector.extract_strided_slice %195 {offsets = [0, 256], sizes = [1, 128], strides = [1, 1]} : vector<1x640xf32> to vector<1x128xf32>
    %cst_106 = arith.constant dense<0.000000e+00> : vector<1x1xf32>
    %201 = tpu.matmul %200, %189, %cst_106 {dimension_numbers = #tpu.dot_dimension_numbers<[1], [0], [0], [1], [0, 0, 1, 1], [], []>} : vector<1x128xf32>, vector<128x1xf32>, vector<1x1xf32> -> vector<1x1xf32>
    %202 = vector.extract_strided_slice %195 {offsets = [0, 384], sizes = [1, 128], strides = [1, 1]} : vector<1x640xf32> to vector<1x128xf32>
    %cst_107 = arith.constant dense<0.000000e+00> : vector<1x1xf32>
    %203 = tpu.matmul %202, %189, %cst_107 {dimension_numbers = #tpu.dot_dimension_numbers<[1], [0], [0], [1], [0, 0, 1, 1], [], []>} : vector<1x128xf32>, vector<128x1xf32>, vector<1x1xf32> -> vector<1x1xf32>
    %204 = vector.extract_strided_slice %195 {offsets = [0, 512], sizes = [1, 128], strides = [1, 1]} : vector<1x640xf32> to vector<1x128xf32>
    %cst_108 = arith.constant dense<0.000000e+00> : vector<1x1xf32>
    %205 = tpu.matmul %204, %189, %cst_108 {dimension_numbers = #tpu.dot_dimension_numbers<[1], [0], [0], [1], [0, 0, 1, 1], [], []>} : vector<1x128xf32>, vector<128x1xf32>, vector<1x1xf32> -> vector<1x1xf32>
    %206 = arith.mulf %197, %197 : vector<1x1xf32>
    %207 = arith.mulf %199, %199 : vector<1x1xf32>
    %208 = arith.mulf %197, %199 : vector<1x1xf32>
    %209 = arith.subf %201, %206 : vector<1x1xf32>
    %210 = arith.subf %203, %207 : vector<1x1xf32>
    %211 = arith.subf %205, %208 : vector<1x1xf32>
    %cst_109 = arith.constant 2.000000e+00 : f32
    %212 = vector.broadcast %cst_109 : f32 to vector<1x1xf32>
    %213 = arith.mulf %212, %211 : vector<1x1xf32>
    %cst_110 = arith.constant 8.99999984E-4 : f32
    %214 = vector.broadcast %cst_110 : f32 to vector<1x1xf32>
    %215 = arith.addf %213, %214 : vector<1x1xf32>
    %216 = arith.addf %209, %210 : vector<1x1xf32>
    %cst_111 = arith.constant 8.99999984E-4 : f32
    %217 = vector.broadcast %cst_111 : f32 to vector<1x1xf32>
    %218 = arith.addf %216, %217 : vector<1x1xf32>
    %219 = tpu.reciprocal %218 {approx = true} : vector<1x1xf32> -> vector<1x1xf32>
    %220 = arith.mulf %215, %219 : vector<1x1xf32>
    %cst_112 = arith.constant 2.000000e+00 : f32
    %221 = vector.broadcast %cst_112 : f32 to vector<1x1xf32>
    %222 = arith.mulf %221, %208 : vector<1x1xf32>
    %cst_113 = arith.constant 9.99999974E-5 : f32
    %223 = vector.broadcast %cst_113 : f32 to vector<1x1xf32>
    %224 = arith.addf %222, %223 : vector<1x1xf32>
    %225 = arith.addf %206, %207 : vector<1x1xf32>
    %cst_114 = arith.constant 9.99999974E-5 : f32
    %226 = vector.broadcast %cst_114 : f32 to vector<1x1xf32>
    %227 = arith.addf %225, %226 : vector<1x1xf32>
    %228 = tpu.reciprocal %227 {approx = true} : vector<1x1xf32> -> vector<1x1xf32>
    %229 = arith.mulf %224, %228 : vector<1x1xf32>
    %230 = arith.mulf %229, %220 : vector<1x1xf32>
    %231 = vector.shape_cast %230 : vector<1x1xf32> to vector<1x1x1xf32>
    %cst_115 = arith.constant dense<0.000000e+00> : vector<1xf32>
    %232 = vector.multi_reduction <add>, %231, %cst_115 [1, 2] : vector<1x1x1xf32> to vector<1xf32>
    %233 = vector.shape_cast %232 : vector<1xf32> to vector<1x1x1xf32>
    %234 = vector.extract %233[0, 0, 0] : f32 from vector<1x1x1xf32>
    %cst_116 = arith.constant 1.000000e+00 : f32
    %235 = arith.mulf %234, %cst_116 : f32
    %236 = tpu.iota {dimensions = array<i32: 1>} : vector<1x128xi32>
    %cst_117 = arith.constant 0.000000e+00 : f32
    %237 = vector.broadcast %cst_117 : f32 to vector<1x128xf32>
    %c0_i32 = arith.constant 0 : i32
    %238 = vector.broadcast %c0_i32 : i32 to vector<1x128xi32>
    %239 = arith.cmpi eq, %236, %238 : vector<1x128xi32>
    %240 = vector.broadcast %41 : f32 to vector<1x128xf32>
    %241 = arith.select %239, %240, %237 : vector<1x128xi1>, vector<1x128xf32>
    %c1_i32 = arith.constant 1 : i32
    %242 = vector.broadcast %c1_i32 : i32 to vector<1x128xi32>
    %243 = arith.cmpi eq, %236, %242 : vector<1x128xi32>
    %244 = vector.broadcast %87 : f32 to vector<1x128xf32>
    %245 = arith.select %243, %244, %241 : vector<1x128xi1>, vector<1x128xf32>
    %c2_i32 = arith.constant 2 : i32
    %246 = vector.broadcast %c2_i32 : i32 to vector<1x128xi32>
    %247 = arith.cmpi eq, %236, %246 : vector<1x128xi32>
    %248 = vector.broadcast %133 : f32 to vector<1x128xf32>
    %249 = arith.select %247, %248, %245 : vector<1x128xi1>, vector<1x128xf32>
    %c3_i32 = arith.constant 3 : i32
    %250 = vector.broadcast %c3_i32 : i32 to vector<1x128xi32>
    %251 = arith.cmpi eq, %236, %250 : vector<1x128xi32>
    %252 = vector.broadcast %179 : f32 to vector<1x128xf32>
    %253 = arith.select %251, %252, %249 : vector<1x128xi1>, vector<1x128xf32>
    %c4_i32 = arith.constant 4 : i32
    %254 = vector.broadcast %c4_i32 : i32 to vector<1x128xi32>
    %255 = arith.cmpi eq, %236, %254 : vector<1x128xi32>
    %256 = vector.broadcast %235 : f32 to vector<1x128xf32>
    %257 = arith.select %255, %256, %253 : vector<1x128xi1>, vector<1x128xf32>
    %c0_118 = arith.constant 0 : index
    %c0_119 = arith.constant 0 : index
    %c0_120 = arith.constant 0 : index
    %c0_121 = arith.constant 0 : index
    %258 = vector.load %arg22[%c0_118, %c0_119, %c0_120, %c0_121] : memref<1x1x1x128xf32, #tpu.memory_space<vmem>>, vector<1x1x1x128xf32>
    %259 = vector.shape_cast %258 : vector<1x1x1x128xf32> to vector<1x128xf32>
    %260 = vector.shape_cast %257 : vector<1x128xf32> to vector<1x1x1x128xf32>
    tpu.vector_store %arg22[%c0_118, %c0_119, %c0_120, %c0_121], %260 {strides = array<i32>} : memref<1x1x1x128xf32, #tpu.memory_space<vmem>>, vector<1x1x1x128xf32>,
    return
  }
  func.func @transform_0(%arg0: i32, %arg1: i32) -> (i32, i32) {
    %c0_i32 = arith.constant 0 : i32
    %c0_i32_0 = arith.constant 0 : i32
    %c0_i32_1 = arith.constant 0 : i32
    return %c0_i32, %c0_i32_0 : i32, i32
  }
  func.func @transform_1(%arg0: i32, %arg1: i32) -> (i32, i32) {
    %c0_i32 = arith.constant 0 : i32
    %c0_i32_0 = arith.constant 0 : i32
    %c0_i32_1 = arith.constant 0 : i32
    return %c0_i32, %c0_i32_0 : i32, i32
  }
  func.func @transform_2(%arg0: i32, %arg1: i32) -> (i32, i32) {
    %c0_i32 = arith.constant 0 : i32
    %c0_i32_0 = arith.constant 0 : i32
    %c0_i32_1 = arith.constant 0 : i32
    return %c0_i32, %c0_i32_0 : i32, i32
  }
  func.func @transform_3(%arg0: i32, %arg1: i32) -> (i32, i32) {
    %c0_i32 = arith.constant 0 : i32
    %c0_i32_0 = arith.constant 0 : i32
    %c0_i32_1 = arith.constant 0 : i32
    return %c0_i32, %c0_i32_0 : i32, i32
  }
  func.func @transform_4(%arg0: i32, %arg1: i32) -> (i32, i32) {
    %c0_i32 = arith.constant 0 : i32
    %c0_i32_0 = arith.constant 0 : i32
    %c0_i32_1 = arith.constant 0 : i32
    return %c0_i32, %c0_i32_0 : i32, i32
  }
  func.func @transform_5(%arg0: i32, %arg1: i32) -> (i32, i32) {
    %c0_i32 = arith.constant 0 : i32
    %c0_i32_0 = arith.constant 0 : i32
    %c0_i32_1 = arith.constant 0 : i32
    return %c0_i32, %c0_i32_0 : i32, i32
  }
  func.func @transform_6(%arg0: i32, %arg1: i32) -> (i32, i32) {
    %c0_i32 = arith.constant 0 : i32
    %c0_i32_0 = arith.constant 0 : i32
    %c0_i32_1 = arith.constant 0 : i32
    return %c0_i32, %c0_i32_0 : i32, i32
  }
  func.func @transform_7(%arg0: i32, %arg1: i32) -> (i32, i32) {
    %c0_i32 = arith.constant 0 : i32
    %c0_i32_0 = arith.constant 0 : i32
    %c0_i32_1 = arith.constant 0 : i32
    return %c0_i32, %c0_i32_0 : i32, i32
  }
  func.func @transform_8(%arg0: i32, %arg1: i32) -> (i32, i32) {
    %c0_i32 = arith.constant 0 : i32
    %c0_i32_0 = arith.constant 0 : i32
    %c0_i32_1 = arith.constant 0 : i32
    return %c0_i32, %c0_i32_0 : i32, i32
  }
  func.func @transform_9(%arg0: i32, %arg1: i32) -> (i32, i32) {
    %c0_i32 = arith.constant 0 : i32
    %c0_i32_0 = arith.constant 0 : i32
    %c0_i32_1 = arith.constant 0 : i32
    return %c0_i32, %c0_i32_0 : i32, i32
  }
  func.func @transform_10(%arg0: i32, %arg1: i32) -> (i32, i32) {
    %c0_i32 = arith.constant 0 : i32
    %c0_i32_0 = arith.constant 0 : i32
    %c0_i32_1 = arith.constant 0 : i32
    return %c0_i32, %c0_i32_0 : i32, i32
  }
  func.func @transform_11(%arg0: i32, %arg1: i32) -> (i32, i32) {
    %c0_i32 = arith.constant 0 : i32
    %c0_i32_0 = arith.constant 0 : i32
    %c0_i32_1 = arith.constant 0 : i32
    return %c0_i32, %c0_i32_0 : i32, i32
  }
  func.func @transform_12(%arg0: i32, %arg1: i32) -> (i32, i32) {
    %c0_i32 = arith.constant 0 : i32
    %c0_i32_0 = arith.constant 0 : i32
    %c0_i32_1 = arith.constant 0 : i32
    return %c0_i32, %c0_i32_0 : i32, i32
  }
  func.func @transform_13(%arg0: i32, %arg1: i32) -> (i32, i32) {
    %c0_i32 = arith.constant 0 : i32
    %c0_i32_0 = arith.constant 0 : i32
    %c0_i32_1 = arith.constant 0 : i32
    return %c0_i32, %c0_i32_0 : i32, i32
  }
  func.func @transform_14(%arg0: i32, %arg1: i32) -> (i32, i32) {
    %c0_i32 = arith.constant 0 : i32
    %c0_i32_0 = arith.constant 0 : i32
    %c0_i32_1 = arith.constant 0 : i32
    return %c0_i32, %c0_i32_0 : i32, i32
  }
  func.func @transform_15(%arg0: i32, %arg1: i32) -> (i32, i32) {
    %c0_i32 = arith.constant 0 : i32
    %c0_i32_0 = arith.constant 0 : i32
    %c0_i32_1 = arith.constant 0 : i32
    return %c0_i32, %c0_i32_0 : i32, i32
  }
  func.func @transform_16(%arg0: i32, %arg1: i32) -> (i32, i32) {
    %c0_i32 = arith.constant 0 : i32
    %c0_i32_0 = arith.constant 0 : i32
    %c0_i32_1 = arith.constant 0 : i32
    return %c0_i32, %c0_i32_0 : i32, i32
  }
  func.func @transform_17(%arg0: i32, %arg1: i32) -> (i32, i32) {
    %c0_i32 = arith.constant 0 : i32
    %c0_i32_0 = arith.constant 0 : i32
    %c0_i32_1 = arith.constant 0 : i32
    return %c0_i32, %c0_i32_0 : i32, i32
  }
  func.func @transform_18(%arg0: i32, %arg1: i32) -> (i32, i32, i32, i32) {
    %c0_i32 = arith.constant 0 : i32
    %c0_i32_0 = arith.constant 0 : i32
    %c0_i32_1 = arith.constant 0 : i32
    return %arg0, %arg1, %c0_i32, %c0_i32_0 : i32, i32, i32, i32
  }
  func.func @transform_19(%arg0: i32, %arg1: i32) -> (i32, i32, i32, i32) {
    %c0_i32 = arith.constant 0 : i32
    %c0_i32_0 = arith.constant 0 : i32
    %c0_i32_1 = arith.constant 0 : i32
    return %arg0, %arg1, %c0_i32, %c0_i32_0 : i32, i32, i32, i32
  }
  func.func @transform_20(%arg0: i32, %arg1: i32) -> (i32, i32, i32, i32) {
    %c0_i32 = arith.constant 0 : i32
    %c0_i32_0 = arith.constant 0 : i32
    %c0_i32_1 = arith.constant 0 : i32
    return %arg0, %arg1, %c0_i32, %c0_i32_0 : i32, i32, i32, i32
  }
}

</mosaic_0001>

<llo_original>
// kernel: msssim_loss.1
$region0: #{msssim_loss.1}
  #allocation0 [shape = 'u32[]', space=smem, size = 0x4, offset = 0x4, fixed_abs, tag = 'smem constant byte address 0x4 - core index']
  #allocation1 [shape = 'u32[144,128]{1,0:T(1,128)}', space=vmem, size = 0x12000, scoped, tag = 'internal scratch']
  %s0 = inlined_call_operand.hbm [shape: f32[166,176], index: 0, kind: input, shape index: {}]
  %s1 = inlined_call_operand.hbm [shape: f32[256,166], index: 1, kind: input, shape index: {}]
  %s2 = inlined_call_operand.hbm [shape: f32[88,176], index: 2, kind: input, shape index: {}]
  %s3 = inlined_call_operand.hbm [shape: f32[256,88], index: 3, kind: input, shape index: {}]
  %s4 = inlined_call_operand.hbm [shape: f32[78,88], index: 4, kind: input, shape index: {}]
  %s5 = inlined_call_operand.hbm [shape: f32[128,78], index: 5, kind: input, shape index: {}]
  %s6 = inlined_call_operand.hbm [shape: f32[44,88], index: 6, kind: input, shape index: {}]
  %s7 = inlined_call_operand.hbm [shape: f32[128,44], index: 7, kind: input, shape index: {}]
  %s8 = inlined_call_operand.hbm [shape: f32[34,44], index: 8, kind: input, shape index: {}]
  %s9 = inlined_call_operand.hbm [shape: f32[128,34], index: 9, kind: input, shape index: {}]
  %s10 = inlined_call_operand.hbm [shape: f32[22,44], index: 10, kind: input, shape index: {}]
  %s11 = inlined_call_operand.hbm [shape: f32[128,22], index: 11, kind: input, shape index: {}]
  %s12 = inlined_call_operand.hbm [shape: f32[12,22], index: 12, kind: input, shape index: {}]
  %s13 = inlined_call_operand.hbm [shape: f32[128,12], index: 13, kind: input, shape index: {}]
  %s14 = inlined_call_operand.hbm [shape: f32[11,22], index: 14, kind: input, shape index: {}]
  %s15 = inlined_call_operand.hbm [shape: f32[128,11], index: 15, kind: input, shape index: {}]
  %s16 = inlined_call_operand.hbm [shape: f32[1,11], index: 16, kind: input, shape index: {}]
  %s17 = inlined_call_operand.hbm [shape: f32[128,1], index: 17, kind: input, shape index: {}]
  %s18 = inlined_call_operand.hbm [shape: f32[2,3,176,176], index: 18, kind: input, shape index: {}]
  %s19 = inlined_call_operand.hbm [shape: f32[2,3,176,176], index: 19, kind: input, shape index: {}]
  %s20 = inlined_call_operand.vmem [shape: f32[2,3,1,128], index: 20, kind: output, shape index: {}]
  %s21 = sld [smem:[#allocation0]]
  $region193: #{msssim_loss.1} parent=0
    _
  %s23 = ssub.s32 1, %s21
  %s24 = scalar_select 0, %s23, %s21
  $region1: #{msssim_loss.1} parent=0
    #allocation2 [shape = 'u8[172032]{0}', space=vmem, size = 0x2a000, scoped, tag = 'input window, operand 0, single buffered']
    #allocation3 [shape = 's32[2]{0}', space=sflag, size = 0x8, scoped, tag = 'scoped memory for msssim_loss.1']
    #allocation4 [shape = 'u8[262144]{0}', space=vmem, size = 0x40000, scoped, tag = 'input window, operand 1, single buffered']
    #allocation5 [shape = 's32[1]{0}', space=sflag, size = 0x4, scoped, tag = 'scoped memory for msssim_loss.1']
    #allocation6 [shape = 'u8[90112]{0}', space=vmem, size = 0x16000, scoped, tag = 'input window, operand 2, single buffered']
    #allocation7 [shape = 'u8[131072]{0}', space=vmem, size = 0x20000, scoped, tag = 'input window, operand 3, single buffered']
    #allocation8 [shape = 's32[1]{0}', space=sflag, size = 0x4, scoped, tag = 'scoped memory for msssim_loss.1']
    #allocation9 [shape = 'u8[40960]{0}', space=vmem, size = 0xa000, scoped, tag = 'input window, operand 4, single buffered']
    #allocation10 [shape = 'u8[65536]{0}', space=vmem, size = 0x10000, scoped, tag = 'input window, operand 5, single buffered']
    #allocation11 [shape = 's32[1]{0}', space=sflag, size = 0x4, scoped, tag = 'scoped memory for msssim_loss.1']
    #allocation12 [shape = 'u8[24576]{0}', space=vmem, size = 0x6000, scoped, tag = 'input window, operand 6, single buffered']
    #allocation13 [shape = 'u8[65536]{0}', space=vmem, size = 0x10000, scoped, tag = 'input window, operand 7, single buffered']
    #allocation14 [shape = 's32[1]{0}', space=sflag, size = 0x4, scoped, tag = 'scoped memory for msssim_loss.1']
    #allocation15 [shape = 'u8[20480]{0}', space=vmem, size = 0x5000, scoped, tag = 'input window, operand 8, single buffered']
    #allocation16 [shape = 'u8[65536]{0}', space=vmem, size = 0x10000, scoped, tag = 'input window, operand 9, single buffered']
    #allocation17 [shape = 's32[1]{0}', space=sflag, size = 0x4, scoped, tag = 'scoped memory for msssim_loss.1']
    #allocation18 [shape = 'u8[12288]{0}', space=vmem, size = 0x3000, scoped, tag = 'input window, operand 10, single buffered']
    #allocation19 [shape = 'u8[65536]{0}', space=vmem, size = 0x10000, scoped, tag = 'input window, operand 11, single buffered']
    #allocation20 [shape = 's32[1]{0}', space=sflag, size = 0x4, scoped, tag = 'scoped memory for msssim_loss.1']
    #allocation21 [shape = 'u8[8192]{0}', space=vmem, size = 0x2000, scoped, tag = 'input window, operand 12, single buffered']
    #allocation22 [shape = 'u8[65536]{0}', space=vmem, size = 0x10000, scoped, tag = 'input window, operand 13, single buffered']
    #allocation23 [shape = 's32[1]{0}', space=sflag, size = 0x4, scoped, tag = 'scoped memory for msssim_loss.1']
    #allocation24 [shape = 'u8[8192]{0}', space=vmem, size = 0x2000, scoped, tag = 'input window, operand 14, single buffered']
    #allocation25 [shape = 'u8[65536]{0}', space=vmem, size = 0x10000, scoped, tag = 'input window, operand 15, single buffered']
    #allocation26 [shape = 's32[1]{0}', space=sflag, size = 0x4, scoped, tag = 'scoped memory for msssim_loss.1']
    #allocation27 [shape = 'u8[512]{0}', space=vmem, size = 0x400, scoped, tag = 'input window, operand 16, single buffered']
    #allocation28 [shape = 'u8[65536]{0}', space=vmem, size = 0x10000, scoped, tag = 'input window, operand 17, single buffered']
    #allocation29 [shape = 's32[1]{0}', space=sflag, size = 0x4, scoped, tag = 'scoped memory for msssim_loss.1']
    #allocation30 [shape = 'u8[360448]{0}', space=vmem, size = 0x58000, scoped, tag = 'input window, operand 18']
    #allocation31 [shape = 'u8[360448]{0}', space=vmem, size = 0x58000, scoped, tag = 'input window, operand 19']
    %25 = vsyncpa [#allocation3], 0
    %26 = vsyncpa [#allocation5], 0
    %27 = vsyncpa [#allocation8], 0
    %28 = vsyncpa [#allocation11], 0
    %29 = vsyncpa [#allocation14], 0
    %30 = vsyncpa [#allocation17], 0
    %31 = vsyncpa [#allocation20], 0
    %32 = vsyncpa [#allocation23], 0
    %33 = vsyncpa [#allocation26], 0
    %34 = vsyncpa [#allocation29], 0
    loop: start=0, step=1, limit=8
    $region2: #{msssim_loss.1} parent=1 // loop_pre_header
      _
    $region3: #{msssim_loss.1} parent=1 // loop_header
      %s36 = sphi 0, %s40
      %p37 = scmp.ge.s32.totalorder %s36, 8
      %s43 = sphi 0, %s55
      %s44 = sphi 0, %s51
      %s45 = sphi 0, %s43
      %s46 = sphi 0, %s44
      %s47 = sphi 0, %s45
      %s48 = sphi 0, %s46
      %s56 = sphi 0, %s56
      %s58 = sphi 0, %s56
      %s59 = sphi 0, %s58
      %s73 = sphi 0, %s59
      %s77 = sphi 0, %s77
      %s79 = sphi 0, %s77
      %s80 = sphi 0, %s79
      %s94 = sphi 0, %s80
      %s98 = sphi 0, %s98
      %s100 = sphi 0, %s98
      %s101 = sphi 0, %s100
      %s115 = sphi 0, %s101
      %s119 = sphi 0, %s119
      %s121 = sphi 0, %s119
      %s122 = sphi 0, %s121
      %s136 = sphi 0, %s122
      %s140 = sphi 0, %s140
      %s142 = sphi 0, %s140
      %s143 = sphi 0, %s142
      %s157 = sphi 0, %s143
      %s161 = sphi 0, %s161
      %s163 = sphi 0, %s161
      %s164 = sphi 0, %s163
      %s178 = sphi 0, %s164
      %s182 = sphi 0, %s182
      %s184 = sphi 0, %s182
      %s185 = sphi 0, %s184
      %s199 = sphi 0, %s185
      %s203 = sphi 0, %s203
      %s205 = sphi 0, %s203
      %s206 = sphi 0, %s205
      %s220 = sphi 0, %s206
      %s224 = sphi 0, %s224
      %s226 = sphi 0, %s224
      %s227 = sphi 0, %s226
      %s241 = sphi 0, %s227
      %s245 = sphi 0, %s245
      %s247 = sphi 0, %s245
      %s248 = sphi 0, %s247
      %s262 = sphi 0, %s248
      %s266 = sphi 0, %s266
      %s268 = sphi 0, %s266
      %s269 = sphi 0, %s268
      %s283 = sphi 0, %s269
      %s287 = sphi 0, %s287
      %s289 = sphi 0, %s287
      %s290 = sphi 0, %s289
      %s304 = sphi 0, %s290
      %s308 = sphi 0, %s308
      %s310 = sphi 0, %s308
      %s311 = sphi 0, %s310
      %s325 = sphi 0, %s311
      %s329 = sphi 0, %s329
      %s331 = sphi 0, %s329
      %s332 = sphi 0, %s331
      %s346 = sphi 0, %s332
      %s350 = sphi 0, %s350
      %s352 = sphi 0, %s350
      %s353 = sphi 0, %s352
      %s367 = sphi 0, %s353
      %s371 = sphi 0, %s371
      %s373 = sphi 0, %s371
      %s374 = sphi 0, %s373
      %s388 = sphi 0, %s374
      %s392 = sphi 0, %s392
      %s394 = sphi 0, %s392
      %s395 = sphi 0, %s394
      %s409 = sphi 0, %s395
      %s413 = sphi 0, %s413
      %s415 = sphi 0, %s413
      %s416 = sphi 0, %s415
      %s430 = sphi 0, %s416
      %s438 = sphi 0, %s440
      %s441 = sphi 0, %s438
      %s442 = sphi 0, %s441
      %s458 = sphi 0, %s442
      %s466 = sphi 0, %s468
      %s469 = sphi 0, %s466
      %s470 = sphi 0, %s469
      %s486 = sphi 0, %s470
      %s494 = sphi 0, %s496
      %s497 = sphi 0, %s494
      %s498 = sphi 0, %s497
      %s514 = sphi 0, %s498
    $region4: #{msssim_loss.1} parent=1 // loop_header_branch
      %39 = sbr.rel (%p37) target = $region8
    $region5: #{msssim_loss.1} parent=1 // loop_body
      %s41 = ssub.s32 %s36, 1
      %s42 = ssub.s32 %s36, 2
      %s49 = sadd.s32 1, %s44
      %p50 = scmp.ge.s32.totalorder %s49, 3
      %s51 = scalar_select %p50, 0, %s49
      %s52 = sadd.s32 1, %s43
      %s53 = scalar_select %p50, %s52, %s43
      %p54 = scmp.ge.s32.totalorder %s53, 2
      %s55 = scalar_select %p54, 0, %s53
      %s57 = sadd.s32 %s56, 1
      %p60 = scmp.eq.s32.totalorder %s36, 5
      %p61 = scmp.ne.s32.totalorder %s56, %s58
      %p62 = scmp.eq.s32.totalorder %s36, 0
      %p63 = por %p61, %p62
      %p64 = scmp.ne.s32.totalorder %s56, %s58
      %p65 = scmp.eq.s32.totalorder %s41, 5
      %p66 = por %p64, %p65
      %p67 = scmp.ne.s32.totalorder %s58, %s59
      %p68 = scmp.eq.s32.totalorder %s41, 0
      %p69 = por %p67, %p68
      %p70 = scmp.ne.s32.totalorder %s58, %s59
      %p71 = scmp.eq.s32.totalorder %s42, 5
      %p72 = por %p70, %p71
      %p74 = scmp.ne.s32.totalorder %s59, %s73
      %p75 = scmp.eq.s32.totalorder %s42, 0
      %p76 = por %p74, %p75
      %s78 = sadd.s32 %s77, 1
      %p81 = scmp.eq.s32.totalorder %s36, 5
      %p82 = scmp.ne.s32.totalorder %s77, %s79
      %p83 = scmp.eq.s32.totalorder %s36, 0
      %p84 = por %p82, %p83
      %p85 = scmp.ne.s32.totalorder %s77, %s79
      %p86 = scmp.eq.s32.totalorder %s41, 5
      %p87 = por %p85, %p86
      %p88 = scmp.ne.s32.totalorder %s79, %s80
      %p89 = scmp.eq.s32.totalorder %s41, 0
      %p90 = por %p88, %p89
      %p91 = scmp.ne.s32.totalorder %s79, %s80
      %p92 = scmp.eq.s32.totalorder %s42, 5
      %p93 = por %p91, %p92
      %p95 = scmp.ne.s32.totalorder %s80, %s94
      %p96 = scmp.eq.s32.totalorder %s42, 0
      %p97 = por %p95, %p96
      %s99 = sadd.s32 %s98, 1
      %p102 = scmp.eq.s32.totalorder %s36, 5
      %p103 = scmp.ne.s32.totalorder %s98, %s100
      %p104 = scmp.eq.s32.totalorder %s36, 0
      %p105 = por %p103, %p104
      %p106 = scmp.ne.s32.totalorder %s98, %s100
      %p107 = scmp.eq.s32.totalorder %s41, 5
      %p108 = por %p106, %p107
      %p109 = scmp.ne.s32.totalorder %s100, %s101
      %p110 = scmp.eq.s32.totalorder %s41, 0
      %p111 = por %p109, %p110
      %p112 = scmp.ne.s32.totalorder %s100, %s101
      %p113 = scmp.eq.s32.totalorder %s42, 5
      %p114 = por %p112, %p113
      %p116 = scmp.ne.s32.totalorder %s101, %s115
      %p117 = scmp.eq.s32.totalorder %s42, 0
      %p118 = por %p116, %p117
      %s120 = sadd.s32 %s119, 1
      %p123 = scmp.eq.s32.totalorder %s36, 5
      %p124 = scmp.ne.s32.totalorder %s119, %s121
      %p125 = scmp.eq.s32.totalorder %s36, 0
      %p126 = por %p124, %p125
      %p127 = scmp.ne.s32.totalorder %s119, %s121
      %p128 = scmp.eq.s32.totalorder %s41, 5
      %p129 = por %p127, %p128
      %p130 = scmp.ne.s32.totalorder %s121, %s122
      %p131 = scmp.eq.s32.totalorder %s41, 0
      %p132 = por %p130, %p131
      %p133 = scmp.ne.s32.totalorder %s121, %s122
      %p134 = scmp.eq.s32.totalorder %s42, 5
      %p135 = por %p133, %p134
      %p137 = scmp.ne.s32.totalorder %s122, %s136
      %p138 = scmp.eq.s32.totalorder %s42, 0
      %p139 = por %p137, %p138
      %s141 = sadd.s32 %s140, 1
      %p144 = scmp.eq.s32.totalorder %s36, 5
      %p145 = scmp.ne.s32.totalorder %s140, %s142
      %p146 = scmp.eq.s32.totalorder %s36, 0
      %p147 = por %p145, %p146
      %p148 = scmp.ne.s32.totalorder %s140, %s142
      %p149 = scmp.eq.s32.totalorder %s41, 5
      %p150 = por %p148, %p149
      %p151 = scmp.ne.s32.totalorder %s142, %s143
      %p152 = scmp.eq.s32.totalorder %s41, 0
      %p153 = por %p151, %p152
      %p154 = scmp.ne.s32.totalorder %s142, %s143
      %p155 = scmp.eq.s32.totalorder %s42, 5
      %p156 = por %p154, %p155
      %p158 = scmp.ne.s32.totalorder %s143, %s157
      %p159 = scmp.eq.s32.totalorder %s42, 0
      %p160 = por %p158, %p159
      %s162 = sadd.s32 %s161, 1
      %p165 = scmp.eq.s32.totalorder %s36, 5
      %p166 = scmp.ne.s32.totalorder %s161, %s163
      %p167 = scmp.eq.s32.totalorder %s36, 0
      %p168 = por %p166, %p167
      %p169 = scmp.ne.s32.totalorder %s161, %s163
      %p170 = scmp.eq.s32.totalorder %s41, 5
      %p171 = por %p169, %p170
      %p172 = scmp.ne.s32.totalorder %s163, %s164
      %p173 = scmp.eq.s32.totalorder %s41, 0
      %p174 = por %p172, %p173
      %p175 = scmp.ne.s32.totalorder %s163, %s164
      %p176 = scmp.eq.s32.totalorder %s42, 5
      %p177 = por %p175, %p176
      %p179 = scmp.ne.s32.totalorder %s164, %s178
      %p180 = scmp.eq.s32.totalorder %s42, 0
      %p181 = por %p179, %p180
      %s183 = sadd.s32 %s182, 1
      %p186 = scmp.eq.s32.totalorder %s36, 5
      %p187 = scmp.ne.s32.totalorder %s182, %s184
      %p188 = scmp.eq.s32.totalorder %s36, 0
      %p189 = por %p187, %p188
      %p190 = scmp.ne.s32.totalorder %s182, %s184
      %p191 = scmp.eq.s32.totalorder %s41, 5
      %p192 = por %p190, %p191
      %p193 = scmp.ne.s32.totalorder %s184, %s185
      %p194 = scmp.eq.s32.totalorder %s41, 0
      %p195 = por %p193, %p194
      %p196 = scmp.ne.s32.totalorder %s184, %s185
      %p197 = scmp.eq.s32.totalorder %s42, 5
      %p198 = por %p196, %p197
      %p200 = scmp.ne.s32.totalorder %s185, %s199
      %p201 = scmp.eq.s32.totalorder %s42, 0
      %p202 = por %p200, %p201
      %s204 = sadd.s32 %s203, 1
      %p207 = scmp.eq.s32.totalorder %s36, 5
      %p208 = scmp.ne.s32.totalorder %s203, %s205
      %p209 = scmp.eq.s32.totalorder %s36, 0
      %p210 = por %p208, %p209
      %p211 = scmp.ne.s32.totalorder %s203, %s205
      %p212 = scmp.eq.s32.totalorder %s41, 5
      %p213 = por %p211, %p212
      %p214 = scmp.ne.s32.totalorder %s205, %s206
      %p215 = scmp.eq.s32.totalorder %s41, 0
      %p216 = por %p214, %p215
      %p217 = scmp.ne.s32.totalorder %s205, %s206
      %p218 = scmp.eq.s32.totalorder %s42, 5
      %p219 = por %p217, %p218
      %p221 = scmp.ne.s32.totalorder %s206, %s220
      %p222 = scmp.eq.s32.totalorder %s42, 0
      %p223 = por %p221, %p222
      %s225 = sadd.s32 %s224, 1
      %p228 = scmp.eq.s32.totalorder %s36, 5
      %p229 = scmp.ne.s32.totalorder %s224, %s226
      %p230 = scmp.eq.s32.totalorder %s36, 0
      %p231 = por %p229, %p230
      %p232 = scmp.ne.s32.totalorder %s224, %s226
      %p233 = scmp.eq.s32.totalorder %s41, 5
      %p234 = por %p232, %p233
      %p235 = scmp.ne.s32.totalorder %s226, %s227
      %p236 = scmp.eq.s32.totalorder %s41, 0
      %p237 = por %p235, %p236
      %p238 = scmp.ne.s32.totalorder %s226, %s227
      %p239 = scmp.eq.s32.totalorder %s42, 5
      %p240 = por %p238, %p239
      %p242 = scmp.ne.s32.totalorder %s227, %s241
      %p243 = scmp.eq.s32.totalorder %s42, 0
      %p244 = por %p242, %p243
      %s246 = sadd.s32 %s245, 1
      %p249 = scmp.eq.s32.totalorder %s36, 5
      %p250 = scmp.ne.s32.totalorder %s245, %s247
      %p251 = scmp.eq.s32.totalorder %s36, 0
      %p252 = por %p250, %p251
      %p253 = scmp.ne.s32.totalorder %s245, %s247
      %p254 = scmp.eq.s32.totalorder %s41, 5
      %p255 = por %p253, %p254
      %p256 = scmp.ne.s32.totalorder %s247, %s248
      %p257 = scmp.eq.s32.totalorder %s41, 0
      %p258 = por %p256, %p257
      %p259 = scmp.ne.s32.totalorder %s247, %s248
      %p260 = scmp.eq.s32.totalorder %s42, 5
      %p261 = por %p259, %p260
      %p263 = scmp.ne.s32.totalorder %s248, %s262
      %p264 = scmp.eq.s32.totalorder %s42, 0
      %p265 = por %p263, %p264
      %s267 = sadd.s32 %s266, 1
      %p270 = scmp.eq.s32.totalorder %s36, 5
      %p271 = scmp.ne.s32.totalorder %s266, %s268
      %p272 = scmp.eq.s32.totalorder %s36, 0
      %p273 = por %p271, %p272
      %p274 = scmp.ne.s32.totalorder %s266, %s268
      %p275 = scmp.eq.s32.totalorder %s41, 5
      %p276 = por %p274, %p275
      %p277 = scmp.ne.s32.totalorder %s268, %s269
      %p278 = scmp.eq.s32.totalorder %s41, 0
      %p279 = por %p277, %p278
      %p280 = scmp.ne.s32.totalorder %s268, %s269
      %p281 = scmp.eq.s32.totalorder %s42, 5
      %p282 = por %p280, %p281
      %p284 = scmp.ne.s32.totalorder %s269, %s283
      %p285 = scmp.eq.s32.totalorder %s42, 0
      %p286 = por %p284, %p285
      %s288 = sadd.s32 %s287, 1
      %p291 = scmp.eq.s32.totalorder %s36, 5
      %p292 = scmp.ne.s32.totalorder %s287, %s289
      %p293 = scmp.eq.s32.totalorder %s36, 0
      %p294 = por %p292, %p293
      %p295 = scmp.ne.s32.totalorder %s287, %s289
      %p296 = scmp.eq.s32.totalorder %s41, 5
      %p297 = por %p295, %p296
      %p298 = scmp.ne.s32.totalorder %s289, %s290
      %p299 = scmp.eq.s32.totalorder %s41, 0
      %p300 = por %p298, %p299
      %p301 = scmp.ne.s32.totalorder %s289, %s290
      %p302 = scmp.eq.s32.totalorder %s42, 5
      %p303 = por %p301, %p302
      %p305 = scmp.ne.s32.totalorder %s290, %s304
      %p306 = scmp.eq.s32.totalorder %s42, 0
      %p307 = por %p305, %p306
      %s309 = sadd.s32 %s308, 1
      %p312 = scmp.eq.s32.totalorder %s36, 5
      %p313 = scmp.ne.s32.totalorder %s308, %s310
      %p314 = scmp.eq.s32.totalorder %s36, 0
      %p315 = por %p313, %p314
      %p316 = scmp.ne.s32.totalorder %s308, %s310
      %p317 = scmp.eq.s32.totalorder %s41, 5
      %p318 = por %p316, %p317
      %p319 = scmp.ne.s32.totalorder %s310, %s311
      %p320 = scmp.eq.s32.totalorder %s41, 0
      %p321 = por %p319, %p320
      %p322 = scmp.ne.s32.totalorder %s310, %s311
      %p323 = scmp.eq.s32.totalorder %s42, 5
      %p324 = por %p322, %p323
      %p326 = scmp.ne.s32.totalorder %s311, %s325
      %p327 = scmp.eq.s32.totalorder %s42, 0
      %p328 = por %p326, %p327
      %s330 = sadd.s32 %s329, 1
      %p333 = scmp.eq.s32.totalorder %s36, 5
      %p334 = scmp.ne.s32.totalorder %s329, %s331
      %p335 = scmp.eq.s32.totalorder %s36, 0
      %p336 = por %p334, %p335
      %p337 = scmp.ne.s32.totalorder %s329, %s331
      %p338 = scmp.eq.s32.totalorder %s41, 5
      %p339 = por %p337, %p338
      %p340 = scmp.ne.s32.totalorder %s331, %s332
      %p341 = scmp.eq.s32.totalorder %s41, 0
      %p342 = por %p340, %p341
      %p343 = scmp.ne.s32.totalorder %s331, %s332
      %p344 = scmp.eq.s32.totalorder %s42, 5
      %p345 = por %p343, %p344
      %p347 = scmp.ne.s32.totalorder %s332, %s346
      %p348 = scmp.eq.s32.totalorder %s42, 0
      %p349 = por %p347, %p348
      %s351 = sadd.s32 %s350, 1
      %p354 = scmp.eq.s32.totalorder %s36, 5
      %p355 = scmp.ne.s32.totalorder %s350, %s352
      %p356 = scmp.eq.s32.totalorder %s36, 0
      %p357 = por %p355, %p356
      %p358 = scmp.ne.s32.totalorder %s350, %s352
      %p359 = scmp.eq.s32.totalorder %s41, 5
      %p360 = por %p358, %p359
      %p361 = scmp.ne.s32.totalorder %s352, %s353
      %p362 = scmp.eq.s32.totalorder %s41, 0
      %p363 = por %p361, %p362
      %p364 = scmp.ne.s32.totalorder %s352, %s353
      %p365 = scmp.eq.s32.totalorder %s42, 5
      %p366 = por %p364, %p365
      %p368 = scmp.ne.s32.totalorder %s353, %s367
      %p369 = scmp.eq.s32.totalorder %s42, 0
      %p370 = por %p368, %p369
      %s372 = sadd.s32 %s371, 1
      %p375 = scmp.eq.s32.totalorder %s36, 5
      %p376 = scmp.ne.s32.totalorder %s371, %s373
      %p377 = scmp.eq.s32.totalorder %s36, 0
      %p378 = por %p376, %p377
      %p379 = scmp.ne.s32.totalorder %s371, %s373
      %p380 = scmp.eq.s32.totalorder %s41, 5
      %p381 = por %p379, %p380
      %p382 = scmp.ne.s32.totalorder %s373, %s374
      %p383 = scmp.eq.s32.totalorder %s41, 0
      %p384 = por %p382, %p383
      %p385 = scmp.ne.s32.totalorder %s373, %s374
      %p386 = scmp.eq.s32.totalorder %s42, 5
      %p387 = por %p385, %p386
      %p389 = scmp.ne.s32.totalorder %s374, %s388
      %p390 = scmp.eq.s32.totalorder %s42, 0
      %p391 = por %p389, %p390
      %s393 = sadd.s32 %s392, 1
      %p396 = scmp.eq.s32.totalorder %s36, 5
      %p397 = scmp.ne.s32.totalorder %s392, %s394
      %p398 = scmp.eq.s32.totalorder %s36, 0
      %p399 = por %p397, %p398
      %p400 = scmp.ne.s32.totalorder %s392, %s394
      %p401 = scmp.eq.s32.totalorder %s41, 5
      %p402 = por %p400, %p401
      %p403 = scmp.ne.s32.totalorder %s394, %s395
      %p404 = scmp.eq.s32.totalorder %s41, 0
      %p405 = por %p403, %p404
      %p406 = scmp.ne.s32.totalorder %s394, %s395
      %p407 = scmp.eq.s32.totalorder %s42, 5
      %p408 = por %p406, %p407
      %p410 = scmp.ne.s32.totalorder %s395, %s409
      %p411 = scmp.eq.s32.totalorder %s42, 0
      %p412 = por %p410, %p411
      %s414 = sadd.s32 %s413, 1
      %p417 = scmp.eq.s32.totalorder %s36, 5
      %p418 = scmp.ne.s32.totalorder %s413, %s415
      %p419 = scmp.eq.s32.totalorder %s36, 0
      %p420 = por %p418, %p419
      %p421 = scmp.ne.s32.totalorder %s413, %s415
      %p422 = scmp.eq.s32.totalorder %s41, 5
      %p423 = por %p421, %p422
      %p424 = scmp.ne.s32.totalorder %s415, %s416
      %p425 = scmp.eq.s32.totalorder %s41, 0
      %p426 = por %p424, %p425
      %p427 = scmp.ne.s32.totalorder %s415, %s416
      %p428 = scmp.eq.s32.totalorder %s42, 5
      %p429 = por %p427, %p428
      %p431 = scmp.ne.s32.totalorder %s416, %s430
      %p432 = scmp.eq.s32.totalorder %s42, 0
      %p433 = por %p431, %p432
      %s434 = ssub.s32 %s43, %s55
      %s435 = ssub.s32 %s44, %s51
      %s436 = sor.u32 %s434, %s435
      %p437 = scmp.eq.s32.totalorder %s436, 0
      %s439 = sadd.s32 %s438, 1
      %s440 = scalar_select %p437, %s438, %s439
      %p443 = pneg %p437
      %p444 = scmp.eq.s32.totalorder %s36, 5
      %p445 = por %p443, %p444
      %p446 = scmp.ne.s32.totalorder %s438, %s441
      %p447 = scmp.eq.s32.totalorder %s36, 0
      %p448 = por %p446, %p447
      %p449 = scmp.ne.s32.totalorder %s438, %s441
      %p450 = scmp.eq.s32.totalorder %s41, 5
      %p451 = por %p449, %p450
      %p452 = scmp.ne.s32.totalorder %s441, %s442
      %p453 = scmp.eq.s32.totalorder %s41, 0
      %p454 = por %p452, %p453
      %p455 = scmp.ne.s32.totalorder %s441, %s442
      %p456 = scmp.eq.s32.totalorder %s42, 5
      %p457 = por %p455, %p456
      %p459 = scmp.ne.s32.totalorder %s442, %s458
      %p460 = scmp.eq.s32.totalorder %s42, 0
      %p461 = por %p459, %p460
      %s462 = ssub.s32 %s43, %s55
      %s463 = ssub.s32 %s44, %s51
      %s464 = sor.u32 %s462, %s463
      %p465 = scmp.eq.s32.totalorder %s464, 0
      %s467 = sadd.s32 %s466, 1
      %s468 = scalar_select %p465, %s466, %s467
      %p471 = pneg %p465
      %p472 = scmp.eq.s32.totalorder %s36, 5
      %p473 = por %p471, %p472
      %p474 = scmp.ne.s32.totalorder %s466, %s469
      %p475 = scmp.eq.s32.totalorder %s36, 0
      %p476 = por %p474, %p475
      %p477 = scmp.ne.s32.totalorder %s466, %s469
      %p478 = scmp.eq.s32.totalorder %s41, 5
      %p479 = por %p477, %p478
      %p480 = scmp.ne.s32.totalorder %s469, %s470
      %p481 = scmp.eq.s32.totalorder %s41, 0
      %p482 = por %p480, %p481
      %p483 = scmp.ne.s32.totalorder %s469, %s470
      %p484 = scmp.eq.s32.totalorder %s42, 5
      %p485 = por %p483, %p484
      %p487 = scmp.ne.s32.totalorder %s470, %s486
      %p488 = scmp.eq.s32.totalorder %s42, 0
      %p489 = por %p487, %p488
      %s490 = ssub.s32 %s43, %s55
      %s491 = ssub.s32 %s44, %s51
      %s492 = sor.u32 %s490, %s491
      %p493 = scmp.eq.s32.totalorder %s492, 0
      %s495 = sadd.s32 %s494, 1
      %s496 = scalar_select %p493, %s494, %s495
      %p499 = pneg %p493
      %p500 = scmp.eq.s32.totalorder %s36, 5
      %p501 = por %p499, %p500
      %p502 = scmp.ne.s32.totalorder %s494, %s497
      %p503 = scmp.eq.s32.totalorder %s36, 0
      %p504 = por %p502, %p503
      %p505 = scmp.ne.s32.totalorder %s494, %s497
      %p506 = scmp.eq.s32.totalorder %s41, 5
      %p507 = por %p505, %p506
      %p508 = scmp.ne.s32.totalorder %s497, %s498
      %p509 = scmp.eq.s32.totalorder %s41, 0
      %p510 = por %p508, %p509
      %p511 = scmp.ne.s32.totalorder %s497, %s498
      %p512 = scmp.eq.s32.totalorder %s42, 5
      %p513 = por %p511, %p512
      %p515 = scmp.ne.s32.totalorder %s498, %s514
      %p516 = scmp.eq.s32.totalorder %s42, 0
      %p517 = por %p515, %p516
      %p518 = scmp.le.s32.totalorder 1, %s36
      %p519 = scmp.lt.s32.totalorder %s36, 7
      %p520 = pnand %p518, %p519
      %p521 = pneg %p520
      // Predicated region
      $region9: #{msssim_loss.1} parent=5 // pred_check
        _
      $region10: #{msssim_loss.1} parent=5 // pred_check_branch
        %523 = sbr.rel (%p520) target = $region12
      $region11: #{msssim_loss.1} parent=5 // pred_region
        %s524 = ssub.s32 %s36, 1
        // Predicated region
        $region13: #{msssim_loss.1} parent=11 // pred_check
          %p525 = pneg %p69
        $region14: #{msssim_loss.1} parent=11 // pred_check_branch
          %527 = sbr.rel (%p525) target = $region16
        $region15: #{msssim_loss.1} parent=11 // pred_region
          %s529 = ssub.s32 5376, 5376
          %530 = vsyncadd [#allocation3], %s529
          %s531 = sshll.u32 [#allocation2], 4
          %s532 = int_to_ptr.vmem [resolvable:$true] %s531
          %537 = dma.hbm_to_vmem [thread:$0]  %s0, 5376, %s532, [#allocation3], 256, 256, 16
        $region16: #{msssim_loss.1} parent=11 // pred_fallthru
          _
        // Predicated region
        $region17: #{msssim_loss.1} parent=11 // pred_check
          %p538 = pneg %p90
        $region18: #{msssim_loss.1} parent=11 // pred_check_branch
          %540 = sbr.rel (%p538) target = $region20
        $region19: #{msssim_loss.1} parent=11 // pred_region
          %s542 = ssub.s32 8192, 8192
          %543 = vsyncadd [#allocation5], %s542
          %s544 = sshll.u32 [#allocation4], 4
          %s545 = int_to_ptr.vmem [resolvable:$true] %s544
          %550 = dma.hbm_to_vmem [thread:$0]  %s1, 8192, %s545, [#allocation5], 256, 256, 16
        $region20: #{msssim_loss.1} parent=11 // pred_fallthru
          _
        // Predicated region
        $region21: #{msssim_loss.1} parent=11 // pred_check
          %p551 = pneg %p111
        $region22: #{msssim_loss.1} parent=11 // pred_check_branch
          %553 = sbr.rel (%p551) target = $region24
        $region23: #{msssim_loss.1} parent=11 // pred_region
          %s555 = ssub.s32 2816, 2816
          %556 = vsyncadd [#allocation5], %s555
          %s557 = sshll.u32 [#allocation6], 4
          %s558 = int_to_ptr.vmem [resolvable:$true] %s557
          %563 = dma.hbm_to_vmem [thread:$0]  %s2, 2816, %s558, [#allocation5], 256, 256, 16
        $region24: #{msssim_loss.1} parent=11 // pred_fallthru
          _
        // Predicated region
        $region25: #{msssim_loss.1} parent=11 // pred_check
          %p564 = pneg %p132
        $region26: #{msssim_loss.1} parent=11 // pred_check_branch
          %566 = sbr.rel (%p564) target = $region28
        $region27: #{msssim_loss.1} parent=11 // pred_region
          %s568 = ssub.s32 4096, 4096
          %569 = vsyncadd [#allocation8], %s568
          %s570 = sshll.u32 [#allocation7], 4
          %s571 = int_to_ptr.vmem [resolvable:$true] %s570
          %576 = dma.hbm_to_vmem [thread:$0]  %s3, 4096, %s571, [#allocation8], 128, 128, 8
        $region28: #{msssim_loss.1} parent=11 // pred_fallthru
          _
        // Predicated region
        $region29: #{msssim_loss.1} parent=11 // pred_check
          %p577 = pneg %p153
        $region30: #{msssim_loss.1} parent=11 // pred_check_branch
          %579 = sbr.rel (%p577) target = $region32
        $region31: #{msssim_loss.1} parent=11 // pred_region
          %s581 = ssub.s32 1280, 1280
          %582 = vsyncadd [#allocation8], %s581
          %s583 = sshll.u32 [#allocation9], 4
          %s584 = int_to_ptr.vmem [resolvable:$true] %s583
          %589 = dma.hbm_to_vmem [thread:$0]  %s4, 1280, %s584, [#allocation8], 128, 128, 8
        $region32: #{msssim_loss.1} parent=11 // pred_fallthru
          _
        // Predicated region
        $region33: #{msssim_loss.1} parent=11 // pred_check
          %p590 = pneg %p174
        $region34: #{msssim_loss.1} parent=11 // pred_check_branch
          %592 = sbr.rel (%p590) target = $region36
        $region35: #{msssim_loss.1} parent=11 // pred_region
          %s594 = ssub.s32 2048, 2048
          %595 = vsyncadd [#allocation11], %s594
          %s596 = sshll.u32 [#allocation10], 4
          %s597 = int_to_ptr.vmem [resolvable:$true] %s596
          %602 = dma.hbm_to_vmem [thread:$0]  %s5, 2048, %s597, [#allocation11], 128, 128, 8
        $region36: #{msssim_loss.1} parent=11 // pred_fallthru
          _
        // Predicated region
        $region37: #{msssim_loss.1} parent=11 // pred_check
          %p603 = pneg %p195
        $region38: #{msssim_loss.1} parent=11 // pred_check_branch
          %605 = sbr.rel (%p603) target = $region40
        $region39: #{msssim_loss.1} parent=11 // pred_region
          %s607 = ssub.s32 768, 768
          %608 = vsyncadd [#allocation11], %s607
          %s609 = sshll.u32 [#allocation12], 4
          %s610 = int_to_ptr.vmem [resolvable:$true] %s609
          %615 = dma.hbm_to_vmem [thread:$0]  %s6, 768, %s610, [#allocation11], 128, 128, 8
        $region40: #{msssim_loss.1} parent=11 // pred_fallthru
          _
        // Predicated region
        $region41: #{msssim_loss.1} parent=11 // pred_check
          %p616 = pneg %p216
        $region42: #{msssim_loss.1} parent=11 // pred_check_branch
          %618 = sbr.rel (%p616) target = $region44
        $region43: #{msssim_loss.1} parent=11 // pred_region
          %s620 = ssub.s32 2048, 2048
          %621 = vsyncadd [#allocation14], %s620
          %s622 = sshll.u32 [#allocation13], 4
          %s623 = int_to_ptr.vmem [resolvable:$true] %s622
          %628 = dma.hbm_to_vmem [thread:$0]  %s7, 2048, %s623, [#allocation14], 128, 128, 8
        $region44: #{msssim_loss.1} parent=11 // pred_fallthru
          _
        // Predicated region
        $region45: #{msssim_loss.1} parent=11 // pred_check
          %p629 = pneg %p237
        $region46: #{msssim_loss.1} parent=11 // pred_check_branch
          %631 = sbr.rel (%p629) target = $region48
        $region47: #{msssim_loss.1} parent=11 // pred_region
          %s633 = ssub.s32 640, 640
          %634 = vsyncadd [#allocation14], %s633
          %s635 = sshll.u32 [#allocation15], 4
          %s636 = int_to_ptr.vmem [resolvable:$true] %s635
          %641 = dma.hbm_to_vmem [thread:$0]  %s8, 640, %s636, [#allocation14], 128, 128, 8
        $region48: #{msssim_loss.1} parent=11 // pred_fallthru
          _
        // Predicated region
        $region49: #{msssim_loss.1} parent=11 // pred_check
          %p642 = pneg %p258
        $region50: #{msssim_loss.1} parent=11 // pred_check_branch
          %644 = sbr.rel (%p642) target = $region52
        $region51: #{msssim_loss.1} parent=11 // pred_region
          %s646 = ssub.s32 2048, 2048
          %647 = vsyncadd [#allocation17], %s646
          %s648 = sshll.u32 [#allocation16], 4
          %s649 = int_to_ptr.vmem [resolvable:$true] %s648
          %654 = dma.hbm_to_vmem [thread:$0]  %s9, 2048, %s649, [#allocation17], 128, 128, 8
        $region52: #{msssim_loss.1} parent=11 // pred_fallthru
          _
        // Predicated region
        $region53: #{msssim_loss.1} parent=11 // pred_check
          %p655 = pneg %p279
        $region54: #{msssim_loss.1} parent=11 // pred_check_branch
          %657 = sbr.rel (%p655) target = $region56
        $region55: #{msssim_loss.1} parent=11 // pred_region
          %s659 = ssub.s32 384, 384
          %660 = vsyncadd [#allocation17], %s659
          %s661 = sshll.u32 [#allocation18], 4
          %s662 = int_to_ptr.vmem [resolvable:$true] %s661
          %667 = dma.hbm_to_vmem [thread:$0]  %s10, 384, %s662, [#allocation17], 128, 128, 8
        $region56: #{msssim_loss.1} parent=11 // pred_fallthru
          _
        // Predicated region
        $region57: #{msssim_loss.1} parent=11 // pred_check
          %p668 = pneg %p300
        $region58: #{msssim_loss.1} parent=11 // pred_check_branch
          %670 = sbr.rel (%p668) target = $region60
        $region59: #{msssim_loss.1} parent=11 // pred_region
          %s672 = ssub.s32 2048, 2048
          %673 = vsyncadd [#allocation20], %s672
          %s674 = sshll.u32 [#allocation19], 4
          %s675 = int_to_ptr.vmem [resolvable:$true] %s674
          %680 = dma.hbm_to_vmem [thread:$0]  %s11, 2048, %s675, [#allocation20], 128, 128, 8
        $region60: #{msssim_loss.1} parent=11 // pred_fallthru
          _
        // Predicated region
        $region61: #{msssim_loss.1} parent=11 // pred_check
          %p681 = pneg %p321
        $region62: #{msssim_loss.1} parent=11 // pred_check_branch
          %683 = sbr.rel (%p681) target = $region64
        $region63: #{msssim_loss.1} parent=11 // pred_region
          %s685 = ssub.s32 256, 256
          %686 = vsyncadd [#allocation20], %s685
          %s687 = sshll.u32 [#allocation21], 4
          %s688 = int_to_ptr.vmem [resolvable:$true] %s687
          %693 = dma.hbm_to_vmem [thread:$0]  %s12, 256, %s688, [#allocation20], 128, 128, 8
        $region64: #{msssim_loss.1} parent=11 // pred_fallthru
          _
        // Predicated region
        $region65: #{msssim_loss.1} parent=11 // pred_check
          %p694 = pneg %p342
        $region66: #{msssim_loss.1} parent=11 // pred_check_branch
          %696 = sbr.rel (%p694) target = $region68
        $region67: #{msssim_loss.1} parent=11 // pred_region
          %s698 = ssub.s32 2048, 2048
          %699 = vsyncadd [#allocation23], %s698
          %s700 = sshll.u32 [#allocation22], 4
          %s701 = int_to_ptr.vmem [resolvable:$true] %s700
          %706 = dma.hbm_to_vmem [thread:$0]  %s13, 2048, %s701, [#allocation23], 128, 128, 8
        $region68: #{msssim_loss.1} parent=11 // pred_fallthru
          _
        // Predicated region
        $region69: #{msssim_loss.1} parent=11 // pred_check
          %p707 = pneg %p363
        $region70: #{msssim_loss.1} parent=11 // pred_check_branch
          %709 = sbr.rel (%p707) target = $region72
        $region71: #{msssim_loss.1} parent=11 // pred_region
          %s711 = ssub.s32 256, 256
          %712 = vsyncadd [#allocation23], %s711
          %s713 = sshll.u32 [#allocation24], 4
          %s714 = int_to_ptr.vmem [resolvable:$true] %s713
          %719 = dma.hbm_to_vmem [thread:$0]  %s14, 256, %s714, [#allocation23], 128, 128, 8
        $region72: #{msssim_loss.1} parent=11 // pred_fallthru
          _
        // Predicated region
        $region73: #{msssim_loss.1} parent=11 // pred_check
          %p720 = pneg %p384
        $region74: #{msssim_loss.1} parent=11 // pred_check_branch
          %722 = sbr.rel (%p720) target = $region76
        $region75: #{msssim_loss.1} parent=11 // pred_region
          %s724 = ssub.s32 2048, 2048
          %725 = vsyncadd [#allocation26], %s724
          %s726 = sshll.u32 [#allocation25], 4
          %s727 = int_to_ptr.vmem [resolvable:$true] %s726
          %732 = dma.hbm_to_vmem [thread:$0]  %s15, 2048, %s727, [#allocation26], 128, 128, 8
        $region76: #{msssim_loss.1} parent=11 // pred_fallthru
          _
        // Predicated region
        $region77: #{msssim_loss.1} parent=11 // pred_check
          %p733 = pneg %p405
        $region78: #{msssim_loss.1} parent=11 // pred_check_branch
          %735 = sbr.rel (%p733) target = $region80
        $region79: #{msssim_loss.1} parent=11 // pred_region
          %s737 = ssub.s32 16, 16
          %738 = vsyncadd [#allocation26], %s737
          %s740 = sshll.u32 [#allocation27], 4
          %s741 = int_to_ptr.vmem [resolvable:$true] %s740
          %743 = dma.hbm_to_vmem [thread:$0]  %s16, 16, %s741, [#allocation26]
        $region80: #{msssim_loss.1} parent=11 // pred_fallthru
          _
        // Predicated region
        $region81: #{msssim_loss.1} parent=11 // pred_check
          %p744 = pneg %p426
        $region82: #{msssim_loss.1} parent=11 // pred_check_branch
          %746 = sbr.rel (%p744) target = $region84
        $region83: #{msssim_loss.1} parent=11 // pred_region
          %s748 = ssub.s32 2048, 2048
          %749 = vsyncadd [#allocation29], %s748
          %s750 = sshll.u32 [#allocation28], 4
          %s751 = int_to_ptr.vmem [resolvable:$true] %s750
          %756 = dma.hbm_to_vmem [thread:$0]  %s17, 2048, %s751, [#allocation29], 128, 128, 8
        $region84: #{msssim_loss.1} parent=11 // pred_fallthru
          _
      $region12: #{msssim_loss.1} parent=5 // pred_fallthru
        _
      %p757 = scmp.lt.s32.totalorder %s36, 6
      // Predicated region
      $region85: #{msssim_loss.1} parent=5 // pred_check
        %p758 = pneg %p757
      $region86: #{msssim_loss.1} parent=5 // pred_check_branch
        %760 = sbr.rel (%p758) target = $region88
      $region87: #{msssim_loss.1} parent=5 // pred_region
        // Predicated region
        $region89: #{msssim_loss.1} parent=87 // pred_check
          %p761 = pneg %p448
        $region90: #{msssim_loss.1} parent=87 // pred_check_branch
          %763 = sbr.rel (%p761) target = $region92
        $region91: #{msssim_loss.1} parent=87 // pred_region
          %s764 = sand.u32 %s36, 1
          %s765 = scalar_lea.sflag [#allocation3], %s764
          %s766 = sand.u32 %s438, 1
          %s767 = smul.addr %s766, 352
          %s768 = scalar_lea.vmem [#allocation30], %s767
          %s770 = ssub.s32 5632, 5632
          %771 = vsyncadd %s765, %s770
          %s772 = smul.addr %s44, 44
          %s773 = smul.addr %s43, 132
          %s774 = sadd.s32 %s772, %s773
          %s775 = smul.addr %s774, 128
          %s776 = scalar_lea.hbm %s18, %s775
          %s777 = sshll.u32 %s768, 4
          %s778 = int_to_ptr.vmem [resolvable:$true] %s777
          %783 = dma.hbm_to_vmem [thread:$0]  %s776, 5632, %s778, %s765, 256, 256, 16
        $region92: #{msssim_loss.1} parent=87 // pred_fallthru
          _
        // Predicated region
        $region93: #{msssim_loss.1} parent=87 // pred_check
          %p784 = pneg %p476
        $region94: #{msssim_loss.1} parent=87 // pred_check_branch
          %786 = sbr.rel (%p784) target = $region96
        $region95: #{msssim_loss.1} parent=87 // pred_region
          %s787 = sand.u32 %s36, 1
          %s788 = scalar_lea.sflag [#allocation3], %s787
          %s789 = sand.u32 %s466, 1
          %s790 = smul.addr %s789, 352
          %s791 = scalar_lea.vmem [#allocation31], %s790
          %s793 = ssub.s32 5632, 5632
          %794 = vsyncadd %s788, %s793
          %s795 = smul.addr %s44, 44
          %s796 = smul.addr %s43, 132
          %s797 = sadd.s32 %s795, %s796
          %s798 = smul.addr %s797, 128
          %s799 = scalar_lea.hbm %s19, %s798
          %s800 = sshll.u32 %s791, 4
          %s801 = int_to_ptr.vmem [resolvable:$true] %s800
          %806 = dma.hbm_to_vmem [thread:$0]  %s799, 5632, %s801, %s788, 256, 256, 16
        $region96: #{msssim_loss.1} parent=87 // pred_fallthru
          _
      $region88: #{msssim_loss.1} parent=5 // pred_fallthru
        _
      %p807 = scmp.le.s32.totalorder 1, %s36
      %p808 = scmp.lt.s32.totalorder %s36, 7
      %p809 = pnand %p807, %p808
      %p810 = pneg %p809
      // Predicated region
      $region97: #{msssim_loss.1} parent=5 // pred_check
        _
      $region98: #{msssim_loss.1} parent=5 // pred_check_branch
        %812 = sbr.rel (%p809) target = $region100
      $region99: #{msssim_loss.1} parent=5 // pred_region
        %s813 = ssub.s32 %s36, 1
        // Predicated region
        $region101: #{msssim_loss.1} parent=99 // pred_check
          %p814 = pneg %p69
        $region102: #{msssim_loss.1} parent=99 // pred_check_branch
          %816 = sbr.rel (%p814) target = $region104
        $region103: #{msssim_loss.1} parent=99 // pred_region
          %817 = dma.done [#allocation3], 5376
        $region104: #{msssim_loss.1} parent=99 // pred_fallthru
          _
        // Predicated region
        $region105: #{msssim_loss.1} parent=99 // pred_check
          %p818 = pneg %p90
        $region106: #{msssim_loss.1} parent=99 // pred_check_branch
          %820 = sbr.rel (%p818) target = $region108
        $region107: #{msssim_loss.1} parent=99 // pred_region
          %821 = dma.done [#allocation5], 8192
        $region108: #{msssim_loss.1} parent=99 // pred_fallthru
          _
        // Predicated region
        $region109: #{msssim_loss.1} parent=99 // pred_check
          %p822 = pneg %p111
        $region110: #{msssim_loss.1} parent=99 // pred_check_branch
          %824 = sbr.rel (%p822) target = $region112
        $region111: #{msssim_loss.1} parent=99 // pred_region
          %825 = dma.done [#allocation5], 2816
        $region112: #{msssim_loss.1} parent=99 // pred_fallthru
          _
        // Predicated region
        $region113: #{msssim_loss.1} parent=99 // pred_check
          %p826 = pneg %p132
        $region114: #{msssim_loss.1} parent=99 // pred_check_branch
          %828 = sbr.rel (%p826) target = $region116
        $region115: #{msssim_loss.1} parent=99 // pred_region
          %829 = dma.done [#allocation8], 4096
        $region116: #{msssim_loss.1} parent=99 // pred_fallthru
          _
        // Predicated region
        $region117: #{msssim_loss.1} parent=99 // pred_check
          %p830 = pneg %p153
        $region118: #{msssim_loss.1} parent=99 // pred_check_branch
          %832 = sbr.rel (%p830) target = $region120
        $region119: #{msssim_loss.1} parent=99 // pred_region
          %833 = dma.done [#allocation8], 1280
        $region120: #{msssim_loss.1} parent=99 // pred_fallthru
          _
        // Predicated region
        $region121: #{msssim_loss.1} parent=99 // pred_check
          %p834 = pneg %p174
        $region122: #{msssim_loss.1} parent=99 // pred_check_branch
          %836 = sbr.rel (%p834) target = $region124
        $region123: #{msssim_loss.1} parent=99 // pred_region
          %837 = dma.done [#allocation11], 2048
        $region124: #{msssim_loss.1} parent=99 // pred_fallthru
          _
        // Predicated region
        $region125: #{msssim_loss.1} parent=99 // pred_check
          %p838 = pneg %p195
        $region126: #{msssim_loss.1} parent=99 // pred_check_branch
          %840 = sbr.rel (%p838) target = $region128
        $region127: #{msssim_loss.1} parent=99 // pred_region
          %841 = dma.done [#allocation11], 768
        $region128: #{msssim_loss.1} parent=99 // pred_fallthru
          _
        // Predicated region
        $region129: #{msssim_loss.1} parent=99 // pred_check
          %p842 = pneg %p216
        $region130: #{msssim_loss.1} parent=99 // pred_check_branch
          %844 = sbr.rel (%p842) target = $region132
        $region131: #{msssim_loss.1} parent=99 // pred_region
          %845 = dma.done [#allocation14], 2048
        $region132: #{msssim_loss.1} parent=99 // pred_fallthru
          _
        // Predicated region
        $region133: #{msssim_loss.1} parent=99 // pred_check
          %p846 = pneg %p237
        $region134: #{msssim_loss.1} parent=99 // pred_check_branch
          %848 = sbr.rel (%p846) target = $region136
        $region135: #{msssim_loss.1} parent=99 // pred_region
          %849 = dma.done [#allocation14], 640
        $region136: #{msssim_loss.1} parent=99 // pred_fallthru
          _
        // Predicated region
        $region137: #{msssim_loss.1} parent=99 // pred_check
          %p850 = pneg %p258
        $region138: #{msssim_loss.1} parent=99 // pred_check_branch
          %852 = sbr.rel (%p850) target = $region140
        $region139: #{msssim_loss.1} parent=99 // pred_region
          %853 = dma.done [#allocation17], 2048
        $region140: #{msssim_loss.1} parent=99 // pred_fallthru
          _
        // Predicated region
        $region141: #{msssim_loss.1} parent=99 // pred_check
          %p854 = pneg %p279
        $region142: #{msssim_loss.1} parent=99 // pred_check_branch
          %856 = sbr.rel (%p854) target = $region144
        $region143: #{msssim_loss.1} parent=99 // pred_region
          %857 = dma.done [#allocation17], 384
        $region144: #{msssim_loss.1} parent=99 // pred_fallthru
          _
        // Predicated region
        $region145: #{msssim_loss.1} parent=99 // pred_check
          %p858 = pneg %p300
        $region146: #{msssim_loss.1} parent=99 // pred_check_branch
          %860 = sbr.rel (%p858) target = $region148
        $region147: #{msssim_loss.1} parent=99 // pred_region
          %861 = dma.done [#allocation20], 2048
        $region148: #{msssim_loss.1} parent=99 // pred_fallthru
          _
        // Predicated region
        $region149: #{msssim_loss.1} parent=99 // pred_check
          %p862 = pneg %p321
        $region150: #{msssim_loss.1} parent=99 // pred_check_branch
          %864 = sbr.rel (%p862) target = $region152
        $region151: #{msssim_loss.1} parent=99 // pred_region
          %865 = dma.done [#allocation20], 256
        $region152: #{msssim_loss.1} parent=99 // pred_fallthru
          _
        // Predicated region
        $region153: #{msssim_loss.1} parent=99 // pred_check
          %p866 = pneg %p342
        $region154: #{msssim_loss.1} parent=99 // pred_check_branch
          %868 = sbr.rel (%p866) target = $region156
        $region155: #{msssim_loss.1} parent=99 // pred_region
          %869 = dma.done [#allocation23], 2048
        $region156: #{msssim_loss.1} parent=99 // pred_fallthru
          _
        // Predicated region
        $region157: #{msssim_loss.1} parent=99 // pred_check
          %p870 = pneg %p363
        $region158: #{msssim_loss.1} parent=99 // pred_check_branch
          %872 = sbr.rel (%p870) target = $region160
        $region159: #{msssim_loss.1} parent=99 // pred_region
          %873 = dma.done [#allocation23], 256
        $region160: #{msssim_loss.1} parent=99 // pred_fallthru
          _
        // Predicated region
        $region161: #{msssim_loss.1} parent=99 // pred_check
          %p874 = pneg %p384
        $region162: #{msssim_loss.1} parent=99 // pred_check_branch
          %876 = sbr.rel (%p874) target = $region164
        $region163: #{msssim_loss.1} parent=99 // pred_region
          %877 = dma.done [#allocation26], 2048
        $region164: #{msssim_loss.1} parent=99 // pred_fallthru
          _
        // Predicated region
        $region165: #{msssim_loss.1} parent=99 // pred_check
          %p878 = pneg %p405
        $region166: #{msssim_loss.1} parent=99 // pred_check_branch
          %880 = sbr.rel (%p878) target = $region168
        $region167: #{msssim_loss.1} parent=99 // pred_region
          %881 = dma.done [#allocation26], 16
        $region168: #{msssim_loss.1} parent=99 // pred_fallthru
          _
        // Predicated region
        $region169: #{msssim_loss.1} parent=99 // pred_check
          %p882 = pneg %p426
        $region170: #{msssim_loss.1} parent=99 // pred_check_branch
          %884 = sbr.rel (%p882) target = $region172
        $region171: #{msssim_loss.1} parent=99 // pred_region
          %885 = dma.done [#allocation29], 2048
        $region172: #{msssim_loss.1} parent=99 // pred_fallthru
          _
        %s886 = sand.u32 %s41, 1
        %s887 = scalar_lea.sflag [#allocation3], %s886
        %s888 = sand.u32 %s441, 1
        %s889 = smul.addr %s888, 352
        %s890 = scalar_lea.vmem [#allocation30], %s889
        // Predicated region
        $region173: #{msssim_loss.1} parent=99 // pred_check
          %p891 = pneg %p454
        $region174: #{msssim_loss.1} parent=99 // pred_check_branch
          %893 = sbr.rel (%p891) target = $region176
        $region175: #{msssim_loss.1} parent=99 // pred_region
          %894 = dma.done %s887, 5632
        $region176: #{msssim_loss.1} parent=99 // pred_fallthru
          _
        %s895 = sand.u32 %s41, 1
        %s896 = scalar_lea.sflag [#allocation3], %s895
        %s897 = sand.u32 %s469, 1
        %s898 = smul.addr %s897, 352
        %s899 = scalar_lea.vmem [#allocation31], %s898
        // Predicated region
        $region177: #{msssim_loss.1} parent=99 // pred_check
          %p900 = pneg %p482
        $region178: #{msssim_loss.1} parent=99 // pred_check_branch
          %902 = sbr.rel (%p900) target = $region180
        $region179: #{msssim_loss.1} parent=99 // pred_region
          %903 = dma.done %s896, 5632
        $region180: #{msssim_loss.1} parent=99 // pred_fallthru
          _
        %p904 = pneg %p69
        %p905 = pneg %p66
        %p906 = pneg %p90
        %p907 = pneg %p87
        %p908 = pneg %p111
        %p909 = pneg %p108
        %p910 = pneg %p132
        %p911 = pneg %p129
        %p912 = pneg %p153
        %p913 = pneg %p150
        %p914 = pneg %p174
        %p915 = pneg %p171
        %p916 = pneg %p195
        %p917 = pneg %p192
        %p918 = pneg %p216
        %p919 = pneg %p213
        %p920 = pneg %p237
        %p921 = pneg %p234
        %p922 = pneg %p258
        %p923 = pneg %p255
        %p924 = pneg %p279
        %p925 = pneg %p276
        %p926 = pneg %p300
        %p927 = pneg %p297
        %p928 = pneg %p321
        %p929 = pneg %p318
        %p930 = pneg %p342
        %p931 = pneg %p339
        %p932 = pneg %p363
        %p933 = pneg %p360
        %p934 = pneg %p384
        %p935 = pneg %p381
        %p936 = pneg %p405
        %p937 = pneg %p402
        %p938 = pneg %p426
        %p939 = pneg %p423
        %s940 = sand.u32 %s41, 1
        %s941 = scalar_lea.sflag [#allocation3], %s940
        %s942 = sand.u32 %s441, 1
        %s943 = smul.addr %s942, 352
        %s944 = scalar_lea.vmem [#allocation30], %s943
        %p945 = pneg %p454
        %p946 = pneg %p451
        %s947 = sand.u32 %s41, 1
        %s948 = scalar_lea.sflag [#allocation3], %s947
        %s949 = sand.u32 %s469, 1
        %s950 = smul.addr %s949, 352
        %s951 = scalar_lea.vmem [#allocation31], %s950
        %p952 = pneg %p482
        %p953 = pneg %p479
        %p954 = pneg %p510
        %p955 = pneg %p507
        %p956 = scmp.lt.s32.totalorder %s45, 1
        %s957 = scalar_select %p956, %s45, 1
        %p958 = scmp.lt.s32.totalorder %s46, 2
        %s959 = scalar_select %p958, %s46, 2
        %s960 = smul.addr %s957, 3
        %s961 = sadd.s32 %s959, %s960
        %s962 = scalar_lea.vmem %s20, %s961
        %p963 = scmp.lt.s32.totalorder %s45, 1
        %s964 = scalar_select %p963, %s45, 1
        %p965 = scmp.lt.s32.totalorder %s46, 2
        %s966 = scalar_select %p965, %s46, 2
        %s967 = smul.addr %s964, 3
        %s968 = sadd.s32 %s966, %s967
        %s969 = scalar_lea.vmem %s20, %s968
        %v970 = vld [vmem:[%s890] sm:$0xff]
        %v971 = vld [vmem:[%s890 + $0x8] sm:$0xff]
        %v972 = vld [vmem:[%s890 + $0x10] sm:$0xff]
        %v973 = vld [vmem:[%s890 + $0x18] sm:$0xff]
        %v974 = vld [vmem:[%s890 + $0x20] sm:$0xff]
        %v975 = vld [vmem:[%s890 + $0x28] sm:$0xff]
        %v976 = vld [vmem:[%s890 + $0x30] sm:$0xff]
        %v977 = vld [vmem:[%s890 + $0x38] sm:$0xff]
        %v978 = vld [vmem:[%s890 + $0x40] sm:$0xff]
        %v979 = vld [vmem:[%s890 + $0x48] sm:$0xff]
        %v980 = vld [vmem:[%s890 + $0x50] sm:$0xff]
        %v981 = vld [vmem:[%s890 + $0x58] sm:$0xff]
        %v982 = vld [vmem:[%s890 + $0x60] sm:$0xff]
        %v983 = vld [vmem:[%s890 + $0x68] sm:$0xff]
        %v984 = vld [vmem:[%s890 + $0x70] sm:$0xff]
        %v985 = vld [vmem:[%s890 + $0x78] sm:$0xff]
        %v986 = vld [vmem:[%s890 + $0x80] sm:$0xff]
        %v987 = vld [vmem:[%s890 + $0x88] sm:$0xff]
        %v988 = vld [vmem:[%s890 + $0x90] sm:$0xff]
        %v989 = vld [vmem:[%s890 + $0x98] sm:$0xff]
        %v990 = vld [vmem:[%s890 + $0xa0] sm:$0xff]
        %v991 = vld [vmem:[%s890 + $0xa8] sm:$0xff]
        %v992 = vld [vmem:[%s890 + $0xb0] sm:$0xff]
        %v993 = vld [vmem:[%s890 + $0xb8] sm:$0xff]
        %v994 = vld [vmem:[%s890 + $0xc0] sm:$0xff]
        %v995 = vld [vmem:[%s890 + $0xc8] sm:$0xff]
        %v996 = vld [vmem:[%s890 + $0xd0] sm:$0xff]
        %v997 = vld [vmem:[%s890 + $0xd8] sm:$0xff]
        %v998 = vld [vmem:[%s890 + $0xe0] sm:$0xff]
        %v999 = vld [vmem:[%s890 + $0xe8] sm:$0xff]
        %v1000 = vld [vmem:[%s890 + $0xf0] sm:$0xff]
        %v1001 = vld [vmem:[%s890 + $0xf8] sm:$0xff]
        %v1002 = vld [vmem:[%s890 + $0x100] sm:$0xff]
        %v1003 = vld [vmem:[%s890 + $0x108] sm:$0xff]
        %v1004 = vld [vmem:[%s890 + $0x110] sm:$0xff]
        %v1005 = vld [vmem:[%s890 + $0x118] sm:$0xff]
        %v1006 = vld [vmem:[%s890 + $0x120] sm:$0xff]
        %v1007 = vld [vmem:[%s890 + $0x128] sm:$0xff]
        %v1008 = vld [vmem:[%s890 + $0x130] sm:$0xff]
        %v1009 = vld [vmem:[%s890 + $0x138] sm:$0xff]
        %v1010 = vld [vmem:[%s890 + $0x140] sm:$0xff]
        %v1011 = vld [vmem:[%s890 + $0x148] sm:$0xff]
        %v1012 = vld [vmem:[%s890 + $0x150] sm:$0xff]
        %v1013 = vld [vmem:[%s890 + $0x158] sm:$0xff]
        %v1014 = vld [vmem:[%s899] sm:$0xff]
        %v1015 = vld [vmem:[%s899 + $0x8] sm:$0xff]
        %v1016 = vld [vmem:[%s899 + $0x10] sm:$0xff]
        %v1017 = vld [vmem:[%s899 + $0x18] sm:$0xff]
        %v1018 = vld [vmem:[%s899 + $0x20] sm:$0xff]
        %v1019 = vld [vmem:[%s899 + $0x28] sm:$0xff]
        %v1020 = vld [vmem:[%s899 + $0x30] sm:$0xff]
        %v1021 = vld [vmem:[%s899 + $0x38] sm:$0xff]
        %v1022 = vld [vmem:[%s899 + $0x40] sm:$0xff]
        %v1023 = vld [vmem:[%s899 + $0x48] sm:$0xff]
        %v1024 = vld [vmem:[%s899 + $0x50] sm:$0xff]
        %v1025 = vld [vmem:[%s899 + $0x58] sm:$0xff]
        %v1026 = vld [vmem:[%s899 + $0x60] sm:$0xff]
        %v1027 = vld [vmem:[%s899 + $0x68] sm:$0xff]
        %v1028 = vld [vmem:[%s899 + $0x70] sm:$0xff]
        %v1029 = vld [vmem:[%s899 + $0x78] sm:$0xff]
        %v1030 = vld [vmem:[%s899 + $0x80] sm:$0xff]
        %v1031 = vld [vmem:[%s899 + $0x88] sm:$0xff]
        %v1032 = vld [vmem:[%s899 + $0x90] sm:$0xff]
        %v1033 = vld [vmem:[%s899 + $0x98] sm:$0xff]
        %v1034 = vld [vmem:[%s899 + $0xa0] sm:$0xff]
        %v1035 = vld [vmem:[%s899 + $0xa8] sm:$0xff]
        %v1036 = vld [vmem:[%s899 + $0xb0] sm:$0xff]
        %v1037 = vld [vmem:[%s899 + $0xb8] sm:$0xff]
        %v1038 = vld [vmem:[%s899 + $0xc0] sm:$0xff]
        %v1039 = vld [vmem:[%s899 + $0xc8] sm:$0xff]
        %v1040 = vld [vmem:[%s899 + $0xd0] sm:$0xff]
        %v1041 = vld [vmem:[%s899 + $0xd8] sm:$0xff]
        %v1042 = vld [vmem:[%s899 + $0xe0] sm:$0xff]
        %v1043 = vld [vmem:[%s899 + $0xe8] sm:$0xff]
        %v1044 = vld [vmem:[%s899 + $0xf0] sm:$0xff]
        %v1045 = vld [vmem:[%s899 + $0xf8] sm:$0xff]
        %v1046 = vld [vmem:[%s899 + $0x100] sm:$0xff]
        %v1047 = vld [vmem:[%s899 + $0x108] sm:$0xff]
        %v1048 = vld [vmem:[%s899 + $0x110] sm:$0xff]
        %v1049 = vld [vmem:[%s899 + $0x118] sm:$0xff]
        %v1050 = vld [vmem:[%s899 + $0x120] sm:$0xff]
        %v1051 = vld [vmem:[%s899 + $0x128] sm:$0xff]
        %v1052 = vld [vmem:[%s899 + $0x130] sm:$0xff]
        %v1053 = vld [vmem:[%s899 + $0x138] sm:$0xff]
        %v1054 = vld [vmem:[%s899 + $0x140] sm:$0xff]
        %v1055 = vld [vmem:[%s899 + $0x148] sm:$0xff]
        %v1056 = vld [vmem:[%s899 + $0x150] sm:$0xff]
        %v1057 = vld [vmem:[%s899 + $0x158] sm:$0xff]
        %v1058 = vld [vmem:[#allocation2] sm:$0xff]
        %v1059 = vld [vmem:[#allocation2 + $0x8] sm:$0xff]
        %v1060 = vld [vmem:[#allocation2 + $0x10] sm:$0xff]
        %v1061 = vld [vmem:[#allocation2 + $0x18] sm:$0xff]
        %v1062 = vld [vmem:[#allocation2 + $0x20] sm:$0xff]
        %v1063 = vld [vmem:[#allocation2 + $0x28] sm:$0xff]
        %v1064 = vld [vmem:[#allocation2 + $0x30] sm:$0xff]
        %v1065 = vld [vmem:[#allocation2 + $0x38] sm:$0xff]
        %v1066 = vld [vmem:[#allocation2 + $0x40] sm:$0xff]
        %v1067 = vld [vmem:[#allocation2 + $0x48] sm:$0xff]
        %v1068 = vld [vmem:[#allocation2 + $0x50] sm:$0xff]
        %v1069 = vld [vmem:[#allocation2 + $0x58] sm:$0xff]
        %v1070 = vld [vmem:[#allocation2 + $0x60] sm:$0xff]
        %v1071 = vld [vmem:[#allocation2 + $0x68] sm:$0xff]
        %v1072 = vld [vmem:[#allocation2 + $0x70] sm:$0xff]
        %v1073 = vld [vmem:[#allocation2 + $0x78] sm:$0xff]
        %v1074 = vld [vmem:[#allocation2 + $0x80] sm:$0xff]
        %v1075 = vld [vmem:[#allocation2 + $0x88] sm:$0xff]
        %v1076 = vld [vmem:[#allocation2 + $0x90] sm:$0xff]
        %v1077 = vld [vmem:[#allocation2 + $0x98] sm:$0xff]
        %v1078 = vld [vmem:[#allocation2 + $0xa0] sm:$0xff]
        %v1079 = vld [vmem:[#allocation2 + $0xa8] sm:$0xff]
        %v1080 = vld [vmem:[#allocation2 + $0xb0] sm:$0xff]
        %v1081 = vld [vmem:[#allocation2 + $0xb8] sm:$0xff]
        %v1082 = vld [vmem:[#allocation2 + $0xc0] sm:$0xff]
        %v1083 = vld [vmem:[#allocation2 + $0xc8] sm:$0xff]
        %v1084 = vld [vmem:[#allocation2 + $0xd0] sm:$0xff]
        %v1085 = vld [vmem:[#allocation2 + $0xd8] sm:$0xff]
        %v1086 = vld [vmem:[#allocation2 + $0xe0] sm:$0xff]
        %v1087 = vld [vmem:[#allocation2 + $0xe8] sm:$0xff]
        %v1088 = vld [vmem:[#allocation2 + $0xf0] sm:$0xff]
        %v1089 = vld [vmem:[#allocation2 + $0xf8] sm:$0xff]
        %v1090 = vld [vmem:[#allocation2 + $0x100] sm:$0xff]
        %v1091 = vld [vmem:[#allocation2 + $0x108] sm:$0xff]
        %v1092 = vld [vmem:[#allocation2 + $0x110] sm:$0xff]
        %v1093 = vld [vmem:[#allocation2 + $0x118] sm:$0xff]
        %v1094 = vld [vmem:[#allocation2 + $0x120] sm:$0xff]
        %v1095 = vld [vmem:[#allocation2 + $0x128] sm:$0xff]
        %v1096 = vld [vmem:[#allocation2 + $0x130] sm:$0xff]
        %v1097 = vld [vmem:[#allocation2 + $0x138] sm:$0xff]
        %v1098 = vld [vmem:[#allocation2 + $0x140] sm:$0x3f]
        %v1099 = vld [vmem:[#allocation2 + $0x148] sm:$0x3f]
        %v1100 = vld [vmem:[#allocation4] sm:$0xff]
        %v1101 = vld [vmem:[#allocation4 + $0x8] sm:$0xff]
        %v1102 = vld [vmem:[#allocation4 + $0x10] sm:$0xff]
        %v1103 = vld [vmem:[#allocation4 + $0x18] sm:$0xff]
        %v1104 = vld [vmem:[#allocation4 + $0x20] sm:$0xff]
        %v1105 = vld [vmem:[#allocation4 + $0x28] sm:$0xff]
        %v1106 = vld [vmem:[#allocation4 + $0x30] sm:$0xff]
        %v1107 = vld [vmem:[#allocation4 + $0x38] sm:$0xff]
        %v1108 = vld [vmem:[#allocation4 + $0x40] sm:$0xff]
        %v1109 = vld [vmem:[#allocation4 + $0x48] sm:$0xff]
        %v1110 = vld [vmem:[#allocation4 + $0x50] sm:$0xff]
        %v1111 = vld [vmem:[#allocation4 + $0x58] sm:$0xff]
        %v1112 = vld [vmem:[#allocation4 + $0x60] sm:$0xff]
        %v1113 = vld [vmem:[#allocation4 + $0x68] sm:$0xff]
        %v1114 = vld [vmem:[#allocation4 + $0x70] sm:$0xff]
        %v1115 = vld [vmem:[#allocation4 + $0x78] sm:$0xff]
        %v1116 = vld [vmem:[#allocation4 + $0x80] sm:$0xff]
        %v1117 = vld [vmem:[#allocation4 + $0x88] sm:$0xff]
        %v1118 = vld [vmem:[#allocation4 + $0x90] sm:$0xff]
        %v1119 = vld [vmem:[#allocation4 + $0x98] sm:$0xff]
        %v1120 = vld [vmem:[#allocation4 + $0xa0] sm:$0xff]
        %v1121 = vld [vmem:[#allocation4 + $0xa8] sm:$0xff]
        %v1122 = vld [vmem:[#allocation4 + $0xb0] sm:$0xff]
        %v1123 = vld [vmem:[#allocation4 + $0xb8] sm:$0xff]
        %v1124 = vld [vmem:[#allocation4 + $0xc0] sm:$0xff]
        %v1125 = vld [vmem:[#allocation4 + $0xc8] sm:$0xff]
        %v1126 = vld [vmem:[#allocation4 + $0xd0] sm:$0xff]
        %v1127 = vld [vmem:[#allocation4 + $0xd8] sm:$0xff]
        %v1128 = vld [vmem:[#allocation4 + $0xe0] sm:$0xff]
        %v1129 = vld [vmem:[#allocation4 + $0xe8] sm:$0xff]
        %v1130 = vld [vmem:[#allocation4 + $0xf0] sm:$0xff]
        %v1131 = vld [vmem:[#allocation4 + $0xf8] sm:$0xff]
        %v1132 = vld [vmem:[#allocation4 + $0x100] sm:$0xff]
        %v1133 = vld [vmem:[#allocation4 + $0x108] sm:$0xff]
        %v1134 = vld [vmem:[#allocation4 + $0x110] sm:$0xff]
        %v1135 = vld [vmem:[#allocation4 + $0x118] sm:$0xff]
        %v1136 = vld [vmem:[#allocation4 + $0x120] sm:$0xff]
        %v1137 = vld [vmem:[#allocation4 + $0x128] sm:$0xff]
        %v1138 = vld [vmem:[#allocation4 + $0x130] sm:$0xff]
        %v1139 = vld [vmem:[#allocation4 + $0x138] sm:$0xff]
        %v1140 = vld [vmem:[#allocation4 + $0x140] sm:$0xff]
        %v1141 = vld [vmem:[#allocation4 + $0x148] sm:$0xff]
        %v1142 = vld [vmem:[#allocation4 + $0x150] sm:$0xff]
        %v1143 = vld [vmem:[#allocation4 + $0x158] sm:$0xff]
        %v1144 = vld [vmem:[#allocation4 + $0x160] sm:$0xff]
        %v1145 = vld [vmem:[#allocation4 + $0x168] sm:$0xff]
        %v1146 = vld [vmem:[#allocation4 + $0x170] sm:$0xff]
        %v1147 = vld [vmem:[#allocation4 + $0x178] sm:$0xff]
        %v1148 = vld [vmem:[#allocation4 + $0x180] sm:$0xff]
        %v1149 = vld [vmem:[#allocation4 + $0x188] sm:$0xff]
        %v1150 = vld [vmem:[#allocation4 + $0x190] sm:$0xff]
        %v1151 = vld [vmem:[#allocation4 + $0x198] sm:$0xff]
        %v1152 = vld [vmem:[#allocation4 + $0x1a0] sm:$0xff]
        %v1153 = vld [vmem:[#allocation4 + $0x1a8] sm:$0xff]
        %v1154 = vld [vmem:[#allocation4 + $0x1b0] sm:$0xff]
        %v1155 = vld [vmem:[#allocation4 + $0x1b8] sm:$0xff]
        %v1156 = vld [vmem:[#allocation4 + $0x1c0] sm:$0xff]
        %v1157 = vld [vmem:[#allocation4 + $0x1c8] sm:$0xff]
        %v1158 = vld [vmem:[#allocation4 + $0x1d0] sm:$0xff]
        %v1159 = vld [vmem:[#allocation4 + $0x1d8] sm:$0xff]
        %v1160 = vld [vmem:[#allocation4 + $0x1e0] sm:$0xff]
        %v1161 = vld [vmem:[#allocation4 + $0x1e8] sm:$0xff]
        %v1162 = vld [vmem:[#allocation4 + $0x1f0] sm:$0xff]
        %v1163 = vld [vmem:[#allocation4 + $0x1f8] sm:$0xff]
        %v1164 = vmul.f32 %v970, %v970
        %v1165 = vmul.f32 %v971, %v971
        %v1166 = vmul.f32 %v972, %v972
        %v1167 = vmul.f32 %v973, %v973
        %v1168 = vmul.f32 %v974, %v974
        %v1169 = vmul.f32 %v975, %v975
        %v1170 = vmul.f32 %v976, %v976
        %v1171 = vmul.f32 %v977, %v977
        %v1172 = vmul.f32 %v978, %v978
        %v1173 = vmul.f32 %v979, %v979
        %v1174 = vmul.f32 %v980, %v980
        %v1175 = vmul.f32 %v981, %v981
        %v1176 = vmul.f32 %v982, %v982
        %v1177 = vmul.f32 %v983, %v983
        %v1178 = vmul.f32 %v984, %v984
        %v1179 = vmul.f32 %v985, %v985
        %v1180 = vmul.f32 %v986, %v986
        %v1181 = vmul.f32 %v987, %v987
        %v1182 = vmul.f32 %v988, %v988
        %v1183 = vmul.f32 %v989, %v989
        %v1184 = vmul.f32 %v990, %v990
        %v1185 = vmul.f32 %v991, %v991
        %v1186 = vmul.f32 %v992, %v992
        %v1187 = vmul.f32 %v993, %v993
        %v1188 = vmul.f32 %v994, %v994
        %v1189 = vmul.f32 %v995, %v995
        %v1190 = vmul.f32 %v996, %v996
        %v1191 = vmul.f32 %v997, %v997
        %v1192 = vmul.f32 %v998, %v998
        %v1193 = vmul.f32 %v999, %v999
        %v1194 = vmul.f32 %v1000, %v1000
        %v1195 = vmul.f32 %v1001, %v1001
        %v1196 = vmul.f32 %v1002, %v1002
        %v1197 = vmul.f32 %v1003, %v1003
        %v1198 = vmul.f32 %v1004, %v1004
        %v1199 = vmul.f32 %v1005, %v1005
        %v1200 = vmul.f32 %v1006, %v1006
        %v1201 = vmul.f32 %v1007, %v1007
        %v1202 = vmul.f32 %v1008, %v1008
        %v1203 = vmul.f32 %v1009, %v1009
        %v1204 = vmul.f32 %v1010, %v1010
        %v1205 = vmul.f32 %v1011, %v1011
        %v1206 = vmul.f32 %v1012, %v1012
        %v1207 = vmul.f32 %v1013, %v1013
        %v1208 = vmul.f32 %v1014, %v1014
        %v1209 = vmul.f32 %v1015, %v1015
        %v1210 = vmul.f32 %v1016, %v1016
        %v1211 = vmul.f32 %v1017, %v1017
        %v1212 = vmul.f32 %v1018, %v1018
        %v1213 = vmul.f32 %v1019, %v1019
        %v1214 = vmul.f32 %v1020, %v1020
        %v1215 = vmul.f32 %v1021, %v1021
        %v1216 = vmul.f32 %v1022, %v1022
        %v1217 = vmul.f32 %v1023, %v1023
        %v1218 = vmul.f32 %v1024, %v1024
        %v1219 = vmul.f32 %v1025, %v1025
        %v1220 = vmul.f32 %v1026, %v1026
        %v1221 = vmul.f32 %v1027, %v1027
        %v1222 = vmul.f32 %v1028, %v1028
        %v1223 = vmul.f32 %v1029, %v1029
        %v1224 = vmul.f32 %v1030, %v1030
        %v1225 = vmul.f32 %v1031, %v1031
        %v1226 = vmul.f32 %v1032, %v1032
        %v1227 = vmul.f32 %v1033, %v1033
        %v1228 = vmul.f32 %v1034, %v1034
        %v1229 = vmul.f32 %v1035, %v1035
        %v1230 = vmul.f32 %v1036, %v1036
        %v1231 = vmul.f32 %v1037, %v1037
        %v1232 = vmul.f32 %v1038, %v1038
        %v1233 = vmul.f32 %v1039, %v1039
        %v1234 = vmul.f32 %v1040, %v1040
        %v1235 = vmul.f32 %v1041, %v1041
        %v1236 = vmul.f32 %v1042, %v1042
        %v1237 = vmul.f32 %v1043, %v1043
        %v1238 = vmul.f32 %v1044, %v1044
        %v1239 = vmul.f32 %v1045, %v1045
        %v1240 = vmul.f32 %v1046, %v1046
        %v1241 = vmul.f32 %v1047, %v1047
        %v1242 = vmul.f32 %v1048, %v1048
        %v1243 = vmul.f32 %v1049, %v1049
        %v1244 = vmul.f32 %v1050, %v1050
        %v1245 = vmul.f32 %v1051, %v1051
        %v1246 = vmul.f32 %v1052, %v1052
        %v1247 = vmul.f32 %v1053, %v1053
        %v1248 = vmul.f32 %v1054, %v1054
        %v1249 = vmul.f32 %v1055, %v1055
        %v1250 = vmul.f32 %v1056, %v1056
        %v1251 = vmul.f32 %v1057, %v1057
        %v1252 = vmul.f32 %v970, %v1014
        %v1253 = vmul.f32 %v971, %v1015
        %v1254 = vmul.f32 %v972, %v1016
        %v1255 = vmul.f32 %v973, %v1017
        %v1256 = vmul.f32 %v974, %v1018
        %v1257 = vmul.f32 %v975, %v1019
        %v1258 = vmul.f32 %v976, %v1020
        %v1259 = vmul.f32 %v977, %v1021
        %v1260 = vmul.f32 %v978, %v1022
        %v1261 = vmul.f32 %v979, %v1023
        %v1262 = vmul.f32 %v980, %v1024
        %v1263 = vmul.f32 %v981, %v1025
        %v1264 = vmul.f32 %v982, %v1026
        %v1265 = vmul.f32 %v983, %v1027
        %v1266 = vmul.f32 %v984, %v1028
        %v1267 = vmul.f32 %v985, %v1029
        %v1268 = vmul.f32 %v986, %v1030
        %v1269 = vmul.f32 %v987, %v1031
        %v1270 = vmul.f32 %v988, %v1032
        %v1271 = vmul.f32 %v989, %v1033
        %v1272 = vmul.f32 %v990, %v1034
        %v1273 = vmul.f32 %v991, %v1035
        %v1274 = vmul.f32 %v992, %v1036
        %v1275 = vmul.f32 %v993, %v1037
        %v1276 = vmul.f32 %v994, %v1038
        %v1277 = vmul.f32 %v995, %v1039
        %v1278 = vmul.f32 %v996, %v1040
        %v1279 = vmul.f32 %v997, %v1041
        %v1280 = vmul.f32 %v998, %v1042
        %v1281 = vmul.f32 %v999, %v1043
        %v1282 = vmul.f32 %v1000, %v1044
        %v1283 = vmul.f32 %v1001, %v1045
        %v1284 = vmul.f32 %v1002, %v1046
        %v1285 = vmul.f32 %v1003, %v1047
        %v1286 = vmul.f32 %v1004, %v1048
        %v1287 = vmul.f32 %v1005, %v1049
        %v1288 = vmul.f32 %v1006, %v1050
        %v1289 = vmul.f32 %v1007, %v1051
        %v1290 = vmul.f32 %v1008, %v1052
        %v1291 = vmul.f32 %v1009, %v1053
        %v1292 = vmul.f32 %v1010, %v1054
        %v1293 = vmul.f32 %v1011, %v1055
        %v1294 = vmul.f32 %v1012, %v1056
        %v1295 = vmul.f32 %v1013, %v1057
        %vm1296 = vcmask 392192
        %v1297 = vsel %vm1296, %v971, 0.0
        %v1298 = vsel %vm1296, %v973, 0.0
        %v1299 = vsel %vm1296, %v975, 0.0
        %v1300 = vsel %vm1296, %v977, 0.0
        %v1301 = vsel %vm1296, %v979, 0.0
        %v1302 = vsel %vm1296, %v981, 0.0
        %v1303 = vsel %vm1296, %v983, 0.0
        %v1304 = vsel %vm1296, %v985, 0.0
        %v1305 = vsel %vm1296, %v987, 0.0
        %v1306 = vsel %vm1296, %v989, 0.0
        %v1307 = vsel %vm1296, %v991, 0.0
        %v1308 = vsel %vm1296, %v993, 0.0
        %v1309 = vsel %vm1296, %v995, 0.0
        %v1310 = vsel %vm1296, %v997, 0.0
        %v1311 = vsel %vm1296, %v999, 0.0
        %v1312 = vsel %vm1296, %v1001, 0.0
        %v1313 = vsel %vm1296, %v1003, 0.0
        %v1314 = vsel %vm1296, %v1005, 0.0
        %v1315 = vsel %vm1296, %v1007, 0.0
        %v1316 = vsel %vm1296, %v1009, 0.0
        %v1317 = vsel %vm1296, %v1011, 0.0
        %v1318 = vsel %vm1296, %v1013, 0.0
        %v1319 = vsel %vm1296, %v1015, 0.0
        %v1320 = vsel %vm1296, %v1017, 0.0
        %v1321 = vsel %vm1296, %v1019, 0.0
        %v1322 = vsel %vm1296, %v1021, 0.0
        %v1323 = vsel %vm1296, %v1023, 0.0
        %v1324 = vsel %vm1296, %v1025, 0.0
        %v1325 = vsel %vm1296, %v1027, 0.0
        %v1326 = vsel %vm1296, %v1029, 0.0
        %v1327 = vsel %vm1296, %v1031, 0.0
        %v1328 = vsel %vm1296, %v1033, 0.0
        %v1329 = vsel %vm1296, %v1035, 0.0
        %v1330 = vsel %vm1296, %v1037, 0.0
        %v1331 = vsel %vm1296, %v1039, 0.0
        %v1332 = vsel %vm1296, %v1041, 0.0
        %v1333 = vsel %vm1296, %v1043, 0.0
        %v1334 = vsel %vm1296, %v1045, 0.0
        %v1335 = vsel %vm1296, %v1047, 0.0
        %v1336 = vsel %vm1296, %v1049, 0.0
        %v1337 = vsel %vm1296, %v1051, 0.0
        %v1338 = vsel %vm1296, %v1053, 0.0
        %v1339 = vsel %vm1296, %v1055, 0.0
        %v1340 = vsel %vm1296, %v1057, 0.0
        %v1341 = vsel %vm1296, %v1165, 0.0
        %v1342 = vsel %vm1296, %v1167, 0.0
        %v1343 = vsel %vm1296, %v1169, 0.0
        %v1344 = vsel %vm1296, %v1171, 0.0
        %v1345 = vsel %vm1296, %v1173, 0.0
        %v1346 = vsel %vm1296, %v1175, 0.0
        %v1347 = vsel %vm1296, %v1177, 0.0
        %v1348 = vsel %vm1296, %v1179, 0.0
        %v1349 = vsel %vm1296, %v1181, 0.0
        %v1350 = vsel %vm1296, %v1183, 0.0
        %v1351 = vsel %vm1296, %v1185, 0.0
        %v1352 = vsel %vm1296, %v1187, 0.0
        %v1353 = vsel %vm1296, %v1189, 0.0
        %v1354 = vsel %vm1296, %v1191, 0.0
        %v1355 = vsel %vm1296, %v1193, 0.0
        %v1356 = vsel %vm1296, %v1195, 0.0
        %v1357 = vsel %vm1296, %v1197, 0.0
        %v1358 = vsel %vm1296, %v1199, 0.0
        %v1359 = vsel %vm1296, %v1201, 0.0
        %v1360 = vsel %vm1296, %v1203, 0.0
        %v1361 = vsel %vm1296, %v1205, 0.0
        %v1362 = vsel %vm1296, %v1207, 0.0
        %v1363 = vsel %vm1296, %v1209, 0.0
        %v1364 = vsel %vm1296, %v1211, 0.0
        %v1365 = vsel %vm1296, %v1213, 0.0
        %v1366 = vsel %vm1296, %v1215, 0.0
        %v1367 = vsel %vm1296, %v1217, 0.0
        %v1368 = vsel %vm1296, %v1219, 0.0
        %v1369 = vsel %vm1296, %v1221, 0.0
        %v1370 = vsel %vm1296, %v1223, 0.0
        %v1371 = vsel %vm1296, %v1225, 0.0
        %v1372 = vsel %vm1296, %v1227, 0.0
        %v1373 = vsel %vm1296, %v1229, 0.0
        %v1374 = vsel %vm1296, %v1231, 0.0
        %v1375 = vsel %vm1296, %v1233, 0.0
        %v1376 = vsel %vm1296, %v1235, 0.0
        %v1377 = vsel %vm1296, %v1237, 0.0
        %v1378 = vsel %vm1296, %v1239, 0.0
        %v1379 = vsel %vm1296, %v1241, 0.0
        %v1380 = vsel %vm1296, %v1243, 0.0
        %v1381 = vsel %vm1296, %v1245, 0.0
        %v1382 = vsel %vm1296, %v1247, 0.0
        %v1383 = vsel %vm1296, %v1249, 0.0
        %v1384 = vsel %vm1296, %v1251, 0.0
        %v1385 = vsel %vm1296, %v1253, 0.0
        %v1386 = vsel %vm1296, %v1255, 0.0
        %v1387 = vsel %vm1296, %v1257, 0.0
        %v1388 = vsel %vm1296, %v1259, 0.0
        %v1389 = vsel %vm1296, %v1261, 0.0
        %v1390 = vsel %vm1296, %v1263, 0.0
        %v1391 = vsel %vm1296, %v1265, 0.0
        %v1392 = vsel %vm1296, %v1267, 0.0
        %v1393 = vsel %vm1296, %v1269, 0.0
        %v1394 = vsel %vm1296, %v1271, 0.0
        %v1395 = vsel %vm1296, %v1273, 0.0
        %v1396 = vsel %vm1296, %v1275, 0.0
        %v1397 = vsel %vm1296, %v1277, 0.0
        %v1398 = vsel %vm1296, %v1279, 0.0
        %v1399 = vsel %vm1296, %v1281, 0.0
        %v1400 = vsel %vm1296, %v1283, 0.0
        %v1401 = vsel %vm1296, %v1285, 0.0
        %v1402 = vsel %vm1296, %v1287, 0.0
        %v1403 = vsel %vm1296, %v1289, 0.0
        %v1404 = vsel %vm1296, %v1291, 0.0
        %v1405 = vsel %vm1296, %v1293, 0.0
        %v1406 = vsel %vm1296, %v1295, 0.0
        %v1408 = vsel %vm1296, %v1059, 0
        %v1411 = vsel %vm1296, %v1061, 0
        %v1414 = vsel %vm1296, %v1063, 0
        %v1417 = vsel %vm1296, %v1065, 0
        %v1420 = vsel %vm1296, %v1067, 0
        %v1423 = vsel %vm1296, %v1069, 0
        %v1426 = vsel %vm1296, %v1071, 0
        %v1429 = vsel %vm1296, %v1073, 0
        %v1432 = vsel %vm1296, %v1075, 0
        %v1435 = vsel %vm1296, %v1077, 0
        %v1438 = vsel %vm1296, %v1079, 0
        %v1441 = vsel %vm1296, %v1081, 0
        %v1444 = vsel %vm1296, %v1083, 0
        %v1447 = vsel %vm1296, %v1085, 0
        %v1450 = vsel %vm1296, %v1087, 0
        %v1453 = vsel %vm1296, %v1089, 0
        %v1456 = vsel %vm1296, %v1091, 0
        %v1459 = vsel %vm1296, %v1093, 0
        %v1462 = vsel %vm1296, %v1095, 0
        %v1465 = vsel %vm1296, %v1097, 0
        %v1468 = vsel %vm1296, %v1099, 0
        %1470 = vmatprep.subr.mxu0 %v1297
        %1471 = vmatpush1.msra.mxu0 %v970
        %1472 = vmatprep.subr.mxu0 %v1298
        %1473 = vmatpush1.msra.mxu0 %v972
        %1474 = vmatprep.subr.mxu0 %v1299
        %1475 = vmatpush1.msra.mxu0 %v974
        %1476 = vmatprep.subr.mxu0 %v1300
        %1477 = vmatpush1.msra.mxu0 %v976
        %1478 = vmatprep.subr.mxu0 %v1301
        %1479 = vmatpush1.msra.mxu0 %v978
        %1480 = vmatprep.subr.mxu0 %v1302
        %1481 = vmatpush1.msra.mxu0 %v980
        %1482 = vmatprep.subr.mxu0 %v1303
        %1483 = vmatpush1.msra.mxu0 %v982
        %1484 = vmatprep.subr.mxu0 %v1304
        %1485 = vmatpush1.msra.mxu0 %v984
        %1486 = vmatprep.subr.mxu0 %v1305
        %1487 = vmatpush1.msra.mxu0 %v986
        %1488 = vmatprep.subr.mxu0 %v1306
        %1489 = vmatpush1.msra.mxu0 %v988
        %1490 = vmatprep.subr.mxu0 %v1307
        %1491 = vmatpush1.msra.mxu0 %v990
        %1492 = vmatprep.subr.mxu0 %v1308
        %1493 = vmatpush1.msra.mxu0 %v992
        %1494 = vmatprep.subr.mxu0 %v1309
        %1495 = vmatpush1.msra.mxu0 %v994
        %1496 = vmatprep.subr.mxu0 %v1310
        %1497 = vmatpush1.msra.mxu0 %v996
        %1498 = vmatprep.subr.mxu0 %v1311
        %1499 = vmatpush1.msra.mxu0 %v998
        %1500 = vmatprep.subr.mxu0 %v1312
        %1501 = vmatpush1.msra.mxu0 %v1000
        %1502 = vmatprep.subr.mxu0 %v1313
        %1503 = vmatpush1.msra.mxu0 %v1002
        %1504 = vmatprep.subr.mxu0 %v1314
        %1505 = vmatpush1.msra.mxu0 %v1004
        %1506 = vmatprep.subr.mxu0 %v1315
        %1507 = vmatpush1.msra.mxu0 %v1006
        %1508 = vmatprep.subr.mxu0 %v1316
        %1509 = vmatpush1.msra.mxu0 %v1008
        %1510 = vmatprep.subr.mxu0 %v1317
        %1511 = vmatpush1.msra.mxu0 %v1010
        %1512 = vmatprep.subr.mxu0 %v1318
        %1513 = vmatpush1.msra.mxu0 %v1012
        %1514 = vmatprep.subr.mxu0 0.0
        %1515 = vmatpush1.msra.mxu0 0.0
        %1516 = vmatprep.subr.mxu0 0.0
        %1517 = vmatpush1.msra.mxu0 0.0
        %1518 = vmatprep.subr.mxu0 0.0
        %1519 = vmatpush1.msra.mxu0 0.0
        %1520 = vmatprep.subr.mxu0 0.0
        %1521 = vmatpush1.msra.mxu0 0.0
        %1522 = vmatprep.subr.mxu0 0.0
        %1523 = vmatpush1.msra.mxu0 0.0
        %1524 = vmatprep.subr.mxu0 0.0
        %1525 = vmatpush1.msra.mxu0 0.0
        %1526 = vmatprep.subr.mxu0 0.0
        %1527 = vmatpush1.msra.mxu0 0.0
        %1528 = vmatprep.subr.mxu0 0.0
        %1529 = vmatpush1.msra.mxu0 0.0
        %1530 = vmatprep.subr.mxu0 0.0
        %1531 = vmatpush1.msra.mxu0 0.0
        %1532 = vmatprep.subr.mxu0 0.0
        %1533 = vmatpush1.msra.mxu0 0.0
        %1534 = vmatprep.mubr.f32.mxu0 %v1408
        %1535 = vmatmul.mubr.f32.gmra.mrb[0].mxu0 %v1058
        %v1536 = vpop.f32.mrb[0].mxu0
        %v1537 = vadd.f32 0.0, %v1536
        %v1538 = vpop.f32.mrb[0].mxu0
        %v1539 = vadd.f32 0.0, %v1538
        %1540 = vmatprep.mubr.f32.mxu0 %v1411
        %1541 = vmatmul.mubr.f32.gmra.mrb[0].mxu0 %v1060
        %v1542 = vpop.f32.mrb[0].mxu0
        %v1543 = vadd.f32 0.0, %v1542
        %v1544 = vpop.f32.mrb[0].mxu0
        %v1545 = vadd.f32 0.0, %v1544
        %1546 = vmatprep.mubr.f32.mxu0 %v1414
        %1547 = vmatmul.mubr.f32.gmra.mrb[0].mxu0 %v1062
        %v1548 = vpop.f32.mrb[0].mxu0
        %v1549 = vadd.f32 0.0, %v1548
        %v1550 = vpop.f32.mrb[0].mxu0
        %v1551 = vadd.f32 0.0, %v1550
        %1552 = vmatprep.mubr.f32.mxu0 %v1417
        %1553 = vmatmul.mubr.f32.gmra.mrb[0].mxu0 %v1064
        %v1554 = vpop.f32.mrb[0].mxu0
        %v1555 = vadd.f32 0.0, %v1554
        %v1556 = vpop.f32.mrb[0].mxu0
        %v1557 = vadd.f32 0.0, %v1556
        %1558 = vmatprep.mubr.f32.mxu0 %v1420
        %1559 = vmatmul.mubr.f32.gmra.mrb[0].mxu0 %v1066
        %v1560 = vpop.f32.mrb[0].mxu0
        %v1561 = vadd.f32 0.0, %v1560
        %v1562 = vpop.f32.mrb[0].mxu0
        %v1563 = vadd.f32 0.0, %v1562
        %1564 = vmatprep.mubr.f32.mxu0 %v1423
        %1565 = vmatmul.mubr.f32.gmra.mrb[0].mxu0 %v1068
        %v1566 = vpop.f32.mrb[0].mxu0
        %v1567 = vadd.f32 0.0, %v1566
        %v1568 = vpop.f32.mrb[0].mxu0
        %v1569 = vadd.f32 0.0, %v1568
        %1570 = vmatprep.mubr.f32.mxu0 %v1426
        %1571 = vmatmul.mubr.f32.gmra.mrb[0].mxu0 %v1070
        %v1572 = vpop.f32.mrb[0].mxu0
        %v1573 = vadd.f32 0.0, %v1572
        %v1574 = vpop.f32.mrb[0].mxu0
        %v1575 = vadd.f32 0.0, %v1574
        %1576 = vmatprep.mubr.f32.mxu0 %v1429
        %1577 = vmatmul.mubr.f32.gmra.mrb[0].mxu0 %v1072
        %v1578 = vpop.f32.mrb[0].mxu0
        %v1579 = vadd.f32 0.0, %v1578
        %v1580 = vpop.f32.mrb[0].mxu0
        %v1581 = vadd.f32 0.0, %v1580
        %1582 = vmatprep.mubr.f32.mxu0 %v1432
        %1583 = vmatmul.mubr.f32.gmra.mrb[0].mxu0 %v1074
        %v1584 = vpop.f32.mrb[0].mxu0
        %v1585 = vadd.f32 0.0, %v1584
        %v1586 = vpop.f32.mrb[0].mxu0
        %v1587 = vadd.f32 0.0, %v1586
        %1588 = vmatprep.mubr.f32.mxu0 %v1435
        %1589 = vmatmul.mubr.f32.gmra.mrb[0].mxu0 %v1076
        %v1590 = vpop.f32.mrb[0].mxu0
        %v1591 = vadd.f32 0.0, %v1590
        %v1592 = vpop.f32.mrb[0].mxu0
        %v1593 = vadd.f32 0.0, %v1592
        %1594 = vmatprep.mubr.f32.mxu0 %v1438
        %1595 = vmatmul.mubr.f32.gmra.mrb[0].mxu0 %v1078
        %v1596 = vpop.f32.mrb[0].mxu0
        %v1597 = vadd.f32 0.0, %v1596
        %v1598 = vpop.f32.mrb[0].mxu0
        %v1599 = vadd.f32 0.0, %v1598
        %1600 = vmatprep.mubr.f32.mxu0 %v1441
        %1601 = vmatmul.mubr.f32.gmra.mrb[0].mxu0 %v1080
        %v1602 = vpop.f32.mrb[0].mxu0
        %v1603 = vadd.f32 0.0, %v1602
        %v1604 = vpop.f32.mrb[0].mxu0
        %v1605 = vadd.f32 0.0, %v1604
        %1606 = vmatprep.mubr.f32.mxu0 %v1444
        %1607 = vmatmul.mubr.f32.gmra.mrb[0].mxu0 %v1082
        %v1608 = vpop.f32.mrb[0].mxu0
        %v1609 = vadd.f32 0.0, %v1608
        %v1610 = vpop.f32.mrb[0].mxu0
        %v1611 = vadd.f32 0.0, %v1610
        %1612 = vmatprep.mubr.f32.mxu0 %v1447
        %1613 = vmatmul.mubr.f32.gmra.mrb[0].mxu0 %v1084
        %v1614 = vpop.f32.mrb[0].mxu0
        %v1615 = vadd.f32 0.0, %v1614
        %v1616 = vpop.f32.mrb[0].mxu0
        %v1617 = vadd.f32 0.0, %v1616
        %1618 = vmatprep.mubr.f32.mxu0 %v1450
        %1619 = vmatmul.mubr.f32.gmra.mrb[0].mxu0 %v1086
        %v1620 = vpop.f32.mrb[0].mxu0
        %v1621 = vadd.f32 0.0, %v1620
        %v1622 = vpop.f32.mrb[0].mxu0
        %v1623 = vadd.f32 0.0, %v1622
        %1624 = vmatprep.mubr.f32.mxu0 %v1453
        %1625 = vmatmul.mubr.f32.gmra.mrb[0].mxu0 %v1088
        %v1626 = vpop.f32.mrb[0].mxu0
        %v1627 = vadd.f32 0.0, %v1626
        %v1628 = vpop.f32.mrb[0].mxu0
        %v1629 = vadd.f32 0.0, %v1628
        %1630 = vmatprep.mubr.f32.mxu0 %v1456
        %1631 = vmatmul.mubr.f32.gmra.mrb[0].mxu0 %v1090
        %v1632 = vpop.f32.mrb[0].mxu0
        %v1633 = vadd.f32 0.0, %v1632
        %v1634 = vpop.f32.mrb[0].mxu0
        %v1635 = vadd.f32 0.0, %v1634
        %1636 = vmatprep.mubr.f32.mxu0 %v1459
        %1637 = vmatmul.mubr.f32.gmra.mrb[0].mxu0 %v1092
        %v1638 = vpop.f32.mrb[0].mxu0
        %v1639 = vadd.f32 0.0, %v1638
        %v1640 = vpop.f32.mrb[0].mxu0
        %v1641 = vadd.f32 0.0, %v1640
        %1642 = vmatprep.mubr.f32.mxu0 %v1462
        %1643 = vmatmul.mubr.f32.gmra.mrb[0].mxu0 %v1094
        %v1644 = vpop.f32.mrb[0].mxu0
        %v1645 = vadd.f32 0.0, %v1644
        %v1646 = vpop.f32.mrb[0].mxu0
        %v1647 = vadd.f32 0.0, %v1646
        %1648 = vmatprep.mubr.f32.mxu0 %v1465
        %1649 = vmatmul.mubr.f32.gmra.mrb[0].mxu0 %v1096
        %v1650 = vpop.f32.mrb[0].mxu0
        %v1651 = vadd.f32 0.0, %v1650
        %v1652 = vpop.f32.mrb[0].mxu0
        %v1653 = vadd.f32 0.0, %v1652
        %1654 = vmatprep.mubr.f32.mxu0 %v1468
        %1655 = vmatmul.mubr.f32.gmra.mrb[0].mxu0 %v1098
        %v1656 = vpop.f32.mrb[0].mxu0
        %v1657 = vadd.f32 0.0, %v1656
        %v1658 = vpop.f32.mrb[0].mxu0
        %v1659 = vadd.f32 0.0, %v1658
        %1660 = vdwg.mxu0
        %1661 = vmatprep.subr.mxu0 %v1319
        %1662 = vmatpush1.msra.mxu0 %v1014
        %1663 = vmatprep.subr.mxu0 %v1320
        %1664 = vmatpush1.msra.mxu0 %v1016
        %1665 = vmatprep.subr.mxu0 %v1321
        %1666 = vmatpush1.msra.mxu0 %v1018
        %1667 = vmatprep.subr.mxu0 %v1322
        %1668 = vmatpush1.msra.mxu0 %v1020
        %1669 = vmatprep.subr.mxu0 %v1323
        %1670 = vmatpush1.msra.mxu0 %v1022
        %1671 = vmatprep.subr.mxu0 %v1324
        %1672 = vmatpush1.msra.mxu0 %v1024
        %1673 = vmatprep.subr.mxu0 %v1325
        %1674 = vmatpush1.msra.mxu0 %v1026
        %1675 = vmatprep.subr.mxu0 %v1326
        %1676 = vmatpush1.msra.mxu0 %v1028
        %1677 = vmatprep.subr.mxu0 %v1327
        %1678 = vmatpush1.msra.mxu0 %v1030
        %1679 = vmatprep.subr.mxu0 %v1328
        %1680 = vmatpush1.msra.mxu0 %v1032
        %1681 = vmatprep.subr.mxu0 %v1329
        %1682 = vmatpush1.msra.mxu0 %v1034
        %1683 = vmatprep.subr.mxu0 %v1330
        %1684 = vmatpush1.msra.mxu0 %v1036
        %1685 = vmatprep.subr.mxu0 %v1331
        %1686 = vmatpush1.msra.mxu0 %v1038
        %1687 = vmatprep.subr.mxu0 %v1332
        %1688 = vmatpush1.msra.mxu0 %v1040
        %1689 = vmatprep.subr.mxu0 %v1333
        %1690 = vmatpush1.msra.mxu0 %v1042
        %1691 = vmatprep.subr.mxu0 %v1334
        %1692 = vmatpush1.msra.mxu0 %v1044
        %1693 = vmatprep.subr.mxu0 %v1335
        %1694 = vmatpush1.msra.mxu0 %v1046
        %1695 = vmatprep.subr.mxu0 %v1336
        %1696 = vmatpush1.msra.mxu0 %v1048
        %1697 = vmatprep.subr.mxu0 %v1337
        %1698 = vmatpush1.msra.mxu0 %v1050
        %1699 = vmatprep.subr.mxu0 %v1338
        %1700 = vmatpush1.msra.mxu0 %v1052
        %1701 = vmatprep.subr.mxu0 %v1339
        %1702 = vmatpush1.msra.mxu0 %v1054
        %1703 = vmatprep.subr.mxu0 %v1340
        %1704 = vmatpush1.msra.mxu0 %v1056
        %1705 = vmatprep.subr.mxu0 0.0
        %1706 = vmatpush1.msra.mxu0 0.0
        %1707 = vmatprep.subr.mxu0 0.0
        %1708 = vmatpush1.msra.mxu0 0.0
        %1709 = vmatprep.subr.mxu0 0.0
        %1710 = vmatpush1.msra.mxu0 0.0
        %1711 = vmatprep.subr.mxu0 0.0
        %1712 = vmatpush1.msra.mxu0 0.0
        %1713 = vmatprep.subr.mxu0 0.0
        %1714 = vmatpush1.msra.mxu0 0.0
        %1715 = vmatprep.subr.mxu0 0.0
        %1716 = vmatpush1.msra.mxu0 0.0
        %1717 = vmatprep.subr.mxu0 0.0
        %1718 = vmatpush1.msra.mxu0 0.0
        %1719 = vmatprep.subr.mxu0 0.0
        %1720 = vmatpush1.msra.mxu0 0.0
        %1721 = vmatprep.subr.mxu0 0.0
        %1722 = vmatpush1.msra.mxu0 0.0
        %1723 = vmatprep.subr.mxu0 0.0
        %1724 = vmatpush1.msra.mxu0 0.0
        %1725 = vmatprep.mubr.f32.mxu0 %v1408
        %1726 = vmatmul.mubr.f32.gmra.mrb[0].mxu0 %v1058
        %v1727 = vpop.f32.mrb[0].mxu0
        %v1728 = vadd.f32 0.0, %v1727
        %v1729 = vpop.f32.mrb[0].mxu0
        %v1730 = vadd.f32 0.0, %v1729
        %1731 = vmatprep.mubr.f32.mxu0 %v1411
        %1732 = vmatmul.mubr.f32.gmra.mrb[0].mxu0 %v1060
        %v1733 = vpop.f32.mrb[0].mxu0
        %v1734 = vadd.f32 0.0, %v1733
        %v1735 = vpop.f32.mrb[0].mxu0
        %v1736 = vadd.f32 0.0, %v1735
        %1737 = vmatprep.mubr.f32.mxu0 %v1414
        %1738 = vmatmul.mubr.f32.gmra.mrb[0].mxu0 %v1062
        %v1739 = vpop.f32.mrb[0].mxu0
        %v1740 = vadd.f32 0.0, %v1739
        %v1741 = vpop.f32.mrb[0].mxu0
        %v1742 = vadd.f32 0.0, %v1741
        %1743 = vmatprep.mubr.f32.mxu0 %v1417
        %1744 = vmatmul.mubr.f32.gmra.mrb[0].mxu0 %v1064
        %v1745 = vpop.f32.mrb[0].mxu0
        %v1746 = vadd.f32 0.0, %v1745
        %v1747 = vpop.f32.mrb[0].mxu0
        %v1748 = vadd.f32 0.0, %v1747
        %1749 = vmatprep.mubr.f32.mxu0 %v1420
        %1750 = vmatmul.mubr.f32.gmra.mrb[0].mxu0 %v1066
        %v1751 = vpop.f32.mrb[0].mxu0
        %v1752 = vadd.f32 0.0, %v1751
        %v1753 = vpop.f32.mrb[0].mxu0
        %v1754 = vadd.f32 0.0, %v1753
        %1755 = vmatprep.mubr.f32.mxu0 %v1423
        %1756 = vmatmul.mubr.f32.gmra.mrb[0].mxu0 %v1068
        %v1757 = vpop.f32.mrb[0].mxu0
        %v1758 = vadd.f32 0.0, %v1757
        %v1759 = vpop.f32.mrb[0].mxu0
        %v1760 = vadd.f32 0.0, %v1759
        %1761 = vmatprep.mubr.f32.mxu0 %v1426
        %1762 = vmatmul.mubr.f32.gmra.mrb[0].mxu0 %v1070
        %v1763 = vpop.f32.mrb[0].mxu0
        %v1764 = vadd.f32 0.0, %v1763
        %v1765 = vpop.f32.mrb[0].mxu0
        %v1766 = vadd.f32 0.0, %v1765
        %1767 = vmatprep.mubr.f32.mxu0 %v1429
        %1768 = vmatmul.mubr.f32.gmra.mrb[0].mxu0 %v1072
        %v1769 = vpop.f32.mrb[0].mxu0
        %v1770 = vadd.f32 0.0, %v1769
        %v1771 = vpop.f32.mrb[0].mxu0
        %v1772 = vadd.f32 0.0, %v1771
        %1773 = vmatprep.mubr.f32.mxu0 %v1432
        %1774 = vmatmul.mubr.f32.gmra.mrb[0].mxu0 %v1074
        %v1775 = vpop.f32.mrb[0].mxu0
        %v1776 = vadd.f32 0.0, %v1775
        %v1777 = vpop.f32.mrb[0].mxu0
        %v1778 = vadd.f32 0.0, %v1777
        %1779 = vmatprep.mubr.f32.mxu0 %v1435
        %1780 = vmatmul.mubr.f32.gmra.mrb[0].mxu0 %v1076
        %v1781 = vpop.f32.mrb[0].mxu0
        %v1782 = vadd.f32 0.0, %v1781
        %v1783 = vpop.f32.mrb[0].mxu0
        %v1784 = vadd.f32 0.0, %v1783
        %1785 = vmatprep.mubr.f32.mxu0 %v1438
        %1786 = vmatmul.mubr.f32.gmra.mrb[0].mxu0 %v1078
        %v1787 = vpop.f32.mrb[0].mxu0
        %v1788 = vadd.f32 0.0, %v1787
        %v1789 = vpop.f32.mrb[0].mxu0
        %v1790 = vadd.f32 0.0, %v1789
        %1791 = vmatprep.mubr.f32.mxu0 %v1441
        %1792 = vmatmul.mubr.f32.gmra.mrb[0].mxu0 %v1080
        %v1793 = vpop.f32.mrb[0].mxu0
        %v1794 = vadd.f32 0.0, %v1793
        %v1795 = vpop.f32.mrb[0].mxu0
        %v1796 = vadd.f32 0.0, %v1795
        %1797 = vmatprep.mubr.f32.mxu0 %v1444
        %1798 = vmatmul.mubr.f32.gmra.mrb[0].mxu0 %v1082
        %v1799 = vpop.f32.mrb[0].mxu0
        %v1800 = vadd.f32 0.0, %v1799
        %v1801 = vpop.f32.mrb[0].mxu0
        %v1802 = vadd.f32 0.0, %v1801
        %1803 = vmatprep.mubr.f32.mxu0 %v1447
        %1804 = vmatmul.mubr.f32.gmra.mrb[0].mxu0 %v1084
        %v1805 = vpop.f32.mrb[0].mxu0
        %v1806 = vadd.f32 0.0, %v1805
        %v1807 = vpop.f32.mrb[0].mxu0
        %v1808 = vadd.f32 0.0, %v1807
        %1809 = vmatprep.mubr.f32.mxu0 %v1450
        %1810 = vmatmul.mubr.f32.gmra.mrb[0].mxu0 %v1086
        %v1811 = vpop.f32.mrb[0].mxu0
        %v1812 = vadd.f32 0.0, %v1811
        %v1813 = vpop.f32.mrb[0].mxu0
        %v1814 = vadd.f32 0.0, %v1813
        %1815 = vmatprep.mubr.f32.mxu0 %v1453
        %1816 = vmatmul.mubr.f32.gmra.mrb[0].mxu0 %v1088
        %v1817 = vpop.f32.mrb[0].mxu0
        %v1818 = vadd.f32 0.0, %v1817
        %v1819 = vpop.f32.mrb[0].mxu0
        %v1820 = vadd.f32 0.0, %v1819
        %1821 = vmatprep.mubr.f32.mxu0 %v1456
        %1822 = vmatmul.mubr.f32.gmra.mrb[0].mxu0 %v1090
        %v1823 = vpop.f32.mrb[0].mxu0
        %v1824 = vadd.f32 0.0, %v1823
        %v1825 = vpop.f32.mrb[0].mxu0
        %v1826 = vadd.f32 0.0, %v1825
        %1827 = vmatprep.mubr.f32.mxu0 %v1459
        %1828 = vmatmul.mubr.f32.gmra.mrb[0].mxu0 %v1092
        %v1829 = vpop.f32.mrb[0].mxu0
        %v1830 = vadd.f32 0.0, %v1829
        %v1831 = vpop.f32.mrb[0].mxu0
        %v1832 = vadd.f32 0.0, %v1831
        %1833 = vmatprep.mubr.f32.mxu0 %v1462
        %1834 = vmatmul.mubr.f32.gmra.mrb[0].mxu0 %v1094
        %v1835 = vpop.f32.mrb[0].mxu0
        %v1836 = vadd.f32 0.0, %v1835
        %v1837 = vpop.f32.mrb[0].mxu0
        %v1838 = vadd.f32 0.0, %v1837
        %1839 = vmatprep.mubr.f32.mxu0 %v1465
        %1840 = vmatmul.mubr.f32.gmra.mrb[0].mxu0 %v1096
        %v1841 = vpop.f32.mrb[0].mxu0
        %v1842 = vadd.f32 0.0, %v1841
        %v1843 = vpop.f32.mrb[0].mxu0
        %v1844 = vadd.f32 0.0, %v1843
        %1845 = vmatprep.mubr.f32.mxu0 %v1468
        %1846 = vmatmul.mubr.f32.gmra.mrb[0].mxu0 %v1098
        %v1847 = vpop.f32.mrb[0].mxu0
        %v1848 = vadd.f32 0.0, %v1847
        %v1849 = vpop.f32.mrb[0].mxu0
        %v1850 = vadd.f32 0.0, %v1849
        %1851 = vdwg.mxu0
        %1852 = vmatprep.subr.mxu0 %v1341
        %1853 = vmatpush1.msra.mxu0 %v1164
        %1854 = vmatprep.subr.mxu0 %v1342
        %1855 = vmatpush1.msra.mxu0 %v1166
        %1856 = vmatprep.subr.mxu0 %v1343
        %1857 = vmatpush1.msra.mxu0 %v1168
        %1858 = vmatprep.subr.mxu0 %v1344
        %1859 = vmatpush1.msra.mxu0 %v1170
        %1860 = vmatprep.subr.mxu0 %v1345
        %1861 = vmatpush1.msra.mxu0 %v1172
        %1862 = vmatprep.subr.mxu0 %v1346
        %1863 = vmatpush1.msra.mxu0 %v1174
        %1864 = vmatprep.subr.mxu0 %v1347
        %1865 = vmatpush1.msra.mxu0 %v1176
        %1866 = vmatprep.subr.mxu0 %v1348
        %1867 = vmatpush1.msra.mxu0 %v1178
        %1868 = vmatprep.subr.mxu0 %v1349
        %1869 = vmatpush1.msra.mxu0 %v1180
        %1870 = vmatprep.subr.mxu0 %v1350
        %1871 = vmatpush1.msra.mxu0 %v1182
        %1872 = vmatprep.subr.mxu0 %v1351
        %1873 = vmatpush1.msra.mxu0 %v1184
        %1874 = vmatprep.subr.mxu0 %v1352
        %1875 = vmatpush1.msra.mxu0 %v1186
        %1876 = vmatprep.subr.mxu0 %v1353
        %1877 = vmatpush1.msra.mxu0 %v1188
        %1878 = vmatprep.subr.mxu0 %v1354
        %1879 = vmatpush1.msra.mxu0 %v1190
        %1880 = vmatprep.subr.mxu0 %v1355
        %1881 = vmatpush1.msra.mxu0 %v1192
        %1882 = vmatprep.subr.mxu0 %v1356
        %1883 = vmatpush1.msra.mxu0 %v1194
        %1884 = vmatprep.subr.mxu0 %v1357
        %1885 = vmatpush1.msra.mxu0 %v1196
        %1886 = vmatprep.subr.mxu0 %v1358
        %1887 = vmatpush1.msra.mxu0 %v1198
        %1888 = vmatprep.subr.mxu0 %v1359
        %1889 = vmatpush1.msra.mxu0 %v1200
        %1890 = vmatprep.subr.mxu0 %v1360
        %1891 = vmatpush1.msra.mxu0 %v1202
        %1892 = vmatprep.subr.mxu0 %v1361
        %1893 = vmatpush1.msra.mxu0 %v1204
        %1894 = vmatprep.subr.mxu0 %v1362
        %1895 = vmatpush1.msra.mxu0 %v1206
        %1896 = vmatprep.subr.mxu0 0.0
        %1897 = vmatpush1.msra.mxu0 0.0
        %1898 = vmatprep.subr.mxu0 0.0
        %1899 = vmatpush1.msra.mxu0 0.0
        %1900 = vmatprep.subr.mxu0 0.0
        %1901 = vmatpush1.msra.mxu0 0.0
        %1902 = vmatprep.subr.mxu0 0.0
        %1903 = vmatpush1.msra.mxu0 0.0
        %1904 = vmatprep.subr.mxu0 0.0
        %1905 = vmatpush1.msra.mxu0 0.0
        %1906 = vmatprep.subr.mxu0 0.0
        %1907 = vmatpush1.msra.mxu0 0.0
        %1908 = vmatprep.subr.mxu0 0.0
        %1909 = vmatpush1.msra.mxu0 0.0
        %1910 = vmatprep.subr.mxu0 0.0
        %1911 = vmatpush1.msra.mxu0 0.0
        %1912 = vmatprep.subr.mxu0 0.0
        %1913 = vmatpush1.msra.mxu0 0.0
        %1914 = vmatprep.subr.mxu0 0.0
        %1915 = vmatpush1.msra.mxu0 0.0
        %1916 = vmatprep.mubr.f32.mxu0 %v1408
        %1917 = vmatmul.mubr.f32.gmra.mrb[0].mxu0 %v1058
        %v1918 = vpop.f32.mrb[0].mxu0
        %v1919 = vadd.f32 0.0, %v1918
        %v1920 = vpop.f32.mrb[0].mxu0
        %v1921 = vadd.f32 0.0, %v1920
        %1922 = vmatprep.mubr.f32.mxu0 %v1411
        %1923 = vmatmul.mubr.f32.gmra.mrb[0].mxu0 %v1060
        %v1924 = vpop.f32.mrb[0].mxu0
        %v1925 = vadd.f32 0.0, %v1924
        %v1926 = vpop.f32.mrb[0].mxu0
        %v1927 = vadd.f32 0.0, %v1926
        %1928 = vmatprep.mubr.f32.mxu0 %v1414
        %1929 = vmatmul.mubr.f32.gmra.mrb[0].mxu0 %v1062
        %v1930 = vpop.f32.mrb[0].mxu0
        %v1931 = vadd.f32 0.0, %v1930
        %v1932 = vpop.f32.mrb[0].mxu0
        %v1933 = vadd.f32 0.0, %v1932
        %1934 = vmatprep.mubr.f32.mxu0 %v1417
        %1935 = vmatmul.mubr.f32.gmra.mrb[0].mxu0 %v1064
        %v1936 = vpop.f32.mrb[0].mxu0
        %v1937 = vadd.f32 0.0, %v1936
        %v1938 = vpop.f32.mrb[0].mxu0
        %v1939 = vadd.f32 0.0, %v1938
        %1940 = vmatprep.mubr.f32.mxu0 %v1420
        %1941 = vmatmul.mubr.f32.gmra.mrb[0].mxu0 %v1066
        %v1942 = vpop.f32.mrb[0].mxu0
        %v1943 = vadd.f32 0.0, %v1942
        %v1944 = vpop.f32.mrb[0].mxu0
        %v1945 = vadd.f32 0.0, %v1944
        %1946 = vmatprep.mubr.f32.mxu0 %v1423
        %1947 = vmatmul.mubr.f32.gmra.mrb[0].mxu0 %v1068
        %v1948 = vpop.f32.mrb[0].mxu0
        %v1949 = vadd.f32 0.0, %v1948
        %v1950 = vpop.f32.mrb[0].mxu0
        %v1951 = vadd.f32 0.0, %v1950
        %1952 = vmatprep.mubr.f32.mxu0 %v1426
        %1953 = vmatmul.mubr.f32.gmra.mrb[0].mxu0 %v1070
        %v1954 = vpop.f32.mrb[0].mxu0
        %v1955 = vadd.f32 0.0, %v1954
        %v1956 = vpop.f32.mrb[0].mxu0
        %v1957 = vadd.f32 0.0, %v1956
        %1958 = vmatprep.mubr.f32.mxu0 %v1429
        %1959 = vmatmul.mubr.f32.gmra.mrb[0].mxu0 %v1072
        %v1960 = vpop.f32.mrb[0].mxu0
        %v1961 = vadd.f32 0.0, %v1960
        %v1962 = vpop.f32.mrb[0].mxu0
        %v1963 = vadd.f32 0.0, %v1962
        %1964 = vmatprep.mubr.f32.mxu0 %v1432
        %1965 = vmatmul.mubr.f32.gmra.mrb[0].mxu0 %v1074
        %v1966 = vpop.f32.mrb[0].mxu0
        %v1967 = vadd.f32 0.0, %v1966
        %v1968 = vpop.f32.mrb[0].mxu0
        %v1969 = vadd.f32 0.0, %v1968
        %1970 = vmatprep.mubr.f32.mxu0 %v1435
        %1971 = vmatmul.mubr.f32.gmra.mrb[0].mxu0 %v1076
        %v1972 = vpop.f32.mrb[0].mxu0
        %v1973 = vadd.f32 0.0, %v1972
        %v1974 = vpop.f32.mrb[0].mxu0
        %v1975 = vadd.f32 0.0, %v1974
        %1976 = vmatprep.mubr.f32.mxu0 %v1438
        %1977 = vmatmul.mubr.f32.gmra.mrb[0].mxu0 %v1078
        %v1978 = vpop.f32.mrb[0].mxu0
        %v1979 = vadd.f32 0.0, %v1978
        %v1980 = vpop.f32.mrb[0].mxu0
        %v1981 = vadd.f32 0.0, %v1980
        %1982 = vmatprep.mubr.f32.mxu0 %v1441
        %1983 = vmatmul.mubr.f32.gmra.mrb[0].mxu0 %v1080
        %v1984 = vpop.f32.mrb[0].mxu0
        %v1985 = vadd.f32 0.0, %v1984
        %v1986 = vpop.f32.mrb[0].mxu0
        %v1987 = vadd.f32 0.0, %v1986
        %1988 = vmatprep.mubr.f32.mxu0 %v1444
        %1989 = vmatmul.mubr.f32.gmra.mrb[0].mxu0 %v1082
        %v1990 = vpop.f32.mrb[0].mxu0
        %v1991 = vadd.f32 0.0, %v1990
        %v1992 = vpop.f32.mrb[0].mxu0
        %v1993 = vadd.f32 0.0, %v1992
        %1994 = vmatprep.mubr.f32.mxu0 %v1447
        %1995 = vmatmul.mubr.f32.gmra.mrb[0].mxu0 %v1084
        %v1996 = vpop.f32.mrb[0].mxu0
        %v1997 = vadd.f32 0.0, %v1996
        %v1998 = vpop.f32.mrb[0].mxu0
        %v1999 = vadd.f32 0.0, %v1998
        %2000 = vmatprep.mubr.f32.mxu0 %v1450
        %2001 = vmatmul.mubr.f32.gmra.mrb[0].mxu0 %v1086
        %v2002 = vpop.f32.mrb[0].mxu0
        %v2003 = vadd.f32 0.0, %v2002
        %v2004 = vpop.f32.mrb[0].mxu0
        %v2005 = vadd.f32 0.0, %v2004
        %2006 = vmatprep.mubr.f32.mxu0 %v1453
        %2007 = vmatmul.mubr.f32.gmra.mrb[0].mxu0 %v1088
        %v2008 = vpop.f32.mrb[0].mxu0
        %v2009 = vadd.f32 0.0, %v2008
        %v2010 = vpop.f32.mrb[0].mxu0
        %v2011 = vadd.f32 0.0, %v2010
        %2012 = vmatprep.mubr.f32.mxu0 %v1456
        %2013 = vmatmul.mubr.f32.gmra.mrb[0].mxu0 %v1090
        %v2014 = vpop.f32.mrb[0].mxu0
        %v2015 = vadd.f32 0.0, %v2014
        %v2016 = vpop.f32.mrb[0].mxu0
        %v2017 = vadd.f32 0.0, %v2016
        %2018 = vmatprep.mubr.f32.mxu0 %v1459
        %2019 = vmatmul.mubr.f32.gmra.mrb[0].mxu0 %v1092
        %v2020 = vpop.f32.mrb[0].mxu0
        %v2021 = vadd.f32 0.0, %v2020
        %v2022 = vpop.f32.mrb[0].mxu0
        %v2023 = vadd.f32 0.0, %v2022
        %2024 = vmatprep.mubr.f32.mxu0 %v1462
        %2025 = vmatmul.mubr.f32.gmra.mrb[0].mxu0 %v1094
        %v2026 = vpop.f32.mrb[0].mxu0
        %v2027 = vadd.f32 0.0, %v2026
        %v2028 = vpop.f32.mrb[0].mxu0
        %v2029 = vadd.f32 0.0, %v2028
        %2030 = vmatprep.mubr.f32.mxu0 %v1465
        %2031 = vmatmul.mubr.f32.gmra.mrb[0].mxu0 %v1096
        %v2032 = vpop.f32.mrb[0].mxu0
        %v2033 = vadd.f32 0.0, %v2032
        %v2034 = vpop.f32.mrb[0].mxu0
        %v2035 = vadd.f32 0.0, %v2034
        %2036 = vmatprep.mubr.f32.mxu0 %v1468
        %2037 = vmatmul.mubr.f32.gmra.mrb[0].mxu0 %v1098
        %v2038 = vpop.f32.mrb[0].mxu0
        %v2039 = vadd.f32 0.0, %v2038
        %v2040 = vpop.f32.mrb[0].mxu0
        %v2041 = vadd.f32 0.0, %v2040
        %2042 = vdwg.mxu0
        %2043 = vmatprep.subr.mxu0 %v1363
        %2044 = vmatpush1.msra.mxu0 %v1208
        %2045 = vmatprep.subr.mxu0 %v1364
        %2046 = vmatpush1.msra.mxu0 %v1210
        %2047 = vmatprep.subr.mxu0 %v1365
        %2048 = vmatpush1.msra.mxu0 %v1212
        %2049 = vmatprep.subr.mxu0 %v1366
        %2050 = vmatpush1.msra.mxu0 %v1214
        %2051 = vmatprep.subr.mxu0 %v1367
        %2052 = vmatpush1.msra.mxu0 %v1216
        %2053 = vmatprep.subr.mxu0 %v1368
        %2054 = vmatpush1.msra.mxu0 %v1218
        %2055 = vmatprep.subr.mxu0 %v1369
        %2056 = vmatpush1.msra.mxu0 %v1220
        %2057 = vmatprep.subr.mxu0 %v1370
        %2058 = vmatpush1.msra.mxu0 %v1222
        %2059 = vmatprep.subr.mxu0 %v1371
        %2060 = vmatpush1.msra.mxu0 %v1224
        %2061 = vmatprep.subr.mxu0 %v1372
        %2062 = vmatpush1.msra.mxu0 %v1226
        %2063 = vmatprep.subr.mxu0 %v1373
        %2064 = vmatpush1.msra.mxu0 %v1228
        %2065 = vmatprep.subr.mxu0 %v1374
        %2066 = vmatpush1.msra.mxu0 %v1230
        %2067 = vmatprep.subr.mxu0 %v1375
        %2068 = vmatpush1.msra.mxu0 %v1232
        %2069 = vmatprep.subr.mxu0 %v1376
        %2070 = vmatpush1.msra.mxu0 %v1234
        %2071 = vmatprep.subr.mxu0 %v1377
        %2072 = vmatpush1.msra.mxu0 %v1236
        %2073 = vmatprep.subr.mxu0 %v1378
        %2074 = vmatpush1.msra.mxu0 %v1238
        %2075 = vmatprep.subr.mxu0 %v1379
        %2076 = vmatpush1.msra.mxu0 %v1240
        %2077 = vmatprep.subr.mxu0 %v1380
        %2078 = vmatpush1.msra.mxu0 %v1242
        %2079 = vmatprep.subr.mxu0 %v1381
        %2080 = vmatpush1.msra.mxu0 %v1244
        %2081 = vmatprep.subr.mxu0 %v1382
        %2082 = vmatpush1.msra.mxu0 %v1246
        %2083 = vmatprep.subr.mxu0 %v1383
        %2084 = vmatpush1.msra.mxu0 %v1248
        %2085 = vmatprep.subr.mxu0 %v1384
        %2086 = vmatpush1.msra.mxu0 %v1250
        %2087 = vmatprep.subr.mxu0 0.0
        %2088 = vmatpush1.msra.mxu0 0.0
        %2089 = vmatprep.subr.mxu0 0.0
        %2090 = vmatpush1.msra.mxu0 0.0
        %2091 = vmatprep.subr.mxu0 0.0
        %2092 = vmatpush1.msra.mxu0 0.0
        %2093 = vmatprep.subr.mxu0 0.0
        %2094 = vmatpush1.msra.mxu0 0.0
        %2095 = vmatprep.subr.mxu0 0.0
        %2096 = vmatpush1.msra.mxu0 0.0
        %2097 = vmatprep.subr.mxu0 0.0
        %2098 = vmatpush1.msra.mxu0 0.0
        %2099 = vmatprep.subr.mxu0 0.0
        %2100 = vmatpush1.msra.mxu0 0.0
        %2101 = vmatprep.subr.mxu0 0.0
        %2102 = vmatpush1.msra.mxu0 0.0
        %2103 = vmatprep.subr.mxu0 0.0
        %2104 = vmatpush1.msra.mxu0 0.0
        %2105 = vmatprep.subr.mxu0 0.0
        %2106 = vmatpush1.msra.mxu0 0.0
        %2107 = vmatprep.mubr.f32.mxu0 %v1408
        %2108 = vmatmul.mubr.f32.gmra.mrb[0].mxu0 %v1058
        %v2109 = vpop.f32.mrb[0].mxu0
        %v2110 = vadd.f32 0.0, %v2109
        %v2111 = vpop.f32.mrb[0].mxu0
        %v2112 = vadd.f32 0.0, %v2111
        %2113 = vmatprep.mubr.f32.mxu0 %v1411
        %2114 = vmatmul.mubr.f32.gmra.mrb[0].mxu0 %v1060
        %v2115 = vpop.f32.mrb[0].mxu0
        %v2116 = vadd.f32 0.0, %v2115
        %v2117 = vpop.f32.mrb[0].mxu0
        %v2118 = vadd.f32 0.0, %v2117
        %2119 = vmatprep.mubr.f32.mxu0 %v1414
        %2120 = vmatmul.mubr.f32.gmra.mrb[0].mxu0 %v1062
        %v2121 = vpop.f32.mrb[0].mxu0
        %v2122 = vadd.f32 0.0, %v2121
        %v2123 = vpop.f32.mrb[0].mxu0
        %v2124 = vadd.f32 0.0, %v2123
        %2125 = vmatprep.mubr.f32.mxu0 %v1417
        %2126 = vmatmul.mubr.f32.gmra.mrb[0].mxu0 %v1064
        %v2127 = vpop.f32.mrb[0].mxu0
        %v2128 = vadd.f32 0.0, %v2127
        %v2129 = vpop.f32.mrb[0].mxu0
        %v2130 = vadd.f32 0.0, %v2129
        %2131 = vmatprep.mubr.f32.mxu0 %v1420
        %2132 = vmatmul.mubr.f32.gmra.mrb[0].mxu0 %v1066
        %v2133 = vpop.f32.mrb[0].mxu0
        %v2134 = vadd.f32 0.0, %v2133
        %v2135 = vpop.f32.mrb[0].mxu0
        %v2136 = vadd.f32 0.0, %v2135
        %2137 = vmatprep.mubr.f32.mxu0 %v1423
        %2138 = vmatmul.mubr.f32.gmra.mrb[0].mxu0 %v1068
        %v2139 = vpop.f32.mrb[0].mxu0
        %v2140 = vadd.f32 0.0, %v2139
        %v2141 = vpop.f32.mrb[0].mxu0
        %v2142 = vadd.f32 0.0, %v2141
        %2143 = vmatprep.mubr.f32.mxu0 %v1426
        %2144 = vmatmul.mubr.f32.gmra.mrb[0].mxu0 %v1070
        %v2145 = vpop.f32.mrb[0].mxu0
        %v2146 = vadd.f32 0.0, %v2145
        %v2147 = vpop.f32.mrb[0].mxu0
        %v2148 = vadd.f32 0.0, %v2147
        %2149 = vmatprep.mubr.f32.mxu0 %v1429
        %2150 = vmatmul.mubr.f32.gmra.mrb[0].mxu0 %v1072
        %v2151 = vpop.f32.mrb[0].mxu0
        %v2152 = vadd.f32 0.0, %v2151
        %v2153 = vpop.f32.mrb[0].mxu0
        %v2154 = vadd.f32 0.0, %v2153
        %2155 = vmatprep.mubr.f32.mxu0 %v1432
        %2156 = vmatmul.mubr.f32.gmra.mrb[0].mxu0 %v1074
        %v2157 = vpop.f32.mrb[0].mxu0
        %v2158 = vadd.f32 0.0, %v2157
        %v2159 = vpop.f32.mrb[0].mxu0
        %v2160 = vadd.f32 0.0, %v2159
        %2161 = vmatprep.mubr.f32.mxu0 %v1435
        %2162 = vmatmul.mubr.f32.gmra.mrb[0].mxu0 %v1076
        %v2163 = vpop.f32.mrb[0].mxu0
        %v2164 = vadd.f32 0.0, %v2163
        %v2165 = vpop.f32.mrb[0].mxu0
        %v2166 = vadd.f32 0.0, %v2165
        %2167 = vmatprep.mubr.f32.mxu0 %v1438
        %2168 = vmatmul.mubr.f32.gmra.mrb[0].mxu0 %v1078
        %v2169 = vpop.f32.mrb[0].mxu0
        %v2170 = vadd.f32 0.0, %v2169
        %v2171 = vpop.f32.mrb[0].mxu0
        %v2172 = vadd.f32 0.0, %v2171
        %2173 = vmatprep.mubr.f32.mxu0 %v1441
        %2174 = vmatmul.mubr.f32.gmra.mrb[0].mxu0 %v1080
        %v2175 = vpop.f32.mrb[0].mxu0
        %v2176 = vadd.f32 0.0, %v2175
        %v2177 = vpop.f32.mrb[0].mxu0
        %v2178 = vadd.f32 0.0, %v2177
        %2179 = vmatprep.mubr.f32.mxu0 %v1444
        %2180 = vmatmul.mubr.f32.gmra.mrb[0].mxu0 %v1082
        %v2181 = vpop.f32.mrb[0].mxu0
        %v2182 = vadd.f32 0.0, %v2181
        %v2183 = vpop.f32.mrb[0].mxu0
        %v2184 = vadd.f32 0.0, %v2183
        %2185 = vmatprep.mubr.f32.mxu0 %v1447
        %2186 = vmatmul.mubr.f32.gmra.mrb[0].mxu0 %v1084
        %v2187 = vpop.f32.mrb[0].mxu0
        %v2188 = vadd.f32 0.0, %v2187
        %v2189 = vpop.f32.mrb[0].mxu0
        %v2190 = vadd.f32 0.0, %v2189
        %2191 = vmatprep.mubr.f32.mxu0 %v1450
        %2192 = vmatmul.mubr.f32.gmra.mrb[0].mxu0 %v1086
        %v2193 = vpop.f32.mrb[0].mxu0
        %v2194 = vadd.f32 0.0, %v2193
        %v2195 = vpop.f32.mrb[0].mxu0
        %v2196 = vadd.f32 0.0, %v2195
        %2197 = vmatprep.mubr.f32.mxu0 %v1453
        %2198 = vmatmul.mubr.f32.gmra.mrb[0].mxu0 %v1088
        %v2199 = vpop.f32.mrb[0].mxu0
        %v2200 = vadd.f32 0.0, %v2199
        %v2201 = vpop.f32.mrb[0].mxu0
        %v2202 = vadd.f32 0.0, %v2201
        %2203 = vmatprep.mubr.f32.mxu0 %v1456
        %2204 = vmatmul.mubr.f32.gmra.mrb[0].mxu0 %v1090
        %v2205 = vpop.f32.mrb[0].mxu0
        %v2206 = vadd.f32 0.0, %v2205
        %v2207 = vpop.f32.mrb[0].mxu0
        %v2208 = vadd.f32 0.0, %v2207
        %2209 = vmatprep.mubr.f32.mxu0 %v1459
        %2210 = vmatmul.mubr.f32.gmra.mrb[0].mxu0 %v1092
        %v2211 = vpop.f32.mrb[0].mxu0
        %v2212 = vadd.f32 0.0, %v2211
        %v2213 = vpop.f32.mrb[0].mxu0
        %v2214 = vadd.f32 0.0, %v2213
        %2215 = vmatprep.mubr.f32.mxu0 %v1462
        %2216 = vmatmul.mubr.f32.gmra.mrb[0].mxu0 %v1094
        %v2217 = vpop.f32.mrb[0].mxu0
        %v2218 = vadd.f32 0.0, %v2217
        %v2219 = vpop.f32.mrb[0].mxu0
        %v2220 = vadd.f32 0.0, %v2219
        %2221 = vmatprep.mubr.f32.mxu0 %v1465
        %2222 = vmatmul.mubr.f32.gmra.mrb[0].mxu0 %v1096
        %v2223 = vpop.f32.mrb[0].mxu0
        %v2224 = vadd.f32 0.0, %v2223
        %v2225 = vpop.f32.mrb[0].mxu0
        %v2226 = vadd.f32 0.0, %v2225
        %2227 = vmatprep.mubr.f32.mxu0 %v1468
        %2228 = vmatmul.mubr.f32.gmra.mrb[0].mxu0 %v1098
        %v2229 = vpop.f32.mrb[0].mxu0
        %v2230 = vadd.f32 0.0, %v2229
        %v2231 = vpop.f32.mrb[0].mxu0
        %v2232 = vadd.f32 0.0, %v2231
        %2233 = vdwg.mxu0
        %2234 = vmatprep.subr.mxu0 %v1385
        %2235 = vmatpush1.msra.mxu0 %v1252
        %2236 = vmatprep.subr.mxu0 %v1386
        %2237 = vmatpush1.msra.mxu0 %v1254
        %2238 = vmatprep.subr.mxu0 %v1387
        %2239 = vmatpush1.msra.mxu0 %v1256
        %2240 = vmatprep.subr.mxu0 %v1388
        %2241 = vmatpush1.msra.mxu0 %v1258
        %2242 = vmatprep.subr.mxu0 %v1389
        %2243 = vmatpush1.msra.mxu0 %v1260
        %2244 = vmatprep.subr.mxu0 %v1390
        %2245 = vmatpush1.msra.mxu0 %v1262
        %2246 = vmatprep.subr.mxu0 %v1391
        %2247 = vmatpush1.msra.mxu0 %v1264
        %2248 = vmatprep.subr.mxu0 %v1392
        %2249 = vmatpush1.msra.mxu0 %v1266
        %2250 = vmatprep.subr.mxu0 %v1393
        %2251 = vmatpush1.msra.mxu0 %v1268
        %2252 = vmatprep.subr.mxu0 %v1394
        %2253 = vmatpush1.msra.mxu0 %v1270
        %2254 = vmatprep.subr.mxu0 %v1395
        %2255 = vmatpush1.msra.mxu0 %v1272
        %2256 = vmatprep.subr.mxu0 %v1396
        %2257 = vmatpush1.msra.mxu0 %v1274
        %2258 = vmatprep.subr.mxu0 %v1397
        %2259 = vmatpush1.msra.mxu0 %v1276
        %2260 = vmatprep.subr.mxu0 %v1398
        %2261 = vmatpush1.msra.mxu0 %v1278
        %2262 = vmatprep.subr.mxu0 %v1399
        %2263 = vmatpush1.msra.mxu0 %v1280
        %2264 = vmatprep.subr.mxu0 %v1400
        %2265 = vmatpush1.msra.mxu0 %v1282
        %2266 = vmatprep.subr.mxu0 %v1401
        %2267 = vmatpush1.msra.mxu0 %v1284
        %2268 = vmatprep.subr.mxu0 %v1402
        %2269 = vmatpush1.msra.mxu0 %v1286
        %2270 = vmatprep.subr.mxu0 %v1403
        %2271 = vmatpush1.msra.mxu0 %v1288
        %2272 = vmatprep.subr.mxu0 %v1404
        %2273 = vmatpush1.msra.mxu0 %v1290
        %2274 = vmatprep.subr.mxu0 %v1405
        %2275 = vmatpush1.msra.mxu0 %v1292
        %2276 = vmatprep.subr.mxu0 %v1406
        %2277 = vmatpush1.msra.mxu0 %v1294
        %2278 = vmatprep.subr.mxu0 0.0
        %2279 = vmatpush1.msra.mxu0 0.0
        %2280 = vmatprep.subr.mxu0 0.0
        %2281 = vmatpush1.msra.mxu0 0.0
        %2282 = vmatprep.subr.mxu0 0.0
        %2283 = vmatpush1.msra.mxu0 0.0
        %2284 = vmatprep.subr.mxu0 0.0
        %2285 = vmatpush1.msra.mxu0 0.0
        %2286 = vmatprep.subr.mxu0 0.0
        %2287 = vmatpush1.msra.mxu0 0.0
        %2288 = vmatprep.subr.mxu0 0.0
        %2289 = vmatpush1.msra.mxu0 0.0
        %2290 = vmatprep.subr.mxu0 0.0
        %2291 = vmatpush1.msra.mxu0 0.0
        %2292 = vmatprep.subr.mxu0 0.0
        %2293 = vmatpush1.msra.mxu0 0.0
        %2294 = vmatprep.subr.mxu0 0.0
        %2295 = vmatpush1.msra.mxu0 0.0
        %2296 = vmatprep.subr.mxu0 0.0
        %2297 = vmatpush1.msra.mxu0 0.0
        %2298 = vmatprep.mubr.f32.mxu0 %v1408
        %2299 = vmatmul.mubr.f32.gmra.mrb[0].mxu0 %v1058
        %v2300 = vpop.f32.mrb[0].mxu0
        %v2301 = vadd.f32 0.0, %v2300
        %v2302 = vpop.f32.mrb[0].mxu0
        %v2303 = vadd.f32 0.0, %v2302
        %2304 = vmatprep.mubr.f32.mxu0 %v1411
        %2305 = vmatmul.mubr.f32.gmra.mrb[0].mxu0 %v1060
        %v2306 = vpop.f32.mrb[0].mxu0
        %v2307 = vadd.f32 0.0, %v2306
        %v2308 = vpop.f32.mrb[0].mxu0
        %v2309 = vadd.f32 0.0, %v2308
        %2310 = vmatprep.mubr.f32.mxu0 %v1414
        %2311 = vmatmul.mubr.f32.gmra.mrb[0].mxu0 %v1062
        %v2312 = vpop.f32.mrb[0].mxu0
        %v2313 = vadd.f32 0.0, %v2312
        %v2314 = vpop.f32.mrb[0].mxu0
        %v2315 = vadd.f32 0.0, %v2314
        %2316 = vmatprep.mubr.f32.mxu0 %v1417
        %2317 = vmatmul.mubr.f32.gmra.mrb[0].mxu0 %v1064
        %v2318 = vpop.f32.mrb[0].mxu0
        %v2319 = vadd.f32 0.0, %v2318
        %v2320 = vpop.f32.mrb[0].mxu0
        %v2321 = vadd.f32 0.0, %v2320
        %2322 = vmatprep.mubr.f32.mxu0 %v1420
        %2323 = vmatmul.mubr.f32.gmra.mrb[0].mxu0 %v1066
        %v2324 = vpop.f32.mrb[0].mxu0
        %v2325 = vadd.f32 0.0, %v2324
        %v2326 = vpop.f32.mrb[0].mxu0
        %v2327 = vadd.f32 0.0, %v2326
        %2328 = vmatprep.mubr.f32.mxu0 %v1423
        %2329 = vmatmul.mubr.f32.gmra.mrb[0].mxu0 %v1068
        %v2330 = vpop.f32.mrb[0].mxu0
        %v2331 = vadd.f32 0.0, %v2330
        %v2332 = vpop.f32.mrb[0].mxu0
        %v2333 = vadd.f32 0.0, %v2332
        %2334 = vmatprep.mubr.f32.mxu0 %v1426
        %2335 = vmatmul.mubr.f32.gmra.mrb[0].mxu0 %v1070
        %v2336 = vpop.f32.mrb[0].mxu0
        %v2337 = vadd.f32 0.0, %v2336
        %v2338 = vpop.f32.mrb[0].mxu0
        %v2339 = vadd.f32 0.0, %v2338
        %2340 = vmatprep.mubr.f32.mxu0 %v1429
        %2341 = vmatmul.mubr.f32.gmra.mrb[0].mxu0 %v1072
        %v2342 = vpop.f32.mrb[0].mxu0
        %v2343 = vadd.f32 0.0, %v2342
        %v2344 = vpop.f32.mrb[0].mxu0
        %v2345 = vadd.f32 0.0, %v2344
        %2346 = vmatprep.mubr.f32.mxu0 %v1432
        %2347 = vmatmul.mubr.f32.gmra.mrb[0].mxu0 %v1074
        %v2348 = vpop.f32.mrb[0].mxu0
        %v2349 = vadd.f32 0.0, %v2348
        %v2350 = vpop.f32.mrb[0].mxu0
        %v2351 = vadd.f32 0.0, %v2350
        %2352 = vmatprep.mubr.f32.mxu0 %v1435
        %2353 = vmatmul.mubr.f32.gmra.mrb[0].mxu0 %v1076
        %v2354 = vpop.f32.mrb[0].mxu0
        %v2355 = vadd.f32 0.0, %v2354
        %v2356 = vpop.f32.mrb[0].mxu0
        %v2357 = vadd.f32 0.0, %v2356
        %2358 = vmatprep.mubr.f32.mxu0 %v1438
        %2359 = vmatmul.mubr.f32.gmra.mrb[0].mxu0 %v1078
        %v2360 = vpop.f32.mrb[0].mxu0
        %v2361 = vadd.f32 0.0, %v2360
        %v2362 = vpop.f32.mrb[0].mxu0
        %v2363 = vadd.f32 0.0, %v2362
        %2364 = vmatprep.mubr.f32.mxu0 %v1441
        %2365 = vmatmul.mubr.f32.gmra.mrb[0].mxu0 %v1080
        %v2366 = vpop.f32.mrb[0].mxu0
        %v2367 = vadd.f32 0.0, %v2366
        %v2368 = vpop.f32.mrb[0].mxu0
        %v2369 = vadd.f32 0.0, %v2368
        %2370 = vmatprep.mubr.f32.mxu0 %v1444
        %2371 = vmatmul.mubr.f32.gmra.mrb[0].mxu0 %v1082
        %v2372 = vpop.f32.mrb[0].mxu0
        %v2373 = vadd.f32 0.0, %v2372
        %v2374 = vpop.f32.mrb[0].mxu0
        %v2375 = vadd.f32 0.0, %v2374
        %2376 = vmatprep.mubr.f32.mxu0 %v1447
        %2377 = vmatmul.mubr.f32.gmra.mrb[0].mxu0 %v1084
        %v2378 = vpop.f32.mrb[0].mxu0
        %v2379 = vadd.f32 0.0, %v2378
        %v2380 = vpop.f32.mrb[0].mxu0
        %v2381 = vadd.f32 0.0, %v2380
        %2382 = vmatprep.mubr.f32.mxu0 %v1450
        %2383 = vmatmul.mubr.f32.gmra.mrb[0].mxu0 %v1086
        %v2384 = vpop.f32.mrb[0].mxu0
        %v2385 = vadd.f32 0.0, %v2384
        %v2386 = vpop.f32.mrb[0].mxu0
        %v2387 = vadd.f32 0.0, %v2386
        %2388 = vmatprep.mubr.f32.mxu0 %v1453
        %2389 = vmatmul.mubr.f32.gmra.mrb[0].mxu0 %v1088
        %v2390 = vpop.f32.mrb[0].mxu0
        %v2391 = vadd.f32 0.0, %v2390
        %v2392 = vpop.f32.mrb[0].mxu0
        %v2393 = vadd.f32 0.0, %v2392
        %2394 = vmatprep.mubr.f32.mxu0 %v1456
        %2395 = vmatmul.mubr.f32.gmra.mrb[0].mxu0 %v1090
        %v2396 = vpop.f32.mrb[0].mxu0
        %v2397 = vadd.f32 0.0, %v2396
        %v2398 = vpop.f32.mrb[0].mxu0
        %v2399 = vadd.f32 0.0, %v2398
        %2400 = vmatprep.mubr.f32.mxu0 %v1459
        %2401 = vmatmul.mubr.f32.gmra.mrb[0].mxu0 %v1092
        %v2402 = vpop.f32.mrb[0].mxu0
        %v2403 = vadd.f32 0.0, %v2402
        %v2404 = vpop.f32.mrb[0].mxu0
        %v2405 = vadd.f32 0.0, %v2404
        %2406 = vmatprep.mubr.f32.mxu0 %v1462
        %2407 = vmatmul.mubr.f32.gmra.mrb[0].mxu0 %v1094
        %v2408 = vpop.f32.mrb[0].mxu0
        %v2409 = vadd.f32 0.0, %v2408
        %v2410 = vpop.f32.mrb[0].mxu0
        %v2411 = vadd.f32 0.0, %v2410
        %2412 = vmatprep.mubr.f32.mxu0 %v1465
        %2413 = vmatmul.mubr.f32.gmra.mrb[0].mxu0 %v1096
        %v2414 = vpop.f32.mrb[0].mxu0
        %v2415 = vadd.f32 0.0, %v2414
        %v2416 = vpop.f32.mrb[0].mxu0
        %v2417 = vadd.f32 0.0, %v2416
        %2418 = vmatprep.mubr.f32.mxu0 %v1468
        %2419 = vmatmul.mubr.f32.gmra.mrb[0].mxu0 %v1098
        %v2420 = vpop.f32.mrb[0].mxu0
        %v2421 = vadd.f32 0.0, %v2420
        %v2422 = vpop.f32.mrb[0].mxu0
        %v2423 = vadd.f32 0.0, %v2422
        %2424 = vdwg.mxu0
        %2425 = vmatprep.subr.mxu0 %v1101
        %2426 = vmatpush1.msra.mxu0 %v1100
        %2427 = vmatprep.subr.mxu0 %v1103
        %2428 = vmatpush1.msra.mxu0 %v1102
        %2429 = vmatprep.subr.mxu0 %v1105
        %2430 = vmatpush1.msra.mxu0 %v1104
        %2431 = vmatprep.subr.mxu0 %v1107
        %2432 = vmatpush1.msra.mxu0 %v1106
        %2433 = vmatprep.subr.mxu0 %v1109
        %2434 = vmatpush1.msra.mxu0 %v1108
        %2435 = vmatprep.subr.mxu0 %v1111
        %2436 = vmatpush1.msra.mxu0 %v1110
        %2437 = vmatprep.subr.mxu0 %v1113
        %2438 = vmatpush1.msra.mxu0 %v1112
        %2439 = vmatprep.subr.mxu0 %v1115
        %2440 = vmatpush1.msra.mxu0 %v1114
        %2441 = vmatprep.subr.mxu0 %v1117
        %2442 = vmatpush1.msra.mxu0 %v1116
        %2443 = vmatprep.subr.mxu0 %v1119
        %2444 = vmatpush1.msra.mxu0 %v1118
        %2445 = vmatprep.subr.mxu0 %v1121
        %2446 = vmatpush1.msra.mxu0 %v1120
        %2447 = vmatprep.subr.mxu0 %v1123
        %2448 = vmatpush1.msra.mxu0 %v1122
        %2449 = vmatprep.subr.mxu0 %v1125
        %2450 = vmatpush1.msra.mxu0 %v1124
        %2451 = vmatprep.subr.mxu0 %v1127
        %2452 = vmatpush1.msra.mxu0 %v1126
        %2453 = vmatprep.subr.mxu0 %v1129
        %2454 = vmatpush1.msra.mxu0 %v1128
        %2455 = vmatprep.subr.mxu0 %v1131
        %2456 = vmatpush1.msra.mxu0 %v1130
        %2457 = vmatprep.subr.mxu0 %v1133
        %2458 = vmatpush1.msra.mxu0 %v1132
        %2459 = vmatprep.subr.mxu0 %v1135
        %2460 = vmatpush1.msra.mxu0 %v1134
        %2461 = vmatprep.subr.mxu0 %v1137
        %2462 = vmatpush1.msra.mxu0 %v1136
        %2463 = vmatprep.subr.mxu0 %v1139
        %2464 = vmatpush1.msra.mxu0 %v1138
        %2465 = vmatprep.subr.mxu0 %v1141
        %2466 = vmatpush1.msra.mxu0 %v1140
        %2467 = vmatprep.subr.mxu0 %v1143
        %2468 = vmatpush1.msra.mxu0 %v1142
        %2469 = vmatprep.subr.mxu0 %v1145
        %2470 = vmatpush1.msra.mxu0 %v1144
        %2471 = vmatprep.subr.mxu0 %v1147
        %2472 = vmatpush1.msra.mxu0 %v1146
        %2473 = vmatprep.subr.mxu0 %v1149
        %2474 = vmatpush1.msra.mxu0 %v1148
        %2475 = vmatprep.subr.mxu0 %v1151
        %2476 = vmatpush1.msra.mxu0 %v1150
        %2477 = vmatprep.subr.mxu0 %v1153
        %2478 = vmatpush1.msra.mxu0 %v1152
        %2479 = vmatprep.subr.mxu0 %v1155
        %2480 = vmatpush1.msra.mxu0 %v1154
        %2481 = vmatprep.subr.mxu0 %v1157
        %2482 = vmatpush1.msra.mxu0 %v1156
        %2483 = vmatprep.subr.mxu0 %v1159
        %2484 = vmatpush1.msra.mxu0 %v1158
        %2485 = vmatprep.subr.mxu0 %v1161
        %2486 = vmatpush1.msra.mxu0 %v1160
        %2487 = vmatprep.subr.mxu0 %v1163
        %2488 = vmatpush1.msra.mxu0 %v1162
        %2489 = vmatprep.mubr.f32.mxu0 %v1539
        %2490 = vmatmul.mubr.f32.gmra.mrb[0].mxu0 %v1537
        %v2491 = vpop.f32.mrb[0].mxu0
        %v2492 = vadd.f32 0.0, %v2491
        %v2493 = vpop.f32.mrb[0].mxu0
        %v2494 = vadd.f32 0.0, %v2493
        %2495 = vmatprep.mubr.f32.mxu0 %v1545
        %2496 = vmatmul.mubr.f32.gmra.mrb[0].mxu0 %v1543
        %v2497 = vpop.f32.mrb[0].mxu0
        %v2498 = vadd.f32 0.0, %v2497
        %v2499 = vpop.f32.mrb[0].mxu0
        %v2500 = vadd.f32 0.0, %v2499
        %2501 = vmatprep.mubr.f32.mxu0 %v1551
        %2502 = vmatmul.mubr.f32.gmra.mrb[0].mxu0 %v1549
        %v2503 = vpop.f32.mrb[0].mxu0
        %v2504 = vadd.f32 0.0, %v2503
        %v2505 = vpop.f32.mrb[0].mxu0
        %v2506 = vadd.f32 0.0, %v2505
        %2507 = vmatprep.mubr.f32.mxu0 %v1557
        %2508 = vmatmul.mubr.f32.gmra.mrb[0].mxu0 %v1555
        %v2509 = vpop.f32.mrb[0].mxu0
        %v2510 = vadd.f32 0.0, %v2509
        %v2511 = vpop.f32.mrb[0].mxu0
        %v2512 = vadd.f32 0.0, %v2511
        %2513 = vmatprep.mubr.f32.mxu0 %v1563
        %2514 = vmatmul.mubr.f32.gmra.mrb[0].mxu0 %v1561
        %v2515 = vpop.f32.mrb[0].mxu0
        %v2516 = vadd.f32 0.0, %v2515
        %v2517 = vpop.f32.mrb[0].mxu0
        %v2518 = vadd.f32 0.0, %v2517
        %2519 = vmatprep.mubr.f32.mxu0 %v1569
        %2520 = vmatmul.mubr.f32.gmra.mrb[0].mxu0 %v1567
        %v2521 = vpop.f32.mrb[0].mxu0
        %v2522 = vadd.f32 0.0, %v2521
        %v2523 = vpop.f32.mrb[0].mxu0
        %v2524 = vadd.f32 0.0, %v2523
        %2525 = vmatprep.mubr.f32.mxu0 %v1575
        %2526 = vmatmul.mubr.f32.gmra.mrb[0].mxu0 %v1573
        %v2527 = vpop.f32.mrb[0].mxu0
        %v2528 = vadd.f32 0.0, %v2527
        %v2529 = vpop.f32.mrb[0].mxu0
        %v2530 = vadd.f32 0.0, %v2529
        %2531 = vmatprep.mubr.f32.mxu0 %v1581
        %2532 = vmatmul.mubr.f32.gmra.mrb[0].mxu0 %v1579
        %v2533 = vpop.f32.mrb[0].mxu0
        %v2534 = vadd.f32 0.0, %v2533
        %v2535 = vpop.f32.mrb[0].mxu0
        %v2536 = vadd.f32 0.0, %v2535
        %2537 = vmatprep.mubr.f32.mxu0 %v1587
        %2538 = vmatmul.mubr.f32.gmra.mrb[0].mxu0 %v1585
        %v2539 = vpop.f32.mrb[0].mxu0
        %v2540 = vadd.f32 0.0, %v2539
        %v2541 = vpop.f32.mrb[0].mxu0
        %v2542 = vadd.f32 0.0, %v2541
        %2543 = vmatprep.mubr.f32.mxu0 %v1593
        %2544 = vmatmul.mubr.f32.gmra.mrb[0].mxu0 %v1591
        %v2545 = vpop.f32.mrb[0].mxu0
        %v2546 = vadd.f32 0.0, %v2545
        %v2547 = vpop.f32.mrb[0].mxu0
        %v2548 = vadd.f32 0.0, %v2547
        %2549 = vmatprep.mubr.f32.mxu0 %v1599
        %2550 = vmatmul.mubr.f32.gmra.mrb[0].mxu0 %v1597
        %v2551 = vpop.f32.mrb[0].mxu0
        %v2552 = vadd.f32 0.0, %v2551
        %v2553 = vpop.f32.mrb[0].mxu0
        %v2554 = vadd.f32 0.0, %v2553
        %2555 = vmatprep.mubr.f32.mxu0 %v1605
        %2556 = vmatmul.mubr.f32.gmra.mrb[0].mxu0 %v1603
        %v2557 = vpop.f32.mrb[0].mxu0
        %v2558 = vadd.f32 0.0, %v2557
        %v2559 = vpop.f32.mrb[0].mxu0
        %v2560 = vadd.f32 0.0, %v2559
        %2561 = vmatprep.mubr.f32.mxu0 %v1611
        %2562 = vmatmul.mubr.f32.gmra.mrb[0].mxu0 %v1609
        %v2563 = vpop.f32.mrb[0].mxu0
        %v2564 = vadd.f32 0.0, %v2563
        %v2565 = vpop.f32.mrb[0].mxu0
        %v2566 = vadd.f32 0.0, %v2565
        %2567 = vmatprep.mubr.f32.mxu0 %v1617
        %2568 = vmatmul.mubr.f32.gmra.mrb[0].mxu0 %v1615
        %v2569 = vpop.f32.mrb[0].mxu0
        %v2570 = vadd.f32 0.0, %v2569
        %v2571 = vpop.f32.mrb[0].mxu0
        %v2572 = vadd.f32 0.0, %v2571
        %2573 = vmatprep.mubr.f32.mxu0 %v1623
        %2574 = vmatmul.mubr.f32.gmra.mrb[0].mxu0 %v1621
        %v2575 = vpop.f32.mrb[0].mxu0
        %v2576 = vadd.f32 0.0, %v2575
        %v2577 = vpop.f32.mrb[0].mxu0
        %v2578 = vadd.f32 0.0, %v2577
        %2579 = vmatprep.mubr.f32.mxu0 %v1629
        %2580 = vmatmul.mubr.f32.gmra.mrb[0].mxu0 %v1627
        %v2581 = vpop.f32.mrb[0].mxu0
        %v2582 = vadd.f32 0.0, %v2581
        %v2583 = vpop.f32.mrb[0].mxu0
        %v2584 = vadd.f32 0.0, %v2583
        %2585 = vmatprep.mubr.f32.mxu0 %v1635
        %2586 = vmatmul.mubr.f32.gmra.mrb[0].mxu0 %v1633
        %v2587 = vpop.f32.mrb[0].mxu0
        %v2588 = vadd.f32 0.0, %v2587
        %v2589 = vpop.f32.mrb[0].mxu0
        %v2590 = vadd.f32 0.0, %v2589
        %2591 = vmatprep.mubr.f32.mxu0 %v1641
        %2592 = vmatmul.mubr.f32.gmra.mrb[0].mxu0 %v1639
        %v2593 = vpop.f32.mrb[0].mxu0
        %v2594 = vadd.f32 0.0, %v2593
        %v2595 = vpop.f32.mrb[0].mxu0
        %v2596 = vadd.f32 0.0, %v2595
        %2597 = vmatprep.mubr.f32.mxu0 %v1647
        %2598 = vmatmul.mubr.f32.gmra.mrb[0].mxu0 %v1645
        %v2599 = vpop.f32.mrb[0].mxu0
        %v2600 = vadd.f32 0.0, %v2599
        %v2601 = vpop.f32.mrb[0].mxu0
        %v2602 = vadd.f32 0.0, %v2601
        %2603 = vmatprep.mubr.f32.mxu0 %v1653
        %2604 = vmatmul.mubr.f32.gmra.mrb[0].mxu0 %v1651
        %v2605 = vpop.f32.mrb[0].mxu0
        %v2606 = vadd.f32 0.0, %v2605
        %v2607 = vpop.f32.mrb[0].mxu0
        %v2608 = vadd.f32 0.0, %v2607
        %2609 = vmatprep.mubr.f32.mxu0 %v1659
        %2610 = vmatmul.mubr.f32.gmra.mrb[0].mxu0 %v1657
        %v2611 = vpop.f32.mrb[0].mxu0
        %v2612 = vadd.f32 0.0, %v2611
        %v2613 = vpop.f32.mrb[0].mxu0
        %v2614 = vadd.f32 0.0, %v2613
        %2615 = vdwg.mxu0
        %2616 = vmatprep.subr.mxu0 %v1101
        %2617 = vmatpush1.msra.mxu0 %v1100
        %2618 = vmatprep.subr.mxu0 %v1103
        %2619 = vmatpush1.msra.mxu0 %v1102
        %2620 = vmatprep.subr.mxu0 %v1105
        %2621 = vmatpush1.msra.mxu0 %v1104
        %2622 = vmatprep.subr.mxu0 %v1107
        %2623 = vmatpush1.msra.mxu0 %v1106
        %2624 = vmatprep.subr.mxu0 %v1109
        %2625 = vmatpush1.msra.mxu0 %v1108
        %2626 = vmatprep.subr.mxu0 %v1111
        %2627 = vmatpush1.msra.mxu0 %v1110
        %2628 = vmatprep.subr.mxu0 %v1113
        %2629 = vmatpush1.msra.mxu0 %v1112
        %2630 = vmatprep.subr.mxu0 %v1115
        %2631 = vmatpush1.msra.mxu0 %v1114
        %2632 = vmatprep.subr.mxu0 %v1117
        %2633 = vmatpush1.msra.mxu0 %v1116
        %2634 = vmatprep.subr.mxu0 %v1119
        %2635 = vmatpush1.msra.mxu0 %v1118
        %2636 = vmatprep.subr.mxu0 %v1121
        %2637 = vmatpush1.msra.mxu0 %v1120
        %2638 = vmatprep.subr.mxu0 %v1123
        %2639 = vmatpush1.msra.mxu0 %v1122
        %2640 = vmatprep.subr.mxu0 %v1125
        %2641 = vmatpush1.msra.mxu0 %v1124
        %2642 = vmatprep.subr.mxu0 %v1127
        %2643 = vmatpush1.msra.mxu0 %v1126
        %2644 = vmatprep.subr.mxu0 %v1129
        %2645 = vmatpush1.msra.mxu0 %v1128
        %2646 = vmatprep.subr.mxu0 %v1131
        %2647 = vmatpush1.msra.mxu0 %v1130
        %2648 = vmatprep.subr.mxu0 %v1133
        %2649 = vmatpush1.msra.mxu0 %v1132
        %2650 = vmatprep.subr.mxu0 %v1135
        %2651 = vmatpush1.msra.mxu0 %v1134
        %2652 = vmatprep.subr.mxu0 %v1137
        %2653 = vmatpush1.msra.mxu0 %v1136
        %2654 = vmatprep.subr.mxu0 %v1139
        %2655 = vmatpush1.msra.mxu0 %v1138
        %2656 = vmatprep.subr.mxu0 %v1141
        %2657 = vmatpush1.msra.mxu0 %v1140
        %2658 = vmatprep.subr.mxu0 %v1143
        %2659 = vmatpush1.msra.mxu0 %v1142
        %2660 = vmatprep.subr.mxu0 %v1145
        %2661 = vmatpush1.msra.mxu0 %v1144
        %2662 = vmatprep.subr.mxu0 %v1147
        %2663 = vmatpush1.msra.mxu0 %v1146
        %2664 = vmatprep.subr.mxu0 %v1149
        %2665 = vmatpush1.msra.mxu0 %v1148
        %2666 = vmatprep.subr.mxu0 %v1151
        %2667 = vmatpush1.msra.mxu0 %v1150
        %2668 = vmatprep.subr.mxu0 %v1153
        %2669 = vmatpush1.msra.mxu0 %v1152
        %2670 = vmatprep.subr.mxu0 %v1155
        %2671 = vmatpush1.msra.mxu0 %v1154
        %2672 = vmatprep.subr.mxu0 %v1157
        %2673 = vmatpush1.msra.mxu0 %v1156
        %2674 = vmatprep.subr.mxu0 %v1159
        %2675 = vmatpush1.msra.mxu0 %v1158
        %2676 = vmatprep.subr.mxu0 %v1161
        %2677 = vmatpush1.msra.mxu0 %v1160
        %2678 = vmatprep.subr.mxu0 %v1163
        %2679 = vmatpush1.msra.mxu0 %v1162
        %2680 = vmatprep.mubr.f32.mxu0 %v1730
        %2681 = vmatmul.mubr.f32.gmra.mrb[0].mxu0 %v1728
        %v2682 = vpop.f32.mrb[0].mxu0
        %v2683 = vadd.f32 0.0, %v2682
        %v2684 = vpop.f32.mrb[0].mxu0
        %v2685 = vadd.f32 0.0, %v2684
        %2686 = vmatprep.mubr.f32.mxu0 %v1736
        %2687 = vmatmul.mubr.f32.gmra.mrb[0].mxu0 %v1734
        %v2688 = vpop.f32.mrb[0].mxu0
        %v2689 = vadd.f32 0.0, %v2688
        %v2690 = vpop.f32.mrb[0].mxu0
        %v2691 = vadd.f32 0.0, %v2690
        %2692 = vmatprep.mubr.f32.mxu0 %v1742
        %2693 = vmatmul.mubr.f32.gmra.mrb[0].mxu0 %v1740
        %v2694 = vpop.f32.mrb[0].mxu0
        %v2695 = vadd.f32 0.0, %v2694
        %v2696 = vpop.f32.mrb[0].mxu0
        %v2697 = vadd.f32 0.0, %v2696
        %2698 = vmatprep.mubr.f32.mxu0 %v1748
        %2699 = vmatmul.mubr.f32.gmra.mrb[0].mxu0 %v1746
        %v2700 = vpop.f32.mrb[0].mxu0
        %v2701 = vadd.f32 0.0, %v2700
        %v2702 = vpop.f32.mrb[0].mxu0
        %v2703 = vadd.f32 0.0, %v2702
        %2704 = vmatprep.mubr.f32.mxu0 %v1754
        %2705 = vmatmul.mubr.f32.gmra.mrb[0].mxu0 %v1752
        %v2706 = vpop.f32.mrb[0].mxu0
        %v2707 = vadd.f32 0.0, %v2706
        %v2708 = vpop.f32.mrb[0].mxu0
        %v2709 = vadd.f32 0.0, %v2708
        %2710 = vmatprep.mubr.f32.mxu0 %v1760
        %2711 = vmatmul.mubr.f32.gmra.mrb[0].mxu0 %v1758
        %v2712 = vpop.f32.mrb[0].mxu0
        %v2713 = vadd.f32 0.0, %v2712
        %v2714 = vpop.f32.mrb[0].mxu0
        %v2715 = vadd.f32 0.0, %v2714
        %2716 = vmatprep.mubr.f32.mxu0 %v1766
        %2717 = vmatmul.mubr.f32.gmra.mrb[0].mxu0 %v1764
        %v2718 = vpop.f32.mrb[0].mxu0
        %v2719 = vadd.f32 0.0, %v2718
        %v2720 = vpop.f32.mrb[0].mxu0
        %v2721 = vadd.f32 0.0, %v2720
        %2722 = vmatprep.mubr.f32.mxu0 %v1772
        %2723 = vmatmul.mubr.f32.gmra.mrb[0].mxu0 %v1770
        %v2724 = vpop.f32.mrb[0].mxu0
        %v2725 = vadd.f32 0.0, %v2724
        %v2726 = vpop.f32.mrb[0].mxu0
        %v2727 = vadd.f32 0.0, %v2726
        %2728 = vmatprep.mubr.f32.mxu0 %v1778
        %2729 = vmatmul.mubr.f32.gmra.mrb[0].mxu0 %v1776
        %v2730 = vpop.f32.mrb[0].mxu0
        %v2731 = vadd.f32 0.0, %v2730
        %v2732 = vpop.f32.mrb[0].mxu0
        %v2733 = vadd.f32 0.0, %v2732
        %2734 = vmatprep.mubr.f32.mxu0 %v1784
        %2735 = vmatmul.mubr.f32.gmra.mrb[0].mxu0 %v1782
        %v2736 = vpop.f32.mrb[0].mxu0
        %v2737 = vadd.f32 0.0, %v2736
        %v2738 = vpop.f32.mrb[0].mxu0
        %v2739 = vadd.f32 0.0, %v2738
        %2740 = vmatprep.mubr.f32.mxu0 %v1790
        %2741 = vmatmul.mubr.f32.gmra.mrb[0].mxu0 %v1788
        %v2742 = vpop.f32.mrb[0].mxu0
        %v2743 = vadd.f32 0.0, %v2742
        %v2744 = vpop.f32.mrb[0].mxu0
        %v2745 = vadd.f32 0.0, %v2744
        %2746 = vmatprep.mubr.f32.mxu0 %v1796
        %2747 = vmatmul.mubr.f32.gmra.mrb[0].mxu0 %v1794
        %v2748 = vpop.f32.mrb[0].mxu0
        %v2749 = vadd.f32 0.0, %v2748
        %v2750 = vpop.f32.mrb[0].mxu0
        %v2751 = vadd.f32 0.0, %v2750
        %2752 = vmatprep.mubr.f32.mxu0 %v1802
        %2753 = vmatmul.mubr.f32.gmra.mrb[0].mxu0 %v1800
        %v2754 = vpop.f32.mrb[0].mxu0
        %v2755 = vadd.f32 0.0, %v2754
        %v2756 = vpop.f32.mrb[0].mxu0
        %v2757 = vadd.f32 0.0, %v2756
        %2758 = vmatprep.mubr.f32.mxu0 %v1808
        %2759 = vmatmul.mubr.f32.gmra.mrb[0].mxu0 %v1806
        %v2760 = vpop.f32.mrb[0].mxu0
        %v2761 = vadd.f32 0.0, %v2760
        %v2762 = vpop.f32.mrb[0].mxu0
        %v2763 = vadd.f32 0.0, %v2762
        %2764 = vmatprep.mubr.f32.mxu0 %v1814
        %2765 = vmatmul.mubr.f32.gmra.mrb[0].mxu0 %v1812
        %v2766 = vpop.f32.mrb[0].mxu0
        %v2767 = vadd.f32 0.0, %v2766
        %v2768 = vpop.f32.mrb[0].mxu0
        %v2769 = vadd.f32 0.0, %v2768
        %2770 = vmatprep.mubr.f32.mxu0 %v1820
        %2771 = vmatmul.mubr.f32.gmra.mrb[0].mxu0 %v1818
        %v2772 = vpop.f32.mrb[0].mxu0
        %v2773 = vadd.f32 0.0, %v2772
        %v2774 = vpop.f32.mrb[0].mxu0
        %v2775 = vadd.f32 0.0, %v2774
        %2776 = vmatprep.mubr.f32.mxu0 %v1826
        %2777 = vmatmul.mubr.f32.gmra.mrb[0].mxu0 %v1824
        %v2778 = vpop.f32.mrb[0].mxu0
        %v2779 = vadd.f32 0.0, %v2778
        %v2780 = vpop.f32.mrb[0].mxu0
        %v2781 = vadd.f32 0.0, %v2780
        %2782 = vmatprep.mubr.f32.mxu0 %v1832
        %2783 = vmatmul.mubr.f32.gmra.mrb[0].mxu0 %v1830
        %v2784 = vpop.f32.mrb[0].mxu0
        %v2785 = vadd.f32 0.0, %v2784
        %v2786 = vpop.f32.mrb[0].mxu0
        %v2787 = vadd.f32 0.0, %v2786
        %2788 = vmatprep.mubr.f32.mxu0 %v1838
        %2789 = vmatmul.mubr.f32.gmra.mrb[0].mxu0 %v1836
        %v2790 = vpop.f32.mrb[0].mxu0
        %v2791 = vadd.f32 0.0, %v2790
        %v2792 = vpop.f32.mrb[0].mxu0
        %v2793 = vadd.f32 0.0, %v2792
        %2794 = vmatprep.mubr.f32.mxu0 %v1844
        %2795 = vmatmul.mubr.f32.gmra.mrb[0].mxu0 %v1842
        %v2796 = vpop.f32.mrb[0].mxu0
        %v2797 = vadd.f32 0.0, %v2796
        %v2798 = vpop.f32.mrb[0].mxu0
        %v2799 = vadd.f32 0.0, %v2798
        %2800 = vmatprep.mubr.f32.mxu0 %v1850
        %2801 = vmatmul.mubr.f32.gmra.mrb[0].mxu0 %v1848
        %v2802 = vpop.f32.mrb[0].mxu0
        %v2803 = vadd.f32 0.0, %v2802
        %v2804 = vpop.f32.mrb[0].mxu0
        %v2805 = vadd.f32 0.0, %v2804
        %2806 = vdwg.mxu0
        %2807 = vmatprep.subr.mxu0 %v1101
        %2808 = vmatpush1.msra.mxu0 %v1100
        %2809 = vmatprep.subr.mxu0 %v1103
        %2810 = vmatpush1.msra.mxu0 %v1102
        %2811 = vmatprep.subr.mxu0 %v1105
        %2812 = vmatpush1.msra.mxu0 %v1104
        %2813 = vmatprep.subr.mxu0 %v1107
        %2814 = vmatpush1.msra.mxu0 %v1106
        %2815 = vmatprep.subr.mxu0 %v1109
        %2816 = vmatpush1.msra.mxu0 %v1108
        %2817 = vmatprep.subr.mxu0 %v1111
        %2818 = vmatpush1.msra.mxu0 %v1110
        %2819 = vmatprep.subr.mxu0 %v1113
        %2820 = vmatpush1.msra.mxu0 %v1112
        %2821 = vmatprep.subr.mxu0 %v1115
        %2822 = vmatpush1.msra.mxu0 %v1114
        %2823 = vmatprep.subr.mxu0 %v1117
        %2824 = vmatpush1.msra.mxu0 %v1116
        %2825 = vmatprep.subr.mxu0 %v1119
        %2826 = vmatpush1.msra.mxu0 %v1118
        %2827 = vmatprep.subr.mxu0 %v1121
        %2828 = vmatpush1.msra.mxu0 %v1120
        %2829 = vmatprep.subr.mxu0 %v1123
        %2830 = vmatpush1.msra.mxu0 %v1122
        %2831 = vmatprep.subr.mxu0 %v1125
        %2832 = vmatpush1.msra.mxu0 %v1124
        %2833 = vmatprep.subr.mxu0 %v1127
        %2834 = vmatpush1.msra.mxu0 %v1126
        %2835 = vmatprep.subr.mxu0 %v1129
        %2836 = vmatpush1.msra.mxu0 %v1128
        %2837 = vmatprep.subr.mxu0 %v1131
        %2838 = vmatpush1.msra.mxu0 %v1130
        %2839 = vmatprep.subr.mxu0 %v1133
        %2840 = vmatpush1.msra.mxu0 %v1132
        %2841 = vmatprep.subr.mxu0 %v1135
        %2842 = vmatpush1.msra.mxu0 %v1134
        %2843 = vmatprep.subr.mxu0 %v1137
        %2844 = vmatpush1.msra.mxu0 %v1136
        %2845 = vmatprep.subr.mxu0 %v1139
        %2846 = vmatpush1.msra.mxu0 %v1138
        %2847 = vmatprep.subr.mxu0 %v1141
        %2848 = vmatpush1.msra.mxu0 %v1140
        %2849 = vmatprep.subr.mxu0 %v1143
        %2850 = vmatpush1.msra.mxu0 %v1142
        %2851 = vmatprep.subr.mxu0 %v1145
        %2852 = vmatpush1.msra.mxu0 %v1144
        %2853 = vmatprep.subr.mxu0 %v1147
        %2854 = vmatpush1.msra.mxu0 %v1146
        %2855 = vmatprep.subr.mxu0 %v1149
        %2856 = vmatpush1.msra.mxu0 %v1148
        %2857 = vmatprep.subr.mxu0 %v1151
        %2858 = vmatpush1.msra.mxu0 %v1150
        %2859 = vmatprep.subr.mxu0 %v1153
        %2860 = vmatpush1.msra.mxu0 %v1152
        %2861 = vmatprep.subr.mxu0 %v1155
        %2862 = vmatpush1.msra.mxu0 %v1154
        %2863 = vmatprep.subr.mxu0 %v1157
        %2864 = vmatpush1.msra.mxu0 %v1156
        %2865 = vmatprep.subr.mxu0 %v1159
        %2866 = vmatpush1.msra.mxu0 %v1158
        %2867 = vmatprep.subr.mxu0 %v1161
        %2868 = vmatpush1.msra.mxu0 %v1160
        %2869 = vmatprep.subr.mxu0 %v1163
        %2870 = vmatpush1.msra.mxu0 %v1162
        %2871 = vmatprep.mubr.f32.mxu0 %v1921
        %2872 = vmatmul.mubr.f32.gmra.mrb[0].mxu0 %v1919
        %v2873 = vpop.f32.mrb[0].mxu0
        %v2874 = vadd.f32 0.0, %v2873
        %v2875 = vpop.f32.mrb[0].mxu0
        %v2876 = vadd.f32 0.0, %v2875
        %2877 = vmatprep.mubr.f32.mxu0 %v1927
        %2878 = vmatmul.mubr.f32.gmra.mrb[0].mxu0 %v1925
        %v2879 = vpop.f32.mrb[0].mxu0
        %v2880 = vadd.f32 0.0, %v2879
        %v2881 = vpop.f32.mrb[0].mxu0
        %v2882 = vadd.f32 0.0, %v2881
        %2883 = vmatprep.mubr.f32.mxu0 %v1933
        %2884 = vmatmul.mubr.f32.gmra.mrb[0].mxu0 %v1931
        %v2885 = vpop.f32.mrb[0].mxu0
        %v2886 = vadd.f32 0.0, %v2885
        %v2887 = vpop.f32.mrb[0].mxu0
        %v2888 = vadd.f32 0.0, %v2887
        %2889 = vmatprep.mubr.f32.mxu0 %v1939
        %2890 = vmatmul.mubr.f32.gmra.mrb[0].mxu0 %v1937
        %v2891 = vpop.f32.mrb[0].mxu0
        %v2892 = vadd.f32 0.0, %v2891
        %v2893 = vpop.f32.mrb[0].mxu0
        %v2894 = vadd.f32 0.0, %v2893
        %2895 = vmatprep.mubr.f32.mxu0 %v1945
        %2896 = vmatmul.mubr.f32.gmra.mrb[0].mxu0 %v1943
        %v2897 = vpop.f32.mrb[0].mxu0
        %v2898 = vadd.f32 0.0, %v2897
        %v2899 = vpop.f32.mrb[0].mxu0
        %v2900 = vadd.f32 0.0, %v2899
        %2901 = vmatprep.mubr.f32.mxu0 %v1951
        %2902 = vmatmul.mubr.f32.gmra.mrb[0].mxu0 %v1949
        %v2903 = vpop.f32.mrb[0].mxu0
        %v2904 = vadd.f32 0.0, %v2903
        %v2905 = vpop.f32.mrb[0].mxu0
        %v2906 = vadd.f32 0.0, %v2905
        %2907 = vmatprep.mubr.f32.mxu0 %v1957
        %2908 = vmatmul.mubr.f32.gmra.mrb[0].mxu0 %v1955
        %v2909 = vpop.f32.mrb[0].mxu0
        %v2910 = vadd.f32 0.0, %v2909
        %v2911 = vpop.f32.mrb[0].mxu0
        %v2912 = vadd.f32 0.0, %v2911
        %2913 = vmatprep.mubr.f32.mxu0 %v1963
        %2914 = vmatmul.mubr.f32.gmra.mrb[0].mxu0 %v1961
        %v2915 = vpop.f32.mrb[0].mxu0
        %v2916 = vadd.f32 0.0, %v2915
        %v2917 = vpop.f32.mrb[0].mxu0
        %v2918 = vadd.f32 0.0, %v2917
        %2919 = vmatprep.mubr.f32.mxu0 %v1969
        %2920 = vmatmul.mubr.f32.gmra.mrb[0].mxu0 %v1967
        %v2921 = vpop.f32.mrb[0].mxu0
        %v2922 = vadd.f32 0.0, %v2921
        %v2923 = vpop.f32.mrb[0].mxu0
        %v2924 = vadd.f32 0.0, %v2923
        %2925 = vmatprep.mubr.f32.mxu0 %v1975
        %2926 = vmatmul.mubr.f32.gmra.mrb[0].mxu0 %v1973
        %v2927 = vpop.f32.mrb[0].mxu0
        %v2928 = vadd.f32 0.0, %v2927
        %v2929 = vpop.f32.mrb[0].mxu0
        %v2930 = vadd.f32 0.0, %v2929
        %2931 = vmatprep.mubr.f32.mxu0 %v1981
        %2932 = vmatmul.mubr.f32.gmra.mrb[0].mxu0 %v1979
        %v2933 = vpop.f32.mrb[0].mxu0
        %v2934 = vadd.f32 0.0, %v2933
        %v2935 = vpop.f32.mrb[0].mxu0
        %v2936 = vadd.f32 0.0, %v2935
        %2937 = vmatprep.mubr.f32.mxu0 %v1987
        %2938 = vmatmul.mubr.f32.gmra.mrb[0].mxu0 %v1985
        %v2939 = vpop.f32.mrb[0].mxu0
        %v2940 = vadd.f32 0.0, %v2939
        %v2941 = vpop.f32.mrb[0].mxu0
        %v2942 = vadd.f32 0.0, %v2941
        %2943 = vmatprep.mubr.f32.mxu0 %v1993
        %2944 = vmatmul.mubr.f32.gmra.mrb[0].mxu0 %v1991
        %v2945 = vpop.f32.mrb[0].mxu0
        %v2946 = vadd.f32 0.0, %v2945
        %v2947 = vpop.f32.mrb[0].mxu0
        %v2948 = vadd.f32 0.0, %v2947
        %2949 = vmatprep.mubr.f32.mxu0 %v1999
        %2950 = vmatmul.mubr.f32.gmra.mrb[0].mxu0 %v1997
        %v2951 = vpop.f32.mrb[0].mxu0
        %v2952 = vadd.f32 0.0, %v2951
        %v2953 = vpop.f32.mrb[0].mxu0
        %v2954 = vadd.f32 0.0, %v2953
        %2955 = vmatprep.mubr.f32.mxu0 %v2005
        %2956 = vmatmul.mubr.f32.gmra.mrb[0].mxu0 %v2003
        %v2957 = vpop.f32.mrb[0].mxu0
        %v2958 = vadd.f32 0.0, %v2957
        %v2959 = vpop.f32.mrb[0].mxu0
        %v2960 = vadd.f32 0.0, %v2959
        %2961 = vmatprep.mubr.f32.mxu0 %v2011
        %2962 = vmatmul.mubr.f32.gmra.mrb[0].mxu0 %v2009
        %v2963 = vpop.f32.mrb[0].mxu0
        %v2964 = vadd.f32 0.0, %v2963
        %v2965 = vpop.f32.mrb[0].mxu0
        %v2966 = vadd.f32 0.0, %v2965
        %2967 = vmatprep.mubr.f32.mxu0 %v2017
        %2968 = vmatmul.mubr.f32.gmra.mrb[0].mxu0 %v2015
        %v2969 = vpop.f32.mrb[0].mxu0
        %v2970 = vadd.f32 0.0, %v2969
        %v2971 = vpop.f32.mrb[0].mxu0
        %v2972 = vadd.f32 0.0, %v2971
        %2973 = vmatprep.mubr.f32.mxu0 %v2023
        %2974 = vmatmul.mubr.f32.gmra.mrb[0].mxu0 %v2021
        %v2975 = vpop.f32.mrb[0].mxu0
        %v2976 = vadd.f32 0.0, %v2975
        %v2977 = vpop.f32.mrb[0].mxu0
        %v2978 = vadd.f32 0.0, %v2977
        %2979 = vmatprep.mubr.f32.mxu0 %v2029
        %2980 = vmatmul.mubr.f32.gmra.mrb[0].mxu0 %v2027
        %v2981 = vpop.f32.mrb[0].mxu0
        %v2982 = vadd.f32 0.0, %v2981
        %v2983 = vpop.f32.mrb[0].mxu0
        %v2984 = vadd.f32 0.0, %v2983
        %2985 = vmatprep.mubr.f32.mxu0 %v2035
        %2986 = vmatmul.mubr.f32.gmra.mrb[0].mxu0 %v2033
        %v2987 = vpop.f32.mrb[0].mxu0
        %v2988 = vadd.f32 0.0, %v2987
        %v2989 = vpop.f32.mrb[0].mxu0
        %v2990 = vadd.f32 0.0, %v2989
        %2991 = vmatprep.mubr.f32.mxu0 %v2041
        %2992 = vmatmul.mubr.f32.gmra.mrb[0].mxu0 %v2039
        %v2993 = vpop.f32.mrb[0].mxu0
        %v2994 = vadd.f32 0.0, %v2993
        %v2995 = vpop.f32.mrb[0].mxu0
        %v2996 = vadd.f32 0.0, %v2995
        %2997 = vdwg.mxu0
        %2998 = vmatprep.subr.mxu0 %v1101
        %2999 = vmatpush1.msra.mxu0 %v1100
        %3000 = vmatprep.subr.mxu0 %v1103
        %3001 = vmatpush1.msra.mxu0 %v1102
        %3002 = vmatprep.subr.mxu0 %v1105
        %3003 = vmatpush1.msra.mxu0 %v1104
        %3004 = vmatprep.subr.mxu0 %v1107
        %3005 = vmatpush1.msra.mxu0 %v1106
        %3006 = vmatprep.subr.mxu0 %v1109
        %3007 = vmatpush1.msra.mxu0 %v1108
        %3008 = vmatprep.subr.mxu0 %v1111
        %3009 = vmatpush1.msra.mxu0 %v1110
        %3010 = vmatprep.subr.mxu0 %v1113
        %3011 = vmatpush1.msra.mxu0 %v1112
        %3012 = vmatprep.subr.mxu0 %v1115
        %3013 = vmatpush1.msra.mxu0 %v1114
        %3014 = vmatprep.subr.mxu0 %v1117
        %3015 = vmatpush1.msra.mxu0 %v1116
        %3016 = vmatprep.subr.mxu0 %v1119
        %3017 = vmatpush1.msra.mxu0 %v1118
        %3018 = vmatprep.subr.mxu0 %v1121
        %3019 = vmatpush1.msra.mxu0 %v1120
        %3020 = vmatprep.subr.mxu0 %v1123
        %3021 = vmatpush1.msra.mxu0 %v1122
        %3022 = vmatprep.subr.mxu0 %v1125
        %3023 = vmatpush1.msra.mxu0 %v1124
        %3024 = vmatprep.subr.mxu0 %v1127
        %3025 = vmatpush1.msra.mxu0 %v1126
        %3026 = vmatprep.subr.mxu0 %v1129
        %3027 = vmatpush1.msra.mxu0 %v1128
        %3028 = vmatprep.subr.mxu0 %v1131
        %3029 = vmatpush1.msra.mxu0 %v1130
        %3030 = vmatprep.subr.mxu0 %v1133
        %3031 = vmatpush1.msra.mxu0 %v1132
        %3032 = vmatprep.subr.mxu0 %v1135
        %3033 = vmatpush1.msra.mxu0 %v1134
        %3034 = vmatprep.subr.mxu0 %v1137
        %3035 = vmatpush1.msra.mxu0 %v1136
        %3036 = vmatprep.subr.mxu0 %v1139
        %3037 = vmatpush1.msra.mxu0 %v1138
        %3038 = vmatprep.subr.mxu0 %v1141
        %3039 = vmatpush1.msra.mxu0 %v1140
        %3040 = vmatprep.subr.mxu0 %v1143
        %3041 = vmatpush1.msra.mxu0 %v1142
        %3042 = vmatprep.subr.mxu0 %v1145
        %3043 = vmatpush1.msra.mxu0 %v1144
        %3044 = vmatprep.subr.mxu0 %v1147
        %3045 = vmatpush1.msra.mxu0 %v1146
        %3046 = vmatprep.subr.mxu0 %v1149
        %3047 = vmatpush1.msra.mxu0 %v1148
        %3048 = vmatprep.subr.mxu0 %v1151
        %3049 = vmatpush1.msra.mxu0 %v1150
        %3050 = vmatprep.subr.mxu0 %v1153
        %3051 = vmatpush1.msra.mxu0 %v1152
        %3052 = vmatprep.subr.mxu0 %v1155
        %3053 = vmatpush1.msra.mxu0 %v1154
        %3054 = vmatprep.subr.mxu0 %v1157
        %3055 = vmatpush1.msra.mxu0 %v1156
        %3056 = vmatprep.subr.mxu0 %v1159
        %3057 = vmatpush1.msra.mxu0 %v1158
        %3058 = vmatprep.subr.mxu0 %v1161
        %3059 = vmatpush1.msra.mxu0 %v1160
        %3060 = vmatprep.subr.mxu0 %v1163
        %3061 = vmatpush1.msra.mxu0 %v1162
        %3062 = vmatprep.mubr.f32.mxu0 %v2112
        %3063 = vmatmul.mubr.f32.gmra.mrb[0].mxu0 %v2110
        %v3064 = vpop.f32.mrb[0].mxu0
        %v3065 = vadd.f32 0.0, %v3064
        %v3066 = vpop.f32.mrb[0].mxu0
        %v3067 = vadd.f32 0.0, %v3066
        %3068 = vmatprep.mubr.f32.mxu0 %v2118
        %3069 = vmatmul.mubr.f32.gmra.mrb[0].mxu0 %v2116
        %v3070 = vpop.f32.mrb[0].mxu0
        %v3071 = vadd.f32 0.0, %v3070
        %v3072 = vpop.f32.mrb[0].mxu0
        %v3073 = vadd.f32 0.0, %v3072
        %3074 = vmatprep.mubr.f32.mxu0 %v2124
        %3075 = vmatmul.mubr.f32.gmra.mrb[0].mxu0 %v2122
        %v3076 = vpop.f32.mrb[0].mxu0
        %v3077 = vadd.f32 0.0, %v3076
        %v3078 = vpop.f32.mrb[0].mxu0
        %v3079 = vadd.f32 0.0, %v3078
        %3080 = vmatprep.mubr.f32.mxu0 %v2130
        %3081 = vmatmul.mubr.f32.gmra.mrb[0].mxu0 %v2128
        %v3082 = vpop.f32.mrb[0].mxu0
        %v3083 = vadd.f32 0.0, %v3082
        %v3084 = vpop.f32.mrb[0].mxu0
        %v3085 = vadd.f32 0.0, %v3084
        %3086 = vmatprep.mubr.f32.mxu0 %v2136
        %3087 = vmatmul.mubr.f32.gmra.mrb[0].mxu0 %v2134
        %v3088 = vpop.f32.mrb[0].mxu0
        %v3089 = vadd.f32 0.0, %v3088
        %v3090 = vpop.f32.mrb[0].mxu0
        %v3091 = vadd.f32 0.0, %v3090
        %3092 = vmatprep.mubr.f32.mxu0 %v2142
        %3093 = vmatmul.mubr.f32.gmra.mrb[0].mxu0 %v2140
        %v3094 = vpop.f32.mrb[0].mxu0
        %v3095 = vadd.f32 0.0, %v3094
        %v3096 = vpop.f32.mrb[0].mxu0
        %v3097 = vadd.f32 0.0, %v3096
        %3098 = vmatprep.mubr.f32.mxu0 %v2148
        %3099 = vmatmul.mubr.f32.gmra.mrb[0].mxu0 %v2146
        %v3100 = vpop.f32.mrb[0].mxu0
        %v3101 = vadd.f32 0.0, %v3100
        %v3102 = vpop.f32.mrb[0].mxu0
        %v3103 = vadd.f32 0.0, %v3102
        %3104 = vmatprep.mubr.f32.mxu0 %v2154
        %3105 = vmatmul.mubr.f32.gmra.mrb[0].mxu0 %v2152
        %v3106 = vpop.f32.mrb[0].mxu0
        %v3107 = vadd.f32 0.0, %v3106
        %v3108 = vpop.f32.mrb[0].mxu0
        %v3109 = vadd.f32 0.0, %v3108
        %3110 = vmatprep.mubr.f32.mxu0 %v2160
        %3111 = vmatmul.mubr.f32.gmra.mrb[0].mxu0 %v2158
        %v3112 = vpop.f32.mrb[0].mxu0
        %v3113 = vadd.f32 0.0, %v3112
        %v3114 = vpop.f32.mrb[0].mxu0
        %v3115 = vadd.f32 0.0, %v3114
        %3116 = vmatprep.mubr.f32.mxu0 %v2166
        %3117 = vmatmul.mubr.f32.gmra.mrb[0].mxu0 %v2164
        %v3118 = vpop.f32.mrb[0].mxu0
        %v3119 = vadd.f32 0.0, %v3118
        %v3120 = vpop.f32.mrb[0].mxu0
        %v3121 = vadd.f32 0.0, %v3120
        %3122 = vmatprep.mubr.f32.mxu0 %v2172
        %3123 = vmatmul.mubr.f32.gmra.mrb[0].mxu0 %v2170
        %v3124 = vpop.f32.mrb[0].mxu0
        %v3125 = vadd.f32 0.0, %v3124
        %v3126 = vpop.f32.mrb[0].mxu0
        %v3127 = vadd.f32 0.0, %v3126
        %3128 = vmatprep.mubr.f32.mxu0 %v2178
        %3129 = vmatmul.mubr.f32.gmra.mrb[0].mxu0 %v2176
        %v3130 = vpop.f32.mrb[0].mxu0
        %v3131 = vadd.f32 0.0, %v3130
        %v3132 = vpop.f32.mrb[0].mxu0
        %v3133 = vadd.f32 0.0, %v3132
        %3134 = vmatprep.mubr.f32.mxu0 %v2184
        %3135 = vmatmul.mubr.f32.gmra.mrb[0].mxu0 %v2182
        %v3136 = vpop.f32.mrb[0].mxu0
        %v3137 = vadd.f32 0.0, %v3136
        %v3138 = vpop.f32.mrb[0].mxu0
        %v3139 = vadd.f32 0.0, %v3138
        %3140 = vmatprep.mubr.f32.mxu0 %v2190
        %3141 = vmatmul.mubr.f32.gmra.mrb[0].mxu0 %v2188
        %v3142 = vpop.f32.mrb[0].mxu0
        %v3143 = vadd.f32 0.0, %v3142
        %v3144 = vpop.f32.mrb[0].mxu0
        %v3145 = vadd.f32 0.0, %v3144
        %3146 = vmatprep.mubr.f32.mxu0 %v2196
        %3147 = vmatmul.mubr.f32.gmra.mrb[0].mxu0 %v2194
        %v3148 = vpop.f32.mrb[0].mxu0
        %v3149 = vadd.f32 0.0, %v3148
        %v3150 = vpop.f32.mrb[0].mxu0
        %v3151 = vadd.f32 0.0, %v3150
        %3152 = vmatprep.mubr.f32.mxu0 %v2202
        %3153 = vmatmul.mubr.f32.gmra.mrb[0].mxu0 %v2200
        %v3154 = vpop.f32.mrb[0].mxu0
        %v3155 = vadd.f32 0.0, %v3154
        %v3156 = vpop.f32.mrb[0].mxu0
        %v3157 = vadd.f32 0.0, %v3156
        %3158 = vmatprep.mubr.f32.mxu0 %v2208
        %3159 = vmatmul.mubr.f32.gmra.mrb[0].mxu0 %v2206
        %v3160 = vpop.f32.mrb[0].mxu0
        %v3161 = vadd.f32 0.0, %v3160
        %v3162 = vpop.f32.mrb[0].mxu0
        %v3163 = vadd.f32 0.0, %v3162
        %3164 = vmatprep.mubr.f32.mxu0 %v2214
        %3165 = vmatmul.mubr.f32.gmra.mrb[0].mxu0 %v2212
        %v3166 = vpop.f32.mrb[0].mxu0
        %v3167 = vadd.f32 0.0, %v3166
        %v3168 = vpop.f32.mrb[0].mxu0
        %v3169 = vadd.f32 0.0, %v3168
        %3170 = vmatprep.mubr.f32.mxu0 %v2220
        %3171 = vmatmul.mubr.f32.gmra.mrb[0].mxu0 %v2218
        %v3172 = vpop.f32.mrb[0].mxu0
        %v3173 = vadd.f32 0.0, %v3172
        %v3174 = vpop.f32.mrb[0].mxu0
        %v3175 = vadd.f32 0.0, %v3174
        %3176 = vmatprep.mubr.f32.mxu0 %v2226
        %3177 = vmatmul.mubr.f32.gmra.mrb[0].mxu0 %v2224
        %v3178 = vpop.f32.mrb[0].mxu0
        %v3179 = vadd.f32 0.0, %v3178
        %v3180 = vpop.f32.mrb[0].mxu0
        %v3181 = vadd.f32 0.0, %v3180
        %3182 = vmatprep.mubr.f32.mxu0 %v2232
        %3183 = vmatmul.mubr.f32.gmra.mrb[0].mxu0 %v2230
        %v3184 = vpop.f32.mrb[0].mxu0
        %v3185 = vadd.f32 0.0, %v3184
        %v3186 = vpop.f32.mrb[0].mxu0
        %v3187 = vadd.f32 0.0, %v3186
        %3188 = vdwg.mxu0
        %3189 = vmatprep.subr.mxu0 %v1101
        %3190 = vmatpush1.msra.mxu0 %v1100
        %3191 = vmatprep.subr.mxu0 %v1103
        %3192 = vmatpush1.msra.mxu0 %v1102
        %3193 = vmatprep.subr.mxu0 %v1105
        %3194 = vmatpush1.msra.mxu0 %v1104
        %3195 = vmatprep.subr.mxu0 %v1107
        %3196 = vmatpush1.msra.mxu0 %v1106
        %3197 = vmatprep.subr.mxu0 %v1109
        %3198 = vmatpush1.msra.mxu0 %v1108
        %3199 = vmatprep.subr.mxu0 %v1111
        %3200 = vmatpush1.msra.mxu0 %v1110
        %3201 = vmatprep.subr.mxu0 %v1113
        %3202 = vmatpush1.msra.mxu0 %v1112
        %3203 = vmatprep.subr.mxu0 %v1115
        %3204 = vmatpush1.msra.mxu0 %v1114
        %3205 = vmatprep.subr.mxu0 %v1117
        %3206 = vmatpush1.msra.mxu0 %v1116
        %3207 = vmatprep.subr.mxu0 %v1119
        %3208 = vmatpush1.msra.mxu0 %v1118
        %3209 = vmatprep.subr.mxu0 %v1121
        %3210 = vmatpush1.msra.mxu0 %v1120
        %3211 = vmatprep.subr.mxu0 %v1123
        %3212 = vmatpush1.msra.mxu0 %v1122
        %3213 = vmatprep.subr.mxu0 %v1125
        %3214 = vmatpush1.msra.mxu0 %v1124
        %3215 = vmatprep.subr.mxu0 %v1127
        %3216 = vmatpush1.msra.mxu0 %v1126
        %3217 = vmatprep.subr.mxu0 %v1129
        %3218 = vmatpush1.msra.mxu0 %v1128
        %3219 = vmatprep.subr.mxu0 %v1131
        %3220 = vmatpush1.msra.mxu0 %v1130
        %3221 = vmatprep.subr.mxu0 %v1133
        %3222 = vmatpush1.msra.mxu0 %v1132
        %3223 = vmatprep.subr.mxu0 %v1135
        %3224 = vmatpush1.msra.mxu0 %v1134
        %3225 = vmatprep.subr.mxu0 %v1137
        %3226 = vmatpush1.msra.mxu0 %v1136
        %3227 = vmatprep.subr.mxu0 %v1139
        %3228 = vmatpush1.msra.mxu0 %v1138
        %3229 = vmatprep.subr.mxu0 %v1141
        %3230 = vmatpush1.msra.mxu0 %v1140
        %3231 = vmatprep.subr.mxu0 %v1143
        %3232 = vmatpush1.msra.mxu0 %v1142
        %3233 = vmatprep.subr.mxu0 %v1145
        %3234 = vmatpush1.msra.mxu0 %v1144
        %3235 = vmatprep.subr.mxu0 %v1147
        %3236 = vmatpush1.msra.mxu0 %v1146
        %3237 = vmatprep.subr.mxu0 %v1149
        %3238 = vmatpush1.msra.mxu0 %v1148
        %3239 = vmatprep.subr.mxu0 %v1151
        %3240 = vmatpush1.msra.mxu0 %v1150
        %3241 = vmatprep.subr.mxu0 %v1153
        %3242 = vmatpush1.msra.mxu0 %v1152
        %3243 = vmatprep.subr.mxu0 %v1155
        %3244 = vmatpush1.msra.mxu0 %v1154
        %3245 = vmatprep.subr.mxu0 %v1157
        %3246 = vmatpush1.msra.mxu0 %v1156
        %3247 = vmatprep.subr.mxu0 %v1159
        %3248 = vmatpush1.msra.mxu0 %v1158
        %3249 = vmatprep.subr.mxu0 %v1161
        %3250 = vmatpush1.msra.mxu0 %v1160
        %3251 = vmatprep.subr.mxu0 %v1163
        %3252 = vmatpush1.msra.mxu0 %v1162
        %3253 = vmatprep.mubr.f32.mxu0 %v2303
        %3254 = vmatmul.mubr.f32.gmra.mrb[0].mxu0 %v2301
        %v3255 = vpop.f32.mrb[0].mxu0
        %v3256 = vadd.f32 0.0, %v3255
        %v3257 = vpop.f32.mrb[0].mxu0
        %v3258 = vadd.f32 0.0, %v3257
        %3259 = vmatprep.mubr.f32.mxu0 %v2309
        %3260 = vmatmul.mubr.f32.gmra.mrb[0].mxu0 %v2307
        %v3261 = vpop.f32.mrb[0].mxu0
        %v3262 = vadd.f32 0.0, %v3261
        %v3263 = vpop.f32.mrb[0].mxu0
        %v3264 = vadd.f32 0.0, %v3263
        %3265 = vmatprep.mubr.f32.mxu0 %v2315
        %3266 = vmatmul.mubr.f32.gmra.mrb[0].mxu0 %v2313
        %v3267 = vpop.f32.mrb[0].mxu0
        %v3268 = vadd.f32 0.0, %v3267
        %v3269 = vpop.f32.mrb[0].mxu0
        %v3270 = vadd.f32 0.0, %v3269
        %3271 = vmatprep.mubr.f32.mxu0 %v2321
        %3272 = vmatmul.mubr.f32.gmra.mrb[0].mxu0 %v2319
        %v3273 = vpop.f32.mrb[0].mxu0
        %v3274 = vadd.f32 0.0, %v3273
        %v3275 = vpop.f32.mrb[0].mxu0
        %v3276 = vadd.f32 0.0, %v3275
        %3277 = vmatprep.mubr.f32.mxu0 %v2327
        %3278 = vmatmul.mubr.f32.gmra.mrb[0].mxu0 %v2325
        %v3279 = vpop.f32.mrb[0].mxu0
        %v3280 = vadd.f32 0.0, %v3279
        %v3281 = vpop.f32.mrb[0].mxu0
        %v3282 = vadd.f32 0.0, %v3281
        %3283 = vmatprep.mubr.f32.mxu0 %v2333
        %3284 = vmatmul.mubr.f32.gmra.mrb[0].mxu0 %v2331
        %v3285 = vpop.f32.mrb[0].mxu0
        %v3286 = vadd.f32 0.0, %v3285
        %v3287 = vpop.f32.mrb[0].mxu0
        %v3288 = vadd.f32 0.0, %v3287
        %3289 = vmatprep.mubr.f32.mxu0 %v2339
        %3290 = vmatmul.mubr.f32.gmra.mrb[0].mxu0 %v2337
        %v3291 = vpop.f32.mrb[0].mxu0
        %v3292 = vadd.f32 0.0, %v3291
        %v3293 = vpop.f32.mrb[0].mxu0
        %v3294 = vadd.f32 0.0, %v3293
        %3295 = vmatprep.mubr.f32.mxu0 %v2345
        %3296 = vmatmul.mubr.f32.gmra.mrb[0].mxu0 %v2343
        %v3297 = vpop.f32.mrb[0].mxu0
        %v3298 = vadd.f32 0.0, %v3297
        %v3299 = vpop.f32.mrb[0].mxu0
        %v3300 = vadd.f32 0.0, %v3299
        %3301 = vmatprep.mubr.f32.mxu0 %v2351
        %3302 = vmatmul.mubr.f32.gmra.mrb[0].mxu0 %v2349
        %v3303 = vpop.f32.mrb[0].mxu0
        %v3304 = vadd.f32 0.0, %v3303
        %v3305 = vpop.f32.mrb[0].mxu0
        %v3306 = vadd.f32 0.0, %v3305
        %3307 = vmatprep.mubr.f32.mxu0 %v2357
        %3308 = vmatmul.mubr.f32.gmra.mrb[0].mxu0 %v2355
        %v3309 = vpop.f32.mrb[0].mxu0
        %v3310 = vadd.f32 0.0, %v3309
        %v3311 = vpop.f32.mrb[0].mxu0
        %v3312 = vadd.f32 0.0, %v3311
        %3313 = vmatprep.mubr.f32.mxu0 %v2363
        %3314 = vmatmul.mubr.f32.gmra.mrb[0].mxu0 %v2361
        %v3315 = vpop.f32.mrb[0].mxu0
        %v3316 = vadd.f32 0.0, %v3315
        %v3317 = vpop.f32.mrb[0].mxu0
        %v3318 = vadd.f32 0.0, %v3317
        %3319 = vmatprep.mubr.f32.mxu0 %v2369
        %3320 = vmatmul.mubr.f32.gmra.mrb[0].mxu0 %v2367
        %v3321 = vpop.f32.mrb[0].mxu0
        %v3322 = vadd.f32 0.0, %v3321
        %v3323 = vpop.f32.mrb[0].mxu0
        %v3324 = vadd.f32 0.0, %v3323
        %3325 = vmatprep.mubr.f32.mxu0 %v2375
        %3326 = vmatmul.mubr.f32.gmra.mrb[0].mxu0 %v2373
        %v3327 = vpop.f32.mrb[0].mxu0
        %v3328 = vadd.f32 0.0, %v3327
        %v3329 = vpop.f32.mrb[0].mxu0
        %v3330 = vadd.f32 0.0, %v3329
        %3331 = vmatprep.mubr.f32.mxu0 %v2381
        %3332 = vmatmul.mubr.f32.gmra.mrb[0].mxu0 %v2379
        %v3333 = vpop.f32.mrb[0].mxu0
        %v3334 = vadd.f32 0.0, %v3333
        %v3335 = vpop.f32.mrb[0].mxu0
        %v3336 = vadd.f32 0.0, %v3335
        %3337 = vmatprep.mubr.f32.mxu0 %v2387
        %3338 = vmatmul.mubr.f32.gmra.mrb[0].mxu0 %v2385
        %v3339 = vpop.f32.mrb[0].mxu0
        %v3340 = vadd.f32 0.0, %v3339
        %v3341 = vpop.f32.mrb[0].mxu0
        %v3342 = vadd.f32 0.0, %v3341
        %3343 = vmatprep.mubr.f32.mxu0 %v2393
        %3344 = vmatmul.mubr.f32.gmra.mrb[0].mxu0 %v2391
        %v3345 = vpop.f32.mrb[0].mxu0
        %v3346 = vadd.f32 0.0, %v3345
        %v3347 = vpop.f32.mrb[0].mxu0
        %v3348 = vadd.f32 0.0, %v3347
        %3349 = vmatprep.mubr.f32.mxu0 %v2399
        %3350 = vmatmul.mubr.f32.gmra.mrb[0].mxu0 %v2397
        %v3351 = vpop.f32.mrb[0].mxu0
        %v3352 = vadd.f32 0.0, %v3351
        %v3353 = vpop.f32.mrb[0].mxu0
        %v3354 = vadd.f32 0.0, %v3353
        %3355 = vmatprep.mubr.f32.mxu0 %v2405
        %3356 = vmatmul.mubr.f32.gmra.mrb[0].mxu0 %v2403
        %v3357 = vpop.f32.mrb[0].mxu0
        %v3358 = vadd.f32 0.0, %v3357
        %v3359 = vpop.f32.mrb[0].mxu0
        %v3360 = vadd.f32 0.0, %v3359
        %3361 = vmatprep.mubr.f32.mxu0 %v2411
        %3362 = vmatmul.mubr.f32.gmra.mrb[0].mxu0 %v2409
        %v3363 = vpop.f32.mrb[0].mxu0
        %v3364 = vadd.f32 0.0, %v3363
        %v3365 = vpop.f32.mrb[0].mxu0
        %v3366 = vadd.f32 0.0, %v3365
        %3367 = vmatprep.mubr.f32.mxu0 %v2417
        %3368 = vmatmul.mubr.f32.gmra.mrb[0].mxu0 %v2415
        %v3369 = vpop.f32.mrb[0].mxu0
        %v3370 = vadd.f32 0.0, %v3369
        %v3371 = vpop.f32.mrb[0].mxu0
        %v3372 = vadd.f32 0.0, %v3371
        %3373 = vmatprep.mubr.f32.mxu0 %v2423
        %3374 = vmatmul.mubr.f32.gmra.mrb[0].mxu0 %v2421
        %v3375 = vpop.f32.mrb[0].mxu0
        %v3376 = vadd.f32 0.0, %v3375
        %v3377 = vpop.f32.mrb[0].mxu0
        %v3378 = vadd.f32 0.0, %v3377
        %3379 = vdwg.mxu0
        %v3380 = vmul.f32 %v2492, %v2492
        %v3381 = vmul.f32 %v2494, %v2494
        %v3382 = vmul.f32 %v2498, %v2498
        %v3383 = vmul.f32 %v2500, %v2500
        %v3384 = vmul.f32 %v2504, %v2504
        %v3385 = vmul.f32 %v2506, %v2506
        %v3386 = vmul.f32 %v2510, %v2510
        %v3387 = vmul.f32 %v2512, %v2512
        %v3388 = vmul.f32 %v2516, %v2516
        %v3389 = vmul.f32 %v2518, %v2518
        %v3390 = vmul.f32 %v2522, %v2522
        %v3391 = vmul.f32 %v2524, %v2524
        %v3392 = vmul.f32 %v2528, %v2528
        %v3393 = vmul.f32 %v2530, %v2530
        %v3394 = vmul.f32 %v2534, %v2534
        %v3395 = vmul.f32 %v2536, %v2536
        %v3396 = vmul.f32 %v2540, %v2540
        %v3397 = vmul.f32 %v2542, %v2542
        %v3398 = vmul.f32 %v2546, %v2546
        %v3399 = vmul.f32 %v2548, %v2548
        %v3400 = vmul.f32 %v2552, %v2552
        %v3401 = vmul.f32 %v2554, %v2554
        %v3402 = vmul.f32 %v2558, %v2558
        %v3403 = vmul.f32 %v2560, %v2560
        %v3404 = vmul.f32 %v2564, %v2564
        %v3405 = vmul.f32 %v2566, %v2566
        %v3406 = vmul.f32 %v2570, %v2570
        %v3407 = vmul.f32 %v2572, %v2572
        %v3408 = vmul.f32 %v2576, %v2576
        %v3409 = vmul.f32 %v2578, %v2578
        %v3410 = vmul.f32 %v2582, %v2582
        %v3411 = vmul.f32 %v2584, %v2584
        %v3412 = vmul.f32 %v2588, %v2588
        %v3413 = vmul.f32 %v2590, %v2590
        %v3414 = vmul.f32 %v2594, %v2594
        %v3415 = vmul.f32 %v2596, %v2596
        %v3416 = vmul.f32 %v2600, %v2600
        %v3417 = vmul.f32 %v2602, %v2602
        %v3418 = vmul.f32 %v2606, %v2606
        %v3419 = vmul.f32 %v2608, %v2608
        %v3420 = vmul.f32 %v2612, %v2612
        %v3421 = vmul.f32 %v2614, %v2614
        %v3422 = vmul.f32 %v2683, %v2683
        %v3423 = vmul.f32 %v2685, %v2685
        %v3424 = vmul.f32 %v2689, %v2689
        %v3425 = vmul.f32 %v2691, %v2691
        %v3426 = vmul.f32 %v2695, %v2695
        %v3427 = vmul.f32 %v2697, %v2697
        %v3428 = vmul.f32 %v2701, %v2701
        %v3429 = vmul.f32 %v2703, %v2703
        %v3430 = vmul.f32 %v2707, %v2707
        %v3431 = vmul.f32 %v2709, %v2709
        %v3432 = vmul.f32 %v2713, %v2713
        %v3433 = vmul.f32 %v2715, %v2715
        %v3434 = vmul.f32 %v2719, %v2719
        %v3435 = vmul.f32 %v2721, %v2721
        %v3436 = vmul.f32 %v2725, %v2725
        %v3437 = vmul.f32 %v2727, %v2727
        %v3438 = vmul.f32 %v2731, %v2731
        %v3439 = vmul.f32 %v2733, %v2733
        %v3440 = vmul.f32 %v2737, %v2737
        %v3441 = vmul.f32 %v2739, %v2739
        %v3442 = vmul.f32 %v2743, %v2743
        %v3443 = vmul.f32 %v2745, %v2745
        %v3444 = vmul.f32 %v2749, %v2749
        %v3445 = vmul.f32 %v2751, %v2751
        %v3446 = vmul.f32 %v2755, %v2755
        %v3447 = vmul.f32 %v2757, %v2757
        %v3448 = vmul.f32 %v2761, %v2761
        %v3449 = vmul.f32 %v2763, %v2763
        %v3450 = vmul.f32 %v2767, %v2767
        %v3451 = vmul.f32 %v2769, %v2769
        %v3452 = vmul.f32 %v2773, %v2773
        %v3453 = vmul.f32 %v2775, %v2775
        %v3454 = vmul.f32 %v2779, %v2779
        %v3455 = vmul.f32 %v2781, %v2781
        %v3456 = vmul.f32 %v2785, %v2785
        %v3457 = vmul.f32 %v2787, %v2787
        %v3458 = vmul.f32 %v2791, %v2791
        %v3459 = vmul.f32 %v2793, %v2793
        %v3460 = vmul.f32 %v2797, %v2797
        %v3461 = vmul.f32 %v2799, %v2799
        %v3462 = vmul.f32 %v2803, %v2803
        %v3463 = vmul.f32 %v2805, %v2805
        %v3464 = vmul.f32 %v2492, %v2683
        %v3465 = vmul.f32 %v2494, %v2685
        %v3466 = vmul.f32 %v2498, %v2689
        %v3467 = vmul.f32 %v2500, %v2691
        %v3468 = vmul.f32 %v2504, %v2695
        %v3469 = vmul.f32 %v2506, %v2697
        %v3470 = vmul.f32 %v2510, %v2701
        %v3471 = vmul.f32 %v2512, %v2703
        %v3472 = vmul.f32 %v2516, %v2707
        %v3473 = vmul.f32 %v2518, %v2709
        %v3474 = vmul.f32 %v2522, %v2713
        %v3475 = vmul.f32 %v2524, %v2715
        %v3476 = vmul.f32 %v2528, %v2719
        %v3477 = vmul.f32 %v2530, %v2721
        %v3478 = vmul.f32 %v2534, %v2725
        %v3479 = vmul.f32 %v2536, %v2727
        %v3480 = vmul.f32 %v2540, %v2731
        %v3481 = vmul.f32 %v2542, %v2733
        %v3482 = vmul.f32 %v2546, %v2737
        %v3483 = vmul.f32 %v2548, %v2739
        %v3484 = vmul.f32 %v2552, %v2743
        %v3485 = vmul.f32 %v2554, %v2745
        %v3486 = vmul.f32 %v2558, %v2749
        %v3487 = vmul.f32 %v2560, %v2751
        %v3488 = vmul.f32 %v2564, %v2755
        %v3489 = vmul.f32 %v2566, %v2757
        %v3490 = vmul.f32 %v2570, %v2761
        %v3491 = vmul.f32 %v2572, %v2763
        %v3492 = vmul.f32 %v2576, %v2767
        %v3493 = vmul.f32 %v2578, %v2769
        %v3494 = vmul.f32 %v2582, %v2773
        %v3495 = vmul.f32 %v2584, %v2775
        %v3496 = vmul.f32 %v2588, %v2779
        %v3497 = vmul.f32 %v2590, %v2781
        %v3498 = vmul.f32 %v2594, %v2785
        %v3499 = vmul.f32 %v2596, %v2787
        %v3500 = vmul.f32 %v2600, %v2791
        %v3501 = vmul.f32 %v2602, %v2793
        %v3502 = vmul.f32 %v2606, %v2797
        %v3503 = vmul.f32 %v2608, %v2799
        %v3504 = vmul.f32 %v2612, %v2803
        %v3505 = vmul.f32 %v2614, %v2805
        %v3506 = vsub.f32 %v2874, %v3380
        %v3507 = vsub.f32 %v2876, %v3381
        %v3508 = vsub.f32 %v2880, %v3382
        %v3509 = vsub.f32 %v2882, %v3383
        %v3510 = vsub.f32 %v2886, %v3384
        %v3511 = vsub.f32 %v2888, %v3385
        %v3512 = vsub.f32 %v2892, %v3386
        %v3513 = vsub.f32 %v2894, %v3387
        %v3514 = vsub.f32 %v2898, %v3388
        %v3515 = vsub.f32 %v2900, %v3389
        %v3516 = vsub.f32 %v2904, %v3390
        %v3517 = vsub.f32 %v2906, %v3391
        %v3518 = vsub.f32 %v2910, %v3392
        %v3519 = vsub.f32 %v2912, %v3393
        %v3520 = vsub.f32 %v2916, %v3394
        %v3521 = vsub.f32 %v2918, %v3395
        %v3522 = vsub.f32 %v2922, %v3396
        %v3523 = vsub.f32 %v2924, %v3397
        %v3524 = vsub.f32 %v2928, %v3398
        %v3525 = vsub.f32 %v2930, %v3399
        %v3526 = vsub.f32 %v2934, %v3400
        %v3527 = vsub.f32 %v2936, %v3401
        %v3528 = vsub.f32 %v2940, %v3402
        %v3529 = vsub.f32 %v2942, %v3403
        %v3530 = vsub.f32 %v2946, %v3404
        %v3531 = vsub.f32 %v2948, %v3405
        %v3532 = vsub.f32 %v2952, %v3406
        %v3533 = vsub.f32 %v2954, %v3407
        %v3534 = vsub.f32 %v2958, %v3408
        %v3535 = vsub.f32 %v2960, %v3409
        %v3536 = vsub.f32 %v2964, %v3410
        %v3537 = vsub.f32 %v2966, %v3411
        %v3538 = vsub.f32 %v2970, %v3412
        %v3539 = vsub.f32 %v2972, %v3413
        %v3540 = vsub.f32 %v2976, %v3414
        %v3541 = vsub.f32 %v2978, %v3415
        %v3542 = vsub.f32 %v2982, %v3416
        %v3543 = vsub.f32 %v2984, %v3417
        %v3544 = vsub.f32 %v2988, %v3418
        %v3545 = vsub.f32 %v2990, %v3419
        %v3546 = vsub.f32 %v2994, %v3420
        %v3547 = vsub.f32 %v2996, %v3421
        %v3548 = vsub.f32 %v3065, %v3422
        %v3549 = vsub.f32 %v3067, %v3423
        %v3550 = vsub.f32 %v3071, %v3424
        %v3551 = vsub.f32 %v3073, %v3425
        %v3552 = vsub.f32 %v3077, %v3426
        %v3553 = vsub.f32 %v3079, %v3427
        %v3554 = vsub.f32 %v3083, %v3428
        %v3555 = vsub.f32 %v3085, %v3429
        %v3556 = vsub.f32 %v3089, %v3430
        %v3557 = vsub.f32 %v3091, %v3431
        %v3558 = vsub.f32 %v3095, %v3432
        %v3559 = vsub.f32 %v3097, %v3433
        %v3560 = vsub.f32 %v3101, %v3434
        %v3561 = vsub.f32 %v3103, %v3435
        %v3562 = vsub.f32 %v3107, %v3436
        %v3563 = vsub.f32 %v3109, %v3437
        %v3564 = vsub.f32 %v3113, %v3438
        %v3565 = vsub.f32 %v3115, %v3439
        %v3566 = vsub.f32 %v3119, %v3440
        %v3567 = vsub.f32 %v3121, %v3441
        %v3568 = vsub.f32 %v3125, %v3442
        %v3569 = vsub.f32 %v3127, %v3443
        %v3570 = vsub.f32 %v3131, %v3444
        %v3571 = vsub.f32 %v3133, %v3445
        %v3572 = vsub.f32 %v3137, %v3446
        %v3573 = vsub.f32 %v3139, %v3447
        %v3574 = vsub.f32 %v3143, %v3448
        %v3575 = vsub.f32 %v3145, %v3449
        %v3576 = vsub.f32 %v3149, %v3450
        %v3577 = vsub.f32 %v3151, %v3451
        %v3578 = vsub.f32 %v3155, %v3452
        %v3579 = vsub.f32 %v3157, %v3453
        %v3580 = vsub.f32 %v3161, %v3454
        %v3581 = vsub.f32 %v3163, %v3455
        %v3582 = vsub.f32 %v3167, %v3456
        %v3583 = vsub.f32 %v3169, %v3457
        %v3584 = vsub.f32 %v3173, %v3458
        %v3585 = vsub.f32 %v3175, %v3459
        %v3586 = vsub.f32 %v3179, %v3460
        %v3587 = vsub.f32 %v3181, %v3461
        %v3588 = vsub.f32 %v3185, %v3462
        %v3589 = vsub.f32 %v3187, %v3463
        %v3590 = vsub.f32 %v3256, %v3464
        %v3591 = vsub.f32 %v3258, %v3465
        %v3592 = vsub.f32 %v3262, %v3466
        %v3593 = vsub.f32 %v3264, %v3467
        %v3594 = vsub.f32 %v3268, %v3468
        %v3595 = vsub.f32 %v3270, %v3469
        %v3596 = vsub.f32 %v3274, %v3470
        %v3597 = vsub.f32 %v3276, %v3471
        %v3598 = vsub.f32 %v3280, %v3472
        %v3599 = vsub.f32 %v3282, %v3473
        %v3600 = vsub.f32 %v3286, %v3474
        %v3601 = vsub.f32 %v3288, %v3475
        %v3602 = vsub.f32 %v3292, %v3476
        %v3603 = vsub.f32 %v3294, %v3477
        %v3604 = vsub.f32 %v3298, %v3478
        %v3605 = vsub.f32 %v3300, %v3479
        %v3606 = vsub.f32 %v3304, %v3480
        %v3607 = vsub.f32 %v3306, %v3481
        %v3608 = vsub.f32 %v3310, %v3482
        %v3609 = vsub.f32 %v3312, %v3483
        %v3610 = vsub.f32 %v3316, %v3484
        %v3611 = vsub.f32 %v3318, %v3485
        %v3612 = vsub.f32 %v3322, %v3486
        %v3613 = vsub.f32 %v3324, %v3487
        %v3614 = vsub.f32 %v3328, %v3488
        %v3615 = vsub.f32 %v3330, %v3489
        %v3616 = vsub.f32 %v3334, %v3490
        %v3617 = vsub.f32 %v3336, %v3491
        %v3618 = vsub.f32 %v3340, %v3492
        %v3619 = vsub.f32 %v3342, %v3493
        %v3620 = vsub.f32 %v3346, %v3494
        %v3621 = vsub.f32 %v3348, %v3495
        %v3622 = vsub.f32 %v3352, %v3496
        %v3623 = vsub.f32 %v3354, %v3497
        %v3624 = vsub.f32 %v3358, %v3498
        %v3625 = vsub.f32 %v3360, %v3499
        %v3626 = vsub.f32 %v3364, %v3500
        %v3627 = vsub.f32 %v3366, %v3501
        %v3628 = vsub.f32 %v3370, %v3502
        %v3629 = vsub.f32 %v3372, %v3503
        %v3630 = vsub.f32 %v3376, %v3504
        %v3631 = vsub.f32 %v3378, %v3505
        %v3632 = vmul.f32 %v3590, 2.0
        %v3633 = vmul.f32 %v3591, 2.0
        %v3634 = vmul.f32 %v3592, 2.0
        %v3635 = vmul.f32 %v3593, 2.0
        %v3636 = vmul.f32 %v3594, 2.0
        %v3637 = vmul.f32 %v3595, 2.0
        %v3638 = vmul.f32 %v3596, 2.0
        %v3639 = vmul.f32 %v3597, 2.0
        %v3640 = vmul.f32 %v3598, 2.0
        %v3641 = vmul.f32 %v3599, 2.0
        %v3642 = vmul.f32 %v3600, 2.0
        %v3643 = vmul.f32 %v3601, 2.0
        %v3644 = vmul.f32 %v3602, 2.0
        %v3645 = vmul.f32 %v3603, 2.0
        %v3646 = vmul.f32 %v3604, 2.0
        %v3647 = vmul.f32 %v3605, 2.0
        %v3648 = vmul.f32 %v3606, 2.0
        %v3649 = vmul.f32 %v3607, 2.0
        %v3650 = vmul.f32 %v3608, 2.0
        %v3651 = vmul.f32 %v3609, 2.0
        %v3652 = vmul.f32 %v3610, 2.0
        %v3653 = vmul.f32 %v3611, 2.0
        %v3654 = vmul.f32 %v3612, 2.0
        %v3655 = vmul.f32 %v3613, 2.0
        %v3656 = vmul.f32 %v3614, 2.0
        %v3657 = vmul.f32 %v3615, 2.0
        %v3658 = vmul.f32 %v3616, 2.0
        %v3659 = vmul.f32 %v3617, 2.0
        %v3660 = vmul.f32 %v3618, 2.0
        %v3661 = vmul.f32 %v3619, 2.0
        %v3662 = vmul.f32 %v3620, 2.0
        %v3663 = vmul.f32 %v3621, 2.0
        %v3664 = vmul.f32 %v3622, 2.0
        %v3665 = vmul.f32 %v3623, 2.0
        %v3666 = vmul.f32 %v3624, 2.0
        %v3667 = vmul.f32 %v3625, 2.0
        %v3668 = vmul.f32 %v3626, 2.0
        %v3669 = vmul.f32 %v3627, 2.0
        %v3670 = vmul.f32 %v3628, 2.0
        %v3671 = vmul.f32 %v3629, 2.0
        %v3672 = vmul.f32 %v3630, 2.0
        %v3673 = vmul.f32 %v3631, 2.0
        %v3674 = vadd.f32 %v3632, 0.0009
        %v3675 = vadd.f32 %v3633, 0.0009
        %v3676 = vadd.f32 %v3634, 0.0009
        %v3677 = vadd.f32 %v3635, 0.0009
        %v3678 = vadd.f32 %v3636, 0.0009
        %v3679 = vadd.f32 %v3637, 0.0009
        %v3680 = vadd.f32 %v3638, 0.0009
        %v3681 = vadd.f32 %v3639, 0.0009
        %v3682 = vadd.f32 %v3640, 0.0009
        %v3683 = vadd.f32 %v3641, 0.0009
        %v3684 = vadd.f32 %v3642, 0.0009
        %v3685 = vadd.f32 %v3643, 0.0009
        %v3686 = vadd.f32 %v3644, 0.0009
        %v3687 = vadd.f32 %v3645, 0.0009
        %v3688 = vadd.f32 %v3646, 0.0009
        %v3689 = vadd.f32 %v3647, 0.0009
        %v3690 = vadd.f32 %v3648, 0.0009
        %v3691 = vadd.f32 %v3649, 0.0009
        %v3692 = vadd.f32 %v3650, 0.0009
        %v3693 = vadd.f32 %v3651, 0.0009
        %v3694 = vadd.f32 %v3652, 0.0009
        %v3695 = vadd.f32 %v3653, 0.0009
        %v3696 = vadd.f32 %v3654, 0.0009
        %v3697 = vadd.f32 %v3655, 0.0009
        %v3698 = vadd.f32 %v3656, 0.0009
        %v3699 = vadd.f32 %v3657, 0.0009
        %v3700 = vadd.f32 %v3658, 0.0009
        %v3701 = vadd.f32 %v3659, 0.0009
        %v3702 = vadd.f32 %v3660, 0.0009
        %v3703 = vadd.f32 %v3661, 0.0009
        %v3704 = vadd.f32 %v3662, 0.0009
        %v3705 = vadd.f32 %v3663, 0.0009
        %v3706 = vadd.f32 %v3664, 0.0009
        %v3707 = vadd.f32 %v3665, 0.0009
        %v3708 = vadd.f32 %v3666, 0.0009
        %v3709 = vadd.f32 %v3667, 0.0009
        %v3710 = vadd.f32 %v3668, 0.0009
        %v3711 = vadd.f32 %v3669, 0.0009
        %v3712 = vadd.f32 %v3670, 0.0009
        %v3713 = vadd.f32 %v3671, 0.0009
        %v3714 = vadd.f32 %v3672, 0.0009
        %v3715 = vadd.f32 %v3673, 0.0009
        %v3716 = vadd.f32 %v3506, %v3548
        %v3717 = vadd.f32 %v3507, %v3549
        %v3718 = vadd.f32 %v3508, %v3550
        %v3719 = vadd.f32 %v3509, %v3551
        %v3720 = vadd.f32 %v3510, %v3552
        %v3721 = vadd.f32 %v3511, %v3553
        %v3722 = vadd.f32 %v3512, %v3554
        %v3723 = vadd.f32 %v3513, %v3555
        %v3724 = vadd.f32 %v3514, %v3556
        %v3725 = vadd.f32 %v3515, %v3557
        %v3726 = vadd.f32 %v3516, %v3558
        %v3727 = vadd.f32 %v3517, %v3559
        %v3728 = vadd.f32 %v3518, %v3560
        %v3729 = vadd.f32 %v3519, %v3561
        %v3730 = vadd.f32 %v3520, %v3562
        %v3731 = vadd.f32 %v3521, %v3563
        %v3732 = vadd.f32 %v3522, %v3564
        %v3733 = vadd.f32 %v3523, %v3565
        %v3734 = vadd.f32 %v3524, %v3566
        %v3735 = vadd.f32 %v3525, %v3567
        %v3736 = vadd.f32 %v3526, %v3568
        %v3737 = vadd.f32 %v3527, %v3569
        %v3738 = vadd.f32 %v3528, %v3570
        %v3739 = vadd.f32 %v3529, %v3571
        %v3740 = vadd.f32 %v3530, %v3572
        %v3741 = vadd.f32 %v3531, %v3573
        %v3742 = vadd.f32 %v3532, %v3574
        %v3743 = vadd.f32 %v3533, %v3575
        %v3744 = vadd.f32 %v3534, %v3576
        %v3745 = vadd.f32 %v3535, %v3577
        %v3746 = vadd.f32 %v3536, %v3578
        %v3747 = vadd.f32 %v3537, %v3579
        %v3748 = vadd.f32 %v3538, %v3580
        %v3749 = vadd.f32 %v3539, %v3581
        %v3750 = vadd.f32 %v3540, %v3582
        %v3751 = vadd.f32 %v3541, %v3583
        %v3752 = vadd.f32 %v3542, %v3584
        %v3753 = vadd.f32 %v3543, %v3585
        %v3754 = vadd.f32 %v3544, %v3586
        %v3755 = vadd.f32 %v3545, %v3587
        %v3756 = vadd.f32 %v3546, %v3588
        %v3757 = vadd.f32 %v3547, %v3589
        %v3758 = vadd.f32 %v3716, 0.0009
        %v3759 = vadd.f32 %v3717, 0.0009
        %v3760 = vadd.f32 %v3718, 0.0009
        %v3761 = vadd.f32 %v3719, 0.0009
        %v3762 = vadd.f32 %v3720, 0.0009
        %v3763 = vadd.f32 %v3721, 0.0009
        %v3764 = vadd.f32 %v3722, 0.0009
        %v3765 = vadd.f32 %v3723, 0.0009
        %v3766 = vadd.f32 %v3724, 0.0009
        %v3767 = vadd.f32 %v3725, 0.0009
        %v3768 = vadd.f32 %v3726, 0.0009
        %v3769 = vadd.f32 %v3727, 0.0009
        %v3770 = vadd.f32 %v3728, 0.0009
        %v3771 = vadd.f32 %v3729, 0.0009
        %v3772 = vadd.f32 %v3730, 0.0009
        %v3773 = vadd.f32 %v3731, 0.0009
        %v3774 = vadd.f32 %v3732, 0.0009
        %v3775 = vadd.f32 %v3733, 0.0009
        %v3776 = vadd.f32 %v3734, 0.0009
        %v3777 = vadd.f32 %v3735, 0.0009
        %v3778 = vadd.f32 %v3736, 0.0009
        %v3779 = vadd.f32 %v3737, 0.0009
        %v3780 = vadd.f32 %v3738, 0.0009
        %v3781 = vadd.f32 %v3739, 0.0009
        %v3782 = vadd.f32 %v3740, 0.0009
        %v3783 = vadd.f32 %v3741, 0.0009
        %v3784 = vadd.f32 %v3742, 0.0009
        %v3785 = vadd.f32 %v3743, 0.0009
        %v3786 = vadd.f32 %v3744, 0.0009
        %v3787 = vadd.f32 %v3745, 0.0009
        %v3788 = vadd.f32 %v3746, 0.0009
        %v3789 = vadd.f32 %v3747, 0.0009
        %v3790 = vadd.f32 %v3748, 0.0009
        %v3791 = vadd.f32 %v3749, 0.0009
        %v3792 = vadd.f32 %v3750, 0.0009
        %v3793 = vadd.f32 %v3751, 0.0009
        %v3794 = vadd.f32 %v3752, 0.0009
        %v3795 = vadd.f32 %v3753, 0.0009
        %v3796 = vadd.f32 %v3754, 0.0009
        %v3797 = vadd.f32 %v3755, 0.0009
        %v3798 = vadd.f32 %v3756, 0.0009
        %v3799 = vadd.f32 %v3757, 0.0009
        %v3800 = vrcp.pop %v3758
        %v3801 = vrcp.pop %v3759
        %v3802 = vrcp.pop %v3760
        %v3803 = vrcp.pop %v3761
        %v3804 = vrcp.pop %v3762
        %v3805 = vrcp.pop %v3763
        %v3806 = vrcp.pop %v3764
        %v3807 = vrcp.pop %v3765
        %v3808 = vrcp.pop %v3766
        %v3809 = vrcp.pop %v3767
        %v3810 = vrcp.pop %v3768
        %v3811 = vrcp.pop %v3769
        %v3812 = vrcp.pop %v3770
        %v3813 = vrcp.pop %v3771
        %v3814 = vrcp.pop %v3772
        %v3815 = vrcp.pop %v3773
        %v3816 = vrcp.pop %v3774
        %v3817 = vrcp.pop %v3775
        %v3818 = vrcp.pop %v3776
        %v3819 = vrcp.pop %v3777
        %v3820 = vrcp.pop %v3778
        %v3821 = vrcp.pop %v3779
        %v3822 = vrcp.pop %v3780
        %v3823 = vrcp.pop %v3781
        %v3824 = vrcp.pop %v3782
        %v3825 = vrcp.pop %v3783
        %v3826 = vrcp.pop %v3784
        %v3827 = vrcp.pop %v3785
        %v3828 = vrcp.pop %v3786
        %v3829 = vrcp.pop %v3787
        %v3830 = vrcp.pop %v3788
        %v3831 = vrcp.pop %v3789
        %v3832 = vrcp.pop %v3790
        %v3833 = vrcp.pop %v3791
        %v3834 = vrcp.pop %v3792
        %v3835 = vrcp.pop %v3793
        %v3836 = vrcp.pop %v3794
        %v3837 = vrcp.pop %v3795
        %v3838 = vrcp.pop %v3796
        %v3839 = vrcp.pop %v3797
        %v3840 = vrcp.pop %v3798
        %v3841 = vrcp.pop %v3799
        %v3842 = vmul.f32 %v3674, %v3800
        %v3843 = vmul.f32 %v3675, %v3801
        %v3844 = vmul.f32 %v3676, %v3802
        %v3845 = vmul.f32 %v3677, %v3803
        %v3846 = vmul.f32 %v3678, %v3804
        %v3847 = vmul.f32 %v3679, %v3805
        %v3848 = vmul.f32 %v3680, %v3806
        %v3849 = vmul.f32 %v3681, %v3807
        %v3850 = vmul.f32 %v3682, %v3808
        %v3851 = vmul.f32 %v3683, %v3809
        %v3852 = vmul.f32 %v3684, %v3810
        %v3853 = vmul.f32 %v3685, %v3811
        %v3854 = vmul.f32 %v3686, %v3812
        %v3855 = vmul.f32 %v3687, %v3813
        %v3856 = vmul.f32 %v3688, %v3814
        %v3857 = vmul.f32 %v3689, %v3815
        %v3858 = vmul.f32 %v3690, %v3816
        %v3859 = vmul.f32 %v3691, %v3817
        %v3860 = vmul.f32 %v3692, %v3818
        %v3861 = vmul.f32 %v3693, %v3819
        %v3862 = vmul.f32 %v3694, %v3820
        %v3863 = vmul.f32 %v3695, %v3821
        %v3864 = vmul.f32 %v3696, %v3822
        %v3865 = vmul.f32 %v3697, %v3823
        %v3866 = vmul.f32 %v3698, %v3824
        %v3867 = vmul.f32 %v3699, %v3825
        %v3868 = vmul.f32 %v3700, %v3826
        %v3869 = vmul.f32 %v3701, %v3827
        %v3870 = vmul.f32 %v3702, %v3828
        %v3871 = vmul.f32 %v3703, %v3829
        %v3872 = vmul.f32 %v3704, %v3830
        %v3873 = vmul.f32 %v3705, %v3831
        %v3874 = vmul.f32 %v3706, %v3832
        %v3875 = vmul.f32 %v3707, %v3833
        %v3876 = vmul.f32 %v3708, %v3834
        %v3877 = vmul.f32 %v3709, %v3835
        %v3878 = vmul.f32 %v3710, %v3836
        %v3879 = vmul.f32 %v3711, %v3837
        %v3880 = vmul.f32 %v3712, %v3838
        %v3881 = vmul.f32 %v3713, %v3839
        %v3882 = vmul.f32 %v3714, %v3840
        %v3883 = vmul.f32 %v3715, %v3841
        %vm3884 = vcmask 310272
        %v3885 = vsel %vm3884, %v3843, 0.0
        %v3886 = vadd.f32 %v3842, %v3885
        %v3887 = vadd.f32 %v3886, %v3844
        %v3888 = vsel %vm3884, %v3845, 0.0
        %v3889 = vadd.f32 %v3887, %v3888
        %v3890 = vadd.f32 %v3889, %v3846
        %v3891 = vsel %vm3884, %v3847, 0.0
        %v3892 = vadd.f32 %v3890, %v3891
        %v3893 = vadd.f32 %v3892, %v3848
        %v3894 = vsel %vm3884, %v3849, 0.0
        %v3895 = vadd.f32 %v3893, %v3894
        %v3896 = vadd.f32 %v3895, %v3850
        %v3897 = vsel %vm3884, %v3851, 0.0
        %v3898 = vadd.f32 %v3896, %v3897
        %v3899 = vadd.f32 %v3898, %v3852
        %v3900 = vsel %vm3884, %v3853, 0.0
        %v3901 = vadd.f32 %v3899, %v3900
        %v3902 = vadd.f32 %v3901, %v3854
        %v3903 = vsel %vm3884, %v3855, 0.0
        %v3904 = vadd.f32 %v3902, %v3903
        %v3905 = vadd.f32 %v3904, %v3856
        %v3906 = vsel %vm3884, %v3857, 0.0
        %v3907 = vadd.f32 %v3905, %v3906
        %v3908 = vadd.f32 %v3907, %v3858
        %v3909 = vsel %vm3884, %v3859, 0.0
        %v3910 = vadd.f32 %v3908, %v3909
        %v3911 = vadd.f32 %v3910, %v3860
        %v3912 = vsel %vm3884, %v3861, 0.0
        %v3913 = vadd.f32 %v3911, %v3912
        %v3914 = vadd.f32 %v3913, %v3862
        %v3915 = vsel %vm3884, %v3863, 0.0
        %v3916 = vadd.f32 %v3914, %v3915
        %v3917 = vadd.f32 %v3916, %v3864
        %v3918 = vsel %vm3884, %v3865, 0.0
        %v3919 = vadd.f32 %v3917, %v3918
        %v3920 = vadd.f32 %v3919, %v3866
        %v3921 = vsel %vm3884, %v3867, 0.0
        %v3922 = vadd.f32 %v3920, %v3921
        %v3923 = vadd.f32 %v3922, %v3868
        %v3924 = vsel %vm3884, %v3869, 0.0
        %v3925 = vadd.f32 %v3923, %v3924
        %v3926 = vadd.f32 %v3925, %v3870
        %v3927 = vsel %vm3884, %v3871, 0.0
        %v3928 = vadd.f32 %v3926, %v3927
        %v3929 = vadd.f32 %v3928, %v3872
        %v3930 = vsel %vm3884, %v3873, 0.0
        %v3931 = vadd.f32 %v3929, %v3930
        %v3932 = vadd.f32 %v3931, %v3874
        %v3933 = vsel %vm3884, %v3875, 0.0
        %v3934 = vadd.f32 %v3932, %v3933
        %v3935 = vadd.f32 %v3934, %v3876
        %v3936 = vsel %vm3884, %v3877, 0.0
        %v3937 = vadd.f32 %v3935, %v3936
        %v3938 = vadd.f32 %v3937, %v3878
        %v3939 = vsel %vm3884, %v3879, 0.0
        %v3940 = vadd.f32 %v3938, %v3939
        %v3941 = vadd.f32 %v3940, %v3880
        %v3942 = vsel %vm3884, %v3881, 0.0
        %v3943 = vadd.f32 %v3941, %v3942
        %vm3944 = vcmask 1045504
        %v3945 = vsel %vm3944, %v3882, 0.0
        %v3946 = vadd.f32 %v3943, %v3945
        %vm3947 = vcmask 308224
        %v3948 = vsel %vm3947, %v3883, 0.0
        %v3949 = vadd.f32 %v3946, %v3948
        %3950 = vadd.xlane.f32.xlu0 %v3949
        %v3951 = vpop.xlane.xlu0 %3950
        %v3952 = vrot.slane %v3951, 4
        %v3953 = vadd.f32 %v3951, %v3952
        %v3954 = vrot.slane %v3953, 2
        %v3955 = vadd.f32 %v3953, %v3954
        %v3956 = vrot.slane %v3955, 1
        %v3957 = vadd.f32 %v3955, %v3956
        %s3958 = vtos %v3957
        %s3959 = smul.f32 %s3958, 3.6289737e-05
        %v3960 = vld [vmem:[#allocation6] sm:$0xff]
        %v3961 = vld [vmem:[#allocation6 + $0x8] sm:$0xff]
        %v3962 = vld [vmem:[#allocation6 + $0x10] sm:$0xff]
        %v3963 = vld [vmem:[#allocation6 + $0x18] sm:$0xff]
        %v3964 = vld [vmem:[#allocation6 + $0x20] sm:$0xff]
        %v3965 = vld [vmem:[#allocation6 + $0x28] sm:$0xff]
        %v3966 = vld [vmem:[#allocation6 + $0x30] sm:$0xff]
        %v3967 = vld [vmem:[#allocation6 + $0x38] sm:$0xff]
        %v3968 = vld [vmem:[#allocation6 + $0x40] sm:$0xff]
        %v3969 = vld [vmem:[#allocation6 + $0x48] sm:$0xff]
        %v3970 = vld [vmem:[#allocation6 + $0x50] sm:$0xff]
        %v3971 = vld [vmem:[#allocation6 + $0x58] sm:$0xff]
        %v3972 = vld [vmem:[#allocation6 + $0x60] sm:$0xff]
        %v3973 = vld [vmem:[#allocation6 + $0x68] sm:$0xff]
        %v3974 = vld [vmem:[#allocation6 + $0x70] sm:$0xff]
        %v3975 = vld [vmem:[#allocation6 + $0x78] sm:$0xff]
        %v3976 = vld [vmem:[#allocation6 + $0x80] sm:$0xff]
        %v3977 = vld [vmem:[#allocation6 + $0x88] sm:$0xff]
        %v3978 = vld [vmem:[#allocation6 + $0x90] sm:$0xff]
        %v3979 = vld [vmem:[#allocation6 + $0x98] sm:$0xff]
        %v3980 = vld [vmem:[#allocation6 + $0xa0] sm:$0xff]
        %v3981 = vld [vmem:[#allocation6 + $0xa8] sm:$0xff]
        %v3982 = vld [vmem:[#allocation7] sm:$0xff]
        %v3983 = vld [vmem:[#allocation7 + $0x8] sm:$0xff]
        %v3984 = vld [vmem:[#allocation7 + $0x10] sm:$0xff]
        %v3985 = vld [vmem:[#allocation7 + $0x18] sm:$0xff]
        %v3986 = vld [vmem:[#allocation7 + $0x20] sm:$0xff]
        %v3987 = vld [vmem:[#allocation7 + $0x28] sm:$0xff]
        %v3988 = vld [vmem:[#allocation7 + $0x30] sm:$0xff]
        %v3989 = vld [vmem:[#allocation7 + $0x38] sm:$0xff]
        %v3990 = vld [vmem:[#allocation7 + $0x40] sm:$0xff]
        %v3991 = vld [vmem:[#allocation7 + $0x48] sm:$0xff]
        %v3992 = vld [vmem:[#allocation7 + $0x50] sm:$0xff]
        %v3993 = vld [vmem:[#allocation7 + $0x58] sm:$0xff]
        %v3994 = vld [vmem:[#allocation7 + $0x60] sm:$0xff]
        %v3995 = vld [vmem:[#allocation7 + $0x68] sm:$0xff]
        %v3996 = vld [vmem:[#allocation7 + $0x70] sm:$0xff]
        %v3997 = vld [vmem:[#allocation7 + $0x78] sm:$0xff]
        %v3998 = vld [vmem:[#allocation7 + $0x80] sm:$0xff]
        %v3999 = vld [vmem:[#allocation7 + $0x88] sm:$0xff]
        %v4000 = vld [vmem:[#allocation7 + $0x90] sm:$0xff]
        %v4001 = vld [vmem:[#allocation7 + $0x98] sm:$0xff]
        %v4002 = vld [vmem:[#allocation7 + $0xa0] sm:$0xff]
        %v4003 = vld [vmem:[#allocation7 + $0xa8] sm:$0xff]
        %v4004 = vld [vmem:[#allocation7 + $0xb0] sm:$0xff]
        %v4005 = vld [vmem:[#allocation7 + $0xb8] sm:$0xff]
        %v4006 = vld [vmem:[#allocation7 + $0xc0] sm:$0xff]
        %v4007 = vld [vmem:[#allocation7 + $0xc8] sm:$0xff]
        %v4008 = vld [vmem:[#allocation7 + $0xd0] sm:$0xff]
        %v4009 = vld [vmem:[#allocation7 + $0xd8] sm:$0xff]
        %v4010 = vld [vmem:[#allocation7 + $0xe0] sm:$0xff]
        %v4011 = vld [vmem:[#allocation7 + $0xe8] sm:$0xff]
        %v4012 = vld [vmem:[#allocation7 + $0xf0] sm:$0xff]
        %v4013 = vld [vmem:[#allocation7 + $0xf8] sm:$0xff]
        %v4015 = vsel %vm1296, %v3961, 0
        %v4018 = vsel %vm1296, %v3963, 0
        %v4021 = vsel %vm1296, %v3965, 0
        %v4024 = vsel %vm1296, %v3967, 0
        %v4027 = vsel %vm1296, %v3969, 0
        %v4030 = vsel %vm1296, %v3971, 0
        %v4033 = vsel %vm1296, %v3973, 0
        %v4036 = vsel %vm1296, %v3975, 0
        %v4039 = vsel %vm1296, %v3977, 0
        %v4042 = vsel %vm1296, %v3979, 0
        %v4045 = vsel %vm1296, %v3981, 0
        %4047 = vmatprep.subr.mxu0 %v1297
        %4048 = vmatpush1.msra.mxu0 %v970
        %4049 = vmatprep.subr.mxu0 %v1298
        %4050 = vmatpush1.msra.mxu0 %v972
        %4051 = vmatprep.subr.mxu0 %v1299
        %4052 = vmatpush1.msra.mxu0 %v974
        %4053 = vmatprep.subr.mxu0 %v1300
        %4054 = vmatpush1.msra.mxu0 %v976
        %4055 = vmatprep.subr.mxu0 %v1301
        %4056 = vmatpush1.msra.mxu0 %v978
        %4057 = vmatprep.subr.mxu0 %v1302
        %4058 = vmatpush1.msra.mxu0 %v980
        %4059 = vmatprep.subr.mxu0 %v1303
        %4060 = vmatpush1.msra.mxu0 %v982
        %4061 = vmatprep.subr.mxu0 %v1304
        %4062 = vmatpush1.msra.mxu0 %v984
        %4063 = vmatprep.subr.mxu0 %v1305
        %4064 = vmatpush1.msra.mxu0 %v986
        %4065 = vmatprep.subr.mxu0 %v1306
        %4066 = vmatpush1.msra.mxu0 %v988
        %4067 = vmatprep.subr.mxu0 %v1307
        %4068 = vmatpush1.msra.mxu0 %v990
        %4069 = vmatprep.subr.mxu0 %v1308
        %4070 = vmatpush1.msra.mxu0 %v992
        %4071 = vmatprep.subr.mxu0 %v1309
        %4072 = vmatpush1.msra.mxu0 %v994
        %4073 = vmatprep.subr.mxu0 %v1310
        %4074 = vmatpush1.msra.mxu0 %v996
        %4075 = vmatprep.subr.mxu0 %v1311
        %4076 = vmatpush1.msra.mxu0 %v998
        %4077 = vmatprep.subr.mxu0 %v1312
        %4078 = vmatpush1.msra.mxu0 %v1000
        %4079 = vmatprep.subr.mxu0 %v1313
        %4080 = vmatpush1.msra.mxu0 %v1002
        %4081 = vmatprep.subr.mxu0 %v1314
        %4082 = vmatpush1.msra.mxu0 %v1004
        %4083 = vmatprep.subr.mxu0 %v1315
        %4084 = vmatpush1.msra.mxu0 %v1006
        %4085 = vmatprep.subr.mxu0 %v1316
        %4086 = vmatpush1.msra.mxu0 %v1008
        %4087 = vmatprep.subr.mxu0 %v1317
        %4088 = vmatpush1.msra.mxu0 %v1010
        %4089 = vmatprep.subr.mxu0 %v1318
        %4090 = vmatpush1.msra.mxu0 %v1012
        %4091 = vmatprep.subr.mxu0 0.0
        %4092 = vmatpush1.msra.mxu0 0.0
        %4093 = vmatprep.subr.mxu0 0.0
        %4094 = vmatpush1.msra.mxu0 0.0
        %4095 = vmatprep.subr.mxu0 0.0
        %4096 = vmatpush1.msra.mxu0 0.0
        %4097 = vmatprep.subr.mxu0 0.0
        %4098 = vmatpush1.msra.mxu0 0.0
        %4099 = vmatprep.subr.mxu0 0.0
        %4100 = vmatpush1.msra.mxu0 0.0
        %4101 = vmatprep.subr.mxu0 0.0
        %4102 = vmatpush1.msra.mxu0 0.0
        %4103 = vmatprep.subr.mxu0 0.0
        %4104 = vmatpush1.msra.mxu0 0.0
        %4105 = vmatprep.subr.mxu0 0.0
        %4106 = vmatpush1.msra.mxu0 0.0
        %4107 = vmatprep.subr.mxu0 0.0
        %4108 = vmatpush1.msra.mxu0 0.0
        %4109 = vmatprep.subr.mxu0 0.0
        %4110 = vmatpush1.msra.mxu0 0.0
        %4111 = vmatprep.mubr.f32.mxu0 %v4015
        %4112 = vmatmul.mubr.f32.gmra.mrb[0].mxu0 %v3960
        %v4113 = vpop.f32.mrb[0].mxu0
        %v4114 = vadd.f32 0.0, %v4113
        %v4115 = vpop.f32.mrb[0].mxu0
        %v4116 = vadd.f32 0.0, %v4115
        %4117 = vmatprep.mubr.f32.mxu0 %v4018
        %4118 = vmatmul.mubr.f32.gmra.mrb[0].mxu0 %v3962
        %v4119 = vpop.f32.mrb[0].mxu0
        %v4120 = vadd.f32 0.0, %v4119
        %v4121 = vpop.f32.mrb[0].mxu0
        %v4122 = vadd.f32 0.0, %v4121
        %4123 = vmatprep.mubr.f32.mxu0 %v4021
        %4124 = vmatmul.mubr.f32.gmra.mrb[0].mxu0 %v3964
        %v4125 = vpop.f32.mrb[0].mxu0
        %v4126 = vadd.f32 0.0, %v4125
        %v4127 = vpop.f32.mrb[0].mxu0
        %v4128 = vadd.f32 0.0, %v4127
        %4129 = vmatprep.mubr.f32.mxu0 %v4024
        %4130 = vmatmul.mubr.f32.gmra.mrb[0].mxu0 %v3966
        %v4131 = vpop.f32.mrb[0].mxu0
        %v4132 = vadd.f32 0.0, %v4131
        %v4133 = vpop.f32.mrb[0].mxu0
        %v4134 = vadd.f32 0.0, %v4133
        %4135 = vmatprep.mubr.f32.mxu0 %v4027
        %4136 = vmatmul.mubr.f32.gmra.mrb[0].mxu0 %v3968
        %v4137 = vpop.f32.mrb[0].mxu0
        %v4138 = vadd.f32 0.0, %v4137
        %v4139 = vpop.f32.mrb[0].mxu0
        %v4140 = vadd.f32 0.0, %v4139
        %4141 = vmatprep.mubr.f32.mxu0 %v4030
        %4142 = vmatmul.mubr.f32.gmra.mrb[0].mxu0 %v3970
        %v4143 = vpop.f32.mrb[0].mxu0
        %v4144 = vadd.f32 0.0, %v4143
        %v4145 = vpop.f32.mrb[0].mxu0
        %v4146 = vadd.f32 0.0, %v4145
        %4147 = vmatprep.mubr.f32.mxu0 %v4033
        %4148 = vmatmul.mubr.f32.gmra.mrb[0].mxu0 %v3972
        %v4149 = vpop.f32.mrb[0].mxu0
        %v4150 = vadd.f32 0.0, %v4149
        %v4151 = vpop.f32.mrb[0].mxu0
        %v4152 = vadd.f32 0.0, %v4151
        %4153 = vmatprep.mubr.f32.mxu0 %v4036
        %4154 = vmatmul.mubr.f32.gmra.mrb[0].mxu0 %v3974
        %v4155 = vpop.f32.mrb[0].mxu0
        %v4156 = vadd.f32 0.0, %v4155
        %v4157 = vpop.f32.mrb[0].mxu0
        %v4158 = vadd.f32 0.0, %v4157
        %4159 = vmatprep.mubr.f32.mxu0 %v4039
        %4160 = vmatmul.mubr.f32.gmra.mrb[0].mxu0 %v3976
        %v4161 = vpop.f32.mrb[0].mxu0
        %v4162 = vadd.f32 0.0, %v4161
        %v4163 = vpop.f32.mrb[0].mxu0
        %v4164 = vadd.f32 0.0, %v4163
        %4165 = vmatprep.mubr.f32.mxu0 %v4042
        %4166 = vmatmul.mubr.f32.gmra.mrb[0].mxu0 %v3978
        %v4167 = vpop.f32.mrb[0].mxu0
        %v4168 = vadd.f32 0.0, %v4167
        %v4169 = vpop.f32.mrb[0].mxu0
        %v4170 = vadd.f32 0.0, %v4169
        %4171 = vmatprep.mubr.f32.mxu0 %v4045
        %4172 = vmatmul.mubr.f32.gmra.mrb[0].mxu0 %v3980
        %v4173 = vpop.f32.mrb[0].mxu0
        %v4174 = vadd.f32 0.0, %v4173
        %v4175 = vpop.f32.mrb[0].mxu0
        %v4176 = vadd.f32 0.0, %v4175
        %4177 = vdwg.mxu0
        %4178 = vmatprep.subr.mxu0 %v1319
        %4179 = vmatpush1.msra.mxu0 %v1014
        %4180 = vmatprep.subr.mxu0 %v1320
        %4181 = vmatpush1.msra.mxu0 %v1016
        %4182 = vmatprep.subr.mxu0 %v1321
        %4183 = vmatpush1.msra.mxu0 %v1018
        %4184 = vmatprep.subr.mxu0 %v1322
        %4185 = vmatpush1.msra.mxu0 %v1020
        %4186 = vmatprep.subr.mxu0 %v1323
        %4187 = vmatpush1.msra.mxu0 %v1022
        %4188 = vmatprep.subr.mxu0 %v1324
        %4189 = vmatpush1.msra.mxu0 %v1024
        %4190 = vmatprep.subr.mxu0 %v1325
        %4191 = vmatpush1.msra.mxu0 %v1026
        %4192 = vmatprep.subr.mxu0 %v1326
        %4193 = vmatpush1.msra.mxu0 %v1028
        %4194 = vmatprep.subr.mxu0 %v1327
        %4195 = vmatpush1.msra.mxu0 %v1030
        %4196 = vmatprep.subr.mxu0 %v1328
        %4197 = vmatpush1.msra.mxu0 %v1032
        %4198 = vmatprep.subr.mxu0 %v1329
        %4199 = vmatpush1.msra.mxu0 %v1034
        %4200 = vmatprep.subr.mxu0 %v1330
        %4201 = vmatpush1.msra.mxu0 %v1036
        %4202 = vmatprep.subr.mxu0 %v1331
        %4203 = vmatpush1.msra.mxu0 %v1038
        %4204 = vmatprep.subr.mxu0 %v1332
        %4205 = vmatpush1.msra.mxu0 %v1040
        %4206 = vmatprep.subr.mxu0 %v1333
        %4207 = vmatpush1.msra.mxu0 %v1042
        %4208 = vmatprep.subr.mxu0 %v1334
        %4209 = vmatpush1.msra.mxu0 %v1044
        %4210 = vmatprep.subr.mxu0 %v1335
        %4211 = vmatpush1.msra.mxu0 %v1046
        %4212 = vmatprep.subr.mxu0 %v1336
        %4213 = vmatpush1.msra.mxu0 %v1048
        %4214 = vmatprep.subr.mxu0 %v1337
        %4215 = vmatpush1.msra.mxu0 %v1050
        %4216 = vmatprep.subr.mxu0 %v1338
        %4217 = vmatpush1.msra.mxu0 %v1052
        %4218 = vmatprep.subr.mxu0 %v1339
        %4219 = vmatpush1.msra.mxu0 %v1054
        %4220 = vmatprep.subr.mxu0 %v1340
        %4221 = vmatpush1.msra.mxu0 %v1056
        %4222 = vmatprep.subr.mxu0 0.0
        %4223 = vmatpush1.msra.mxu0 0.0
        %4224 = vmatprep.subr.mxu0 0.0
        %4225 = vmatpush1.msra.mxu0 0.0
        %4226 = vmatprep.subr.mxu0 0.0
        %4227 = vmatpush1.msra.mxu0 0.0
        %4228 = vmatprep.subr.mxu0 0.0
        %4229 = vmatpush1.msra.mxu0 0.0
        %4230 = vmatprep.subr.mxu0 0.0
        %4231 = vmatpush1.msra.mxu0 0.0
        %4232 = vmatprep.subr.mxu0 0.0
        %4233 = vmatpush1.msra.mxu0 0.0
        %4234 = vmatprep.subr.mxu0 0.0
        %4235 = vmatpush1.msra.mxu0 0.0
        %4236 = vmatprep.subr.mxu0 0.0
        %4237 = vmatpush1.msra.mxu0 0.0
        %4238 = vmatprep.subr.mxu0 0.0
        %4239 = vmatpush1.msra.mxu0 0.0
        %4240 = vmatprep.subr.mxu0 0.0
        %4241 = vmatpush1.msra.mxu0 0.0
        %4242 = vmatprep.mubr.f32.mxu0 %v4015
        %4243 = vmatmul.mubr.f32.gmra.mrb[0].mxu0 %v3960
        %v4244 = vpop.f32.mrb[0].mxu0
        %v4245 = vadd.f32 0.0, %v4244
        %v4246 = vpop.f32.mrb[0].mxu0
        %v4247 = vadd.f32 0.0, %v4246
        %4248 = vmatprep.mubr.f32.mxu0 %v4018
        %4249 = vmatmul.mubr.f32.gmra.mrb[0].mxu0 %v3962
        %v4250 = vpop.f32.mrb[0].mxu0
        %v4251 = vadd.f32 0.0, %v4250
        %v4252 = vpop.f32.mrb[0].mxu0
        %v4253 = vadd.f32 0.0, %v4252
        %4254 = vmatprep.mubr.f32.mxu0 %v4021
        %4255 = vmatmul.mubr.f32.gmra.mrb[0].mxu0 %v3964
        %v4256 = vpop.f32.mrb[0].mxu0
        %v4257 = vadd.f32 0.0, %v4256
        %v4258 = vpop.f32.mrb[0].mxu0
        %v4259 = vadd.f32 0.0, %v4258
        %4260 = vmatprep.mubr.f32.mxu0 %v4024
        %4261 = vmatmul.mubr.f32.gmra.mrb[0].mxu0 %v3966
        %v4262 = vpop.f32.mrb[0].mxu0
        %v4263 = vadd.f32 0.0, %v4262
        %v4264 = vpop.f32.mrb[0].mxu0
        %v4265 = vadd.f32 0.0, %v4264
        %4266 = vmatprep.mubr.f32.mxu0 %v4027
        %4267 = vmatmul.mubr.f32.gmra.mrb[0].mxu0 %v3968
        %v4268 = vpop.f32.mrb[0].mxu0
        %v4269 = vadd.f32 0.0, %v4268
        %v4270 = vpop.f32.mrb[0].mxu0
        %v4271 = vadd.f32 0.0, %v4270
        %4272 = vmatprep.mubr.f32.mxu0 %v4030
        %4273 = vmatmul.mubr.f32.gmra.mrb[0].mxu0 %v3970
        %v4274 = vpop.f32.mrb[0].mxu0
        %v4275 = vadd.f32 0.0, %v4274
        %v4276 = vpop.f32.mrb[0].mxu0
        %v4277 = vadd.f32 0.0, %v4276
        %4278 = vmatprep.mubr.f32.mxu0 %v4033
        %4279 = vmatmul.mubr.f32.gmra.mrb[0].mxu0 %v3972
        %v4280 = vpop.f32.mrb[0].mxu0
        %v4281 = vadd.f32 0.0, %v4280
        %v4282 = vpop.f32.mrb[0].mxu0
        %v4283 = vadd.f32 0.0, %v4282
        %4284 = vmatprep.mubr.f32.mxu0 %v4036
        %4285 = vmatmul.mubr.f32.gmra.mrb[0].mxu0 %v3974
        %v4286 = vpop.f32.mrb[0].mxu0
        %v4287 = vadd.f32 0.0, %v4286
        %v4288 = vpop.f32.mrb[0].mxu0
        %v4289 = vadd.f32 0.0, %v4288
        %4290 = vmatprep.mubr.f32.mxu0 %v4039
        %4291 = vmatmul.mubr.f32.gmra.mrb[0].mxu0 %v3976
        %v4292 = vpop.f32.mrb[0].mxu0
        %v4293 = vadd.f32 0.0, %v4292
        %v4294 = vpop.f32.mrb[0].mxu0
        %v4295 = vadd.f32 0.0, %v4294
        %4296 = vmatprep.mubr.f32.mxu0 %v4042
        %4297 = vmatmul.mubr.f32.gmra.mrb[0].mxu0 %v3978
        %v4298 = vpop.f32.mrb[0].mxu0
        %v4299 = vadd.f32 0.0, %v4298
        %v4300 = vpop.f32.mrb[0].mxu0
        %v4301 = vadd.f32 0.0, %v4300
        %4302 = vmatprep.mubr.f32.mxu0 %v4045
        %4303 = vmatmul.mubr.f32.gmra.mrb[0].mxu0 %v3980
        %v4304 = vpop.f32.mrb[0].mxu0
        %v4305 = vadd.f32 0.0, %v4304
        %v4306 = vpop.f32.mrb[0].mxu0
        %v4307 = vadd.f32 0.0, %v4306
        %4308 = vdwg.mxu0
        %4309 = vmatprep.subr.mxu0 0.0
        %4310 = vmatpush1.msra.mxu0 %v3982
        %4311 = vmatprep.subr.mxu0 0.0
        %4312 = vmatpush1.msra.mxu0 %v3983
        %4313 = vmatprep.subr.mxu0 0.0
        %4314 = vmatpush1.msra.mxu0 %v3984
        %4315 = vmatprep.subr.mxu0 0.0
        %4316 = vmatpush1.msra.mxu0 %v3985
        %4317 = vmatprep.subr.mxu0 0.0
        %4318 = vmatpush1.msra.mxu0 %v3986
        %4319 = vmatprep.subr.mxu0 0.0
        %4320 = vmatpush1.msra.mxu0 %v3987
        %4321 = vmatprep.subr.mxu0 0.0
        %4322 = vmatpush1.msra.mxu0 %v3988
        %4323 = vmatprep.subr.mxu0 0.0
        %4324 = vmatpush1.msra.mxu0 %v3989
        %4325 = vmatprep.subr.mxu0 0.0
        %4326 = vmatpush1.msra.mxu0 %v3990
        %4327 = vmatprep.subr.mxu0 0.0
        %4328 = vmatpush1.msra.mxu0 %v3991
        %4329 = vmatprep.subr.mxu0 0.0
        %4330 = vmatpush1.msra.mxu0 %v3992
        %4331 = vmatprep.subr.mxu0 0.0
        %4332 = vmatpush1.msra.mxu0 %v3993
        %4333 = vmatprep.subr.mxu0 0.0
        %4334 = vmatpush1.msra.mxu0 %v3994
        %4335 = vmatprep.subr.mxu0 0.0
        %4336 = vmatpush1.msra.mxu0 %v3995
        %4337 = vmatprep.subr.mxu0 0.0
        %4338 = vmatpush1.msra.mxu0 %v3996
        %4339 = vmatprep.subr.mxu0 0.0
        %4340 = vmatpush1.msra.mxu0 %v3997
        %4341 = vmatprep.subr.mxu0 0.0
        %4342 = vmatpush1.msra.mxu0 %v3998
        %4343 = vmatprep.subr.mxu0 0.0
        %4344 = vmatpush1.msra.mxu0 %v3999
        %4345 = vmatprep.subr.mxu0 0.0
        %4346 = vmatpush1.msra.mxu0 %v4000
        %4347 = vmatprep.subr.mxu0 0.0
        %4348 = vmatpush1.msra.mxu0 %v4001
        %4349 = vmatprep.subr.mxu0 0.0
        %4350 = vmatpush1.msra.mxu0 %v4002
        %4351 = vmatprep.subr.mxu0 0.0
        %4352 = vmatpush1.msra.mxu0 %v4003
        %4353 = vmatprep.subr.mxu0 0.0
        %4354 = vmatpush1.msra.mxu0 %v4004
        %4355 = vmatprep.subr.mxu0 0.0
        %4356 = vmatpush1.msra.mxu0 %v4005
        %4357 = vmatprep.subr.mxu0 0.0
        %4358 = vmatpush1.msra.mxu0 %v4006
        %4359 = vmatprep.subr.mxu0 0.0
        %4360 = vmatpush1.msra.mxu0 %v4007
        %4361 = vmatprep.subr.mxu0 0.0
        %4362 = vmatpush1.msra.mxu0 %v4008
        %4363 = vmatprep.subr.mxu0 0.0
        %4364 = vmatpush1.msra.mxu0 %v4009
        %4365 = vmatprep.subr.mxu0 0.0
        %4366 = vmatpush1.msra.mxu0 %v4010
        %4367 = vmatprep.subr.mxu0 0.0
        %4368 = vmatpush1.msra.mxu0 %v4011
        %4369 = vmatprep.subr.mxu0 0.0
        %4370 = vmatpush1.msra.mxu0 %v4012
        %4371 = vmatprep.subr.mxu0 0.0
        %4372 = vmatpush1.msra.mxu0 %v4013
        %4373 = vmatprep.mubr.f32.mxu0 %v4116
        %4374 = vmatmul.mubr.f32.gmra.mrb[0].mxu0 %v4114
        %v4375 = vpop.f32.mrb[0].mxu0
        %v4376 = vadd.f32 0.0, %v4375
        %v4377 = vpop.f32.mrb[0].mxu0
        %4378 = vmatprep.mubr.f32.mxu0 %v4122
        %4379 = vmatmul.mubr.f32.gmra.mrb[0].mxu0 %v4120
        %v4380 = vpop.f32.mrb[0].mxu0
        %v4381 = vadd.f32 0.0, %v4380
        %v4382 = vpop.f32.mrb[0].mxu0
        %4383 = vmatprep.mubr.f32.mxu0 %v4128
        %4384 = vmatmul.mubr.f32.gmra.mrb[0].mxu0 %v4126
        %v4385 = vpop.f32.mrb[0].mxu0
        %v4386 = vadd.f32 0.0, %v4385
        %v4387 = vpop.f32.mrb[0].mxu0
        %4388 = vmatprep.mubr.f32.mxu0 %v4134
        %4389 = vmatmul.mubr.f32.gmra.mrb[0].mxu0 %v4132
        %v4390 = vpop.f32.mrb[0].mxu0
        %v4391 = vadd.f32 0.0, %v4390
        %v4392 = vpop.f32.mrb[0].mxu0
        %4393 = vmatprep.mubr.f32.mxu0 %v4140
        %4394 = vmatmul.mubr.f32.gmra.mrb[0].mxu0 %v4138
        %v4395 = vpop.f32.mrb[0].mxu0
        %v4396 = vadd.f32 0.0, %v4395
        %v4397 = vpop.f32.mrb[0].mxu0
        %4398 = vmatprep.mubr.f32.mxu0 %v4146
        %4399 = vmatmul.mubr.f32.gmra.mrb[0].mxu0 %v4144
        %v4400 = vpop.f32.mrb[0].mxu0
        %v4401 = vadd.f32 0.0, %v4400
        %v4402 = vpop.f32.mrb[0].mxu0
        %4403 = vmatprep.mubr.f32.mxu0 %v4152
        %4404 = vmatmul.mubr.f32.gmra.mrb[0].mxu0 %v4150
        %v4405 = vpop.f32.mrb[0].mxu0
        %v4406 = vadd.f32 0.0, %v4405
        %v4407 = vpop.f32.mrb[0].mxu0
        %4408 = vmatprep.mubr.f32.mxu0 %v4158
        %4409 = vmatmul.mubr.f32.gmra.mrb[0].mxu0 %v4156
        %v4410 = vpop.f32.mrb[0].mxu0
        %v4411 = vadd.f32 0.0, %v4410
        %v4412 = vpop.f32.mrb[0].mxu0
        %4413 = vmatprep.mubr.f32.mxu0 %v4164
        %4414 = vmatmul.mubr.f32.gmra.mrb[0].mxu0 %v4162
        %v4415 = vpop.f32.mrb[0].mxu0
        %v4416 = vadd.f32 0.0, %v4415
        %v4417 = vpop.f32.mrb[0].mxu0
        %4418 = vmatprep.mubr.f32.mxu0 %v4170
        %4419 = vmatmul.mubr.f32.gmra.mrb[0].mxu0 %v4168
        %v4420 = vpop.f32.mrb[0].mxu0
        %v4421 = vadd.f32 0.0, %v4420
        %v4422 = vpop.f32.mrb[0].mxu0
        %4423 = vmatprep.mubr.f32.mxu0 %v4176
        %4424 = vmatmul.mubr.f32.gmra.mrb[0].mxu0 %v4174
        %v4425 = vpop.f32.mrb[0].mxu0
        %v4426 = vadd.f32 0.0, %v4425
        %v4427 = vpop.f32.mrb[0].mxu0
        %4428 = vdwg.mxu0
        %4429 = vmatprep.subr.mxu0 0.0
        %4430 = vmatpush1.msra.mxu0 %v3982
        %4431 = vmatprep.subr.mxu0 0.0
        %4432 = vmatpush1.msra.mxu0 %v3983
        %4433 = vmatprep.subr.mxu0 0.0
        %4434 = vmatpush1.msra.mxu0 %v3984
        %4435 = vmatprep.subr.mxu0 0.0
        %4436 = vmatpush1.msra.mxu0 %v3985
        %4437 = vmatprep.subr.mxu0 0.0
        %4438 = vmatpush1.msra.mxu0 %v3986
        %4439 = vmatprep.subr.mxu0 0.0
        %4440 = vmatpush1.msra.mxu0 %v3987
        %4441 = vmatprep.subr.mxu0 0.0
        %4442 = vmatpush1.msra.mxu0 %v3988
        %4443 = vmatprep.subr.mxu0 0.0
        %4444 = vmatpush1.msra.mxu0 %v3989
        %4445 = vmatprep.subr.mxu0 0.0
        %4446 = vmatpush1.msra.mxu0 %v3990
        %4447 = vmatprep.subr.mxu0 0.0
        %4448 = vmatpush1.msra.mxu0 %v3991
        %4449 = vmatprep.subr.mxu0 0.0
        %4450 = vmatpush1.msra.mxu0 %v3992
        %4451 = vmatprep.subr.mxu0 0.0
        %4452 = vmatpush1.msra.mxu0 %v3993
        %4453 = vmatprep.subr.mxu0 0.0
        %4454 = vmatpush1.msra.mxu0 %v3994
        %4455 = vmatprep.subr.mxu0 0.0
        %4456 = vmatpush1.msra.mxu0 %v3995
        %4457 = vmatprep.subr.mxu0 0.0
        %4458 = vmatpush1.msra.mxu0 %v3996
        %4459 = vmatprep.subr.mxu0 0.0
        %4460 = vmatpush1.msra.mxu0 %v3997
        %4461 = vmatprep.subr.mxu0 0.0
        %4462 = vmatpush1.msra.mxu0 %v3998
        %4463 = vmatprep.subr.mxu0 0.0
        %4464 = vmatpush1.msra.mxu0 %v3999
        %4465 = vmatprep.subr.mxu0 0.0
        %4466 = vmatpush1.msra.mxu0 %v4000
        %4467 = vmatprep.subr.mxu0 0.0
        %4468 = vmatpush1.msra.mxu0 %v4001
        %4469 = vmatprep.subr.mxu0 0.0
        %4470 = vmatpush1.msra.mxu0 %v4002
        %4471 = vmatprep.subr.mxu0 0.0
        %4472 = vmatpush1.msra.mxu0 %v4003
        %4473 = vmatprep.subr.mxu0 0.0
        %4474 = vmatpush1.msra.mxu0 %v4004
        %4475 = vmatprep.subr.mxu0 0.0
        %4476 = vmatpush1.msra.mxu0 %v4005
        %4477 = vmatprep.subr.mxu0 0.0
        %4478 = vmatpush1.msra.mxu0 %v4006
        %4479 = vmatprep.subr.mxu0 0.0
        %4480 = vmatpush1.msra.mxu0 %v4007
        %4481 = vmatprep.subr.mxu0 0.0
        %4482 = vmatpush1.msra.mxu0 %v4008
        %4483 = vmatprep.subr.mxu0 0.0
        %4484 = vmatpush1.msra.mxu0 %v4009
        %4485 = vmatprep.subr.mxu0 0.0
        %4486 = vmatpush1.msra.mxu0 %v4010
        %4487 = vmatprep.subr.mxu0 0.0
        %4488 = vmatpush1.msra.mxu0 %v4011
        %4489 = vmatprep.subr.mxu0 0.0
        %4490 = vmatpush1.msra.mxu0 %v4012
        %4491 = vmatprep.subr.mxu0 0.0
        %4492 = vmatpush1.msra.mxu0 %v4013
        %4493 = vmatprep.mubr.f32.mxu0 %v4247
        %4494 = vmatmul.mubr.f32.gmra.mrb[0].mxu0 %v4245
        %v4495 = vpop.f32.mrb[0].mxu0
        %v4496 = vadd.f32 0.0, %v4495
        %v4497 = vpop.f32.mrb[0].mxu0
        %4498 = vmatprep.mubr.f32.mxu0 %v4253
        %4499 = vmatmul.mubr.f32.gmra.mrb[0].mxu0 %v4251
        %v4500 = vpop.f32.mrb[0].mxu0
        %v4501 = vadd.f32 0.0, %v4500
        %v4502 = vpop.f32.mrb[0].mxu0
        %4503 = vmatprep.mubr.f32.mxu0 %v4259
        %4504 = vmatmul.mubr.f32.gmra.mrb[0].mxu0 %v4257
        %v4505 = vpop.f32.mrb[0].mxu0
        %v4506 = vadd.f32 0.0, %v4505
        %v4507 = vpop.f32.mrb[0].mxu0
        %4508 = vmatprep.mubr.f32.mxu0 %v4265
        %4509 = vmatmul.mubr.f32.gmra.mrb[0].mxu0 %v4263
        %v4510 = vpop.f32.mrb[0].mxu0
        %v4511 = vadd.f32 0.0, %v4510
        %v4512 = vpop.f32.mrb[0].mxu0
        %4513 = vmatprep.mubr.f32.mxu0 %v4271
        %4514 = vmatmul.mubr.f32.gmra.mrb[0].mxu0 %v4269
        %v4515 = vpop.f32.mrb[0].mxu0
        %v4516 = vadd.f32 0.0, %v4515
        %v4517 = vpop.f32.mrb[0].mxu0
        %4518 = vmatprep.mubr.f32.mxu0 %v4277
        %4519 = vmatmul.mubr.f32.gmra.mrb[0].mxu0 %v4275
        %v4520 = vpop.f32.mrb[0].mxu0
        %v4521 = vadd.f32 0.0, %v4520
        %v4522 = vpop.f32.mrb[0].mxu0
        %4523 = vmatprep.mubr.f32.mxu0 %v4283
        %4524 = vmatmul.mubr.f32.gmra.mrb[0].mxu0 %v4281
        %v4525 = vpop.f32.mrb[0].mxu0
        %v4526 = vadd.f32 0.0, %v4525
        %v4527 = vpop.f32.mrb[0].mxu0
        %4528 = vmatprep.mubr.f32.mxu0 %v4289
        %4529 = vmatmul.mubr.f32.gmra.mrb[0].mxu0 %v4287
        %v4530 = vpop.f32.mrb[0].mxu0
        %v4531 = vadd.f32 0.0, %v4530
        %v4532 = vpop.f32.mrb[0].mxu0
        %4533 = vmatprep.mubr.f32.mxu0 %v4295
        %4534 = vmatmul.mubr.f32.gmra.mrb[0].mxu0 %v4293
        %v4535 = vpop.f32.mrb[0].mxu0
        %v4536 = vadd.f32 0.0, %v4535
        %v4537 = vpop.f32.mrb[0].mxu0
        %4538 = vmatprep.mubr.f32.mxu0 %v4301
        %4539 = vmatmul.mubr.f32.gmra.mrb[0].mxu0 %v4299
        %v4540 = vpop.f32.mrb[0].mxu0
        %v4541 = vadd.f32 0.0, %v4540
        %v4542 = vpop.f32.mrb[0].mxu0
        %4543 = vmatprep.mubr.f32.mxu0 %v4307
        %4544 = vmatmul.mubr.f32.gmra.mrb[0].mxu0 %v4305
        %v4545 = vpop.f32.mrb[0].mxu0
        %v4546 = vadd.f32 0.0, %v4545
        %v4547 = vpop.f32.mrb[0].mxu0
        %4548 = vdwg.mxu0
        %v4549 = vld [vmem:[#allocation9] sm:$0xff]
        %v4550 = vld [vmem:[#allocation9 + $0x8] sm:$0xff]
        %v4551 = vld [vmem:[#allocation9 + $0x10] sm:$0xff]
        %v4552 = vld [vmem:[#allocation9 + $0x18] sm:$0xff]
        %v4553 = vld [vmem:[#allocation9 + $0x20] sm:$0xff]
        %v4554 = vld [vmem:[#allocation9 + $0x28] sm:$0xff]
        %v4555 = vld [vmem:[#allocation9 + $0x30] sm:$0xff]
        %v4556 = vld [vmem:[#allocation9 + $0x38] sm:$0xff]
        %v4557 = vld [vmem:[#allocation9 + $0x40] sm:$0xff]
        %v4558 = vld [vmem:[#allocation9 + $0x48] sm:$0x3f]
        %v4559 = vld [vmem:[#allocation10] sm:$0xff]
        %v4560 = vld [vmem:[#allocation10 + $0x8] sm:$0xff]
        %v4561 = vld [vmem:[#allocation10 + $0x10] sm:$0xff]
        %v4562 = vld [vmem:[#allocation10 + $0x18] sm:$0xff]
        %v4563 = vld [vmem:[#allocation10 + $0x20] sm:$0xff]
        %v4564 = vld [vmem:[#allocation10 + $0x28] sm:$0xff]
        %v4565 = vld [vmem:[#allocation10 + $0x30] sm:$0xff]
        %v4566 = vld [vmem:[#allocation10 + $0x38] sm:$0xff]
        %v4567 = vld [vmem:[#allocation10 + $0x40] sm:$0xff]
        %v4568 = vld [vmem:[#allocation10 + $0x48] sm:$0xff]
        %v4569 = vld [vmem:[#allocation10 + $0x50] sm:$0xff]
        %v4570 = vld [vmem:[#allocation10 + $0x58] sm:$0xff]
        %v4571 = vld [vmem:[#allocation10 + $0x60] sm:$0xff]
        %v4572 = vld [vmem:[#allocation10 + $0x68] sm:$0xff]
        %v4573 = vld [vmem:[#allocation10 + $0x70] sm:$0xff]
        %v4574 = vld [vmem:[#allocation10 + $0x78] sm:$0xff]
        %v4575 = vmul.f32 %v4376, %v4376
        %v4576 = vmul.f32 %v4381, %v4381
        %v4577 = vmul.f32 %v4386, %v4386
        %v4578 = vmul.f32 %v4391, %v4391
        %v4579 = vmul.f32 %v4396, %v4396
        %v4580 = vmul.f32 %v4401, %v4401
        %v4581 = vmul.f32 %v4406, %v4406
        %v4582 = vmul.f32 %v4411, %v4411
        %v4583 = vmul.f32 %v4416, %v4416
        %v4584 = vmul.f32 %v4421, %v4421
        %v4585 = vmul.f32 %v4426, %v4426
        %v4586 = vmul.f32 %v4496, %v4496
        %v4587 = vmul.f32 %v4501, %v4501
        %v4588 = vmul.f32 %v4506, %v4506
        %v4589 = vmul.f32 %v4511, %v4511
        %v4590 = vmul.f32 %v4516, %v4516
        %v4591 = vmul.f32 %v4521, %v4521
        %v4592 = vmul.f32 %v4526, %v4526
        %v4593 = vmul.f32 %v4531, %v4531
        %v4594 = vmul.f32 %v4536, %v4536
        %v4595 = vmul.f32 %v4541, %v4541
        %v4596 = vmul.f32 %v4546, %v4546
        %v4597 = vmul.f32 %v4376, %v4496
        %v4598 = vmul.f32 %v4381, %v4501
        %v4599 = vmul.f32 %v4386, %v4506
        %v4600 = vmul.f32 %v4391, %v4511
        %v4601 = vmul.f32 %v4396, %v4516
        %v4602 = vmul.f32 %v4401, %v4521
        %v4603 = vmul.f32 %v4406, %v4526
        %v4604 = vmul.f32 %v4411, %v4531
        %v4605 = vmul.f32 %v4416, %v4536
        %v4606 = vmul.f32 %v4421, %v4541
        %v4607 = vmul.f32 %v4426, %v4546
        %vm4608 = vcmask 719872
        %v4609 = vsel %vm4608, %v4376, 0.0
        %v4610 = vsel %vm4608, %v4381, 0.0
        %v4611 = vsel %vm4608, %v4386, 0.0
        %v4612 = vsel %vm4608, %v4391, 0.0
        %v4613 = vsel %vm4608, %v4396, 0.0
        %v4614 = vsel %vm4608, %v4401, 0.0
        %v4615 = vsel %vm4608, %v4406, 0.0
        %v4616 = vsel %vm4608, %v4411, 0.0
        %v4617 = vsel %vm4608, %v4416, 0.0
        %v4618 = vsel %vm4608, %v4421, 0.0
        %v4619 = vsel %vm4608, %v4426, 0.0
        %v4620 = vsel %vm4608, %v4496, 0.0
        %v4621 = vsel %vm4608, %v4501, 0.0
        %v4622 = vsel %vm4608, %v4506, 0.0
        %v4623 = vsel %vm4608, %v4511, 0.0
        %v4624 = vsel %vm4608, %v4516, 0.0
        %v4625 = vsel %vm4608, %v4521, 0.0
        %v4626 = vsel %vm4608, %v4526, 0.0
        %v4627 = vsel %vm4608, %v4531, 0.0
        %v4628 = vsel %vm4608, %v4536, 0.0
        %v4629 = vsel %vm4608, %v4541, 0.0
        %v4630 = vsel %vm4608, %v4546, 0.0
        %v4631 = vsel %vm4608, %v4575, 0.0
        %v4632 = vsel %vm4608, %v4576, 0.0
        %v4633 = vsel %vm4608, %v4577, 0.0
        %v4634 = vsel %vm4608, %v4578, 0.0
        %v4635 = vsel %vm4608, %v4579, 0.0
        %v4636 = vsel %vm4608, %v4580, 0.0
        %v4637 = vsel %vm4608, %v4581, 0.0
        %v4638 = vsel %vm4608, %v4582, 0.0
        %v4639 = vsel %vm4608, %v4583, 0.0
        %v4640 = vsel %vm4608, %v4584, 0.0
        %v4641 = vsel %vm4608, %v4585, 0.0
        %v4642 = vsel %vm4608, %v4586, 0.0
        %v4643 = vsel %vm4608, %v4587, 0.0
        %v4644 = vsel %vm4608, %v4588, 0.0
        %v4645 = vsel %vm4608, %v4589, 0.0
        %v4646 = vsel %vm4608, %v4590, 0.0
        %v4647 = vsel %vm4608, %v4591, 0.0
        %v4648 = vsel %vm4608, %v4592, 0.0
        %v4649 = vsel %vm4608, %v4593, 0.0
        %v4650 = vsel %vm4608, %v4594, 0.0
        %v4651 = vsel %vm4608, %v4595, 0.0
        %v4652 = vsel %vm4608, %v4596, 0.0
        %v4653 = vsel %vm4608, %v4597, 0.0
        %v4654 = vsel %vm4608, %v4598, 0.0
        %v4655 = vsel %vm4608, %v4599, 0.0
        %v4656 = vsel %vm4608, %v4600, 0.0
        %v4657 = vsel %vm4608, %v4601, 0.0
        %v4658 = vsel %vm4608, %v4602, 0.0
        %v4659 = vsel %vm4608, %v4603, 0.0
        %v4660 = vsel %vm4608, %v4604, 0.0
        %v4661 = vsel %vm4608, %v4605, 0.0
        %v4662 = vsel %vm4608, %v4606, 0.0
        %v4663 = vsel %vm4608, %v4607, 0.0
        %v4665 = vsel %vm4608, %v4549, 0
        %v4668 = vsel %vm4608, %v4550, 0
        %v4671 = vsel %vm4608, %v4551, 0
        %v4674 = vsel %vm4608, %v4552, 0
        %v4677 = vsel %vm4608, %v4553, 0
        %v4680 = vsel %vm4608, %v4554, 0
        %v4683 = vsel %vm4608, %v4555, 0
        %v4686 = vsel %vm4608, %v4556, 0
        %v4689 = vsel %vm4608, %v4557, 0
        %v4692 = vsel %vm4608, %v4558, 0
        %4694 = vmatprep.subr.mxu0 %v4620
        %4695 = vmatpush1.msra.mxu0 %v4609
        %4696 = vmatprep.subr.mxu0 %v4621
        %4697 = vmatpush1.msra.mxu0 %v4610
        %4698 = vmatprep.subr.mxu0 %v4622
        %4699 = vmatpush1.msra.mxu0 %v4611
        %4700 = vmatprep.subr.mxu0 %v4623
        %4701 = vmatpush1.msra.mxu0 %v4612
        %4702 = vmatprep.subr.mxu0 %v4624
        %4703 = vmatpush1.msra.mxu0 %v4613
        %4704 = vmatprep.subr.mxu0 %v4625
        %4705 = vmatpush1.msra.mxu0 %v4614
        %4706 = vmatprep.subr.mxu0 %v4626
        %4707 = vmatpush1.msra.mxu0 %v4615
        %4708 = vmatprep.subr.mxu0 %v4627
        %4709 = vmatpush1.msra.mxu0 %v4616
        %4710 = vmatprep.subr.mxu0 %v4628
        %4711 = vmatpush1.msra.mxu0 %v4617
        %4712 = vmatprep.subr.mxu0 %v4629
        %4713 = vmatpush1.msra.mxu0 %v4618
        %4714 = vmatprep.subr.mxu0 %v4630
        %4715 = vmatpush1.msra.mxu0 %v4619
        %4716 = vmatprep.subr.mxu0 0.0
        %4717 = vmatpush1.msra.mxu0 0.0
        %4718 = vmatprep.subr.mxu0 0.0
        %4719 = vmatpush1.msra.mxu0 0.0
        %4720 = vmatprep.subr.mxu0 0.0
        %4721 = vmatpush1.msra.mxu0 0.0
        %4722 = vmatprep.subr.mxu0 0.0
        %4723 = vmatpush1.msra.mxu0 0.0
        %4724 = vmatprep.subr.mxu0 0.0
        %4725 = vmatpush1.msra.mxu0 0.0
        %4726 = vmatprep.subr.mxu0 0.0
        %4727 = vmatpush1.msra.mxu0 0.0
        %4728 = vmatprep.subr.mxu0 0.0
        %4729 = vmatpush1.msra.mxu0 0.0
        %4730 = vmatprep.subr.mxu0 0.0
        %4731 = vmatpush1.msra.mxu0 0.0
        %4732 = vmatprep.subr.mxu0 0.0
        %4733 = vmatpush1.msra.mxu0 0.0
        %4734 = vmatprep.subr.mxu0 0.0
        %4735 = vmatpush1.msra.mxu0 0.0
        %4736 = vmatprep.subr.mxu0 0.0
        %4737 = vmatpush1.msra.mxu0 0.0
        %4738 = vmatprep.subr.mxu0 0.0
        %4739 = vmatpush1.msra.mxu0 0.0
        %4740 = vmatprep.subr.mxu0 0.0
        %4741 = vmatpush1.msra.mxu0 0.0
        %4742 = vmatprep.subr.mxu0 0.0
        %4743 = vmatpush1.msra.mxu0 0.0
        %4744 = vmatprep.subr.mxu0 0.0
        %4745 = vmatpush1.msra.mxu0 0.0
        %4746 = vmatprep.subr.mxu0 0.0
        %4747 = vmatpush1.msra.mxu0 0.0
        %4748 = vmatprep.subr.mxu0 0.0
        %4749 = vmatpush1.msra.mxu0 0.0
        %4750 = vmatprep.subr.mxu0 0.0
        %4751 = vmatpush1.msra.mxu0 0.0
        %4752 = vmatprep.subr.mxu0 0.0
        %4753 = vmatpush1.msra.mxu0 0.0
        %4754 = vmatprep.subr.mxu0 0.0
        %4755 = vmatpush1.msra.mxu0 0.0
        %4756 = vmatprep.subr.mxu0 0.0
        %4757 = vmatpush1.msra.mxu0 0.0
        %4758 = vmatprep.mubr.f32.mxu0 0.0
        %4759 = vmatmul.mubr.f32.gmra.mrb[0].mxu0 %v4665
        %v4760 = vpop.f32.mrb[0].mxu0
        %v4761 = vadd.f32 0.0, %v4760
        %v4762 = vpop.f32.mrb[0].mxu0
        %v4763 = vadd.f32 0.0, %v4762
        %4764 = vmatprep.mubr.f32.mxu0 0.0
        %4765 = vmatmul.mubr.f32.gmra.mrb[0].mxu0 %v4668
        %v4766 = vpop.f32.mrb[0].mxu0
        %v4767 = vadd.f32 0.0, %v4766
        %v4768 = vpop.f32.mrb[0].mxu0
        %v4769 = vadd.f32 0.0, %v4768
        %4770 = vmatprep.mubr.f32.mxu0 0.0
        %4771 = vmatmul.mubr.f32.gmra.mrb[0].mxu0 %v4671
        %v4772 = vpop.f32.mrb[0].mxu0
        %v4773 = vadd.f32 0.0, %v4772
        %v4774 = vpop.f32.mrb[0].mxu0
        %v4775 = vadd.f32 0.0, %v4774
        %4776 = vmatprep.mubr.f32.mxu0 0.0
        %4777 = vmatmul.mubr.f32.gmra.mrb[0].mxu0 %v4674
        %v4778 = vpop.f32.mrb[0].mxu0
        %v4779 = vadd.f32 0.0, %v4778
        %v4780 = vpop.f32.mrb[0].mxu0
        %v4781 = vadd.f32 0.0, %v4780
        %4782 = vmatprep.mubr.f32.mxu0 0.0
        %4783 = vmatmul.mubr.f32.gmra.mrb[0].mxu0 %v4677
        %v4784 = vpop.f32.mrb[0].mxu0
        %v4785 = vadd.f32 0.0, %v4784
        %v4786 = vpop.f32.mrb[0].mxu0
        %v4787 = vadd.f32 0.0, %v4786
        %4788 = vmatprep.mubr.f32.mxu0 0.0
        %4789 = vmatmul.mubr.f32.gmra.mrb[0].mxu0 %v4680
        %v4790 = vpop.f32.mrb[0].mxu0
        %v4791 = vadd.f32 0.0, %v4790
        %v4792 = vpop.f32.mrb[0].mxu0
        %v4793 = vadd.f32 0.0, %v4792
        %4794 = vmatprep.mubr.f32.mxu0 0.0
        %4795 = vmatmul.mubr.f32.gmra.mrb[0].mxu0 %v4683
        %v4796 = vpop.f32.mrb[0].mxu0
        %v4797 = vadd.f32 0.0, %v4796
        %v4798 = vpop.f32.mrb[0].mxu0
        %v4799 = vadd.f32 0.0, %v4798
        %4800 = vmatprep.mubr.f32.mxu0 0.0
        %4801 = vmatmul.mubr.f32.gmra.mrb[0].mxu0 %v4686
        %v4802 = vpop.f32.mrb[0].mxu0
        %v4803 = vadd.f32 0.0, %v4802
        %v4804 = vpop.f32.mrb[0].mxu0
        %v4805 = vadd.f32 0.0, %v4804
        %4806 = vmatprep.mubr.f32.mxu0 0.0
        %4807 = vmatmul.mubr.f32.gmra.mrb[0].mxu0 %v4689
        %v4808 = vpop.f32.mrb[0].mxu0
        %v4809 = vadd.f32 0.0, %v4808
        %v4810 = vpop.f32.mrb[0].mxu0
        %v4811 = vadd.f32 0.0, %v4810
        %4812 = vmatprep.mubr.f32.mxu0 0.0
        %4813 = vmatmul.mubr.f32.gmra.mrb[0].mxu0 %v4692
        %v4814 = vpop.f32.mrb[0].mxu0
        %v4815 = vadd.f32 0.0, %v4814
        %v4816 = vpop.f32.mrb[0].mxu0
        %v4817 = vadd.f32 0.0, %v4816
        %4818 = vdwg.mxu0
        %4819 = vmatprep.subr.mxu0 %v4642
        %4820 = vmatpush1.msra.mxu0 %v4631
        %4821 = vmatprep.subr.mxu0 %v4643
        %4822 = vmatpush1.msra.mxu0 %v4632
        %4823 = vmatprep.subr.mxu0 %v4644
        %4824 = vmatpush1.msra.mxu0 %v4633
        %4825 = vmatprep.subr.mxu0 %v4645
        %4826 = vmatpush1.msra.mxu0 %v4634
        %4827 = vmatprep.subr.mxu0 %v4646
        %4828 = vmatpush1.msra.mxu0 %v4635
        %4829 = vmatprep.subr.mxu0 %v4647
        %4830 = vmatpush1.msra.mxu0 %v4636
        %4831 = vmatprep.subr.mxu0 %v4648
        %4832 = vmatpush1.msra.mxu0 %v4637
        %4833 = vmatprep.subr.mxu0 %v4649
        %4834 = vmatpush1.msra.mxu0 %v4638
        %4835 = vmatprep.subr.mxu0 %v4650
        %4836 = vmatpush1.msra.mxu0 %v4639
        %4837 = vmatprep.subr.mxu0 %v4651
        %4838 = vmatpush1.msra.mxu0 %v4640
        %4839 = vmatprep.subr.mxu0 %v4652
        %4840 = vmatpush1.msra.mxu0 %v4641
        %4841 = vmatprep.subr.mxu0 0.0
        %4842 = vmatpush1.msra.mxu0 0.0
        %4843 = vmatprep.subr.mxu0 0.0
        %4844 = vmatpush1.msra.mxu0 0.0
        %4845 = vmatprep.subr.mxu0 0.0
        %4846 = vmatpush1.msra.mxu0 0.0
        %4847 = vmatprep.subr.mxu0 0.0
        %4848 = vmatpush1.msra.mxu0 0.0
        %4849 = vmatprep.subr.mxu0 0.0
        %4850 = vmatpush1.msra.mxu0 0.0
        %4851 = vmatprep.subr.mxu0 0.0
        %4852 = vmatpush1.msra.mxu0 0.0
        %4853 = vmatprep.subr.mxu0 0.0
        %4854 = vmatpush1.msra.mxu0 0.0
        %4855 = vmatprep.subr.mxu0 0.0
        %4856 = vmatpush1.msra.mxu0 0.0
        %4857 = vmatprep.subr.mxu0 0.0
        %4858 = vmatpush1.msra.mxu0 0.0
        %4859 = vmatprep.subr.mxu0 0.0
        %4860 = vmatpush1.msra.mxu0 0.0
        %4861 = vmatprep.subr.mxu0 0.0
        %4862 = vmatpush1.msra.mxu0 0.0
        %4863 = vmatprep.subr.mxu0 0.0
        %4864 = vmatpush1.msra.mxu0 0.0
        %4865 = vmatprep.subr.mxu0 0.0
        %4866 = vmatpush1.msra.mxu0 0.0
        %4867 = vmatprep.subr.mxu0 0.0
        %4868 = vmatpush1.msra.mxu0 0.0
        %4869 = vmatprep.subr.mxu0 0.0
        %4870 = vmatpush1.msra.mxu0 0.0
        %4871 = vmatprep.subr.mxu0 0.0
        %4872 = vmatpush1.msra.mxu0 0.0
        %4873 = vmatprep.subr.mxu0 0.0
        %4874 = vmatpush1.msra.mxu0 0.0
        %4875 = vmatprep.subr.mxu0 0.0
        %4876 = vmatpush1.msra.mxu0 0.0
        %4877 = vmatprep.subr.mxu0 0.0
        %4878 = vmatpush1.msra.mxu0 0.0
        %4879 = vmatprep.subr.mxu0 0.0
        %4880 = vmatpush1.msra.mxu0 0.0
        %4881 = vmatprep.subr.mxu0 0.0
        %4882 = vmatpush1.msra.mxu0 0.0
        %4883 = vmatprep.mubr.f32.mxu0 0.0
        %4884 = vmatmul.mubr.f32.gmra.mrb[0].mxu0 %v4665
        %v4885 = vpop.f32.mrb[0].mxu0
        %v4886 = vadd.f32 0.0, %v4885
        %v4887 = vpop.f32.mrb[0].mxu0
        %v4888 = vadd.f32 0.0, %v4887
        %4889 = vmatprep.mubr.f32.mxu0 0.0
        %4890 = vmatmul.mubr.f32.gmra.mrb[0].mxu0 %v4668
        %v4891 = vpop.f32.mrb[0].mxu0
        %v4892 = vadd.f32 0.0, %v4891
        %v4893 = vpop.f32.mrb[0].mxu0
        %v4894 = vadd.f32 0.0, %v4893
        %4895 = vmatprep.mubr.f32.mxu0 0.0
        %4896 = vmatmul.mubr.f32.gmra.mrb[0].mxu0 %v4671
        %v4897 = vpop.f32.mrb[0].mxu0
        %v4898 = vadd.f32 0.0, %v4897
        %v4899 = vpop.f32.mrb[0].mxu0
        %v4900 = vadd.f32 0.0, %v4899
        %4901 = vmatprep.mubr.f32.mxu0 0.0
        %4902 = vmatmul.mubr.f32.gmra.mrb[0].mxu0 %v4674
        %v4903 = vpop.f32.mrb[0].mxu0
        %v4904 = vadd.f32 0.0, %v4903
        %v4905 = vpop.f32.mrb[0].mxu0
        %v4906 = vadd.f32 0.0, %v4905
        %4907 = vmatprep.mubr.f32.mxu0 0.0
        %4908 = vmatmul.mubr.f32.gmra.mrb[0].mxu0 %v4677
        %v4909 = vpop.f32.mrb[0].mxu0
        %v4910 = vadd.f32 0.0, %v4909
        %v4911 = vpop.f32.mrb[0].mxu0
        %v4912 = vadd.f32 0.0, %v4911
        %4913 = vmatprep.mubr.f32.mxu0 0.0
        %4914 = vmatmul.mubr.f32.gmra.mrb[0].mxu0 %v4680
        %v4915 = vpop.f32.mrb[0].mxu0
        %v4916 = vadd.f32 0.0, %v4915
        %v4917 = vpop.f32.mrb[0].mxu0
        %v4918 = vadd.f32 0.0, %v4917
        %4919 = vmatprep.mubr.f32.mxu0 0.0
        %4920 = vmatmul.mubr.f32.gmra.mrb[0].mxu0 %v4683
        %v4921 = vpop.f32.mrb[0].mxu0
        %v4922 = vadd.f32 0.0, %v4921
        %v4923 = vpop.f32.mrb[0].mxu0
        %v4924 = vadd.f32 0.0, %v4923
        %4925 = vmatprep.mubr.f32.mxu0 0.0
        %4926 = vmatmul.mubr.f32.gmra.mrb[0].mxu0 %v4686
        %v4927 = vpop.f32.mrb[0].mxu0
        %v4928 = vadd.f32 0.0, %v4927
        %v4929 = vpop.f32.mrb[0].mxu0
        %v4930 = vadd.f32 0.0, %v4929
        %4931 = vmatprep.mubr.f32.mxu0 0.0
        %4932 = vmatmul.mubr.f32.gmra.mrb[0].mxu0 %v4689
        %v4933 = vpop.f32.mrb[0].mxu0
        %v4934 = vadd.f32 0.0, %v4933
        %v4935 = vpop.f32.mrb[0].mxu0
        %v4936 = vadd.f32 0.0, %v4935
        %4937 = vmatprep.mubr.f32.mxu0 0.0
        %4938 = vmatmul.mubr.f32.gmra.mrb[0].mxu0 %v4692
        %v4939 = vpop.f32.mrb[0].mxu0
        %v4940 = vadd.f32 0.0, %v4939
        %v4941 = vpop.f32.mrb[0].mxu0
        %v4942 = vadd.f32 0.0, %v4941
        %4943 = vdwg.mxu0
        %4944 = vmatprep.subr.mxu0 0.0
        %4945 = vmatpush1.msra.mxu0 %v4653
        %4946 = vmatprep.subr.mxu0 0.0
        %4947 = vmatpush1.msra.mxu0 %v4654
        %4948 = vmatprep.subr.mxu0 0.0
        %4949 = vmatpush1.msra.mxu0 %v4655
        %4950 = vmatprep.subr.mxu0 0.0
        %4951 = vmatpush1.msra.mxu0 %v4656
        %4952 = vmatprep.subr.mxu0 0.0
        %4953 = vmatpush1.msra.mxu0 %v4657
        %4954 = vmatprep.subr.mxu0 0.0
        %4955 = vmatpush1.msra.mxu0 %v4658
        %4956 = vmatprep.subr.mxu0 0.0
        %4957 = vmatpush1.msra.mxu0 %v4659
        %4958 = vmatprep.subr.mxu0 0.0
        %4959 = vmatpush1.msra.mxu0 %v4660
        %4960 = vmatprep.subr.mxu0 0.0
        %4961 = vmatpush1.msra.mxu0 %v4661
        %4962 = vmatprep.subr.mxu0 0.0
        %4963 = vmatpush1.msra.mxu0 %v4662
        %4964 = vmatprep.subr.mxu0 0.0
        %4965 = vmatpush1.msra.mxu0 %v4663
        %4966 = vmatprep.subr.mxu0 0.0
        %4967 = vmatpush1.msra.mxu0 0.0
        %4968 = vmatprep.subr.mxu0 0.0
        %4969 = vmatpush1.msra.mxu0 0.0
        %4970 = vmatprep.subr.mxu0 0.0
        %4971 = vmatpush1.msra.mxu0 0.0
        %4972 = vmatprep.subr.mxu0 0.0
        %4973 = vmatpush1.msra.mxu0 0.0
        %4974 = vmatprep.subr.mxu0 0.0
        %4975 = vmatpush1.msra.mxu0 0.0
        %4976 = vmatprep.subr.mxu0 0.0
        %4977 = vmatpush1.msra.mxu0 0.0
        %4978 = vmatprep.subr.mxu0 0.0
        %4979 = vmatpush1.msra.mxu0 0.0
        %4980 = vmatprep.subr.mxu0 0.0
        %4981 = vmatpush1.msra.mxu0 0.0
        %4982 = vmatprep.subr.mxu0 0.0
        %4983 = vmatpush1.msra.mxu0 0.0
        %4984 = vmatprep.subr.mxu0 0.0
        %4985 = vmatpush1.msra.mxu0 0.0
        %4986 = vmatprep.subr.mxu0 0.0
        %4987 = vmatpush1.msra.mxu0 0.0
        %4988 = vmatprep.subr.mxu0 0.0
        %4989 = vmatpush1.msra.mxu0 0.0
        %4990 = vmatprep.subr.mxu0 0.0
        %4991 = vmatpush1.msra.mxu0 0.0
        %4992 = vmatprep.subr.mxu0 0.0
        %4993 = vmatpush1.msra.mxu0 0.0
        %4994 = vmatprep.subr.mxu0 0.0
        %4995 = vmatpush1.msra.mxu0 0.0
        %4996 = vmatprep.subr.mxu0 0.0
        %4997 = vmatpush1.msra.mxu0 0.0
        %4998 = vmatprep.subr.mxu0 0.0
        %4999 = vmatpush1.msra.mxu0 0.0
        %5000 = vmatprep.subr.mxu0 0.0
        %5001 = vmatpush1.msra.mxu0 0.0
        %5002 = vmatprep.subr.mxu0 0.0
        %5003 = vmatpush1.msra.mxu0 0.0
        %5004 = vmatprep.subr.mxu0 0.0
        %5005 = vmatpush1.msra.mxu0 0.0
        %5006 = vmatprep.subr.mxu0 0.0
        %5007 = vmatpush1.msra.mxu0 0.0
        %5008 = vmatprep.mubr.f32.mxu0 0.0
        %5009 = vmatmul.mubr.f32.gmra.mrb[0].mxu0 %v4665
        %v5010 = vpop.f32.mrb[0].mxu0
        %v5011 = vadd.f32 0.0, %v5010
        %v5012 = vpop.f32.mrb[0].mxu0
        %5013 = vmatprep.mubr.f32.mxu0 0.0
        %5014 = vmatmul.mubr.f32.gmra.mrb[0].mxu0 %v4668
        %v5015 = vpop.f32.mrb[0].mxu0
        %v5016 = vadd.f32 0.0, %v5015
        %v5017 = vpop.f32.mrb[0].mxu0
        %5018 = vmatprep.mubr.f32.mxu0 0.0
        %5019 = vmatmul.mubr.f32.gmra.mrb[0].mxu0 %v4671
        %v5020 = vpop.f32.mrb[0].mxu0
        %v5021 = vadd.f32 0.0, %v5020
        %v5022 = vpop.f32.mrb[0].mxu0
        %5023 = vmatprep.mubr.f32.mxu0 0.0
        %5024 = vmatmul.mubr.f32.gmra.mrb[0].mxu0 %v4674
        %v5025 = vpop.f32.mrb[0].mxu0
        %v5026 = vadd.f32 0.0, %v5025
        %v5027 = vpop.f32.mrb[0].mxu0
        %5028 = vmatprep.mubr.f32.mxu0 0.0
        %5029 = vmatmul.mubr.f32.gmra.mrb[0].mxu0 %v4677
        %v5030 = vpop.f32.mrb[0].mxu0
        %v5031 = vadd.f32 0.0, %v5030
        %v5032 = vpop.f32.mrb[0].mxu0
        %5033 = vmatprep.mubr.f32.mxu0 0.0
        %5034 = vmatmul.mubr.f32.gmra.mrb[0].mxu0 %v4680
        %v5035 = vpop.f32.mrb[0].mxu0
        %v5036 = vadd.f32 0.0, %v5035
        %v5037 = vpop.f32.mrb[0].mxu0
        %5038 = vmatprep.mubr.f32.mxu0 0.0
        %5039 = vmatmul.mubr.f32.gmra.mrb[0].mxu0 %v4683
        %v5040 = vpop.f32.mrb[0].mxu0
        %v5041 = vadd.f32 0.0, %v5040
        %v5042 = vpop.f32.mrb[0].mxu0
        %5043 = vmatprep.mubr.f32.mxu0 0.0
        %5044 = vmatmul.mubr.f32.gmra.mrb[0].mxu0 %v4686
        %v5045 = vpop.f32.mrb[0].mxu0
        %v5046 = vadd.f32 0.0, %v5045
        %v5047 = vpop.f32.mrb[0].mxu0
        %5048 = vmatprep.mubr.f32.mxu0 0.0
        %5049 = vmatmul.mubr.f32.gmra.mrb[0].mxu0 %v4689
        %v5050 = vpop.f32.mrb[0].mxu0
        %v5051 = vadd.f32 0.0, %v5050
        %v5052 = vpop.f32.mrb[0].mxu0
        %5053 = vmatprep.mubr.f32.mxu0 0.0
        %5054 = vmatmul.mubr.f32.gmra.mrb[0].mxu0 %v4692
        %v5055 = vpop.f32.mrb[0].mxu0
        %v5056 = vadd.f32 0.0, %v5055
        %v5057 = vpop.f32.mrb[0].mxu0
        %5058 = vdwg.mxu0
        %5059 = vmatprep.subr.mxu0 0.0
        %5060 = vmatpush1.msra.mxu0 %v4559
        %5061 = vmatprep.subr.mxu0 0.0
        %5062 = vmatpush1.msra.mxu0 %v4560
        %5063 = vmatprep.subr.mxu0 0.0
        %5064 = vmatpush1.msra.mxu0 %v4561
        %5065 = vmatprep.subr.mxu0 0.0
        %5066 = vmatpush1.msra.mxu0 %v4562
        %5067 = vmatprep.subr.mxu0 0.0
        %5068 = vmatpush1.msra.mxu0 %v4563
        %5069 = vmatprep.subr.mxu0 0.0
        %5070 = vmatpush1.msra.mxu0 %v4564
        %5071 = vmatprep.subr.mxu0 0.0
        %5072 = vmatpush1.msra.mxu0 %v4565
        %5073 = vmatprep.subr.mxu0 0.0
        %5074 = vmatpush1.msra.mxu0 %v4566
        %5075 = vmatprep.subr.mxu0 0.0
        %5076 = vmatpush1.msra.mxu0 %v4567
        %5077 = vmatprep.subr.mxu0 0.0
        %5078 = vmatpush1.msra.mxu0 %v4568
        %5079 = vmatprep.subr.mxu0 0.0
        %5080 = vmatpush1.msra.mxu0 %v4569
        %5081 = vmatprep.subr.mxu0 0.0
        %5082 = vmatpush1.msra.mxu0 %v4570
        %5083 = vmatprep.subr.mxu0 0.0
        %5084 = vmatpush1.msra.mxu0 %v4571
        %5085 = vmatprep.subr.mxu0 0.0
        %5086 = vmatpush1.msra.mxu0 %v4572
        %5087 = vmatprep.subr.mxu0 0.0
        %5088 = vmatpush1.msra.mxu0 %v4573
        %5089 = vmatprep.subr.mxu0 0.0
        %5090 = vmatpush1.msra.mxu0 %v4574
        %5091 = vmatprep.subr.mxu0 0.0
        %5092 = vmatpush1.msra.mxu0 0.0
        %5093 = vmatprep.subr.mxu0 0.0
        %5094 = vmatpush1.msra.mxu0 0.0
        %5095 = vmatprep.subr.mxu0 0.0
        %5096 = vmatpush1.msra.mxu0 0.0
        %5097 = vmatprep.subr.mxu0 0.0
        %5098 = vmatpush1.msra.mxu0 0.0
        %5099 = vmatprep.subr.mxu0 0.0
        %5100 = vmatpush1.msra.mxu0 0.0
        %5101 = vmatprep.subr.mxu0 0.0
        %5102 = vmatpush1.msra.mxu0 0.0
        %5103 = vmatprep.subr.mxu0 0.0
        %5104 = vmatpush1.msra.mxu0 0.0
        %5105 = vmatprep.subr.mxu0 0.0
        %5106 = vmatpush1.msra.mxu0 0.0
        %5107 = vmatprep.subr.mxu0 0.0
        %5108 = vmatpush1.msra.mxu0 0.0
        %5109 = vmatprep.subr.mxu0 0.0
        %5110 = vmatpush1.msra.mxu0 0.0
        %5111 = vmatprep.subr.mxu0 0.0
        %5112 = vmatpush1.msra.mxu0 0.0
        %5113 = vmatprep.subr.mxu0 0.0
        %5114 = vmatpush1.msra.mxu0 0.0
        %5115 = vmatprep.subr.mxu0 0.0
        %5116 = vmatpush1.msra.mxu0 0.0
        %5117 = vmatprep.subr.mxu0 0.0
        %5118 = vmatpush1.msra.mxu0 0.0
        %5119 = vmatprep.subr.mxu0 0.0
        %5120 = vmatpush1.msra.mxu0 0.0
        %5121 = vmatprep.subr.mxu0 0.0
        %5122 = vmatpush1.msra.mxu0 0.0
        %5123 = vmatprep.mubr.f32.mxu0 0.0
        %5124 = vmatmul.mubr.f32.gmra.mrb[0].mxu0 %v4761
        %v5125 = vpop.f32.mrb[0].mxu0
        %v5126 = vadd.f32 0.0, %v5125
        %v5127 = vpop.f32.mrb[0].mxu0
        %5128 = vmatprep.mubr.f32.mxu0 0.0
        %5129 = vmatmul.mubr.f32.gmra.mrb[0].mxu0 %v4767
        %v5130 = vpop.f32.mrb[0].mxu0
        %v5131 = vadd.f32 0.0, %v5130
        %v5132 = vpop.f32.mrb[0].mxu0
        %5133 = vmatprep.mubr.f32.mxu0 0.0
        %5134 = vmatmul.mubr.f32.gmra.mrb[0].mxu0 %v4773
        %v5135 = vpop.f32.mrb[0].mxu0
        %v5136 = vadd.f32 0.0, %v5135
        %v5137 = vpop.f32.mrb[0].mxu0
        %5138 = vmatprep.mubr.f32.mxu0 0.0
        %5139 = vmatmul.mubr.f32.gmra.mrb[0].mxu0 %v4779
        %v5140 = vpop.f32.mrb[0].mxu0
        %v5141 = vadd.f32 0.0, %v5140
        %v5142 = vpop.f32.mrb[0].mxu0
        %5143 = vmatprep.mubr.f32.mxu0 0.0
        %5144 = vmatmul.mubr.f32.gmra.mrb[0].mxu0 %v4785
        %v5145 = vpop.f32.mrb[0].mxu0
        %v5146 = vadd.f32 0.0, %v5145
        %v5147 = vpop.f32.mrb[0].mxu0
        %5148 = vmatprep.mubr.f32.mxu0 0.0
        %5149 = vmatmul.mubr.f32.gmra.mrb[0].mxu0 %v4791
        %v5150 = vpop.f32.mrb[0].mxu0
        %v5151 = vadd.f32 0.0, %v5150
        %v5152 = vpop.f32.mrb[0].mxu0
        %5153 = vmatprep.mubr.f32.mxu0 0.0
        %5154 = vmatmul.mubr.f32.gmra.mrb[0].mxu0 %v4797
        %v5155 = vpop.f32.mrb[0].mxu0
        %v5156 = vadd.f32 0.0, %v5155
        %v5157 = vpop.f32.mrb[0].mxu0
        %5158 = vmatprep.mubr.f32.mxu0 0.0
        %5159 = vmatmul.mubr.f32.gmra.mrb[0].mxu0 %v4803
        %v5160 = vpop.f32.mrb[0].mxu0
        %v5161 = vadd.f32 0.0, %v5160
        %v5162 = vpop.f32.mrb[0].mxu0
        %5163 = vmatprep.mubr.f32.mxu0 0.0
        %5164 = vmatmul.mubr.f32.gmra.mrb[0].mxu0 %v4809
        %v5165 = vpop.f32.mrb[0].mxu0
        %v5166 = vadd.f32 0.0, %v5165
        %v5167 = vpop.f32.mrb[0].mxu0
        %5168 = vmatprep.mubr.f32.mxu0 0.0
        %5169 = vmatmul.mubr.f32.gmra.mrb[0].mxu0 %v4815
        %v5170 = vpop.f32.mrb[0].mxu0
        %v5171 = vadd.f32 0.0, %v5170
        %v5172 = vpop.f32.mrb[0].mxu0
        %5173 = vdwg.mxu0
        %5174 = vmatprep.subr.mxu0 0.0
        %5175 = vmatpush1.msra.mxu0 %v4559
        %5176 = vmatprep.subr.mxu0 0.0
        %5177 = vmatpush1.msra.mxu0 %v4560
        %5178 = vmatprep.subr.mxu0 0.0
        %5179 = vmatpush1.msra.mxu0 %v4561
        %5180 = vmatprep.subr.mxu0 0.0
        %5181 = vmatpush1.msra.mxu0 %v4562
        %5182 = vmatprep.subr.mxu0 0.0
        %5183 = vmatpush1.msra.mxu0 %v4563
        %5184 = vmatprep.subr.mxu0 0.0
        %5185 = vmatpush1.msra.mxu0 %v4564
        %5186 = vmatprep.subr.mxu0 0.0
        %5187 = vmatpush1.msra.mxu0 %v4565
        %5188 = vmatprep.subr.mxu0 0.0
        %5189 = vmatpush1.msra.mxu0 %v4566
        %5190 = vmatprep.subr.mxu0 0.0
        %5191 = vmatpush1.msra.mxu0 %v4567
        %5192 = vmatprep.subr.mxu0 0.0
        %5193 = vmatpush1.msra.mxu0 %v4568
        %5194 = vmatprep.subr.mxu0 0.0
        %5195 = vmatpush1.msra.mxu0 %v4569
        %5196 = vmatprep.subr.mxu0 0.0
        %5197 = vmatpush1.msra.mxu0 %v4570
        %5198 = vmatprep.subr.mxu0 0.0
        %5199 = vmatpush1.msra.mxu0 %v4571
        %5200 = vmatprep.subr.mxu0 0.0
        %5201 = vmatpush1.msra.mxu0 %v4572
        %5202 = vmatprep.subr.mxu0 0.0
        %5203 = vmatpush1.msra.mxu0 %v4573
        %5204 = vmatprep.subr.mxu0 0.0
        %5205 = vmatpush1.msra.mxu0 %v4574
        %5206 = vmatprep.subr.mxu0 0.0
        %5207 = vmatpush1.msra.mxu0 0.0
        %5208 = vmatprep.subr.mxu0 0.0
        %5209 = vmatpush1.msra.mxu0 0.0
        %5210 = vmatprep.subr.mxu0 0.0
        %5211 = vmatpush1.msra.mxu0 0.0
        %5212 = vmatprep.subr.mxu0 0.0
        %5213 = vmatpush1.msra.mxu0 0.0
        %5214 = vmatprep.subr.mxu0 0.0
        %5215 = vmatpush1.msra.mxu0 0.0
        %5216 = vmatprep.subr.mxu0 0.0
        %5217 = vmatpush1.msra.mxu0 0.0
        %5218 = vmatprep.subr.mxu0 0.0
        %5219 = vmatpush1.msra.mxu0 0.0
        %5220 = vmatprep.subr.mxu0 0.0
        %5221 = vmatpush1.msra.mxu0 0.0
        %5222 = vmatprep.subr.mxu0 0.0
        %5223 = vmatpush1.msra.mxu0 0.0
        %5224 = vmatprep.subr.mxu0 0.0
        %5225 = vmatpush1.msra.mxu0 0.0
        %5226 = vmatprep.subr.mxu0 0.0
        %5227 = vmatpush1.msra.mxu0 0.0
        %5228 = vmatprep.subr.mxu0 0.0
        %5229 = vmatpush1.msra.mxu0 0.0
        %5230 = vmatprep.subr.mxu0 0.0
        %5231 = vmatpush1.msra.mxu0 0.0
        %5232 = vmatprep.subr.mxu0 0.0
        %5233 = vmatpush1.msra.mxu0 0.0
        %5234 = vmatprep.subr.mxu0 0.0
        %5235 = vmatpush1.msra.mxu0 0.0
        %5236 = vmatprep.subr.mxu0 0.0
        %5237 = vmatpush1.msra.mxu0 0.0
        %5238 = vmatprep.mubr.f32.mxu0 0.0
        %5239 = vmatmul.mubr.f32.gmra.mrb[0].mxu0 %v4763
        %v5240 = vpop.f32.mrb[0].mxu0
        %v5241 = vadd.f32 0.0, %v5240
        %v5242 = vpop.f32.mrb[0].mxu0
        %5243 = vmatprep.mubr.f32.mxu0 0.0
        %5244 = vmatmul.mubr.f32.gmra.mrb[0].mxu0 %v4769
        %v5245 = vpop.f32.mrb[0].mxu0
        %v5246 = vadd.f32 0.0, %v5245
        %v5247 = vpop.f32.mrb[0].mxu0
        %5248 = vmatprep.mubr.f32.mxu0 0.0
        %5249 = vmatmul.mubr.f32.gmra.mrb[0].mxu0 %v4775
        %v5250 = vpop.f32.mrb[0].mxu0
        %v5251 = vadd.f32 0.0, %v5250
        %v5252 = vpop.f32.mrb[0].mxu0
        %5253 = vmatprep.mubr.f32.mxu0 0.0
        %5254 = vmatmul.mubr.f32.gmra.mrb[0].mxu0 %v4781
        %v5255 = vpop.f32.mrb[0].mxu0
        %v5256 = vadd.f32 0.0, %v5255
        %v5257 = vpop.f32.mrb[0].mxu0
        %5258 = vmatprep.mubr.f32.mxu0 0.0
        %5259 = vmatmul.mubr.f32.gmra.mrb[0].mxu0 %v4787
        %v5260 = vpop.f32.mrb[0].mxu0
        %v5261 = vadd.f32 0.0, %v5260
        %v5262 = vpop.f32.mrb[0].mxu0
        %5263 = vmatprep.mubr.f32.mxu0 0.0
        %5264 = vmatmul.mubr.f32.gmra.mrb[0].mxu0 %v4793
        %v5265 = vpop.f32.mrb[0].mxu0
        %v5266 = vadd.f32 0.0, %v5265
        %v5267 = vpop.f32.mrb[0].mxu0
        %5268 = vmatprep.mubr.f32.mxu0 0.0
        %5269 = vmatmul.mubr.f32.gmra.mrb[0].mxu0 %v4799
        %v5270 = vpop.f32.mrb[0].mxu0
        %v5271 = vadd.f32 0.0, %v5270
        %v5272 = vpop.f32.mrb[0].mxu0
        %5273 = vmatprep.mubr.f32.mxu0 0.0
        %5274 = vmatmul.mubr.f32.gmra.mrb[0].mxu0 %v4805
        %v5275 = vpop.f32.mrb[0].mxu0
        %v5276 = vadd.f32 0.0, %v5275
        %v5277 = vpop.f32.mrb[0].mxu0
        %5278 = vmatprep.mubr.f32.mxu0 0.0
        %5279 = vmatmul.mubr.f32.gmra.mrb[0].mxu0 %v4811
        %v5280 = vpop.f32.mrb[0].mxu0
        %v5281 = vadd.f32 0.0, %v5280
        %v5282 = vpop.f32.mrb[0].mxu0
        %5283 = vmatprep.mubr.f32.mxu0 0.0
        %5284 = vmatmul.mubr.f32.gmra.mrb[0].mxu0 %v4817
        %v5285 = vpop.f32.mrb[0].mxu0
        %v5286 = vadd.f32 0.0, %v5285
        %v5287 = vpop.f32.mrb[0].mxu0
        %5288 = vdwg.mxu0
        %5289 = vmatprep.subr.mxu0 0.0
        %5290 = vmatpush1.msra.mxu0 %v4559
        %5291 = vmatprep.subr.mxu0 0.0
        %5292 = vmatpush1.msra.mxu0 %v4560
        %5293 = vmatprep.subr.mxu0 0.0
        %5294 = vmatpush1.msra.mxu0 %v4561
        %5295 = vmatprep.subr.mxu0 0.0
        %5296 = vmatpush1.msra.mxu0 %v4562
        %5297 = vmatprep.subr.mxu0 0.0
        %5298 = vmatpush1.msra.mxu0 %v4563
        %5299 = vmatprep.subr.mxu0 0.0
        %5300 = vmatpush1.msra.mxu0 %v4564
        %5301 = vmatprep.subr.mxu0 0.0
        %5302 = vmatpush1.msra.mxu0 %v4565
        %5303 = vmatprep.subr.mxu0 0.0
        %5304 = vmatpush1.msra.mxu0 %v4566
        %5305 = vmatprep.subr.mxu0 0.0
        %5306 = vmatpush1.msra.mxu0 %v4567
        %5307 = vmatprep.subr.mxu0 0.0
        %5308 = vmatpush1.msra.mxu0 %v4568
        %5309 = vmatprep.subr.mxu0 0.0
        %5310 = vmatpush1.msra.mxu0 %v4569
        %5311 = vmatprep.subr.mxu0 0.0
        %5312 = vmatpush1.msra.mxu0 %v4570
        %5313 = vmatprep.subr.mxu0 0.0
        %5314 = vmatpush1.msra.mxu0 %v4571
        %5315 = vmatprep.subr.mxu0 0.0
        %5316 = vmatpush1.msra.mxu0 %v4572
        %5317 = vmatprep.subr.mxu0 0.0
        %5318 = vmatpush1.msra.mxu0 %v4573
        %5319 = vmatprep.subr.mxu0 0.0
        %5320 = vmatpush1.msra.mxu0 %v4574
        %5321 = vmatprep.subr.mxu0 0.0
        %5322 = vmatpush1.msra.mxu0 0.0
        %5323 = vmatprep.subr.mxu0 0.0
        %5324 = vmatpush1.msra.mxu0 0.0
        %5325 = vmatprep.subr.mxu0 0.0
        %5326 = vmatpush1.msra.mxu0 0.0
        %5327 = vmatprep.subr.mxu0 0.0
        %5328 = vmatpush1.msra.mxu0 0.0
        %5329 = vmatprep.subr.mxu0 0.0
        %5330 = vmatpush1.msra.mxu0 0.0
        %5331 = vmatprep.subr.mxu0 0.0
        %5332 = vmatpush1.msra.mxu0 0.0
        %5333 = vmatprep.subr.mxu0 0.0
        %5334 = vmatpush1.msra.mxu0 0.0
        %5335 = vmatprep.subr.mxu0 0.0
        %5336 = vmatpush1.msra.mxu0 0.0
        %5337 = vmatprep.subr.mxu0 0.0
        %5338 = vmatpush1.msra.mxu0 0.0
        %5339 = vmatprep.subr.mxu0 0.0
        %5340 = vmatpush1.msra.mxu0 0.0
        %5341 = vmatprep.subr.mxu0 0.0
        %5342 = vmatpush1.msra.mxu0 0.0
        %5343 = vmatprep.subr.mxu0 0.0
        %5344 = vmatpush1.msra.mxu0 0.0
        %5345 = vmatprep.subr.mxu0 0.0
        %5346 = vmatpush1.msra.mxu0 0.0
        %5347 = vmatprep.subr.mxu0 0.0
        %5348 = vmatpush1.msra.mxu0 0.0
        %5349 = vmatprep.subr.mxu0 0.0
        %5350 = vmatpush1.msra.mxu0 0.0
        %5351 = vmatprep.subr.mxu0 0.0
        %5352 = vmatpush1.msra.mxu0 0.0
        %5353 = vmatprep.mubr.f32.mxu0 0.0
        %5354 = vmatmul.mubr.f32.gmra.mrb[0].mxu0 %v4886
        %v5355 = vpop.f32.mrb[0].mxu0
        %v5356 = vadd.f32 0.0, %v5355
        %v5357 = vpop.f32.mrb[0].mxu0
        %5358 = vmatprep.mubr.f32.mxu0 0.0
        %5359 = vmatmul.mubr.f32.gmra.mrb[0].mxu0 %v4892
        %v5360 = vpop.f32.mrb[0].mxu0
        %v5361 = vadd.f32 0.0, %v5360
        %v5362 = vpop.f32.mrb[0].mxu0
        %5363 = vmatprep.mubr.f32.mxu0 0.0
        %5364 = vmatmul.mubr.f32.gmra.mrb[0].mxu0 %v4898
        %v5365 = vpop.f32.mrb[0].mxu0
        %v5366 = vadd.f32 0.0, %v5365
        %v5367 = vpop.f32.mrb[0].mxu0
        %5368 = vmatprep.mubr.f32.mxu0 0.0
        %5369 = vmatmul.mubr.f32.gmra.mrb[0].mxu0 %v4904
        %v5370 = vpop.f32.mrb[0].mxu0
        %v5371 = vadd.f32 0.0, %v5370
        %v5372 = vpop.f32.mrb[0].mxu0
        %5373 = vmatprep.mubr.f32.mxu0 0.0
        %5374 = vmatmul.mubr.f32.gmra.mrb[0].mxu0 %v4910
        %v5375 = vpop.f32.mrb[0].mxu0
        %v5376 = vadd.f32 0.0, %v5375
        %v5377 = vpop.f32.mrb[0].mxu0
        %5378 = vmatprep.mubr.f32.mxu0 0.0
        %5379 = vmatmul.mubr.f32.gmra.mrb[0].mxu0 %v4916
        %v5380 = vpop.f32.mrb[0].mxu0
        %v5381 = vadd.f32 0.0, %v5380
        %v5382 = vpop.f32.mrb[0].mxu0
        %5383 = vmatprep.mubr.f32.mxu0 0.0
        %5384 = vmatmul.mubr.f32.gmra.mrb[0].mxu0 %v4922
        %v5385 = vpop.f32.mrb[0].mxu0
        %v5386 = vadd.f32 0.0, %v5385
        %v5387 = vpop.f32.mrb[0].mxu0
        %5388 = vmatprep.mubr.f32.mxu0 0.0
        %5389 = vmatmul.mubr.f32.gmra.mrb[0].mxu0 %v4928
        %v5390 = vpop.f32.mrb[0].mxu0
        %v5391 = vadd.f32 0.0, %v5390
        %v5392 = vpop.f32.mrb[0].mxu0
        %5393 = vmatprep.mubr.f32.mxu0 0.0
        %5394 = vmatmul.mubr.f32.gmra.mrb[0].mxu0 %v4934
        %v5395 = vpop.f32.mrb[0].mxu0
        %v5396 = vadd.f32 0.0, %v5395
        %v5397 = vpop.f32.mrb[0].mxu0
        %5398 = vmatprep.mubr.f32.mxu0 0.0
        %5399 = vmatmul.mubr.f32.gmra.mrb[0].mxu0 %v4940
        %v5400 = vpop.f32.mrb[0].mxu0
        %v5401 = vadd.f32 0.0, %v5400
        %v5402 = vpop.f32.mrb[0].mxu0
        %5403 = vdwg.mxu0
        %5404 = vmatprep.subr.mxu0 0.0
        %5405 = vmatpush1.msra.mxu0 %v4559
        %5406 = vmatprep.subr.mxu0 0.0
        %5407 = vmatpush1.msra.mxu0 %v4560
        %5408 = vmatprep.subr.mxu0 0.0
        %5409 = vmatpush1.msra.mxu0 %v4561
        %5410 = vmatprep.subr.mxu0 0.0
        %5411 = vmatpush1.msra.mxu0 %v4562
        %5412 = vmatprep.subr.mxu0 0.0
        %5413 = vmatpush1.msra.mxu0 %v4563
        %5414 = vmatprep.subr.mxu0 0.0
        %5415 = vmatpush1.msra.mxu0 %v4564
        %5416 = vmatprep.subr.mxu0 0.0
        %5417 = vmatpush1.msra.mxu0 %v4565
        %5418 = vmatprep.subr.mxu0 0.0
        %5419 = vmatpush1.msra.mxu0 %v4566
        %5420 = vmatprep.subr.mxu0 0.0
        %5421 = vmatpush1.msra.mxu0 %v4567
        %5422 = vmatprep.subr.mxu0 0.0
        %5423 = vmatpush1.msra.mxu0 %v4568
        %5424 = vmatprep.subr.mxu0 0.0
        %5425 = vmatpush1.msra.mxu0 %v4569
        %5426 = vmatprep.subr.mxu0 0.0
        %5427 = vmatpush1.msra.mxu0 %v4570
        %5428 = vmatprep.subr.mxu0 0.0
        %5429 = vmatpush1.msra.mxu0 %v4571
        %5430 = vmatprep.subr.mxu0 0.0
        %5431 = vmatpush1.msra.mxu0 %v4572
        %5432 = vmatprep.subr.mxu0 0.0
        %5433 = vmatpush1.msra.mxu0 %v4573
        %5434 = vmatprep.subr.mxu0 0.0
        %5435 = vmatpush1.msra.mxu0 %v4574
        %5436 = vmatprep.subr.mxu0 0.0
        %5437 = vmatpush1.msra.mxu0 0.0
        %5438 = vmatprep.subr.mxu0 0.0
        %5439 = vmatpush1.msra.mxu0 0.0
        %5440 = vmatprep.subr.mxu0 0.0
        %5441 = vmatpush1.msra.mxu0 0.0
        %5442 = vmatprep.subr.mxu0 0.0
        %5443 = vmatpush1.msra.mxu0 0.0
        %5444 = vmatprep.subr.mxu0 0.0
        %5445 = vmatpush1.msra.mxu0 0.0
        %5446 = vmatprep.subr.mxu0 0.0
        %5447 = vmatpush1.msra.mxu0 0.0
        %5448 = vmatprep.subr.mxu0 0.0
        %5449 = vmatpush1.msra.mxu0 0.0
        %5450 = vmatprep.subr.mxu0 0.0
        %5451 = vmatpush1.msra.mxu0 0.0
        %5452 = vmatprep.subr.mxu0 0.0
        %5453 = vmatpush1.msra.mxu0 0.0
        %5454 = vmatprep.subr.mxu0 0.0
        %5455 = vmatpush1.msra.mxu0 0.0
        %5456 = vmatprep.subr.mxu0 0.0
        %5457 = vmatpush1.msra.mxu0 0.0
        %5458 = vmatprep.subr.mxu0 0.0
        %5459 = vmatpush1.msra.mxu0 0.0
        %5460 = vmatprep.subr.mxu0 0.0
        %5461 = vmatpush1.msra.mxu0 0.0
        %5462 = vmatprep.subr.mxu0 0.0
        %5463 = vmatpush1.msra.mxu0 0.0
        %5464 = vmatprep.subr.mxu0 0.0
        %5465 = vmatpush1.msra.mxu0 0.0
        %5466 = vmatprep.subr.mxu0 0.0
        %5467 = vmatpush1.msra.mxu0 0.0
        %5468 = vmatprep.mubr.f32.mxu0 0.0
        %5469 = vmatmul.mubr.f32.gmra.mrb[0].mxu0 %v4888
        %v5470 = vpop.f32.mrb[0].mxu0
        %v5471 = vadd.f32 0.0, %v5470
        %v5472 = vpop.f32.mrb[0].mxu0
        %5473 = vmatprep.mubr.f32.mxu0 0.0
        %5474 = vmatmul.mubr.f32.gmra.mrb[0].mxu0 %v4894
        %v5475 = vpop.f32.mrb[0].mxu0
        %v5476 = vadd.f32 0.0, %v5475
        %v5477 = vpop.f32.mrb[0].mxu0
        %5478 = vmatprep.mubr.f32.mxu0 0.0
        %5479 = vmatmul.mubr.f32.gmra.mrb[0].mxu0 %v4900
        %v5480 = vpop.f32.mrb[0].mxu0
        %v5481 = vadd.f32 0.0, %v5480
        %v5482 = vpop.f32.mrb[0].mxu0
        %5483 = vmatprep.mubr.f32.mxu0 0.0
        %5484 = vmatmul.mubr.f32.gmra.mrb[0].mxu0 %v4906
        %v5485 = vpop.f32.mrb[0].mxu0
        %v5486 = vadd.f32 0.0, %v5485
        %v5487 = vpop.f32.mrb[0].mxu0
        %5488 = vmatprep.mubr.f32.mxu0 0.0
        %5489 = vmatmul.mubr.f32.gmra.mrb[0].mxu0 %v4912
        %v5490 = vpop.f32.mrb[0].mxu0
        %v5491 = vadd.f32 0.0, %v5490
        %v5492 = vpop.f32.mrb[0].mxu0
        %5493 = vmatprep.mubr.f32.mxu0 0.0
        %5494 = vmatmul.mubr.f32.gmra.mrb[0].mxu0 %v4918
        %v5495 = vpop.f32.mrb[0].mxu0
        %v5496 = vadd.f32 0.0, %v5495
        %v5497 = vpop.f32.mrb[0].mxu0
        %5498 = vmatprep.mubr.f32.mxu0 0.0
        %5499 = vmatmul.mubr.f32.gmra.mrb[0].mxu0 %v4924
        %v5500 = vpop.f32.mrb[0].mxu0
        %v5501 = vadd.f32 0.0, %v5500
        %v5502 = vpop.f32.mrb[0].mxu0
        %5503 = vmatprep.mubr.f32.mxu0 0.0
        %5504 = vmatmul.mubr.f32.gmra.mrb[0].mxu0 %v4930
        %v5505 = vpop.f32.mrb[0].mxu0
        %v5506 = vadd.f32 0.0, %v5505
        %v5507 = vpop.f32.mrb[0].mxu0
        %5508 = vmatprep.mubr.f32.mxu0 0.0
        %5509 = vmatmul.mubr.f32.gmra.mrb[0].mxu0 %v4936
        %v5510 = vpop.f32.mrb[0].mxu0
        %v5511 = vadd.f32 0.0, %v5510
        %v5512 = vpop.f32.mrb[0].mxu0
        %5513 = vmatprep.mubr.f32.mxu0 0.0
        %5514 = vmatmul.mubr.f32.gmra.mrb[0].mxu0 %v4942
        %v5515 = vpop.f32.mrb[0].mxu0
        %v5516 = vadd.f32 0.0, %v5515
        %v5517 = vpop.f32.mrb[0].mxu0
        %5518 = vdwg.mxu0
        %5519 = vmatprep.subr.mxu0 0.0
        %5520 = vmatpush1.msra.mxu0 %v4559
        %5521 = vmatprep.subr.mxu0 0.0
        %5522 = vmatpush1.msra.mxu0 %v4560
        %5523 = vmatprep.subr.mxu0 0.0
        %5524 = vmatpush1.msra.mxu0 %v4561
        %5525 = vmatprep.subr.mxu0 0.0
        %5526 = vmatpush1.msra.mxu0 %v4562
        %5527 = vmatprep.subr.mxu0 0.0
        %5528 = vmatpush1.msra.mxu0 %v4563
        %5529 = vmatprep.subr.mxu0 0.0
        %5530 = vmatpush1.msra.mxu0 %v4564
        %5531 = vmatprep.subr.mxu0 0.0
        %5532 = vmatpush1.msra.mxu0 %v4565
        %5533 = vmatprep.subr.mxu0 0.0
        %5534 = vmatpush1.msra.mxu0 %v4566
        %5535 = vmatprep.subr.mxu0 0.0
        %5536 = vmatpush1.msra.mxu0 %v4567
        %5537 = vmatprep.subr.mxu0 0.0
        %5538 = vmatpush1.msra.mxu0 %v4568
        %5539 = vmatprep.subr.mxu0 0.0
        %5540 = vmatpush1.msra.mxu0 %v4569
        %5541 = vmatprep.subr.mxu0 0.0
        %5542 = vmatpush1.msra.mxu0 %v4570
        %5543 = vmatprep.subr.mxu0 0.0
        %5544 = vmatpush1.msra.mxu0 %v4571
        %5545 = vmatprep.subr.mxu0 0.0
        %5546 = vmatpush1.msra.mxu0 %v4572
        %5547 = vmatprep.subr.mxu0 0.0
        %5548 = vmatpush1.msra.mxu0 %v4573
        %5549 = vmatprep.subr.mxu0 0.0
        %5550 = vmatpush1.msra.mxu0 %v4574
        %5551 = vmatprep.subr.mxu0 0.0
        %5552 = vmatpush1.msra.mxu0 0.0
        %5553 = vmatprep.subr.mxu0 0.0
        %5554 = vmatpush1.msra.mxu0 0.0
        %5555 = vmatprep.subr.mxu0 0.0
        %5556 = vmatpush1.msra.mxu0 0.0
        %5557 = vmatprep.subr.mxu0 0.0
        %5558 = vmatpush1.msra.mxu0 0.0
        %5559 = vmatprep.subr.mxu0 0.0
        %5560 = vmatpush1.msra.mxu0 0.0
        %5561 = vmatprep.subr.mxu0 0.0
        %5562 = vmatpush1.msra.mxu0 0.0
        %5563 = vmatprep.subr.mxu0 0.0
        %5564 = vmatpush1.msra.mxu0 0.0
        %5565 = vmatprep.subr.mxu0 0.0
        %5566 = vmatpush1.msra.mxu0 0.0
        %5567 = vmatprep.subr.mxu0 0.0
        %5568 = vmatpush1.msra.mxu0 0.0
        %5569 = vmatprep.subr.mxu0 0.0
        %5570 = vmatpush1.msra.mxu0 0.0
        %5571 = vmatprep.subr.mxu0 0.0
        %5572 = vmatpush1.msra.mxu0 0.0
        %5573 = vmatprep.subr.mxu0 0.0
        %5574 = vmatpush1.msra.mxu0 0.0
        %5575 = vmatprep.subr.mxu0 0.0
        %5576 = vmatpush1.msra.mxu0 0.0
        %5577 = vmatprep.subr.mxu0 0.0
        %5578 = vmatpush1.msra.mxu0 0.0
        %5579 = vmatprep.subr.mxu0 0.0
        %5580 = vmatpush1.msra.mxu0 0.0
        %5581 = vmatprep.subr.mxu0 0.0
        %5582 = vmatpush1.msra.mxu0 0.0
        %5583 = vmatprep.mubr.f32.mxu0 0.0
        %5584 = vmatmul.mubr.f32.gmra.mrb[0].mxu0 %v5011
        %v5585 = vpop.f32.mrb[0].mxu0
        %v5586 = vadd.f32 0.0, %v5585
        %v5587 = vpop.f32.mrb[0].mxu0
        %5588 = vmatprep.mubr.f32.mxu0 0.0
        %5589 = vmatmul.mubr.f32.gmra.mrb[0].mxu0 %v5016
        %v5590 = vpop.f32.mrb[0].mxu0
        %v5591 = vadd.f32 0.0, %v5590
        %v5592 = vpop.f32.mrb[0].mxu0
        %5593 = vmatprep.mubr.f32.mxu0 0.0
        %5594 = vmatmul.mubr.f32.gmra.mrb[0].mxu0 %v5021
        %v5595 = vpop.f32.mrb[0].mxu0
        %v5596 = vadd.f32 0.0, %v5595
        %v5597 = vpop.f32.mrb[0].mxu0
        %5598 = vmatprep.mubr.f32.mxu0 0.0
        %5599 = vmatmul.mubr.f32.gmra.mrb[0].mxu0 %v5026
        %v5600 = vpop.f32.mrb[0].mxu0
        %v5601 = vadd.f32 0.0, %v5600
        %v5602 = vpop.f32.mrb[0].mxu0
        %5603 = vmatprep.mubr.f32.mxu0 0.0
        %5604 = vmatmul.mubr.f32.gmra.mrb[0].mxu0 %v5031
        %v5605 = vpop.f32.mrb[0].mxu0
        %v5606 = vadd.f32 0.0, %v5605
        %v5607 = vpop.f32.mrb[0].mxu0
        %5608 = vmatprep.mubr.f32.mxu0 0.0
        %5609 = vmatmul.mubr.f32.gmra.mrb[0].mxu0 %v5036
        %v5610 = vpop.f32.mrb[0].mxu0
        %v5611 = vadd.f32 0.0, %v5610
        %v5612 = vpop.f32.mrb[0].mxu0
        %5613 = vmatprep.mubr.f32.mxu0 0.0
        %5614 = vmatmul.mubr.f32.gmra.mrb[0].mxu0 %v5041
        %v5615 = vpop.f32.mrb[0].mxu0
        %v5616 = vadd.f32 0.0, %v5615
        %v5617 = vpop.f32.mrb[0].mxu0
        %5618 = vmatprep.mubr.f32.mxu0 0.0
        %5619 = vmatmul.mubr.f32.gmra.mrb[0].mxu0 %v5046
        %v5620 = vpop.f32.mrb[0].mxu0
        %v5621 = vadd.f32 0.0, %v5620
        %v5622 = vpop.f32.mrb[0].mxu0
        %5623 = vmatprep.mubr.f32.mxu0 0.0
        %5624 = vmatmul.mubr.f32.gmra.mrb[0].mxu0 %v5051
        %v5625 = vpop.f32.mrb[0].mxu0
        %v5626 = vadd.f32 0.0, %v5625
        %v5627 = vpop.f32.mrb[0].mxu0
        %5628 = vmatprep.mubr.f32.mxu0 0.0
        %5629 = vmatmul.mubr.f32.gmra.mrb[0].mxu0 %v5056
        %v5630 = vpop.f32.mrb[0].mxu0
        %v5631 = vadd.f32 0.0, %v5630
        %v5632 = vpop.f32.mrb[0].mxu0
        %5633 = vdwg.mxu0
        %v5634 = vmul.f32 %v5126, %v5126
        %v5635 = vmul.f32 %v5131, %v5131
        %v5636 = vmul.f32 %v5136, %v5136
        %v5637 = vmul.f32 %v5141, %v5141
        %v5638 = vmul.f32 %v5146, %v5146
        %v5639 = vmul.f32 %v5151, %v5151
        %v5640 = vmul.f32 %v5156, %v5156
        %v5641 = vmul.f32 %v5161, %v5161
        %v5642 = vmul.f32 %v5166, %v5166
        %v5643 = vmul.f32 %v5171, %v5171
        %v5644 = vmul.f32 %v5241, %v5241
        %v5645 = vmul.f32 %v5246, %v5246
        %v5646 = vmul.f32 %v5251, %v5251
        %v5647 = vmul.f32 %v5256, %v5256
        %v5648 = vmul.f32 %v5261, %v5261
        %v5649 = vmul.f32 %v5266, %v5266
        %v5650 = vmul.f32 %v5271, %v5271
        %v5651 = vmul.f32 %v5276, %v5276
        %v5652 = vmul.f32 %v5281, %v5281
        %v5653 = vmul.f32 %v5286, %v5286
        %v5654 = vmul.f32 %v5126, %v5241
        %v5655 = vmul.f32 %v5131, %v5246
        %v5656 = vmul.f32 %v5136, %v5251
        %v5657 = vmul.f32 %v5141, %v5256
        %v5658 = vmul.f32 %v5146, %v5261
        %v5659 = vmul.f32 %v5151, %v5266
        %v5660 = vmul.f32 %v5156, %v5271
        %v5661 = vmul.f32 %v5161, %v5276
        %v5662 = vmul.f32 %v5166, %v5281
        %v5663 = vmul.f32 %v5171, %v5286
        %v5664 = vsub.f32 %v5356, %v5634
        %v5665 = vsub.f32 %v5361, %v5635
        %v5666 = vsub.f32 %v5366, %v5636
        %v5667 = vsub.f32 %v5371, %v5637
        %v5668 = vsub.f32 %v5376, %v5638
        %v5669 = vsub.f32 %v5381, %v5639
        %v5670 = vsub.f32 %v5386, %v5640
        %v5671 = vsub.f32 %v5391, %v5641
        %v5672 = vsub.f32 %v5396, %v5642
        %v5673 = vsub.f32 %v5401, %v5643
        %v5674 = vsub.f32 %v5471, %v5644
        %v5675 = vsub.f32 %v5476, %v5645
        %v5676 = vsub.f32 %v5481, %v5646
        %v5677 = vsub.f32 %v5486, %v5647
        %v5678 = vsub.f32 %v5491, %v5648
        %v5679 = vsub.f32 %v5496, %v5649
        %v5680 = vsub.f32 %v5501, %v5650
        %v5681 = vsub.f32 %v5506, %v5651
        %v5682 = vsub.f32 %v5511, %v5652
        %v5683 = vsub.f32 %v5516, %v5653
        %v5684 = vsub.f32 %v5586, %v5654
        %v5685 = vsub.f32 %v5591, %v5655
        %v5686 = vsub.f32 %v5596, %v5656
        %v5687 = vsub.f32 %v5601, %v5657
        %v5688 = vsub.f32 %v5606, %v5658
        %v5689 = vsub.f32 %v5611, %v5659
        %v5690 = vsub.f32 %v5616, %v5660
        %v5691 = vsub.f32 %v5621, %v5661
        %v5692 = vsub.f32 %v5626, %v5662
        %v5693 = vsub.f32 %v5631, %v5663
        %v5694 = vmul.f32 %v5684, 2.0
        %v5695 = vmul.f32 %v5685, 2.0
        %v5696 = vmul.f32 %v5686, 2.0
        %v5697 = vmul.f32 %v5687, 2.0
        %v5698 = vmul.f32 %v5688, 2.0
        %v5699 = vmul.f32 %v5689, 2.0
        %v5700 = vmul.f32 %v5690, 2.0
        %v5701 = vmul.f32 %v5691, 2.0
        %v5702 = vmul.f32 %v5692, 2.0
        %v5703 = vmul.f32 %v5693, 2.0
        %v5704 = vadd.f32 %v5694, 0.0009
        %v5705 = vadd.f32 %v5695, 0.0009
        %v5706 = vadd.f32 %v5696, 0.0009
        %v5707 = vadd.f32 %v5697, 0.0009
        %v5708 = vadd.f32 %v5698, 0.0009
        %v5709 = vadd.f32 %v5699, 0.0009
        %v5710 = vadd.f32 %v5700, 0.0009
        %v5711 = vadd.f32 %v5701, 0.0009
        %v5712 = vadd.f32 %v5702, 0.0009
        %v5713 = vadd.f32 %v5703, 0.0009
        %v5714 = vadd.f32 %v5664, %v5674
        %v5715 = vadd.f32 %v5665, %v5675
        %v5716 = vadd.f32 %v5666, %v5676
        %v5717 = vadd.f32 %v5667, %v5677
        %v5718 = vadd.f32 %v5668, %v5678
        %v5719 = vadd.f32 %v5669, %v5679
        %v5720 = vadd.f32 %v5670, %v5680
        %v5721 = vadd.f32 %v5671, %v5681
        %v5722 = vadd.f32 %v5672, %v5682
        %v5723 = vadd.f32 %v5673, %v5683
        %v5724 = vadd.f32 %v5714, 0.0009
        %v5725 = vadd.f32 %v5715, 0.0009
        %v5726 = vadd.f32 %v5716, 0.0009
        %v5727 = vadd.f32 %v5717, 0.0009
        %v5728 = vadd.f32 %v5718, 0.0009
        %v5729 = vadd.f32 %v5719, 0.0009
        %v5730 = vadd.f32 %v5720, 0.0009
        %v5731 = vadd.f32 %v5721, 0.0009
        %v5732 = vadd.f32 %v5722, 0.0009
        %v5733 = vadd.f32 %v5723, 0.0009
        %v5734 = vrcp.pop %v5724
        %v5735 = vrcp.pop %v5725
        %v5736 = vrcp.pop %v5726
        %v5737 = vrcp.pop %v5727
        %v5738 = vrcp.pop %v5728
        %v5739 = vrcp.pop %v5729
        %v5740 = vrcp.pop %v5730
        %v5741 = vrcp.pop %v5731
        %v5742 = vrcp.pop %v5732
        %v5743 = vrcp.pop %v5733
        %v5744 = vmul.f32 %v5704, %v5734
        %v5745 = vmul.f32 %v5705, %v5735
        %v5746 = vmul.f32 %v5706, %v5736
        %v5747 = vmul.f32 %v5707, %v5737
        %v5748 = vmul.f32 %v5708, %v5738
        %v5749 = vmul.f32 %v5709, %v5739
        %v5750 = vmul.f32 %v5710, %v5740
        %v5751 = vmul.f32 %v5711, %v5741
        %v5752 = vmul.f32 %v5712, %v5742
        %v5753 = vmul.f32 %v5713, %v5743
        %vm5754 = vcmask 637952
        %v5755 = vsel %vm5754, %v5744, 0.0
        %v5756 = vsel %vm5754, %v5745, 0.0
        %v5757 = vadd.f32 %v5755, %v5756
        %v5758 = vsel %vm5754, %v5746, 0.0
        %v5759 = vadd.f32 %v5757, %v5758
        %v5760 = vsel %vm5754, %v5747, 0.0
        %v5761 = vadd.f32 %v5759, %v5760
        %v5762 = vsel %vm5754, %v5748, 0.0
        %v5763 = vadd.f32 %v5761, %v5762
        %v5764 = vsel %vm5754, %v5749, 0.0
        %v5765 = vadd.f32 %v5763, %v5764
        %v5766 = vsel %vm5754, %v5750, 0.0
        %v5767 = vadd.f32 %v5765, %v5766
        %v5768 = vsel %vm5754, %v5751, 0.0
        %v5769 = vadd.f32 %v5767, %v5768
        %v5770 = vsel %vm5754, %v5752, 0.0
        %v5771 = vadd.f32 %v5769, %v5770
        %vm5772 = vcmask 635904
        %v5773 = vsel %vm5772, %v5753, 0.0
        %v5774 = vadd.f32 %v5771, %v5773
        %5775 = vadd.xlane.f32.xlu0 %v5774
        %v5776 = vpop.xlane.xlu0 %5775
        %v5777 = vrot.slane %v5776, 4
        %v5778 = vadd.f32 %v5776, %v5777
        %v5779 = vrot.slane %v5778, 2
        %v5780 = vadd.f32 %v5778, %v5779
        %v5781 = vrot.slane %v5780, 1
        %v5782 = vadd.f32 %v5780, %v5781
        %s5783 = vtos %v5782
        %s5784 = smul.f32 %s5783, 0.00016436556
        %v5785 = vld [vmem:[#allocation12] sm:$0xff]
        %v5786 = vld [vmem:[#allocation12 + $0x8] sm:$0xff]
        %v5787 = vld [vmem:[#allocation12 + $0x10] sm:$0xff]
        %v5788 = vld [vmem:[#allocation12 + $0x18] sm:$0xff]
        %v5789 = vld [vmem:[#allocation12 + $0x20] sm:$0xff]
        %v5790 = vld [vmem:[#allocation12 + $0x28] sm:$0xf]
        %v5791 = vld [vmem:[#allocation13] sm:$0xff]
        %v5792 = vld [vmem:[#allocation13 + $0x8] sm:$0xff]
        %v5793 = vld [vmem:[#allocation13 + $0x10] sm:$0xff]
        %v5794 = vld [vmem:[#allocation13 + $0x18] sm:$0xff]
        %v5795 = vld [vmem:[#allocation13 + $0x20] sm:$0xff]
        %v5796 = vld [vmem:[#allocation13 + $0x28] sm:$0xff]
        %v5797 = vld [vmem:[#allocation13 + $0x30] sm:$0xff]
        %v5798 = vld [vmem:[#allocation13 + $0x38] sm:$0xff]
        %v5799 = vld [vmem:[#allocation13 + $0x40] sm:$0xff]
        %v5800 = vld [vmem:[#allocation13 + $0x48] sm:$0xff]
        %v5801 = vld [vmem:[#allocation13 + $0x50] sm:$0xff]
        %v5802 = vld [vmem:[#allocation13 + $0x58] sm:$0xff]
        %v5803 = vld [vmem:[#allocation13 + $0x60] sm:$0xff]
        %v5804 = vld [vmem:[#allocation13 + $0x68] sm:$0xff]
        %v5805 = vld [vmem:[#allocation13 + $0x70] sm:$0xff]
        %v5806 = vld [vmem:[#allocation13 + $0x78] sm:$0xff]
        %v5808 = vsel %vm4608, %v5785, 0
        %v5811 = vsel %vm4608, %v5786, 0
        %v5814 = vsel %vm4608, %v5787, 0
        %v5817 = vsel %vm4608, %v5788, 0
        %v5820 = vsel %vm4608, %v5789, 0
        %v5823 = vsel %vm4608, %v5790, 0
        %5825 = vmatprep.subr.mxu0 %v4620
        %5826 = vmatpush1.msra.mxu0 %v4609
        %5827 = vmatprep.subr.mxu0 %v4621
        %5828 = vmatpush1.msra.mxu0 %v4610
        %5829 = vmatprep.subr.mxu0 %v4622
        %5830 = vmatpush1.msra.mxu0 %v4611
        %5831 = vmatprep.subr.mxu0 %v4623
        %5832 = vmatpush1.msra.mxu0 %v4612
        %5833 = vmatprep.subr.mxu0 %v4624
        %5834 = vmatpush1.msra.mxu0 %v4613
        %5835 = vmatprep.subr.mxu0 %v4625
        %5836 = vmatpush1.msra.mxu0 %v4614
        %5837 = vmatprep.subr.mxu0 %v4626
        %5838 = vmatpush1.msra.mxu0 %v4615
        %5839 = vmatprep.subr.mxu0 %v4627
        %5840 = vmatpush1.msra.mxu0 %v4616
        %5841 = vmatprep.subr.mxu0 %v4628
        %5842 = vmatpush1.msra.mxu0 %v4617
        %5843 = vmatprep.subr.mxu0 %v4629
        %5844 = vmatpush1.msra.mxu0 %v4618
        %5845 = vmatprep.subr.mxu0 %v4630
        %5846 = vmatpush1.msra.mxu0 %v4619
        %5847 = vmatprep.subr.mxu0 0.0
        %5848 = vmatpush1.msra.mxu0 0.0
        %5849 = vmatprep.subr.mxu0 0.0
        %5850 = vmatpush1.msra.mxu0 0.0
        %5851 = vmatprep.subr.mxu0 0.0
        %5852 = vmatpush1.msra.mxu0 0.0
        %5853 = vmatprep.subr.mxu0 0.0
        %5854 = vmatpush1.msra.mxu0 0.0
        %5855 = vmatprep.subr.mxu0 0.0
        %5856 = vmatpush1.msra.mxu0 0.0
        %5857 = vmatprep.subr.mxu0 0.0
        %5858 = vmatpush1.msra.mxu0 0.0
        %5859 = vmatprep.subr.mxu0 0.0
        %5860 = vmatpush1.msra.mxu0 0.0
        %5861 = vmatprep.subr.mxu0 0.0
        %5862 = vmatpush1.msra.mxu0 0.0
        %5863 = vmatprep.subr.mxu0 0.0
        %5864 = vmatpush1.msra.mxu0 0.0
        %5865 = vmatprep.subr.mxu0 0.0
        %5866 = vmatpush1.msra.mxu0 0.0
        %5867 = vmatprep.subr.mxu0 0.0
        %5868 = vmatpush1.msra.mxu0 0.0
        %5869 = vmatprep.subr.mxu0 0.0
        %5870 = vmatpush1.msra.mxu0 0.0
        %5871 = vmatprep.subr.mxu0 0.0
        %5872 = vmatpush1.msra.mxu0 0.0
        %5873 = vmatprep.subr.mxu0 0.0
        %5874 = vmatpush1.msra.mxu0 0.0
        %5875 = vmatprep.subr.mxu0 0.0
        %5876 = vmatpush1.msra.mxu0 0.0
        %5877 = vmatprep.subr.mxu0 0.0
        %5878 = vmatpush1.msra.mxu0 0.0
        %5879 = vmatprep.subr.mxu0 0.0
        %5880 = vmatpush1.msra.mxu0 0.0
        %5881 = vmatprep.subr.mxu0 0.0
        %5882 = vmatpush1.msra.mxu0 0.0
        %5883 = vmatprep.subr.mxu0 0.0
        %5884 = vmatpush1.msra.mxu0 0.0
        %5885 = vmatprep.subr.mxu0 0.0
        %5886 = vmatpush1.msra.mxu0 0.0
        %5887 = vmatprep.subr.mxu0 0.0
        %5888 = vmatpush1.msra.mxu0 0.0
        %5889 = vmatprep.mubr.f32.mxu0 0.0
        %5890 = vmatmul.mubr.f32.gmra.mrb[0].mxu0 %v5808
        %v5891 = vpop.f32.mrb[0].mxu0
        %v5892 = vadd.f32 0.0, %v5891
        %v5893 = vpop.f32.mrb[0].mxu0
        %v5894 = vadd.f32 0.0, %v5893
        %5895 = vmatprep.mubr.f32.mxu0 0.0
        %5896 = vmatmul.mubr.f32.gmra.mrb[0].mxu0 %v5811
        %v5897 = vpop.f32.mrb[0].mxu0
        %v5898 = vadd.f32 0.0, %v5897
        %v5899 = vpop.f32.mrb[0].mxu0
        %v5900 = vadd.f32 0.0, %v5899
        %5901 = vmatprep.mubr.f32.mxu0 0.0
        %5902 = vmatmul.mubr.f32.gmra.mrb[0].mxu0 %v5814
        %v5903 = vpop.f32.mrb[0].mxu0
        %v5904 = vadd.f32 0.0, %v5903
        %v5905 = vpop.f32.mrb[0].mxu0
        %v5906 = vadd.f32 0.0, %v5905
        %5907 = vmatprep.mubr.f32.mxu0 0.0
        %5908 = vmatmul.mubr.f32.gmra.mrb[0].mxu0 %v5817
        %v5909 = vpop.f32.mrb[0].mxu0
        %v5910 = vadd.f32 0.0, %v5909
        %v5911 = vpop.f32.mrb[0].mxu0
        %v5912 = vadd.f32 0.0, %v5911
        %5913 = vmatprep.mubr.f32.mxu0 0.0
        %5914 = vmatmul.mubr.f32.gmra.mrb[0].mxu0 %v5820
        %v5915 = vpop.f32.mrb[0].mxu0
        %v5916 = vadd.f32 0.0, %v5915
        %v5917 = vpop.f32.mrb[0].mxu0
        %v5918 = vadd.f32 0.0, %v5917
        %5919 = vmatprep.mubr.f32.mxu0 0.0
        %5920 = vmatmul.mubr.f32.gmra.mrb[0].mxu0 %v5823
        %v5921 = vpop.f32.mrb[0].mxu0
        %v5922 = vadd.f32 0.0, %v5921
        %v5923 = vpop.f32.mrb[0].mxu0
        %v5924 = vadd.f32 0.0, %v5923
        %5925 = vdwg.mxu0
        %5926 = vmatprep.subr.mxu0 0.0
        %5927 = vmatpush1.msra.mxu0 %v5791
        %5928 = vmatprep.subr.mxu0 0.0
        %5929 = vmatpush1.msra.mxu0 %v5792
        %5930 = vmatprep.subr.mxu0 0.0
        %5931 = vmatpush1.msra.mxu0 %v5793
        %5932 = vmatprep.subr.mxu0 0.0
        %5933 = vmatpush1.msra.mxu0 %v5794
        %5934 = vmatprep.subr.mxu0 0.0
        %5935 = vmatpush1.msra.mxu0 %v5795
        %5936 = vmatprep.subr.mxu0 0.0
        %5937 = vmatpush1.msra.mxu0 %v5796
        %5938 = vmatprep.subr.mxu0 0.0
        %5939 = vmatpush1.msra.mxu0 %v5797
        %5940 = vmatprep.subr.mxu0 0.0
        %5941 = vmatpush1.msra.mxu0 %v5798
        %5942 = vmatprep.subr.mxu0 0.0
        %5943 = vmatpush1.msra.mxu0 %v5799
        %5944 = vmatprep.subr.mxu0 0.0
        %5945 = vmatpush1.msra.mxu0 %v5800
        %5946 = vmatprep.subr.mxu0 0.0
        %5947 = vmatpush1.msra.mxu0 %v5801
        %5948 = vmatprep.subr.mxu0 0.0
        %5949 = vmatpush1.msra.mxu0 %v5802
        %5950 = vmatprep.subr.mxu0 0.0
        %5951 = vmatpush1.msra.mxu0 %v5803
        %5952 = vmatprep.subr.mxu0 0.0
        %5953 = vmatpush1.msra.mxu0 %v5804
        %5954 = vmatprep.subr.mxu0 0.0
        %5955 = vmatpush1.msra.mxu0 %v5805
        %5956 = vmatprep.subr.mxu0 0.0
        %5957 = vmatpush1.msra.mxu0 %v5806
        %5958 = vmatprep.subr.mxu0 0.0
        %5959 = vmatpush1.msra.mxu0 0.0
        %5960 = vmatprep.subr.mxu0 0.0
        %5961 = vmatpush1.msra.mxu0 0.0
        %5962 = vmatprep.subr.mxu0 0.0
        %5963 = vmatpush1.msra.mxu0 0.0
        %5964 = vmatprep.subr.mxu0 0.0
        %5965 = vmatpush1.msra.mxu0 0.0
        %5966 = vmatprep.subr.mxu0 0.0
        %5967 = vmatpush1.msra.mxu0 0.0
        %5968 = vmatprep.subr.mxu0 0.0
        %5969 = vmatpush1.msra.mxu0 0.0
        %5970 = vmatprep.subr.mxu0 0.0
        %5971 = vmatpush1.msra.mxu0 0.0
        %5972 = vmatprep.subr.mxu0 0.0
        %5973 = vmatpush1.msra.mxu0 0.0
        %5974 = vmatprep.subr.mxu0 0.0
        %5975 = vmatpush1.msra.mxu0 0.0
        %5976 = vmatprep.subr.mxu0 0.0
        %5977 = vmatpush1.msra.mxu0 0.0
        %5978 = vmatprep.subr.mxu0 0.0
        %5979 = vmatpush1.msra.mxu0 0.0
        %5980 = vmatprep.subr.mxu0 0.0
        %5981 = vmatpush1.msra.mxu0 0.0
        %5982 = vmatprep.subr.mxu0 0.0
        %5983 = vmatpush1.msra.mxu0 0.0
        %5984 = vmatprep.subr.mxu0 0.0
        %5985 = vmatpush1.msra.mxu0 0.0
        %5986 = vmatprep.subr.mxu0 0.0
        %5987 = vmatpush1.msra.mxu0 0.0
        %5988 = vmatprep.subr.mxu0 0.0
        %5989 = vmatpush1.msra.mxu0 0.0
        %5990 = vmatprep.mubr.f32.mxu0 0.0
        %5991 = vmatmul.mubr.f32.gmra.mrb[0].mxu0 %v5892
        %v5992 = vpop.f32.mrb[0].mxu0
        %v5993 = vadd.f32 0.0, %v5992
        %v5994 = vpop.f32.mrb[0].mxu0
        %5995 = vmatprep.mubr.f32.mxu0 0.0
        %5996 = vmatmul.mubr.f32.gmra.mrb[0].mxu0 %v5898
        %v5997 = vpop.f32.mrb[0].mxu0
        %v5998 = vadd.f32 0.0, %v5997
        %v5999 = vpop.f32.mrb[0].mxu0
        %6000 = vmatprep.mubr.f32.mxu0 0.0
        %6001 = vmatmul.mubr.f32.gmra.mrb[0].mxu0 %v5904
        %v6002 = vpop.f32.mrb[0].mxu0
        %v6003 = vadd.f32 0.0, %v6002
        %v6004 = vpop.f32.mrb[0].mxu0
        %6005 = vmatprep.mubr.f32.mxu0 0.0
        %6006 = vmatmul.mubr.f32.gmra.mrb[0].mxu0 %v5910
        %v6007 = vpop.f32.mrb[0].mxu0
        %v6008 = vadd.f32 0.0, %v6007
        %v6009 = vpop.f32.mrb[0].mxu0
        %6010 = vmatprep.mubr.f32.mxu0 0.0
        %6011 = vmatmul.mubr.f32.gmra.mrb[0].mxu0 %v5916
        %v6012 = vpop.f32.mrb[0].mxu0
        %v6013 = vadd.f32 0.0, %v6012
        %v6014 = vpop.f32.mrb[0].mxu0
        %6015 = vmatprep.mubr.f32.mxu0 0.0
        %6016 = vmatmul.mubr.f32.gmra.mrb[0].mxu0 %v5922
        %v6017 = vpop.f32.mrb[0].mxu0
        %v6018 = vadd.f32 0.0, %v6017
        %v6019 = vpop.f32.mrb[0].mxu0
        %6020 = vdwg.mxu0
        %6021 = vmatprep.subr.mxu0 0.0
        %6022 = vmatpush1.msra.mxu0 %v5791
        %6023 = vmatprep.subr.mxu0 0.0
        %6024 = vmatpush1.msra.mxu0 %v5792
        %6025 = vmatprep.subr.mxu0 0.0
        %6026 = vmatpush1.msra.mxu0 %v5793
        %6027 = vmatprep.subr.mxu0 0.0
        %6028 = vmatpush1.msra.mxu0 %v5794
        %6029 = vmatprep.subr.mxu0 0.0
        %6030 = vmatpush1.msra.mxu0 %v5795
        %6031 = vmatprep.subr.mxu0 0.0
        %6032 = vmatpush1.msra.mxu0 %v5796
        %6033 = vmatprep.subr.mxu0 0.0
        %6034 = vmatpush1.msra.mxu0 %v5797
        %6035 = vmatprep.subr.mxu0 0.0
        %6036 = vmatpush1.msra.mxu0 %v5798
        %6037 = vmatprep.subr.mxu0 0.0
        %6038 = vmatpush1.msra.mxu0 %v5799
        %6039 = vmatprep.subr.mxu0 0.0
        %6040 = vmatpush1.msra.mxu0 %v5800
        %6041 = vmatprep.subr.mxu0 0.0
        %6042 = vmatpush1.msra.mxu0 %v5801
        %6043 = vmatprep.subr.mxu0 0.0
        %6044 = vmatpush1.msra.mxu0 %v5802
        %6045 = vmatprep.subr.mxu0 0.0
        %6046 = vmatpush1.msra.mxu0 %v5803
        %6047 = vmatprep.subr.mxu0 0.0
        %6048 = vmatpush1.msra.mxu0 %v5804
        %6049 = vmatprep.subr.mxu0 0.0
        %6050 = vmatpush1.msra.mxu0 %v5805
        %6051 = vmatprep.subr.mxu0 0.0
        %6052 = vmatpush1.msra.mxu0 %v5806
        %6053 = vmatprep.subr.mxu0 0.0
        %6054 = vmatpush1.msra.mxu0 0.0
        %6055 = vmatprep.subr.mxu0 0.0
        %6056 = vmatpush1.msra.mxu0 0.0
        %6057 = vmatprep.subr.mxu0 0.0
        %6058 = vmatpush1.msra.mxu0 0.0
        %6059 = vmatprep.subr.mxu0 0.0
        %6060 = vmatpush1.msra.mxu0 0.0
        %6061 = vmatprep.subr.mxu0 0.0
        %6062 = vmatpush1.msra.mxu0 0.0
        %6063 = vmatprep.subr.mxu0 0.0
        %6064 = vmatpush1.msra.mxu0 0.0
        %6065 = vmatprep.subr.mxu0 0.0
        %6066 = vmatpush1.msra.mxu0 0.0
        %6067 = vmatprep.subr.mxu0 0.0
        %6068 = vmatpush1.msra.mxu0 0.0
        %6069 = vmatprep.subr.mxu0 0.0
        %6070 = vmatpush1.msra.mxu0 0.0
        %6071 = vmatprep.subr.mxu0 0.0
        %6072 = vmatpush1.msra.mxu0 0.0
        %6073 = vmatprep.subr.mxu0 0.0
        %6074 = vmatpush1.msra.mxu0 0.0
        %6075 = vmatprep.subr.mxu0 0.0
        %6076 = vmatpush1.msra.mxu0 0.0
        %6077 = vmatprep.subr.mxu0 0.0
        %6078 = vmatpush1.msra.mxu0 0.0
        %6079 = vmatprep.subr.mxu0 0.0
        %6080 = vmatpush1.msra.mxu0 0.0
        %6081 = vmatprep.subr.mxu0 0.0
        %6082 = vmatpush1.msra.mxu0 0.0
        %6083 = vmatprep.subr.mxu0 0.0
        %6084 = vmatpush1.msra.mxu0 0.0
        %6085 = vmatprep.mubr.f32.mxu0 0.0
        %6086 = vmatmul.mubr.f32.gmra.mrb[0].mxu0 %v5894
        %v6087 = vpop.f32.mrb[0].mxu0
        %v6088 = vadd.f32 0.0, %v6087
        %v6089 = vpop.f32.mrb[0].mxu0
        %6090 = vmatprep.mubr.f32.mxu0 0.0
        %6091 = vmatmul.mubr.f32.gmra.mrb[0].mxu0 %v5900
        %v6092 = vpop.f32.mrb[0].mxu0
        %v6093 = vadd.f32 0.0, %v6092
        %v6094 = vpop.f32.mrb[0].mxu0
        %6095 = vmatprep.mubr.f32.mxu0 0.0
        %6096 = vmatmul.mubr.f32.gmra.mrb[0].mxu0 %v5906
        %v6097 = vpop.f32.mrb[0].mxu0
        %v6098 = vadd.f32 0.0, %v6097
        %v6099 = vpop.f32.mrb[0].mxu0
        %6100 = vmatprep.mubr.f32.mxu0 0.0
        %6101 = vmatmul.mubr.f32.gmra.mrb[0].mxu0 %v5912
        %v6102 = vpop.f32.mrb[0].mxu0
        %v6103 = vadd.f32 0.0, %v6102
        %v6104 = vpop.f32.mrb[0].mxu0
        %6105 = vmatprep.mubr.f32.mxu0 0.0
        %6106 = vmatmul.mubr.f32.gmra.mrb[0].mxu0 %v5918
        %v6107 = vpop.f32.mrb[0].mxu0
        %v6108 = vadd.f32 0.0, %v6107
        %v6109 = vpop.f32.mrb[0].mxu0
        %6110 = vmatprep.mubr.f32.mxu0 0.0
        %6111 = vmatmul.mubr.f32.gmra.mrb[0].mxu0 %v5924
        %v6112 = vpop.f32.mrb[0].mxu0
        %v6113 = vadd.f32 0.0, %v6112
        %v6114 = vpop.f32.mrb[0].mxu0
        %6115 = vdwg.mxu0
        %v6116 = vld [vmem:[#allocation15] sm:$0xff]
        %v6117 = vld [vmem:[#allocation15 + $0x8] sm:$0xff]
        %v6118 = vld [vmem:[#allocation15 + $0x10] sm:$0xff]
        %v6119 = vld [vmem:[#allocation15 + $0x18] sm:$0xff]
        %v6120 = vld [vmem:[#allocation15 + $0x20] sm:$0x3]
        %v6121 = vld [vmem:[#allocation16] sm:$0xff]
        %v6122 = vld [vmem:[#allocation16 + $0x8] sm:$0xff]
        %v6123 = vld [vmem:[#allocation16 + $0x10] sm:$0xff]
        %v6124 = vld [vmem:[#allocation16 + $0x18] sm:$0xff]
        %v6125 = vld [vmem:[#allocation16 + $0x20] sm:$0xff]
        %v6126 = vld [vmem:[#allocation16 + $0x28] sm:$0xff]
        %v6127 = vld [vmem:[#allocation16 + $0x30] sm:$0xff]
        %v6128 = vld [vmem:[#allocation16 + $0x38] sm:$0xff]
        %v6129 = vld [vmem:[#allocation16 + $0x40] sm:$0xff]
        %v6130 = vld [vmem:[#allocation16 + $0x48] sm:$0xff]
        %v6131 = vld [vmem:[#allocation16 + $0x50] sm:$0xff]
        %v6132 = vld [vmem:[#allocation16 + $0x58] sm:$0xff]
        %v6133 = vld [vmem:[#allocation16 + $0x60] sm:$0xff]
        %v6134 = vld [vmem:[#allocation16 + $0x68] sm:$0xff]
        %v6135 = vld [vmem:[#allocation16 + $0x70] sm:$0xff]
        %v6136 = vld [vmem:[#allocation16 + $0x78] sm:$0xff]
        %v6137 = vmul.f32 %v5993, %v5993
        %v6138 = vmul.f32 %v5998, %v5998
        %v6139 = vmul.f32 %v6003, %v6003
        %v6140 = vmul.f32 %v6008, %v6008
        %v6141 = vmul.f32 %v6013, %v6013
        %v6142 = vmul.f32 %v6018, %v6018
        %v6143 = vmul.f32 %v6088, %v6088
        %v6144 = vmul.f32 %v6093, %v6093
        %v6145 = vmul.f32 %v6098, %v6098
        %v6146 = vmul.f32 %v6103, %v6103
        %v6147 = vmul.f32 %v6108, %v6108
        %v6148 = vmul.f32 %v6113, %v6113
        %v6149 = vmul.f32 %v5993, %v6088
        %v6150 = vmul.f32 %v5998, %v6093
        %v6151 = vmul.f32 %v6003, %v6098
        %v6152 = vmul.f32 %v6008, %v6103
        %v6153 = vmul.f32 %v6013, %v6108
        %v6154 = vmul.f32 %v6018, %v6113
        %vm6155 = vcmask 359424
        %v6156 = vsel %vm6155, %v5993, 0.0
        %v6157 = vsel %vm6155, %v5998, 0.0
        %v6158 = vsel %vm6155, %v6003, 0.0
        %v6159 = vsel %vm6155, %v6008, 0.0
        %v6160 = vsel %vm6155, %v6013, 0.0
        %v6161 = vsel %vm6155, %v6018, 0.0
        %v6162 = vsel %vm6155, %v6088, 0.0
        %v6163 = vsel %vm6155, %v6093, 0.0
        %v6164 = vsel %vm6155, %v6098, 0.0
        %v6165 = vsel %vm6155, %v6103, 0.0
        %v6166 = vsel %vm6155, %v6108, 0.0
        %v6167 = vsel %vm6155, %v6113, 0.0
        %v6168 = vsel %vm6155, %v6137, 0.0
        %v6169 = vsel %vm6155, %v6138, 0.0
        %v6170 = vsel %vm6155, %v6139, 0.0
        %v6171 = vsel %vm6155, %v6140, 0.0
        %v6172 = vsel %vm6155, %v6141, 0.0
        %v6173 = vsel %vm6155, %v6142, 0.0
        %v6174 = vsel %vm6155, %v6143, 0.0
        %v6175 = vsel %vm6155, %v6144, 0.0
        %v6176 = vsel %vm6155, %v6145, 0.0
        %v6177 = vsel %vm6155, %v6146, 0.0
        %v6178 = vsel %vm6155, %v6147, 0.0
        %v6179 = vsel %vm6155, %v6148, 0.0
        %v6180 = vsel %vm6155, %v6149, 0.0
        %v6181 = vsel %vm6155, %v6150, 0.0
        %v6182 = vsel %vm6155, %v6151, 0.0
        %v6183 = vsel %vm6155, %v6152, 0.0
        %v6184 = vsel %vm6155, %v6153, 0.0
        %v6185 = vsel %vm6155, %v6154, 0.0
        %v6187 = vsel %vm6155, %v6116, 0
        %v6190 = vsel %vm6155, %v6117, 0
        %v6193 = vsel %vm6155, %v6118, 0
        %v6196 = vsel %vm6155, %v6119, 0
        %v6199 = vsel %vm6155, %v6120, 0
        %vm6201 = vcmask 1043456
        %v6203 = vsel %vm6201, %v6161, 0
        %v6206 = vsel %vm6201, %v6167, 0
        %v6209 = vsel %vm6201, %v6173, 0
        %v6212 = vsel %vm6201, %v6179, 0
        %v6215 = vsel %vm6201, %v6185, 0
        %6217 = vmatprep.subr.mxu0 %v6162
        %6218 = vmatpush1.msra.mxu0 %v6156
        %6219 = vmatprep.subr.mxu0 %v6163
        %6220 = vmatpush1.msra.mxu0 %v6157
        %6221 = vmatprep.subr.mxu0 %v6164
        %6222 = vmatpush1.msra.mxu0 %v6158
        %6223 = vmatprep.subr.mxu0 %v6165
        %6224 = vmatpush1.msra.mxu0 %v6159
        %6225 = vmatprep.subr.mxu0 %v6166
        %6226 = vmatpush1.msra.mxu0 %v6160
        %6227 = vmatprep.subr.mxu0 %v6206
        %6228 = vmatpush1.msra.mxu0 %v6203
        %6229 = vmatprep.subr.mxu0 0.0
        %6230 = vmatpush1.msra.mxu0 0.0
        %6231 = vmatprep.subr.mxu0 0.0
        %6232 = vmatpush1.msra.mxu0 0.0
        %6233 = vmatprep.subr.mxu0 0.0
        %6234 = vmatpush1.msra.mxu0 0.0
        %6235 = vmatprep.subr.mxu0 0.0
        %6236 = vmatpush1.msra.mxu0 0.0
        %6237 = vmatprep.subr.mxu0 0.0
        %6238 = vmatpush1.msra.mxu0 0.0
        %6239 = vmatprep.subr.mxu0 0.0
        %6240 = vmatpush1.msra.mxu0 0.0
        %6241 = vmatprep.subr.mxu0 0.0
        %6242 = vmatpush1.msra.mxu0 0.0
        %6243 = vmatprep.subr.mxu0 0.0
        %6244 = vmatpush1.msra.mxu0 0.0
        %6245 = vmatprep.subr.mxu0 0.0
        %6246 = vmatpush1.msra.mxu0 0.0
        %6247 = vmatprep.subr.mxu0 0.0
        %6248 = vmatpush1.msra.mxu0 0.0
        %6249 = vmatprep.subr.mxu0 0.0
        %6250 = vmatpush1.msra.mxu0 0.0
        %6251 = vmatprep.subr.mxu0 0.0
        %6252 = vmatpush1.msra.mxu0 0.0
        %6253 = vmatprep.subr.mxu0 0.0
        %6254 = vmatpush1.msra.mxu0 0.0
        %6255 = vmatprep.subr.mxu0 0.0
        %6256 = vmatpush1.msra.mxu0 0.0
        %6257 = vmatprep.subr.mxu0 0.0
        %6258 = vmatpush1.msra.mxu0 0.0
        %6259 = vmatprep.subr.mxu0 0.0
        %6260 = vmatpush1.msra.mxu0 0.0
        %6261 = vmatprep.subr.mxu0 0.0
        %6262 = vmatpush1.msra.mxu0 0.0
        %6263 = vmatprep.subr.mxu0 0.0
        %6264 = vmatpush1.msra.mxu0 0.0
        %6265 = vmatprep.subr.mxu0 0.0
        %6266 = vmatpush1.msra.mxu0 0.0
        %6267 = vmatprep.subr.mxu0 0.0
        %6268 = vmatpush1.msra.mxu0 0.0
        %6269 = vmatprep.subr.mxu0 0.0
        %6270 = vmatpush1.msra.mxu0 0.0
        %6271 = vmatprep.subr.mxu0 0.0
        %6272 = vmatpush1.msra.mxu0 0.0
        %6273 = vmatprep.subr.mxu0 0.0
        %6274 = vmatpush1.msra.mxu0 0.0
        %6275 = vmatprep.subr.mxu0 0.0
        %6276 = vmatpush1.msra.mxu0 0.0
        %6277 = vmatprep.subr.mxu0 0.0
        %6278 = vmatpush1.msra.mxu0 0.0
        %6279 = vmatprep.subr.mxu0 0.0
        %6280 = vmatpush1.msra.mxu0 0.0
        %6281 = vmatprep.mubr.f32.mxu0 0.0
        %6282 = vmatmul.mubr.f32.gmra.mrb[0].mxu0 %v6187
        %v6283 = vpop.f32.mrb[0].mxu0
        %v6284 = vadd.f32 0.0, %v6283
        %v6285 = vpop.f32.mrb[0].mxu0
        %v6286 = vadd.f32 0.0, %v6285
        %6287 = vmatprep.mubr.f32.mxu0 0.0
        %6288 = vmatmul.mubr.f32.gmra.mrb[0].mxu0 %v6190
        %v6289 = vpop.f32.mrb[0].mxu0
        %v6290 = vadd.f32 0.0, %v6289
        %v6291 = vpop.f32.mrb[0].mxu0
        %v6292 = vadd.f32 0.0, %v6291
        %6293 = vmatprep.mubr.f32.mxu0 0.0
        %6294 = vmatmul.mubr.f32.gmra.mrb[0].mxu0 %v6193
        %v6295 = vpop.f32.mrb[0].mxu0
        %v6296 = vadd.f32 0.0, %v6295
        %v6297 = vpop.f32.mrb[0].mxu0
        %v6298 = vadd.f32 0.0, %v6297
        %6299 = vmatprep.mubr.f32.mxu0 0.0
        %6300 = vmatmul.mubr.f32.gmra.mrb[0].mxu0 %v6196
        %v6301 = vpop.f32.mrb[0].mxu0
        %v6302 = vadd.f32 0.0, %v6301
        %v6303 = vpop.f32.mrb[0].mxu0
        %v6304 = vadd.f32 0.0, %v6303
        %6305 = vmatprep.mubr.f32.mxu0 0.0
        %6306 = vmatmul.mubr.f32.gmra.mrb[0].mxu0 %v6199
        %v6307 = vpop.f32.mrb[0].mxu0
        %v6308 = vadd.f32 0.0, %v6307
        %v6309 = vpop.f32.mrb[0].mxu0
        %v6310 = vadd.f32 0.0, %v6309
        %6311 = vdwg.mxu0
        %6312 = vmatprep.subr.mxu0 %v6174
        %6313 = vmatpush1.msra.mxu0 %v6168
        %6314 = vmatprep.subr.mxu0 %v6175
        %6315 = vmatpush1.msra.mxu0 %v6169
        %6316 = vmatprep.subr.mxu0 %v6176
        %6317 = vmatpush1.msra.mxu0 %v6170
        %6318 = vmatprep.subr.mxu0 %v6177
        %6319 = vmatpush1.msra.mxu0 %v6171
        %6320 = vmatprep.subr.mxu0 %v6178
        %6321 = vmatpush1.msra.mxu0 %v6172
        %6322 = vmatprep.subr.mxu0 %v6212
        %6323 = vmatpush1.msra.mxu0 %v6209
        %6324 = vmatprep.subr.mxu0 0.0
        %6325 = vmatpush1.msra.mxu0 0.0
        %6326 = vmatprep.subr.mxu0 0.0
        %6327 = vmatpush1.msra.mxu0 0.0
        %6328 = vmatprep.subr.mxu0 0.0
        %6329 = vmatpush1.msra.mxu0 0.0
        %6330 = vmatprep.subr.mxu0 0.0
        %6331 = vmatpush1.msra.mxu0 0.0
        %6332 = vmatprep.subr.mxu0 0.0
        %6333 = vmatpush1.msra.mxu0 0.0
        %6334 = vmatprep.subr.mxu0 0.0
        %6335 = vmatpush1.msra.mxu0 0.0
        %6336 = vmatprep.subr.mxu0 0.0
        %6337 = vmatpush1.msra.mxu0 0.0
        %6338 = vmatprep.subr.mxu0 0.0
        %6339 = vmatpush1.msra.mxu0 0.0
        %6340 = vmatprep.subr.mxu0 0.0
        %6341 = vmatpush1.msra.mxu0 0.0
        %6342 = vmatprep.subr.mxu0 0.0
        %6343 = vmatpush1.msra.mxu0 0.0
        %6344 = vmatprep.subr.mxu0 0.0
        %6345 = vmatpush1.msra.mxu0 0.0
        %6346 = vmatprep.subr.mxu0 0.0
        %6347 = vmatpush1.msra.mxu0 0.0
        %6348 = vmatprep.subr.mxu0 0.0
        %6349 = vmatpush1.msra.mxu0 0.0
        %6350 = vmatprep.subr.mxu0 0.0
        %6351 = vmatpush1.msra.mxu0 0.0
        %6352 = vmatprep.subr.mxu0 0.0
        %6353 = vmatpush1.msra.mxu0 0.0
        %6354 = vmatprep.subr.mxu0 0.0
        %6355 = vmatpush1.msra.mxu0 0.0
        %6356 = vmatprep.subr.mxu0 0.0
        %6357 = vmatpush1.msra.mxu0 0.0
        %6358 = vmatprep.subr.mxu0 0.0
        %6359 = vmatpush1.msra.mxu0 0.0
        %6360 = vmatprep.subr.mxu0 0.0
        %6361 = vmatpush1.msra.mxu0 0.0
        %6362 = vmatprep.subr.mxu0 0.0
        %6363 = vmatpush1.msra.mxu0 0.0
        %6364 = vmatprep.subr.mxu0 0.0
        %6365 = vmatpush1.msra.mxu0 0.0
        %6366 = vmatprep.subr.mxu0 0.0
        %6367 = vmatpush1.msra.mxu0 0.0
        %6368 = vmatprep.subr.mxu0 0.0
        %6369 = vmatpush1.msra.mxu0 0.0
        %6370 = vmatprep.subr.mxu0 0.0
        %6371 = vmatpush1.msra.mxu0 0.0
        %6372 = vmatprep.subr.mxu0 0.0
        %6373 = vmatpush1.msra.mxu0 0.0
        %6374 = vmatprep.subr.mxu0 0.0
        %6375 = vmatpush1.msra.mxu0 0.0
        %6376 = vmatprep.mubr.f32.mxu0 0.0
        %6377 = vmatmul.mubr.f32.gmra.mrb[0].mxu0 %v6187
        %v6378 = vpop.f32.mrb[0].mxu0
        %v6379 = vadd.f32 0.0, %v6378
        %v6380 = vpop.f32.mrb[0].mxu0
        %v6381 = vadd.f32 0.0, %v6380
        %6382 = vmatprep.mubr.f32.mxu0 0.0
        %6383 = vmatmul.mubr.f32.gmra.mrb[0].mxu0 %v6190
        %v6384 = vpop.f32.mrb[0].mxu0
        %v6385 = vadd.f32 0.0, %v6384
        %v6386 = vpop.f32.mrb[0].mxu0
        %v6387 = vadd.f32 0.0, %v6386
        %6388 = vmatprep.mubr.f32.mxu0 0.0
        %6389 = vmatmul.mubr.f32.gmra.mrb[0].mxu0 %v6193
        %v6390 = vpop.f32.mrb[0].mxu0
        %v6391 = vadd.f32 0.0, %v6390
        %v6392 = vpop.f32.mrb[0].mxu0
        %v6393 = vadd.f32 0.0, %v6392
        %6394 = vmatprep.mubr.f32.mxu0 0.0
        %6395 = vmatmul.mubr.f32.gmra.mrb[0].mxu0 %v6196
        %v6396 = vpop.f32.mrb[0].mxu0
        %v6397 = vadd.f32 0.0, %v6396
        %v6398 = vpop.f32.mrb[0].mxu0
        %v6399 = vadd.f32 0.0, %v6398
        %6400 = vmatprep.mubr.f32.mxu0 0.0
        %6401 = vmatmul.mubr.f32.gmra.mrb[0].mxu0 %v6199
        %v6402 = vpop.f32.mrb[0].mxu0
        %v6403 = vadd.f32 0.0, %v6402
        %v6404 = vpop.f32.mrb[0].mxu0
        %v6405 = vadd.f32 0.0, %v6404
        %6406 = vdwg.mxu0
        %6407 = vmatprep.subr.mxu0 0.0
        %6408 = vmatpush1.msra.mxu0 %v6180
        %6409 = vmatprep.subr.mxu0 0.0
        %6410 = vmatpush1.msra.mxu0 %v6181
        %6411 = vmatprep.subr.mxu0 0.0
        %6412 = vmatpush1.msra.mxu0 %v6182
        %6413 = vmatprep.subr.mxu0 0.0
        %6414 = vmatpush1.msra.mxu0 %v6183
        %6415 = vmatprep.subr.mxu0 0.0
        %6416 = vmatpush1.msra.mxu0 %v6184
        %6417 = vmatprep.subr.mxu0 0.0
        %6418 = vmatpush1.msra.mxu0 %v6215
        %6419 = vmatprep.subr.mxu0 0.0
        %6420 = vmatpush1.msra.mxu0 0.0
        %6421 = vmatprep.subr.mxu0 0.0
        %6422 = vmatpush1.msra.mxu0 0.0
        %6423 = vmatprep.subr.mxu0 0.0
        %6424 = vmatpush1.msra.mxu0 0.0
        %6425 = vmatprep.subr.mxu0 0.0
        %6426 = vmatpush1.msra.mxu0 0.0
        %6427 = vmatprep.subr.mxu0 0.0
        %6428 = vmatpush1.msra.mxu0 0.0
        %6429 = vmatprep.subr.mxu0 0.0
        %6430 = vmatpush1.msra.mxu0 0.0
        %6431 = vmatprep.subr.mxu0 0.0
        %6432 = vmatpush1.msra.mxu0 0.0
        %6433 = vmatprep.subr.mxu0 0.0
        %6434 = vmatpush1.msra.mxu0 0.0
        %6435 = vmatprep.subr.mxu0 0.0
        %6436 = vmatpush1.msra.mxu0 0.0
        %6437 = vmatprep.subr.mxu0 0.0
        %6438 = vmatpush1.msra.mxu0 0.0
        %6439 = vmatprep.subr.mxu0 0.0
        %6440 = vmatpush1.msra.mxu0 0.0
        %6441 = vmatprep.subr.mxu0 0.0
        %6442 = vmatpush1.msra.mxu0 0.0
        %6443 = vmatprep.subr.mxu0 0.0
        %6444 = vmatpush1.msra.mxu0 0.0
        %6445 = vmatprep.subr.mxu0 0.0
        %6446 = vmatpush1.msra.mxu0 0.0
        %6447 = vmatprep.subr.mxu0 0.0
        %6448 = vmatpush1.msra.mxu0 0.0
        %6449 = vmatprep.subr.mxu0 0.0
        %6450 = vmatpush1.msra.mxu0 0.0
        %6451 = vmatprep.subr.mxu0 0.0
        %6452 = vmatpush1.msra.mxu0 0.0
        %6453 = vmatprep.subr.mxu0 0.0
        %6454 = vmatpush1.msra.mxu0 0.0
        %6455 = vmatprep.subr.mxu0 0.0
        %6456 = vmatpush1.msra.mxu0 0.0
        %6457 = vmatprep.subr.mxu0 0.0
        %6458 = vmatpush1.msra.mxu0 0.0
        %6459 = vmatprep.subr.mxu0 0.0
        %6460 = vmatpush1.msra.mxu0 0.0
        %6461 = vmatprep.subr.mxu0 0.0
        %6462 = vmatpush1.msra.mxu0 0.0
        %6463 = vmatprep.subr.mxu0 0.0
        %6464 = vmatpush1.msra.mxu0 0.0
        %6465 = vmatprep.subr.mxu0 0.0
        %6466 = vmatpush1.msra.mxu0 0.0
        %6467 = vmatprep.subr.mxu0 0.0
        %6468 = vmatpush1.msra.mxu0 0.0
        %6469 = vmatprep.subr.mxu0 0.0
        %6470 = vmatpush1.msra.mxu0 0.0
        %6471 = vmatprep.mubr.f32.mxu0 0.0
        %6472 = vmatmul.mubr.f32.gmra.mrb[0].mxu0 %v6187
        %v6473 = vpop.f32.mrb[0].mxu0
        %v6474 = vadd.f32 0.0, %v6473
        %v6475 = vpop.f32.mrb[0].mxu0
        %6476 = vmatprep.mubr.f32.mxu0 0.0
        %6477 = vmatmul.mubr.f32.gmra.mrb[0].mxu0 %v6190
        %v6478 = vpop.f32.mrb[0].mxu0
        %v6479 = vadd.f32 0.0, %v6478
        %v6480 = vpop.f32.mrb[0].mxu0
        %6481 = vmatprep.mubr.f32.mxu0 0.0
        %6482 = vmatmul.mubr.f32.gmra.mrb[0].mxu0 %v6193
        %v6483 = vpop.f32.mrb[0].mxu0
        %v6484 = vadd.f32 0.0, %v6483
        %v6485 = vpop.f32.mrb[0].mxu0
        %6486 = vmatprep.mubr.f32.mxu0 0.0
        %6487 = vmatmul.mubr.f32.gmra.mrb[0].mxu0 %v6196
        %v6488 = vpop.f32.mrb[0].mxu0
        %v6489 = vadd.f32 0.0, %v6488
        %v6490 = vpop.f32.mrb[0].mxu0
        %6491 = vmatprep.mubr.f32.mxu0 0.0
        %6492 = vmatmul.mubr.f32.gmra.mrb[0].mxu0 %v6199
        %v6493 = vpop.f32.mrb[0].mxu0
        %v6494 = vadd.f32 0.0, %v6493
        %v6495 = vpop.f32.mrb[0].mxu0
        %6496 = vdwg.mxu0
        %6497 = vmatprep.subr.mxu0 0.0
        %6498 = vmatpush1.msra.mxu0 %v6121
        %6499 = vmatprep.subr.mxu0 0.0
        %6500 = vmatpush1.msra.mxu0 %v6122
        %6501 = vmatprep.subr.mxu0 0.0
        %6502 = vmatpush1.msra.mxu0 %v6123
        %6503 = vmatprep.subr.mxu0 0.0
        %6504 = vmatpush1.msra.mxu0 %v6124
        %6505 = vmatprep.subr.mxu0 0.0
        %6506 = vmatpush1.msra.mxu0 %v6125
        %6507 = vmatprep.subr.mxu0 0.0
        %6508 = vmatpush1.msra.mxu0 %v6126
        %6509 = vmatprep.subr.mxu0 0.0
        %6510 = vmatpush1.msra.mxu0 %v6127
        %6511 = vmatprep.subr.mxu0 0.0
        %6512 = vmatpush1.msra.mxu0 %v6128
        %6513 = vmatprep.subr.mxu0 0.0
        %6514 = vmatpush1.msra.mxu0 %v6129
        %6515 = vmatprep.subr.mxu0 0.0
        %6516 = vmatpush1.msra.mxu0 %v6130
        %6517 = vmatprep.subr.mxu0 0.0
        %6518 = vmatpush1.msra.mxu0 %v6131
        %6519 = vmatprep.subr.mxu0 0.0
        %6520 = vmatpush1.msra.mxu0 %v6132
        %6521 = vmatprep.subr.mxu0 0.0
        %6522 = vmatpush1.msra.mxu0 %v6133
        %6523 = vmatprep.subr.mxu0 0.0
        %6524 = vmatpush1.msra.mxu0 %v6134
        %6525 = vmatprep.subr.mxu0 0.0
        %6526 = vmatpush1.msra.mxu0 %v6135
        %6527 = vmatprep.subr.mxu0 0.0
        %6528 = vmatpush1.msra.mxu0 %v6136
        %6529 = vmatprep.subr.mxu0 0.0
        %6530 = vmatpush1.msra.mxu0 0.0
        %6531 = vmatprep.subr.mxu0 0.0
        %6532 = vmatpush1.msra.mxu0 0.0
        %6533 = vmatprep.subr.mxu0 0.0
        %6534 = vmatpush1.msra.mxu0 0.0
        %6535 = vmatprep.subr.mxu0 0.0
        %6536 = vmatpush1.msra.mxu0 0.0
        %6537 = vmatprep.subr.mxu0 0.0
        %6538 = vmatpush1.msra.mxu0 0.0
        %6539 = vmatprep.subr.mxu0 0.0
        %6540 = vmatpush1.msra.mxu0 0.0
        %6541 = vmatprep.subr.mxu0 0.0
        %6542 = vmatpush1.msra.mxu0 0.0
        %6543 = vmatprep.subr.mxu0 0.0
        %6544 = vmatpush1.msra.mxu0 0.0
        %6545 = vmatprep.subr.mxu0 0.0
        %6546 = vmatpush1.msra.mxu0 0.0
        %6547 = vmatprep.subr.mxu0 0.0
        %6548 = vmatpush1.msra.mxu0 0.0
        %6549 = vmatprep.subr.mxu0 0.0
        %6550 = vmatpush1.msra.mxu0 0.0
        %6551 = vmatprep.subr.mxu0 0.0
        %6552 = vmatpush1.msra.mxu0 0.0
        %6553 = vmatprep.subr.mxu0 0.0
        %6554 = vmatpush1.msra.mxu0 0.0
        %6555 = vmatprep.subr.mxu0 0.0
        %6556 = vmatpush1.msra.mxu0 0.0
        %6557 = vmatprep.subr.mxu0 0.0
        %6558 = vmatpush1.msra.mxu0 0.0
        %6559 = vmatprep.subr.mxu0 0.0
        %6560 = vmatpush1.msra.mxu0 0.0
        %6561 = vmatprep.mubr.f32.mxu0 0.0
        %6562 = vmatmul.mubr.f32.gmra.mrb[0].mxu0 %v6284
        %v6563 = vpop.f32.mrb[0].mxu0
        %v6564 = vadd.f32 0.0, %v6563
        %v6565 = vpop.f32.mrb[0].mxu0
        %6566 = vmatprep.mubr.f32.mxu0 0.0
        %6567 = vmatmul.mubr.f32.gmra.mrb[0].mxu0 %v6290
        %v6568 = vpop.f32.mrb[0].mxu0
        %v6569 = vadd.f32 0.0, %v6568
        %v6570 = vpop.f32.mrb[0].mxu0
        %6571 = vmatprep.mubr.f32.mxu0 0.0
        %6572 = vmatmul.mubr.f32.gmra.mrb[0].mxu0 %v6296
        %v6573 = vpop.f32.mrb[0].mxu0
        %v6574 = vadd.f32 0.0, %v6573
        %v6575 = vpop.f32.mrb[0].mxu0
        %6576 = vmatprep.mubr.f32.mxu0 0.0
        %6577 = vmatmul.mubr.f32.gmra.mrb[0].mxu0 %v6302
        %v6578 = vpop.f32.mrb[0].mxu0
        %v6579 = vadd.f32 0.0, %v6578
        %v6580 = vpop.f32.mrb[0].mxu0
        %6581 = vmatprep.mubr.f32.mxu0 0.0
        %6582 = vmatmul.mubr.f32.gmra.mrb[0].mxu0 %v6308
        %v6583 = vpop.f32.mrb[0].mxu0
        %v6584 = vadd.f32 0.0, %v6583
        %v6585 = vpop.f32.mrb[0].mxu0
        %6586 = vdwg.mxu0
        %6587 = vmatprep.subr.mxu0 0.0
        %6588 = vmatpush1.msra.mxu0 %v6121
        %6589 = vmatprep.subr.mxu0 0.0
        %6590 = vmatpush1.msra.mxu0 %v6122
        %6591 = vmatprep.subr.mxu0 0.0
        %6592 = vmatpush1.msra.mxu0 %v6123
        %6593 = vmatprep.subr.mxu0 0.0
        %6594 = vmatpush1.msra.mxu0 %v6124
        %6595 = vmatprep.subr.mxu0 0.0
        %6596 = vmatpush1.msra.mxu0 %v6125
        %6597 = vmatprep.subr.mxu0 0.0
        %6598 = vmatpush1.msra.mxu0 %v6126
        %6599 = vmatprep.subr.mxu0 0.0
        %6600 = vmatpush1.msra.mxu0 %v6127
        %6601 = vmatprep.subr.mxu0 0.0
        %6602 = vmatpush1.msra.mxu0 %v6128
        %6603 = vmatprep.subr.mxu0 0.0
        %6604 = vmatpush1.msra.mxu0 %v6129
        %6605 = vmatprep.subr.mxu0 0.0
        %6606 = vmatpush1.msra.mxu0 %v6130
        %6607 = vmatprep.subr.mxu0 0.0
        %6608 = vmatpush1.msra.mxu0 %v6131
        %6609 = vmatprep.subr.mxu0 0.0
        %6610 = vmatpush1.msra.mxu0 %v6132
        %6611 = vmatprep.subr.mxu0 0.0
        %6612 = vmatpush1.msra.mxu0 %v6133
        %6613 = vmatprep.subr.mxu0 0.0
        %6614 = vmatpush1.msra.mxu0 %v6134
        %6615 = vmatprep.subr.mxu0 0.0
        %6616 = vmatpush1.msra.mxu0 %v6135
        %6617 = vmatprep.subr.mxu0 0.0
        %6618 = vmatpush1.msra.mxu0 %v6136
        %6619 = vmatprep.subr.mxu0 0.0
        %6620 = vmatpush1.msra.mxu0 0.0
        %6621 = vmatprep.subr.mxu0 0.0
        %6622 = vmatpush1.msra.mxu0 0.0
        %6623 = vmatprep.subr.mxu0 0.0
        %6624 = vmatpush1.msra.mxu0 0.0
        %6625 = vmatprep.subr.mxu0 0.0
        %6626 = vmatpush1.msra.mxu0 0.0
        %6627 = vmatprep.subr.mxu0 0.0
        %6628 = vmatpush1.msra.mxu0 0.0
        %6629 = vmatprep.subr.mxu0 0.0
        %6630 = vmatpush1.msra.mxu0 0.0
        %6631 = vmatprep.subr.mxu0 0.0
        %6632 = vmatpush1.msra.mxu0 0.0
        %6633 = vmatprep.subr.mxu0 0.0
        %6634 = vmatpush1.msra.mxu0 0.0
        %6635 = vmatprep.subr.mxu0 0.0
        %6636 = vmatpush1.msra.mxu0 0.0
        %6637 = vmatprep.subr.mxu0 0.0
        %6638 = vmatpush1.msra.mxu0 0.0
        %6639 = vmatprep.subr.mxu0 0.0
        %6640 = vmatpush1.msra.mxu0 0.0
        %6641 = vmatprep.subr.mxu0 0.0
        %6642 = vmatpush1.msra.mxu0 0.0
        %6643 = vmatprep.subr.mxu0 0.0
        %6644 = vmatpush1.msra.mxu0 0.0
        %6645 = vmatprep.subr.mxu0 0.0
        %6646 = vmatpush1.msra.mxu0 0.0
        %6647 = vmatprep.subr.mxu0 0.0
        %6648 = vmatpush1.msra.mxu0 0.0
        %6649 = vmatprep.subr.mxu0 0.0
        %6650 = vmatpush1.msra.mxu0 0.0
        %6651 = vmatprep.mubr.f32.mxu0 0.0
        %6652 = vmatmul.mubr.f32.gmra.mrb[0].mxu0 %v6286
        %v6653 = vpop.f32.mrb[0].mxu0
        %v6654 = vadd.f32 0.0, %v6653
        %v6655 = vpop.f32.mrb[0].mxu0
        %6656 = vmatprep.mubr.f32.mxu0 0.0
        %6657 = vmatmul.mubr.f32.gmra.mrb[0].mxu0 %v6292
        %v6658 = vpop.f32.mrb[0].mxu0
        %v6659 = vadd.f32 0.0, %v6658
        %v6660 = vpop.f32.mrb[0].mxu0
        %6661 = vmatprep.mubr.f32.mxu0 0.0
        %6662 = vmatmul.mubr.f32.gmra.mrb[0].mxu0 %v6298
        %v6663 = vpop.f32.mrb[0].mxu0
        %v6664 = vadd.f32 0.0, %v6663
        %v6665 = vpop.f32.mrb[0].mxu0
        %6666 = vmatprep.mubr.f32.mxu0 0.0
        %6667 = vmatmul.mubr.f32.gmra.mrb[0].mxu0 %v6304
        %v6668 = vpop.f32.mrb[0].mxu0
        %v6669 = vadd.f32 0.0, %v6668
        %v6670 = vpop.f32.mrb[0].mxu0
        %6671 = vmatprep.mubr.f32.mxu0 0.0
        %6672 = vmatmul.mubr.f32.gmra.mrb[0].mxu0 %v6310
        %v6673 = vpop.f32.mrb[0].mxu0
        %v6674 = vadd.f32 0.0, %v6673
        %v6675 = vpop.f32.mrb[0].mxu0
        %6676 = vdwg.mxu0
        %6677 = vmatprep.subr.mxu0 0.0
        %6678 = vmatpush1.msra.mxu0 %v6121
        %6679 = vmatprep.subr.mxu0 0.0
        %6680 = vmatpush1.msra.mxu0 %v6122
        %6681 = vmatprep.subr.mxu0 0.0
        %6682 = vmatpush1.msra.mxu0 %v6123
        %6683 = vmatprep.subr.mxu0 0.0
        %6684 = vmatpush1.msra.mxu0 %v6124
        %6685 = vmatprep.subr.mxu0 0.0
        %6686 = vmatpush1.msra.mxu0 %v6125
        %6687 = vmatprep.subr.mxu0 0.0
        %6688 = vmatpush1.msra.mxu0 %v6126
        %6689 = vmatprep.subr.mxu0 0.0
        %6690 = vmatpush1.msra.mxu0 %v6127
        %6691 = vmatprep.subr.mxu0 0.0
        %6692 = vmatpush1.msra.mxu0 %v6128
        %6693 = vmatprep.subr.mxu0 0.0
        %6694 = vmatpush1.msra.mxu0 %v6129
        %6695 = vmatprep.subr.mxu0 0.0
        %6696 = vmatpush1.msra.mxu0 %v6130
        %6697 = vmatprep.subr.mxu0 0.0
        %6698 = vmatpush1.msra.mxu0 %v6131
        %6699 = vmatprep.subr.mxu0 0.0
        %6700 = vmatpush1.msra.mxu0 %v6132
        %6701 = vmatprep.subr.mxu0 0.0
        %6702 = vmatpush1.msra.mxu0 %v6133
        %6703 = vmatprep.subr.mxu0 0.0
        %6704 = vmatpush1.msra.mxu0 %v6134
        %6705 = vmatprep.subr.mxu0 0.0
        %6706 = vmatpush1.msra.mxu0 %v6135
        %6707 = vmatprep.subr.mxu0 0.0
        %6708 = vmatpush1.msra.mxu0 %v6136
        %6709 = vmatprep.subr.mxu0 0.0
        %6710 = vmatpush1.msra.mxu0 0.0
        %6711 = vmatprep.subr.mxu0 0.0
        %6712 = vmatpush1.msra.mxu0 0.0
        %6713 = vmatprep.subr.mxu0 0.0
        %6714 = vmatpush1.msra.mxu0 0.0
        %6715 = vmatprep.subr.mxu0 0.0
        %6716 = vmatpush1.msra.mxu0 0.0
        %6717 = vmatprep.subr.mxu0 0.0
        %6718 = vmatpush1.msra.mxu0 0.0
        %6719 = vmatprep.subr.mxu0 0.0
        %6720 = vmatpush1.msra.mxu0 0.0
        %6721 = vmatprep.subr.mxu0 0.0
        %6722 = vmatpush1.msra.mxu0 0.0
        %6723 = vmatprep.subr.mxu0 0.0
        %6724 = vmatpush1.msra.mxu0 0.0
        %6725 = vmatprep.subr.mxu0 0.0
        %6726 = vmatpush1.msra.mxu0 0.0
        %6727 = vmatprep.subr.mxu0 0.0
        %6728 = vmatpush1.msra.mxu0 0.0
        %6729 = vmatprep.subr.mxu0 0.0
        %6730 = vmatpush1.msra.mxu0 0.0
        %6731 = vmatprep.subr.mxu0 0.0
        %6732 = vmatpush1.msra.mxu0 0.0
        %6733 = vmatprep.subr.mxu0 0.0
        %6734 = vmatpush1.msra.mxu0 0.0
        %6735 = vmatprep.subr.mxu0 0.0
        %6736 = vmatpush1.msra.mxu0 0.0
        %6737 = vmatprep.subr.mxu0 0.0
        %6738 = vmatpush1.msra.mxu0 0.0
        %6739 = vmatprep.subr.mxu0 0.0
        %6740 = vmatpush1.msra.mxu0 0.0
        %6741 = vmatprep.mubr.f32.mxu0 0.0
        %6742 = vmatmul.mubr.f32.gmra.mrb[0].mxu0 %v6379
        %v6743 = vpop.f32.mrb[0].mxu0
        %v6744 = vadd.f32 0.0, %v6743
        %v6745 = vpop.f32.mrb[0].mxu0
        %6746 = vmatprep.mubr.f32.mxu0 0.0
        %6747 = vmatmul.mubr.f32.gmra.mrb[0].mxu0 %v6385
        %v6748 = vpop.f32.mrb[0].mxu0
        %v6749 = vadd.f32 0.0, %v6748
        %v6750 = vpop.f32.mrb[0].mxu0
        %6751 = vmatprep.mubr.f32.mxu0 0.0
        %6752 = vmatmul.mubr.f32.gmra.mrb[0].mxu0 %v6391
        %v6753 = vpop.f32.mrb[0].mxu0
        %v6754 = vadd.f32 0.0, %v6753
        %v6755 = vpop.f32.mrb[0].mxu0
        %6756 = vmatprep.mubr.f32.mxu0 0.0
        %6757 = vmatmul.mubr.f32.gmra.mrb[0].mxu0 %v6397
        %v6758 = vpop.f32.mrb[0].mxu0
        %v6759 = vadd.f32 0.0, %v6758
        %v6760 = vpop.f32.mrb[0].mxu0
        %6761 = vmatprep.mubr.f32.mxu0 0.0
        %6762 = vmatmul.mubr.f32.gmra.mrb[0].mxu0 %v6403
        %v6763 = vpop.f32.mrb[0].mxu0
        %v6764 = vadd.f32 0.0, %v6763
        %v6765 = vpop.f32.mrb[0].mxu0
        %6766 = vdwg.mxu0
        %6767 = vmatprep.subr.mxu0 0.0
        %6768 = vmatpush1.msra.mxu0 %v6121
        %6769 = vmatprep.subr.mxu0 0.0
        %6770 = vmatpush1.msra.mxu0 %v6122
        %6771 = vmatprep.subr.mxu0 0.0
        %6772 = vmatpush1.msra.mxu0 %v6123
        %6773 = vmatprep.subr.mxu0 0.0
        %6774 = vmatpush1.msra.mxu0 %v6124
        %6775 = vmatprep.subr.mxu0 0.0
        %6776 = vmatpush1.msra.mxu0 %v6125
        %6777 = vmatprep.subr.mxu0 0.0
        %6778 = vmatpush1.msra.mxu0 %v6126
        %6779 = vmatprep.subr.mxu0 0.0
        %6780 = vmatpush1.msra.mxu0 %v6127
        %6781 = vmatprep.subr.mxu0 0.0
        %6782 = vmatpush1.msra.mxu0 %v6128
        %6783 = vmatprep.subr.mxu0 0.0
        %6784 = vmatpush1.msra.mxu0 %v6129
        %6785 = vmatprep.subr.mxu0 0.0
        %6786 = vmatpush1.msra.mxu0 %v6130
        %6787 = vmatprep.subr.mxu0 0.0
        %6788 = vmatpush1.msra.mxu0 %v6131
        %6789 = vmatprep.subr.mxu0 0.0
        %6790 = vmatpush1.msra.mxu0 %v6132
        %6791 = vmatprep.subr.mxu0 0.0
        %6792 = vmatpush1.msra.mxu0 %v6133
        %6793 = vmatprep.subr.mxu0 0.0
        %6794 = vmatpush1.msra.mxu0 %v6134
        %6795 = vmatprep.subr.mxu0 0.0
        %6796 = vmatpush1.msra.mxu0 %v6135
        %6797 = vmatprep.subr.mxu0 0.0
        %6798 = vmatpush1.msra.mxu0 %v6136
        %6799 = vmatprep.subr.mxu0 0.0
        %6800 = vmatpush1.msra.mxu0 0.0
        %6801 = vmatprep.subr.mxu0 0.0
        %6802 = vmatpush1.msra.mxu0 0.0
        %6803 = vmatprep.subr.mxu0 0.0
        %6804 = vmatpush1.msra.mxu0 0.0
        %6805 = vmatprep.subr.mxu0 0.0
        %6806 = vmatpush1.msra.mxu0 0.0
        %6807 = vmatprep.subr.mxu0 0.0
        %6808 = vmatpush1.msra.mxu0 0.0
        %6809 = vmatprep.subr.mxu0 0.0
        %6810 = vmatpush1.msra.mxu0 0.0
        %6811 = vmatprep.subr.mxu0 0.0
        %6812 = vmatpush1.msra.mxu0 0.0
        %6813 = vmatprep.subr.mxu0 0.0
        %6814 = vmatpush1.msra.mxu0 0.0
        %6815 = vmatprep.subr.mxu0 0.0
        %6816 = vmatpush1.msra.mxu0 0.0
        %6817 = vmatprep.subr.mxu0 0.0
        %6818 = vmatpush1.msra.mxu0 0.0
        %6819 = vmatprep.subr.mxu0 0.0
        %6820 = vmatpush1.msra.mxu0 0.0
        %6821 = vmatprep.subr.mxu0 0.0
        %6822 = vmatpush1.msra.mxu0 0.0
        %6823 = vmatprep.subr.mxu0 0.0
        %6824 = vmatpush1.msra.mxu0 0.0
        %6825 = vmatprep.subr.mxu0 0.0
        %6826 = vmatpush1.msra.mxu0 0.0
        %6827 = vmatprep.subr.mxu0 0.0
        %6828 = vmatpush1.msra.mxu0 0.0
        %6829 = vmatprep.subr.mxu0 0.0
        %6830 = vmatpush1.msra.mxu0 0.0
        %6831 = vmatprep.mubr.f32.mxu0 0.0
        %6832 = vmatmul.mubr.f32.gmra.mrb[0].mxu0 %v6381
        %v6833 = vpop.f32.mrb[0].mxu0
        %v6834 = vadd.f32 0.0, %v6833
        %v6835 = vpop.f32.mrb[0].mxu0
        %6836 = vmatprep.mubr.f32.mxu0 0.0
        %6837 = vmatmul.mubr.f32.gmra.mrb[0].mxu0 %v6387
        %v6838 = vpop.f32.mrb[0].mxu0
        %v6839 = vadd.f32 0.0, %v6838
        %v6840 = vpop.f32.mrb[0].mxu0
        %6841 = vmatprep.mubr.f32.mxu0 0.0
        %6842 = vmatmul.mubr.f32.gmra.mrb[0].mxu0 %v6393
        %v6843 = vpop.f32.mrb[0].mxu0
        %v6844 = vadd.f32 0.0, %v6843
        %v6845 = vpop.f32.mrb[0].mxu0
        %6846 = vmatprep.mubr.f32.mxu0 0.0
        %6847 = vmatmul.mubr.f32.gmra.mrb[0].mxu0 %v6399
        %v6848 = vpop.f32.mrb[0].mxu0
        %v6849 = vadd.f32 0.0, %v6848
        %v6850 = vpop.f32.mrb[0].mxu0
        %6851 = vmatprep.mubr.f32.mxu0 0.0
        %6852 = vmatmul.mubr.f32.gmra.mrb[0].mxu0 %v6405
        %v6853 = vpop.f32.mrb[0].mxu0
        %v6854 = vadd.f32 0.0, %v6853
        %v6855 = vpop.f32.mrb[0].mxu0
        %6856 = vdwg.mxu0
        %6857 = vmatprep.subr.mxu0 0.0
        %6858 = vmatpush1.msra.mxu0 %v6121
        %6859 = vmatprep.subr.mxu0 0.0
        %6860 = vmatpush1.msra.mxu0 %v6122
        %6861 = vmatprep.subr.mxu0 0.0
        %6862 = vmatpush1.msra.mxu0 %v6123
        %6863 = vmatprep.subr.mxu0 0.0
        %6864 = vmatpush1.msra.mxu0 %v6124
        %6865 = vmatprep.subr.mxu0 0.0
        %6866 = vmatpush1.msra.mxu0 %v6125
        %6867 = vmatprep.subr.mxu0 0.0
        %6868 = vmatpush1.msra.mxu0 %v6126
        %6869 = vmatprep.subr.mxu0 0.0
        %6870 = vmatpush1.msra.mxu0 %v6127
        %6871 = vmatprep.subr.mxu0 0.0
        %6872 = vmatpush1.msra.mxu0 %v6128
        %6873 = vmatprep.subr.mxu0 0.0
        %6874 = vmatpush1.msra.mxu0 %v6129
        %6875 = vmatprep.subr.mxu0 0.0
        %6876 = vmatpush1.msra.mxu0 %v6130
        %6877 = vmatprep.subr.mxu0 0.0
        %6878 = vmatpush1.msra.mxu0 %v6131
        %6879 = vmatprep.subr.mxu0 0.0
        %6880 = vmatpush1.msra.mxu0 %v6132
        %6881 = vmatprep.subr.mxu0 0.0
        %6882 = vmatpush1.msra.mxu0 %v6133
        %6883 = vmatprep.subr.mxu0 0.0
        %6884 = vmatpush1.msra.mxu0 %v6134
        %6885 = vmatprep.subr.mxu0 0.0
        %6886 = vmatpush1.msra.mxu0 %v6135
        %6887 = vmatprep.subr.mxu0 0.0
        %6888 = vmatpush1.msra.mxu0 %v6136
        %6889 = vmatprep.subr.mxu0 0.0
        %6890 = vmatpush1.msra.mxu0 0.0
        %6891 = vmatprep.subr.mxu0 0.0
        %6892 = vmatpush1.msra.mxu0 0.0
        %6893 = vmatprep.subr.mxu0 0.0
        %6894 = vmatpush1.msra.mxu0 0.0
        %6895 = vmatprep.subr.mxu0 0.0
        %6896 = vmatpush1.msra.mxu0 0.0
        %6897 = vmatprep.subr.mxu0 0.0
        %6898 = vmatpush1.msra.mxu0 0.0
        %6899 = vmatprep.subr.mxu0 0.0
        %6900 = vmatpush1.msra.mxu0 0.0
        %6901 = vmatprep.subr.mxu0 0.0
        %6902 = vmatpush1.msra.mxu0 0.0
        %6903 = vmatprep.subr.mxu0 0.0
        %6904 = vmatpush1.msra.mxu0 0.0
        %6905 = vmatprep.subr.mxu0 0.0
        %6906 = vmatpush1.msra.mxu0 0.0
        %6907 = vmatprep.subr.mxu0 0.0
        %6908 = vmatpush1.msra.mxu0 0.0
        %6909 = vmatprep.subr.mxu0 0.0
        %6910 = vmatpush1.msra.mxu0 0.0
        %6911 = vmatprep.subr.mxu0 0.0
        %6912 = vmatpush1.msra.mxu0 0.0
        %6913 = vmatprep.subr.mxu0 0.0
        %6914 = vmatpush1.msra.mxu0 0.0
        %6915 = vmatprep.subr.mxu0 0.0
        %6916 = vmatpush1.msra.mxu0 0.0
        %6917 = vmatprep.subr.mxu0 0.0
        %6918 = vmatpush1.msra.mxu0 0.0
        %6919 = vmatprep.subr.mxu0 0.0
        %6920 = vmatpush1.msra.mxu0 0.0
        %6921 = vmatprep.mubr.f32.mxu0 0.0
        %6922 = vmatmul.mubr.f32.gmra.mrb[0].mxu0 %v6474
        %v6923 = vpop.f32.mrb[0].mxu0
        %v6924 = vadd.f32 0.0, %v6923
        %v6925 = vpop.f32.mrb[0].mxu0
        %6926 = vmatprep.mubr.f32.mxu0 0.0
        %6927 = vmatmul.mubr.f32.gmra.mrb[0].mxu0 %v6479
        %v6928 = vpop.f32.mrb[0].mxu0
        %v6929 = vadd.f32 0.0, %v6928
        %v6930 = vpop.f32.mrb[0].mxu0
        %6931 = vmatprep.mubr.f32.mxu0 0.0
        %6932 = vmatmul.mubr.f32.gmra.mrb[0].mxu0 %v6484
        %v6933 = vpop.f32.mrb[0].mxu0
        %v6934 = vadd.f32 0.0, %v6933
        %v6935 = vpop.f32.mrb[0].mxu0
        %6936 = vmatprep.mubr.f32.mxu0 0.0
        %6937 = vmatmul.mubr.f32.gmra.mrb[0].mxu0 %v6489
        %v6938 = vpop.f32.mrb[0].mxu0
        %v6939 = vadd.f32 0.0, %v6938
        %v6940 = vpop.f32.mrb[0].mxu0
        %6941 = vmatprep.mubr.f32.mxu0 0.0
        %6942 = vmatmul.mubr.f32.gmra.mrb[0].mxu0 %v6494
        %v6943 = vpop.f32.mrb[0].mxu0
        %v6944 = vadd.f32 0.0, %v6943
        %v6945 = vpop.f32.mrb[0].mxu0
        %6946 = vdwg.mxu0
        %v6947 = vmul.f32 %v6564, %v6564
        %v6948 = vmul.f32 %v6569, %v6569
        %v6949 = vmul.f32 %v6574, %v6574
        %v6950 = vmul.f32 %v6579, %v6579
        %v6951 = vmul.f32 %v6584, %v6584
        %v6952 = vmul.f32 %v6654, %v6654
        %v6953 = vmul.f32 %v6659, %v6659
        %v6954 = vmul.f32 %v6664, %v6664
        %v6955 = vmul.f32 %v6669, %v6669
        %v6956 = vmul.f32 %v6674, %v6674
        %v6957 = vmul.f32 %v6564, %v6654
        %v6958 = vmul.f32 %v6569, %v6659
        %v6959 = vmul.f32 %v6574, %v6664
        %v6960 = vmul.f32 %v6579, %v6669
        %v6961 = vmul.f32 %v6584, %v6674
        %v6962 = vsub.f32 %v6744, %v6947
        %v6963 = vsub.f32 %v6749, %v6948
        %v6964 = vsub.f32 %v6754, %v6949
        %v6965 = vsub.f32 %v6759, %v6950
        %v6966 = vsub.f32 %v6764, %v6951
        %v6967 = vsub.f32 %v6834, %v6952
        %v6968 = vsub.f32 %v6839, %v6953
        %v6969 = vsub.f32 %v6844, %v6954
        %v6970 = vsub.f32 %v6849, %v6955
        %v6971 = vsub.f32 %v6854, %v6956
        %v6972 = vsub.f32 %v6924, %v6957
        %v6973 = vsub.f32 %v6929, %v6958
        %v6974 = vsub.f32 %v6934, %v6959
        %v6975 = vsub.f32 %v6939, %v6960
        %v6976 = vsub.f32 %v6944, %v6961
        %v6977 = vmul.f32 %v6972, 2.0
        %v6978 = vmul.f32 %v6973, 2.0
        %v6979 = vmul.f32 %v6974, 2.0
        %v6980 = vmul.f32 %v6975, 2.0
        %v6981 = vmul.f32 %v6976, 2.0
        %v6982 = vadd.f32 %v6977, 0.0009
        %v6983 = vadd.f32 %v6978, 0.0009
        %v6984 = vadd.f32 %v6979, 0.0009
        %v6985 = vadd.f32 %v6980, 0.0009
        %v6986 = vadd.f32 %v6981, 0.0009
        %v6987 = vadd.f32 %v6962, %v6967
        %v6988 = vadd.f32 %v6963, %v6968
        %v6989 = vadd.f32 %v6964, %v6969
        %v6990 = vadd.f32 %v6965, %v6970
        %v6991 = vadd.f32 %v6966, %v6971
        %v6992 = vadd.f32 %v6987, 0.0009
        %v6993 = vadd.f32 %v6988, 0.0009
        %v6994 = vadd.f32 %v6989, 0.0009
        %v6995 = vadd.f32 %v6990, 0.0009
        %v6996 = vadd.f32 %v6991, 0.0009
        %v6997 = vrcp.pop %v6992
        %v6998 = vrcp.pop %v6993
        %v6999 = vrcp.pop %v6994
        %v7000 = vrcp.pop %v6995
        %v7001 = vrcp.pop %v6996
        %v7002 = vmul.f32 %v6982, %v6997
        %v7003 = vmul.f32 %v6983, %v6998
        %v7004 = vmul.f32 %v6984, %v6999
        %v7005 = vmul.f32 %v6985, %v7000
        %v7006 = vmul.f32 %v6986, %v7001
        %vm7007 = vcmask 277504
        %v7008 = vsel %vm7007, %v7002, 0.0
        %v7009 = vsel %vm7007, %v7003, 0.0
        %v7010 = vadd.f32 %v7008, %v7009
        %v7011 = vsel %vm7007, %v7004, 0.0
        %v7012 = vadd.f32 %v7010, %v7011
        %v7013 = vsel %vm7007, %v7005, 0.0
        %v7014 = vadd.f32 %v7012, %v7013
        %vm7015 = vcmask 271360
        %v7016 = vsel %vm7015, %v7006, 0.0
        %v7017 = vadd.f32 %v7014, %v7016
        %7018 = vadd.xlane.f32.xlu0 %v7017
        %v7019 = vpop.xlane.xlu0 %7018
        %v7020 = vrot.slane %v7019, 4
        %v7021 = vadd.f32 %v7019, %v7020
        %v7022 = vrot.slane %v7021, 2
        %v7023 = vadd.f32 %v7021, %v7022
        %v7024 = vrot.slane %v7023, 1
        %v7025 = vadd.f32 %v7023, %v7024
        %s7026 = vtos %v7025
        %s7027 = smul.f32 %s7026, 0.00086505193
        %v7028 = vld [vmem:[#allocation18] sm:$0xff]
        %v7029 = vld [vmem:[#allocation18 + $0x8] sm:$0xff]
        %v7030 = vld [vmem:[#allocation18 + $0x10] sm:$0x3f]
        %v7031 = vld [vmem:[#allocation19] sm:$0xff]
        %v7032 = vld [vmem:[#allocation19 + $0x8] sm:$0xff]
        %v7033 = vld [vmem:[#allocation19 + $0x10] sm:$0xff]
        %v7034 = vld [vmem:[#allocation19 + $0x18] sm:$0xff]
        %v7035 = vld [vmem:[#allocation19 + $0x20] sm:$0xff]
        %v7036 = vld [vmem:[#allocation19 + $0x28] sm:$0xff]
        %v7037 = vld [vmem:[#allocation19 + $0x30] sm:$0xff]
        %v7038 = vld [vmem:[#allocation19 + $0x38] sm:$0xff]
        %v7039 = vld [vmem:[#allocation19 + $0x40] sm:$0xff]
        %v7040 = vld [vmem:[#allocation19 + $0x48] sm:$0xff]
        %v7041 = vld [vmem:[#allocation19 + $0x50] sm:$0xff]
        %v7042 = vld [vmem:[#allocation19 + $0x58] sm:$0xff]
        %v7043 = vld [vmem:[#allocation19 + $0x60] sm:$0xff]
        %v7044 = vld [vmem:[#allocation19 + $0x68] sm:$0xff]
        %v7045 = vld [vmem:[#allocation19 + $0x70] sm:$0xff]
        %v7046 = vld [vmem:[#allocation19 + $0x78] sm:$0xff]
        %v7048 = vsel %vm6155, %v7028, 0
        %v7051 = vsel %vm6155, %v7029, 0
        %v7054 = vsel %vm6155, %v7030, 0
        %7056 = vmatprep.subr.mxu0 %v6162
        %7057 = vmatpush1.msra.mxu0 %v6156
        %7058 = vmatprep.subr.mxu0 %v6163
        %7059 = vmatpush1.msra.mxu0 %v6157
        %7060 = vmatprep.subr.mxu0 %v6164
        %7061 = vmatpush1.msra.mxu0 %v6158
        %7062 = vmatprep.subr.mxu0 %v6165
        %7063 = vmatpush1.msra.mxu0 %v6159
        %7064 = vmatprep.subr.mxu0 %v6166
        %7065 = vmatpush1.msra.mxu0 %v6160
        %7066 = vmatprep.subr.mxu0 %v6206
        %7067 = vmatpush1.msra.mxu0 %v6203
        %7068 = vmatprep.subr.mxu0 0.0
        %7069 = vmatpush1.msra.mxu0 0.0
        %7070 = vmatprep.subr.mxu0 0.0
        %7071 = vmatpush1.msra.mxu0 0.0
        %7072 = vmatprep.subr.mxu0 0.0
        %7073 = vmatpush1.msra.mxu0 0.0
        %7074 = vmatprep.subr.mxu0 0.0
        %7075 = vmatpush1.msra.mxu0 0.0
        %7076 = vmatprep.subr.mxu0 0.0
        %7077 = vmatpush1.msra.mxu0 0.0
        %7078 = vmatprep.subr.mxu0 0.0
        %7079 = vmatpush1.msra.mxu0 0.0
        %7080 = vmatprep.subr.mxu0 0.0
        %7081 = vmatpush1.msra.mxu0 0.0
        %7082 = vmatprep.subr.mxu0 0.0
        %7083 = vmatpush1.msra.mxu0 0.0
        %7084 = vmatprep.subr.mxu0 0.0
        %7085 = vmatpush1.msra.mxu0 0.0
        %7086 = vmatprep.subr.mxu0 0.0
        %7087 = vmatpush1.msra.mxu0 0.0
        %7088 = vmatprep.subr.mxu0 0.0
        %7089 = vmatpush1.msra.mxu0 0.0
        %7090 = vmatprep.subr.mxu0 0.0
        %7091 = vmatpush1.msra.mxu0 0.0
        %7092 = vmatprep.subr.mxu0 0.0
        %7093 = vmatpush1.msra.mxu0 0.0
        %7094 = vmatprep.subr.mxu0 0.0
        %7095 = vmatpush1.msra.mxu0 0.0
        %7096 = vmatprep.subr.mxu0 0.0
        %7097 = vmatpush1.msra.mxu0 0.0
        %7098 = vmatprep.subr.mxu0 0.0
        %7099 = vmatpush1.msra.mxu0 0.0
        %7100 = vmatprep.subr.mxu0 0.0
        %7101 = vmatpush1.msra.mxu0 0.0
        %7102 = vmatprep.subr.mxu0 0.0
        %7103 = vmatpush1.msra.mxu0 0.0
        %7104 = vmatprep.subr.mxu0 0.0
        %7105 = vmatpush1.msra.mxu0 0.0
        %7106 = vmatprep.subr.mxu0 0.0
        %7107 = vmatpush1.msra.mxu0 0.0
        %7108 = vmatprep.subr.mxu0 0.0
        %7109 = vmatpush1.msra.mxu0 0.0
        %7110 = vmatprep.subr.mxu0 0.0
        %7111 = vmatpush1.msra.mxu0 0.0
        %7112 = vmatprep.subr.mxu0 0.0
        %7113 = vmatpush1.msra.mxu0 0.0
        %7114 = vmatprep.subr.mxu0 0.0
        %7115 = vmatpush1.msra.mxu0 0.0
        %7116 = vmatprep.subr.mxu0 0.0
        %7117 = vmatpush1.msra.mxu0 0.0
        %7118 = vmatprep.subr.mxu0 0.0
        %7119 = vmatpush1.msra.mxu0 0.0
        %7120 = vmatprep.mubr.f32.mxu0 0.0
        %7121 = vmatmul.mubr.f32.gmra.mrb[0].mxu0 %v7048
        %v7122 = vpop.f32.mrb[0].mxu0
        %v7123 = vadd.f32 0.0, %v7122
        %v7124 = vpop.f32.mrb[0].mxu0
        %v7125 = vadd.f32 0.0, %v7124
        %7126 = vmatprep.mubr.f32.mxu0 0.0
        %7127 = vmatmul.mubr.f32.gmra.mrb[0].mxu0 %v7051
        %v7128 = vpop.f32.mrb[0].mxu0
        %v7129 = vadd.f32 0.0, %v7128
        %v7130 = vpop.f32.mrb[0].mxu0
        %v7131 = vadd.f32 0.0, %v7130
        %7132 = vmatprep.mubr.f32.mxu0 0.0
        %7133 = vmatmul.mubr.f32.gmra.mrb[0].mxu0 %v7054
        %v7134 = vpop.f32.mrb[0].mxu0
        %v7135 = vadd.f32 0.0, %v7134
        %v7136 = vpop.f32.mrb[0].mxu0
        %v7137 = vadd.f32 0.0, %v7136
        %7138 = vdwg.mxu0
        %7139 = vmatprep.subr.mxu0 0.0
        %7140 = vmatpush1.msra.mxu0 %v7031
        %7141 = vmatprep.subr.mxu0 0.0
        %7142 = vmatpush1.msra.mxu0 %v7032
        %7143 = vmatprep.subr.mxu0 0.0
        %7144 = vmatpush1.msra.mxu0 %v7033
        %7145 = vmatprep.subr.mxu0 0.0
        %7146 = vmatpush1.msra.mxu0 %v7034
        %7147 = vmatprep.subr.mxu0 0.0
        %7148 = vmatpush1.msra.mxu0 %v7035
        %7149 = vmatprep.subr.mxu0 0.0
        %7150 = vmatpush1.msra.mxu0 %v7036
        %7151 = vmatprep.subr.mxu0 0.0
        %7152 = vmatpush1.msra.mxu0 %v7037
        %7153 = vmatprep.subr.mxu0 0.0
        %7154 = vmatpush1.msra.mxu0 %v7038
        %7155 = vmatprep.subr.mxu0 0.0
        %7156 = vmatpush1.msra.mxu0 %v7039
        %7157 = vmatprep.subr.mxu0 0.0
        %7158 = vmatpush1.msra.mxu0 %v7040
        %7159 = vmatprep.subr.mxu0 0.0
        %7160 = vmatpush1.msra.mxu0 %v7041
        %7161 = vmatprep.subr.mxu0 0.0
        %7162 = vmatpush1.msra.mxu0 %v7042
        %7163 = vmatprep.subr.mxu0 0.0
        %7164 = vmatpush1.msra.mxu0 %v7043
        %7165 = vmatprep.subr.mxu0 0.0
        %7166 = vmatpush1.msra.mxu0 %v7044
        %7167 = vmatprep.subr.mxu0 0.0
        %7168 = vmatpush1.msra.mxu0 %v7045
        %7169 = vmatprep.subr.mxu0 0.0
        %7170 = vmatpush1.msra.mxu0 %v7046
        %7171 = vmatprep.subr.mxu0 0.0
        %7172 = vmatpush1.msra.mxu0 0.0
        %7173 = vmatprep.subr.mxu0 0.0
        %7174 = vmatpush1.msra.mxu0 0.0
        %7175 = vmatprep.subr.mxu0 0.0
        %7176 = vmatpush1.msra.mxu0 0.0
        %7177 = vmatprep.subr.mxu0 0.0
        %7178 = vmatpush1.msra.mxu0 0.0
        %7179 = vmatprep.subr.mxu0 0.0
        %7180 = vmatpush1.msra.mxu0 0.0
        %7181 = vmatprep.subr.mxu0 0.0
        %7182 = vmatpush1.msra.mxu0 0.0
        %7183 = vmatprep.subr.mxu0 0.0
        %7184 = vmatpush1.msra.mxu0 0.0
        %7185 = vmatprep.subr.mxu0 0.0
        %7186 = vmatpush1.msra.mxu0 0.0
        %7187 = vmatprep.subr.mxu0 0.0
        %7188 = vmatpush1.msra.mxu0 0.0
        %7189 = vmatprep.subr.mxu0 0.0
        %7190 = vmatpush1.msra.mxu0 0.0
        %7191 = vmatprep.subr.mxu0 0.0
        %7192 = vmatpush1.msra.mxu0 0.0
        %7193 = vmatprep.subr.mxu0 0.0
        %7194 = vmatpush1.msra.mxu0 0.0
        %7195 = vmatprep.subr.mxu0 0.0
        %7196 = vmatpush1.msra.mxu0 0.0
        %7197 = vmatprep.subr.mxu0 0.0
        %7198 = vmatpush1.msra.mxu0 0.0
        %7199 = vmatprep.subr.mxu0 0.0
        %7200 = vmatpush1.msra.mxu0 0.0
        %7201 = vmatprep.subr.mxu0 0.0
        %7202 = vmatpush1.msra.mxu0 0.0
        %7203 = vmatprep.mubr.f32.mxu0 0.0
        %7204 = vmatmul.mubr.f32.gmra.mrb[0].mxu0 %v7123
        %v7205 = vpop.f32.mrb[0].mxu0
        %v7206 = vadd.f32 0.0, %v7205
        %v7207 = vpop.f32.mrb[0].mxu0
        %7208 = vmatprep.mubr.f32.mxu0 0.0
        %7209 = vmatmul.mubr.f32.gmra.mrb[0].mxu0 %v7129
        %v7210 = vpop.f32.mrb[0].mxu0
        %v7211 = vadd.f32 0.0, %v7210
        %v7212 = vpop.f32.mrb[0].mxu0
        %7213 = vmatprep.mubr.f32.mxu0 0.0
        %7214 = vmatmul.mubr.f32.gmra.mrb[0].mxu0 %v7135
        %v7215 = vpop.f32.mrb[0].mxu0
        %v7216 = vadd.f32 0.0, %v7215
        %v7217 = vpop.f32.mrb[0].mxu0
        %7218 = vdwg.mxu0
        %7219 = vmatprep.subr.mxu0 0.0
        %7220 = vmatpush1.msra.mxu0 %v7031
        %7221 = vmatprep.subr.mxu0 0.0
        %7222 = vmatpush1.msra.mxu0 %v7032
        %7223 = vmatprep.subr.mxu0 0.0
        %7224 = vmatpush1.msra.mxu0 %v7033
        %7225 = vmatprep.subr.mxu0 0.0
        %7226 = vmatpush1.msra.mxu0 %v7034
        %7227 = vmatprep.subr.mxu0 0.0
        %7228 = vmatpush1.msra.mxu0 %v7035
        %7229 = vmatprep.subr.mxu0 0.0
        %7230 = vmatpush1.msra.mxu0 %v7036
        %7231 = vmatprep.subr.mxu0 0.0
        %7232 = vmatpush1.msra.mxu0 %v7037
        %7233 = vmatprep.subr.mxu0 0.0
        %7234 = vmatpush1.msra.mxu0 %v7038
        %7235 = vmatprep.subr.mxu0 0.0
        %7236 = vmatpush1.msra.mxu0 %v7039
        %7237 = vmatprep.subr.mxu0 0.0
        %7238 = vmatpush1.msra.mxu0 %v7040
        %7239 = vmatprep.subr.mxu0 0.0
        %7240 = vmatpush1.msra.mxu0 %v7041
        %7241 = vmatprep.subr.mxu0 0.0
        %7242 = vmatpush1.msra.mxu0 %v7042
        %7243 = vmatprep.subr.mxu0 0.0
        %7244 = vmatpush1.msra.mxu0 %v7043
        %7245 = vmatprep.subr.mxu0 0.0
        %7246 = vmatpush1.msra.mxu0 %v7044
        %7247 = vmatprep.subr.mxu0 0.0
        %7248 = vmatpush1.msra.mxu0 %v7045
        %7249 = vmatprep.subr.mxu0 0.0
        %7250 = vmatpush1.msra.mxu0 %v7046
        %7251 = vmatprep.subr.mxu0 0.0
        %7252 = vmatpush1.msra.mxu0 0.0
        %7253 = vmatprep.subr.mxu0 0.0
        %7254 = vmatpush1.msra.mxu0 0.0
        %7255 = vmatprep.subr.mxu0 0.0
        %7256 = vmatpush1.msra.mxu0 0.0
        %7257 = vmatprep.subr.mxu0 0.0
        %7258 = vmatpush1.msra.mxu0 0.0
        %7259 = vmatprep.subr.mxu0 0.0
        %7260 = vmatpush1.msra.mxu0 0.0
        %7261 = vmatprep.subr.mxu0 0.0
        %7262 = vmatpush1.msra.mxu0 0.0
        %7263 = vmatprep.subr.mxu0 0.0
        %7264 = vmatpush1.msra.mxu0 0.0
        %7265 = vmatprep.subr.mxu0 0.0
        %7266 = vmatpush1.msra.mxu0 0.0
        %7267 = vmatprep.subr.mxu0 0.0
        %7268 = vmatpush1.msra.mxu0 0.0
        %7269 = vmatprep.subr.mxu0 0.0
        %7270 = vmatpush1.msra.mxu0 0.0
        %7271 = vmatprep.subr.mxu0 0.0
        %7272 = vmatpush1.msra.mxu0 0.0
        %7273 = vmatprep.subr.mxu0 0.0
        %7274 = vmatpush1.msra.mxu0 0.0
        %7275 = vmatprep.subr.mxu0 0.0
        %7276 = vmatpush1.msra.mxu0 0.0
        %7277 = vmatprep.subr.mxu0 0.0
        %7278 = vmatpush1.msra.mxu0 0.0
        %7279 = vmatprep.subr.mxu0 0.0
        %7280 = vmatpush1.msra.mxu0 0.0
        %7281 = vmatprep.subr.mxu0 0.0
        %7282 = vmatpush1.msra.mxu0 0.0
        %7283 = vmatprep.mubr.f32.mxu0 0.0
        %7284 = vmatmul.mubr.f32.gmra.mrb[0].mxu0 %v7125
        %v7285 = vpop.f32.mrb[0].mxu0
        %v7286 = vadd.f32 0.0, %v7285
        %v7287 = vpop.f32.mrb[0].mxu0
        %7288 = vmatprep.mubr.f32.mxu0 0.0
        %7289 = vmatmul.mubr.f32.gmra.mrb[0].mxu0 %v7131
        %v7290 = vpop.f32.mrb[0].mxu0
        %v7291 = vadd.f32 0.0, %v7290
        %v7292 = vpop.f32.mrb[0].mxu0
        %7293 = vmatprep.mubr.f32.mxu0 0.0
        %7294 = vmatmul.mubr.f32.gmra.mrb[0].mxu0 %v7137
        %v7295 = vpop.f32.mrb[0].mxu0
        %v7296 = vadd.f32 0.0, %v7295
        %v7297 = vpop.f32.mrb[0].mxu0
        %7298 = vdwg.mxu0
        %v7299 = vld [vmem:[#allocation21] sm:$0xff]
        %v7300 = vld [vmem:[#allocation21 + $0x8] sm:$0xf]
        %v7301 = vld [vmem:[#allocation22] sm:$0xff]
        %v7302 = vld [vmem:[#allocation22 + $0x8] sm:$0xff]
        %v7303 = vld [vmem:[#allocation22 + $0x10] sm:$0xff]
        %v7304 = vld [vmem:[#allocation22 + $0x18] sm:$0xff]
        %v7305 = vld [vmem:[#allocation22 + $0x20] sm:$0xff]
        %v7306 = vld [vmem:[#allocation22 + $0x28] sm:$0xff]
        %v7307 = vld [vmem:[#allocation22 + $0x30] sm:$0xff]
        %v7308 = vld [vmem:[#allocation22 + $0x38] sm:$0xff]
        %v7309 = vld [vmem:[#allocation22 + $0x40] sm:$0xff]
        %v7310 = vld [vmem:[#allocation22 + $0x48] sm:$0xff]
        %v7311 = vld [vmem:[#allocation22 + $0x50] sm:$0xff]
        %v7312 = vld [vmem:[#allocation22 + $0x58] sm:$0xff]
        %v7313 = vld [vmem:[#allocation22 + $0x60] sm:$0xff]
        %v7314 = vld [vmem:[#allocation22 + $0x68] sm:$0xff]
        %v7315 = vld [vmem:[#allocation22 + $0x70] sm:$0xff]
        %v7316 = vld [vmem:[#allocation22 + $0x78] sm:$0xff]
        %v7317 = vmul.f32 %v7206, %v7206
        %v7318 = vmul.f32 %v7211, %v7211
        %v7319 = vmul.f32 %v7216, %v7216
        %v7320 = vmul.f32 %v7286, %v7286
        %v7321 = vmul.f32 %v7291, %v7291
        %v7322 = vmul.f32 %v7296, %v7296
        %v7323 = vmul.f32 %v7206, %v7286
        %v7324 = vmul.f32 %v7211, %v7291
        %v7325 = vmul.f32 %v7216, %v7296
        %vm7326 = vcmask 179200
        %v7327 = vsel %vm7326, %v7206, 0.0
        %v7328 = vsel %vm7326, %v7211, 0.0
        %v7329 = vsel %vm7326, %v7216, 0.0
        %v7330 = vsel %vm7326, %v7286, 0.0
        %v7331 = vsel %vm7326, %v7291, 0.0
        %v7332 = vsel %vm7326, %v7296, 0.0
        %v7333 = vsel %vm7326, %v7317, 0.0
        %v7334 = vsel %vm7326, %v7318, 0.0
        %v7335 = vsel %vm7326, %v7319, 0.0
        %v7336 = vsel %vm7326, %v7320, 0.0
        %v7337 = vsel %vm7326, %v7321, 0.0
        %v7338 = vsel %vm7326, %v7322, 0.0
        %v7339 = vsel %vm7326, %v7323, 0.0
        %v7340 = vsel %vm7326, %v7324, 0.0
        %v7341 = vsel %vm7326, %v7325, 0.0
        %v7343 = vsel %vm7326, %v7299, 0
        %v7346 = vsel %vm7326, %v7300, 0
        %v7349 = vsel %vm3944, %v7329, 0
        %v7352 = vsel %vm3944, %v7332, 0
        %v7355 = vsel %vm3944, %v7335, 0
        %v7358 = vsel %vm3944, %v7338, 0
        %v7361 = vsel %vm3944, %v7341, 0
        %7363 = vmatprep.subr.mxu0 %v7330
        %7364 = vmatpush1.msra.mxu0 %v7327
        %7365 = vmatprep.subr.mxu0 %v7331
        %7366 = vmatpush1.msra.mxu0 %v7328
        %7367 = vmatprep.subr.mxu0 %v7352
        %7368 = vmatpush1.msra.mxu0 %v7349
        %7369 = vmatprep.subr.mxu0 0.0
        %7370 = vmatpush1.msra.mxu0 0.0
        %7371 = vmatprep.subr.mxu0 0.0
        %7372 = vmatpush1.msra.mxu0 0.0
        %7373 = vmatprep.subr.mxu0 0.0
        %7374 = vmatpush1.msra.mxu0 0.0
        %7375 = vmatprep.subr.mxu0 0.0
        %7376 = vmatpush1.msra.mxu0 0.0
        %7377 = vmatprep.subr.mxu0 0.0
        %7378 = vmatpush1.msra.mxu0 0.0
        %7379 = vmatprep.subr.mxu0 0.0
        %7380 = vmatpush1.msra.mxu0 0.0
        %7381 = vmatprep.subr.mxu0 0.0
        %7382 = vmatpush1.msra.mxu0 0.0
        %7383 = vmatprep.subr.mxu0 0.0
        %7384 = vmatpush1.msra.mxu0 0.0
        %7385 = vmatprep.subr.mxu0 0.0
        %7386 = vmatpush1.msra.mxu0 0.0
        %7387 = vmatprep.subr.mxu0 0.0
        %7388 = vmatpush1.msra.mxu0 0.0
        %7389 = vmatprep.subr.mxu0 0.0
        %7390 = vmatpush1.msra.mxu0 0.0
        %7391 = vmatprep.subr.mxu0 0.0
        %7392 = vmatpush1.msra.mxu0 0.0
        %7393 = vmatprep.subr.mxu0 0.0
        %7394 = vmatpush1.msra.mxu0 0.0
        %7395 = vmatprep.subr.mxu0 0.0
        %7396 = vmatpush1.msra.mxu0 0.0
        %7397 = vmatprep.subr.mxu0 0.0
        %7398 = vmatpush1.msra.mxu0 0.0
        %7399 = vmatprep.subr.mxu0 0.0
        %7400 = vmatpush1.msra.mxu0 0.0
        %7401 = vmatprep.subr.mxu0 0.0
        %7402 = vmatpush1.msra.mxu0 0.0
        %7403 = vmatprep.subr.mxu0 0.0
        %7404 = vmatpush1.msra.mxu0 0.0
        %7405 = vmatprep.subr.mxu0 0.0
        %7406 = vmatpush1.msra.mxu0 0.0
        %7407 = vmatprep.subr.mxu0 0.0
        %7408 = vmatpush1.msra.mxu0 0.0
        %7409 = vmatprep.subr.mxu0 0.0
        %7410 = vmatpush1.msra.mxu0 0.0
        %7411 = vmatprep.subr.mxu0 0.0
        %7412 = vmatpush1.msra.mxu0 0.0
        %7413 = vmatprep.subr.mxu0 0.0
        %7414 = vmatpush1.msra.mxu0 0.0
        %7415 = vmatprep.subr.mxu0 0.0
        %7416 = vmatpush1.msra.mxu0 0.0
        %7417 = vmatprep.subr.mxu0 0.0
        %7418 = vmatpush1.msra.mxu0 0.0
        %7419 = vmatprep.subr.mxu0 0.0
        %7420 = vmatpush1.msra.mxu0 0.0
        %7421 = vmatprep.subr.mxu0 0.0
        %7422 = vmatpush1.msra.mxu0 0.0
        %7423 = vmatprep.subr.mxu0 0.0
        %7424 = vmatpush1.msra.mxu0 0.0
        %7425 = vmatprep.subr.mxu0 0.0
        %7426 = vmatpush1.msra.mxu0 0.0
        %7427 = vmatprep.mubr.f32.mxu0 0.0
        %7428 = vmatmul.mubr.f32.gmra.mrb[0].mxu0 %v7343
        %v7429 = vpop.f32.mrb[0].mxu0
        %v7430 = vadd.f32 0.0, %v7429
        %v7431 = vpop.f32.mrb[0].mxu0
        %v7432 = vadd.f32 0.0, %v7431
        %7433 = vmatprep.mubr.f32.mxu0 0.0
        %7434 = vmatmul.mubr.f32.gmra.mrb[0].mxu0 %v7346
        %v7435 = vpop.f32.mrb[0].mxu0
        %v7436 = vadd.f32 0.0, %v7435
        %v7437 = vpop.f32.mrb[0].mxu0
        %v7438 = vadd.f32 0.0, %v7437
        %7439 = vdwg.mxu0
        %7440 = vmatprep.subr.mxu0 %v7336
        %7441 = vmatpush1.msra.mxu0 %v7333
        %7442 = vmatprep.subr.mxu0 %v7337
        %7443 = vmatpush1.msra.mxu0 %v7334
        %7444 = vmatprep.subr.mxu0 %v7358
        %7445 = vmatpush1.msra.mxu0 %v7355
        %7446 = vmatprep.subr.mxu0 0.0
        %7447 = vmatpush1.msra.mxu0 0.0
        %7448 = vmatprep.subr.mxu0 0.0
        %7449 = vmatpush1.msra.mxu0 0.0
        %7450 = vmatprep.subr.mxu0 0.0
        %7451 = vmatpush1.msra.mxu0 0.0
        %7452 = vmatprep.subr.mxu0 0.0
        %7453 = vmatpush1.msra.mxu0 0.0
        %7454 = vmatprep.subr.mxu0 0.0
        %7455 = vmatpush1.msra.mxu0 0.0
        %7456 = vmatprep.subr.mxu0 0.0
        %7457 = vmatpush1.msra.mxu0 0.0
        %7458 = vmatprep.subr.mxu0 0.0
        %7459 = vmatpush1.msra.mxu0 0.0
        %7460 = vmatprep.subr.mxu0 0.0
        %7461 = vmatpush1.msra.mxu0 0.0
        %7462 = vmatprep.subr.mxu0 0.0
        %7463 = vmatpush1.msra.mxu0 0.0
        %7464 = vmatprep.subr.mxu0 0.0
        %7465 = vmatpush1.msra.mxu0 0.0
        %7466 = vmatprep.subr.mxu0 0.0
        %7467 = vmatpush1.msra.mxu0 0.0
        %7468 = vmatprep.subr.mxu0 0.0
        %7469 = vmatpush1.msra.mxu0 0.0
        %7470 = vmatprep.subr.mxu0 0.0
        %7471 = vmatpush1.msra.mxu0 0.0
        %7472 = vmatprep.subr.mxu0 0.0
        %7473 = vmatpush1.msra.mxu0 0.0
        %7474 = vmatprep.subr.mxu0 0.0
        %7475 = vmatpush1.msra.mxu0 0.0
        %7476 = vmatprep.subr.mxu0 0.0
        %7477 = vmatpush1.msra.mxu0 0.0
        %7478 = vmatprep.subr.mxu0 0.0
        %7479 = vmatpush1.msra.mxu0 0.0
        %7480 = vmatprep.subr.mxu0 0.0
        %7481 = vmatpush1.msra.mxu0 0.0
        %7482 = vmatprep.subr.mxu0 0.0
        %7483 = vmatpush1.msra.mxu0 0.0
        %7484 = vmatprep.subr.mxu0 0.0
        %7485 = vmatpush1.msra.mxu0 0.0
        %7486 = vmatprep.subr.mxu0 0.0
        %7487 = vmatpush1.msra.mxu0 0.0
        %7488 = vmatprep.subr.mxu0 0.0
        %7489 = vmatpush1.msra.mxu0 0.0
        %7490 = vmatprep.subr.mxu0 0.0
        %7491 = vmatpush1.msra.mxu0 0.0
        %7492 = vmatprep.subr.mxu0 0.0
        %7493 = vmatpush1.msra.mxu0 0.0
        %7494 = vmatprep.subr.mxu0 0.0
        %7495 = vmatpush1.msra.mxu0 0.0
        %7496 = vmatprep.subr.mxu0 0.0
        %7497 = vmatpush1.msra.mxu0 0.0
        %7498 = vmatprep.subr.mxu0 0.0
        %7499 = vmatpush1.msra.mxu0 0.0
        %7500 = vmatprep.subr.mxu0 0.0
        %7501 = vmatpush1.msra.mxu0 0.0
        %7502 = vmatprep.subr.mxu0 0.0
        %7503 = vmatpush1.msra.mxu0 0.0
        %7504 = vmatprep.mubr.f32.mxu0 0.0
        %7505 = vmatmul.mubr.f32.gmra.mrb[0].mxu0 %v7343
        %v7506 = vpop.f32.mrb[0].mxu0
        %v7507 = vadd.f32 0.0, %v7506
        %v7508 = vpop.f32.mrb[0].mxu0
        %v7509 = vadd.f32 0.0, %v7508
        %7510 = vmatprep.mubr.f32.mxu0 0.0
        %7511 = vmatmul.mubr.f32.gmra.mrb[0].mxu0 %v7346
        %v7512 = vpop.f32.mrb[0].mxu0
        %v7513 = vadd.f32 0.0, %v7512
        %v7514 = vpop.f32.mrb[0].mxu0
        %v7515 = vadd.f32 0.0, %v7514
        %7516 = vdwg.mxu0
        %7517 = vmatprep.subr.mxu0 0.0
        %7518 = vmatpush1.msra.mxu0 %v7339
        %7519 = vmatprep.subr.mxu0 0.0
        %7520 = vmatpush1.msra.mxu0 %v7340
        %7521 = vmatprep.subr.mxu0 0.0
        %7522 = vmatpush1.msra.mxu0 %v7361
        %7523 = vmatprep.subr.mxu0 0.0
        %7524 = vmatpush1.msra.mxu0 0.0
        %7525 = vmatprep.subr.mxu0 0.0
        %7526 = vmatpush1.msra.mxu0 0.0
        %7527 = vmatprep.subr.mxu0 0.0
        %7528 = vmatpush1.msra.mxu0 0.0
        %7529 = vmatprep.subr.mxu0 0.0
        %7530 = vmatpush1.msra.mxu0 0.0
        %7531 = vmatprep.subr.mxu0 0.0
        %7532 = vmatpush1.msra.mxu0 0.0
        %7533 = vmatprep.subr.mxu0 0.0
        %7534 = vmatpush1.msra.mxu0 0.0
        %7535 = vmatprep.subr.mxu0 0.0
        %7536 = vmatpush1.msra.mxu0 0.0
        %7537 = vmatprep.subr.mxu0 0.0
        %7538 = vmatpush1.msra.mxu0 0.0
        %7539 = vmatprep.subr.mxu0 0.0
        %7540 = vmatpush1.msra.mxu0 0.0
        %7541 = vmatprep.subr.mxu0 0.0
        %7542 = vmatpush1.msra.mxu0 0.0
        %7543 = vmatprep.subr.mxu0 0.0
        %7544 = vmatpush1.msra.mxu0 0.0
        %7545 = vmatprep.subr.mxu0 0.0
        %7546 = vmatpush1.msra.mxu0 0.0
        %7547 = vmatprep.subr.mxu0 0.0
        %7548 = vmatpush1.msra.mxu0 0.0
        %7549 = vmatprep.subr.mxu0 0.0
        %7550 = vmatpush1.msra.mxu0 0.0
        %7551 = vmatprep.subr.mxu0 0.0
        %7552 = vmatpush1.msra.mxu0 0.0
        %7553 = vmatprep.subr.mxu0 0.0
        %7554 = vmatpush1.msra.mxu0 0.0
        %7555 = vmatprep.subr.mxu0 0.0
        %7556 = vmatpush1.msra.mxu0 0.0
        %7557 = vmatprep.subr.mxu0 0.0
        %7558 = vmatpush1.msra.mxu0 0.0
        %7559 = vmatprep.subr.mxu0 0.0
        %7560 = vmatpush1.msra.mxu0 0.0
        %7561 = vmatprep.subr.mxu0 0.0
        %7562 = vmatpush1.msra.mxu0 0.0
        %7563 = vmatprep.subr.mxu0 0.0
        %7564 = vmatpush1.msra.mxu0 0.0
        %7565 = vmatprep.subr.mxu0 0.0
        %7566 = vmatpush1.msra.mxu0 0.0
        %7567 = vmatprep.subr.mxu0 0.0
        %7568 = vmatpush1.msra.mxu0 0.0
        %7569 = vmatprep.subr.mxu0 0.0
        %7570 = vmatpush1.msra.mxu0 0.0
        %7571 = vmatprep.subr.mxu0 0.0
        %7572 = vmatpush1.msra.mxu0 0.0
        %7573 = vmatprep.subr.mxu0 0.0
        %7574 = vmatpush1.msra.mxu0 0.0
        %7575 = vmatprep.subr.mxu0 0.0
        %7576 = vmatpush1.msra.mxu0 0.0
        %7577 = vmatprep.subr.mxu0 0.0
        %7578 = vmatpush1.msra.mxu0 0.0
        %7579 = vmatprep.subr.mxu0 0.0
        %7580 = vmatpush1.msra.mxu0 0.0
        %7581 = vmatprep.mubr.f32.mxu0 0.0
        %7582 = vmatmul.mubr.f32.gmra.mrb[0].mxu0 %v7343
        %v7583 = vpop.f32.mrb[0].mxu0
        %v7584 = vadd.f32 0.0, %v7583
        %v7585 = vpop.f32.mrb[0].mxu0
        %7586 = vmatprep.mubr.f32.mxu0 0.0
        %7587 = vmatmul.mubr.f32.gmra.mrb[0].mxu0 %v7346
        %v7588 = vpop.f32.mrb[0].mxu0
        %v7589 = vadd.f32 0.0, %v7588
        %v7590 = vpop.f32.mrb[0].mxu0
        %7591 = vdwg.mxu0
        %7592 = vmatprep.subr.mxu0 0.0
        %7593 = vmatpush1.msra.mxu0 %v7301
        %7594 = vmatprep.subr.mxu0 0.0
        %7595 = vmatpush1.msra.mxu0 %v7302
        %7596 = vmatprep.subr.mxu0 0.0
        %7597 = vmatpush1.msra.mxu0 %v7303
        %7598 = vmatprep.subr.mxu0 0.0
        %7599 = vmatpush1.msra.mxu0 %v7304
        %7600 = vmatprep.subr.mxu0 0.0
        %7601 = vmatpush1.msra.mxu0 %v7305
        %7602 = vmatprep.subr.mxu0 0.0
        %7603 = vmatpush1.msra.mxu0 %v7306
        %7604 = vmatprep.subr.mxu0 0.0
        %7605 = vmatpush1.msra.mxu0 %v7307
        %7606 = vmatprep.subr.mxu0 0.0
        %7607 = vmatpush1.msra.mxu0 %v7308
        %7608 = vmatprep.subr.mxu0 0.0
        %7609 = vmatpush1.msra.mxu0 %v7309
        %7610 = vmatprep.subr.mxu0 0.0
        %7611 = vmatpush1.msra.mxu0 %v7310
        %7612 = vmatprep.subr.mxu0 0.0
        %7613 = vmatpush1.msra.mxu0 %v7311
        %7614 = vmatprep.subr.mxu0 0.0
        %7615 = vmatpush1.msra.mxu0 %v7312
        %7616 = vmatprep.subr.mxu0 0.0
        %7617 = vmatpush1.msra.mxu0 %v7313
        %7618 = vmatprep.subr.mxu0 0.0
        %7619 = vmatpush1.msra.mxu0 %v7314
        %7620 = vmatprep.subr.mxu0 0.0
        %7621 = vmatpush1.msra.mxu0 %v7315
        %7622 = vmatprep.subr.mxu0 0.0
        %7623 = vmatpush1.msra.mxu0 %v7316
        %7624 = vmatprep.subr.mxu0 0.0
        %7625 = vmatpush1.msra.mxu0 0.0
        %7626 = vmatprep.subr.mxu0 0.0
        %7627 = vmatpush1.msra.mxu0 0.0
        %7628 = vmatprep.subr.mxu0 0.0
        %7629 = vmatpush1.msra.mxu0 0.0
        %7630 = vmatprep.subr.mxu0 0.0
        %7631 = vmatpush1.msra.mxu0 0.0
        %7632 = vmatprep.subr.mxu0 0.0
        %7633 = vmatpush1.msra.mxu0 0.0
        %7634 = vmatprep.subr.mxu0 0.0
        %7635 = vmatpush1.msra.mxu0 0.0
        %7636 = vmatprep.subr.mxu0 0.0
        %7637 = vmatpush1.msra.mxu0 0.0
        %7638 = vmatprep.subr.mxu0 0.0
        %7639 = vmatpush1.msra.mxu0 0.0
        %7640 = vmatprep.subr.mxu0 0.0
        %7641 = vmatpush1.msra.mxu0 0.0
        %7642 = vmatprep.subr.mxu0 0.0
        %7643 = vmatpush1.msra.mxu0 0.0
        %7644 = vmatprep.subr.mxu0 0.0
        %7645 = vmatpush1.msra.mxu0 0.0
        %7646 = vmatprep.subr.mxu0 0.0
        %7647 = vmatpush1.msra.mxu0 0.0
        %7648 = vmatprep.subr.mxu0 0.0
        %7649 = vmatpush1.msra.mxu0 0.0
        %7650 = vmatprep.subr.mxu0 0.0
        %7651 = vmatpush1.msra.mxu0 0.0
        %7652 = vmatprep.subr.mxu0 0.0
        %7653 = vmatpush1.msra.mxu0 0.0
        %7654 = vmatprep.subr.mxu0 0.0
        %7655 = vmatpush1.msra.mxu0 0.0
        %7656 = vmatprep.mubr.f32.mxu0 0.0
        %7657 = vmatmul.mubr.f32.gmra.mrb[0].mxu0 %v7430
        %v7658 = vpop.f32.mrb[0].mxu0
        %v7659 = vadd.f32 0.0, %v7658
        %v7660 = vpop.f32.mrb[0].mxu0
        %7661 = vmatprep.mubr.f32.mxu0 0.0
        %7662 = vmatmul.mubr.f32.gmra.mrb[0].mxu0 %v7436
        %v7663 = vpop.f32.mrb[0].mxu0
        %v7664 = vadd.f32 0.0, %v7663
        %v7665 = vpop.f32.mrb[0].mxu0
        %7666 = vdwg.mxu0
        %7667 = vmatprep.subr.mxu0 0.0
        %7668 = vmatpush1.msra.mxu0 %v7301
        %7669 = vmatprep.subr.mxu0 0.0
        %7670 = vmatpush1.msra.mxu0 %v7302
        %7671 = vmatprep.subr.mxu0 0.0
        %7672 = vmatpush1.msra.mxu0 %v7303
        %7673 = vmatprep.subr.mxu0 0.0
        %7674 = vmatpush1.msra.mxu0 %v7304
        %7675 = vmatprep.subr.mxu0 0.0
        %7676 = vmatpush1.msra.mxu0 %v7305
        %7677 = vmatprep.subr.mxu0 0.0
        %7678 = vmatpush1.msra.mxu0 %v7306
        %7679 = vmatprep.subr.mxu0 0.0
        %7680 = vmatpush1.msra.mxu0 %v7307
        %7681 = vmatprep.subr.mxu0 0.0
        %7682 = vmatpush1.msra.mxu0 %v7308
        %7683 = vmatprep.subr.mxu0 0.0
        %7684 = vmatpush1.msra.mxu0 %v7309
        %7685 = vmatprep.subr.mxu0 0.0
        %7686 = vmatpush1.msra.mxu0 %v7310
        %7687 = vmatprep.subr.mxu0 0.0
        %7688 = vmatpush1.msra.mxu0 %v7311
        %7689 = vmatprep.subr.mxu0 0.0
        %7690 = vmatpush1.msra.mxu0 %v7312
        %7691 = vmatprep.subr.mxu0 0.0
        %7692 = vmatpush1.msra.mxu0 %v7313
        %7693 = vmatprep.subr.mxu0 0.0
        %7694 = vmatpush1.msra.mxu0 %v7314
        %7695 = vmatprep.subr.mxu0 0.0
        %7696 = vmatpush1.msra.mxu0 %v7315
        %7697 = vmatprep.subr.mxu0 0.0
        %7698 = vmatpush1.msra.mxu0 %v7316
        %7699 = vmatprep.subr.mxu0 0.0
        %7700 = vmatpush1.msra.mxu0 0.0
        %7701 = vmatprep.subr.mxu0 0.0
        %7702 = vmatpush1.msra.mxu0 0.0
        %7703 = vmatprep.subr.mxu0 0.0
        %7704 = vmatpush1.msra.mxu0 0.0
        %7705 = vmatprep.subr.mxu0 0.0
        %7706 = vmatpush1.msra.mxu0 0.0
        %7707 = vmatprep.subr.mxu0 0.0
        %7708 = vmatpush1.msra.mxu0 0.0
        %7709 = vmatprep.subr.mxu0 0.0
        %7710 = vmatpush1.msra.mxu0 0.0
        %7711 = vmatprep.subr.mxu0 0.0
        %7712 = vmatpush1.msra.mxu0 0.0
        %7713 = vmatprep.subr.mxu0 0.0
        %7714 = vmatpush1.msra.mxu0 0.0
        %7715 = vmatprep.subr.mxu0 0.0
        %7716 = vmatpush1.msra.mxu0 0.0
        %7717 = vmatprep.subr.mxu0 0.0
        %7718 = vmatpush1.msra.mxu0 0.0
        %7719 = vmatprep.subr.mxu0 0.0
        %7720 = vmatpush1.msra.mxu0 0.0
        %7721 = vmatprep.subr.mxu0 0.0
        %7722 = vmatpush1.msra.mxu0 0.0
        %7723 = vmatprep.subr.mxu0 0.0
        %7724 = vmatpush1.msra.mxu0 0.0
        %7725 = vmatprep.subr.mxu0 0.0
        %7726 = vmatpush1.msra.mxu0 0.0
        %7727 = vmatprep.subr.mxu0 0.0
        %7728 = vmatpush1.msra.mxu0 0.0
        %7729 = vmatprep.subr.mxu0 0.0
        %7730 = vmatpush1.msra.mxu0 0.0
        %7731 = vmatprep.mubr.f32.mxu0 0.0
        %7732 = vmatmul.mubr.f32.gmra.mrb[0].mxu0 %v7432
        %v7733 = vpop.f32.mrb[0].mxu0
        %v7734 = vadd.f32 0.0, %v7733
        %v7735 = vpop.f32.mrb[0].mxu0
        %7736 = vmatprep.mubr.f32.mxu0 0.0
        %7737 = vmatmul.mubr.f32.gmra.mrb[0].mxu0 %v7438
        %v7738 = vpop.f32.mrb[0].mxu0
        %v7739 = vadd.f32 0.0, %v7738
        %v7740 = vpop.f32.mrb[0].mxu0
        %7741 = vdwg.mxu0
        %7742 = vmatprep.subr.mxu0 0.0
        %7743 = vmatpush1.msra.mxu0 %v7301
        %7744 = vmatprep.subr.mxu0 0.0
        %7745 = vmatpush1.msra.mxu0 %v7302
        %7746 = vmatprep.subr.mxu0 0.0
        %7747 = vmatpush1.msra.mxu0 %v7303
        %7748 = vmatprep.subr.mxu0 0.0
        %7749 = vmatpush1.msra.mxu0 %v7304
        %7750 = vmatprep.subr.mxu0 0.0
        %7751 = vmatpush1.msra.mxu0 %v7305
        %7752 = vmatprep.subr.mxu0 0.0
        %7753 = vmatpush1.msra.mxu0 %v7306
        %7754 = vmatprep.subr.mxu0 0.0
        %7755 = vmatpush1.msra.mxu0 %v7307
        %7756 = vmatprep.subr.mxu0 0.0
        %7757 = vmatpush1.msra.mxu0 %v7308
        %7758 = vmatprep.subr.mxu0 0.0
        %7759 = vmatpush1.msra.mxu0 %v7309
        %7760 = vmatprep.subr.mxu0 0.0
        %7761 = vmatpush1.msra.mxu0 %v7310
        %7762 = vmatprep.subr.mxu0 0.0
        %7763 = vmatpush1.msra.mxu0 %v7311
        %7764 = vmatprep.subr.mxu0 0.0
        %7765 = vmatpush1.msra.mxu0 %v7312
        %7766 = vmatprep.subr.mxu0 0.0
        %7767 = vmatpush1.msra.mxu0 %v7313
        %7768 = vmatprep.subr.mxu0 0.0
        %7769 = vmatpush1.msra.mxu0 %v7314
        %7770 = vmatprep.subr.mxu0 0.0
        %7771 = vmatpush1.msra.mxu0 %v7315
        %7772 = vmatprep.subr.mxu0 0.0
        %7773 = vmatpush1.msra.mxu0 %v7316
        %7774 = vmatprep.subr.mxu0 0.0
        %7775 = vmatpush1.msra.mxu0 0.0
        %7776 = vmatprep.subr.mxu0 0.0
        %7777 = vmatpush1.msra.mxu0 0.0
        %7778 = vmatprep.subr.mxu0 0.0
        %7779 = vmatpush1.msra.mxu0 0.0
        %7780 = vmatprep.subr.mxu0 0.0
        %7781 = vmatpush1.msra.mxu0 0.0
        %7782 = vmatprep.subr.mxu0 0.0
        %7783 = vmatpush1.msra.mxu0 0.0
        %7784 = vmatprep.subr.mxu0 0.0
        %7785 = vmatpush1.msra.mxu0 0.0
        %7786 = vmatprep.subr.mxu0 0.0
        %7787 = vmatpush1.msra.mxu0 0.0
        %7788 = vmatprep.subr.mxu0 0.0
        %7789 = vmatpush1.msra.mxu0 0.0
        %7790 = vmatprep.subr.mxu0 0.0
        %7791 = vmatpush1.msra.mxu0 0.0
        %7792 = vmatprep.subr.mxu0 0.0
        %7793 = vmatpush1.msra.mxu0 0.0
        %7794 = vmatprep.subr.mxu0 0.0
        %7795 = vmatpush1.msra.mxu0 0.0
        %7796 = vmatprep.subr.mxu0 0.0
        %7797 = vmatpush1.msra.mxu0 0.0
        %7798 = vmatprep.subr.mxu0 0.0
        %7799 = vmatpush1.msra.mxu0 0.0
        %7800 = vmatprep.subr.mxu0 0.0
        %7801 = vmatpush1.msra.mxu0 0.0
        %7802 = vmatprep.subr.mxu0 0.0
        %7803 = vmatpush1.msra.mxu0 0.0
        %7804 = vmatprep.subr.mxu0 0.0
        %7805 = vmatpush1.msra.mxu0 0.0
        %7806 = vmatprep.mubr.f32.mxu0 0.0
        %7807 = vmatmul.mubr.f32.gmra.mrb[0].mxu0 %v7507
        %v7808 = vpop.f32.mrb[0].mxu0
        %v7809 = vadd.f32 0.0, %v7808
        %v7810 = vpop.f32.mrb[0].mxu0
        %7811 = vmatprep.mubr.f32.mxu0 0.0
        %7812 = vmatmul.mubr.f32.gmra.mrb[0].mxu0 %v7513
        %v7813 = vpop.f32.mrb[0].mxu0
        %v7814 = vadd.f32 0.0, %v7813
        %v7815 = vpop.f32.mrb[0].mxu0
        %7816 = vdwg.mxu0
        %7817 = vmatprep.subr.mxu0 0.0
        %7818 = vmatpush1.msra.mxu0 %v7301
        %7819 = vmatprep.subr.mxu0 0.0
        %7820 = vmatpush1.msra.mxu0 %v7302
        %7821 = vmatprep.subr.mxu0 0.0
        %7822 = vmatpush1.msra.mxu0 %v7303
        %7823 = vmatprep.subr.mxu0 0.0
        %7824 = vmatpush1.msra.mxu0 %v7304
        %7825 = vmatprep.subr.mxu0 0.0
        %7826 = vmatpush1.msra.mxu0 %v7305
        %7827 = vmatprep.subr.mxu0 0.0
        %7828 = vmatpush1.msra.mxu0 %v7306
        %7829 = vmatprep.subr.mxu0 0.0
        %7830 = vmatpush1.msra.mxu0 %v7307
        %7831 = vmatprep.subr.mxu0 0.0
        %7832 = vmatpush1.msra.mxu0 %v7308
        %7833 = vmatprep.subr.mxu0 0.0
        %7834 = vmatpush1.msra.mxu0 %v7309
        %7835 = vmatprep.subr.mxu0 0.0
        %7836 = vmatpush1.msra.mxu0 %v7310
        %7837 = vmatprep.subr.mxu0 0.0
        %7838 = vmatpush1.msra.mxu0 %v7311
        %7839 = vmatprep.subr.mxu0 0.0
        %7840 = vmatpush1.msra.mxu0 %v7312
        %7841 = vmatprep.subr.mxu0 0.0
        %7842 = vmatpush1.msra.mxu0 %v7313
        %7843 = vmatprep.subr.mxu0 0.0
        %7844 = vmatpush1.msra.mxu0 %v7314
        %7845 = vmatprep.subr.mxu0 0.0
        %7846 = vmatpush1.msra.mxu0 %v7315
        %7847 = vmatprep.subr.mxu0 0.0
        %7848 = vmatpush1.msra.mxu0 %v7316
        %7849 = vmatprep.subr.mxu0 0.0
        %7850 = vmatpush1.msra.mxu0 0.0
        %7851 = vmatprep.subr.mxu0 0.0
        %7852 = vmatpush1.msra.mxu0 0.0
        %7853 = vmatprep.subr.mxu0 0.0
        %7854 = vmatpush1.msra.mxu0 0.0
        %7855 = vmatprep.subr.mxu0 0.0
        %7856 = vmatpush1.msra.mxu0 0.0
        %7857 = vmatprep.subr.mxu0 0.0
        %7858 = vmatpush1.msra.mxu0 0.0
        %7859 = vmatprep.subr.mxu0 0.0
        %7860 = vmatpush1.msra.mxu0 0.0
        %7861 = vmatprep.subr.mxu0 0.0
        %7862 = vmatpush1.msra.mxu0 0.0
        %7863 = vmatprep.subr.mxu0 0.0
        %7864 = vmatpush1.msra.mxu0 0.0
        %7865 = vmatprep.subr.mxu0 0.0
        %7866 = vmatpush1.msra.mxu0 0.0
        %7867 = vmatprep.subr.mxu0 0.0
        %7868 = vmatpush1.msra.mxu0 0.0
        %7869 = vmatprep.subr.mxu0 0.0
        %7870 = vmatpush1.msra.mxu0 0.0
        %7871 = vmatprep.subr.mxu0 0.0
        %7872 = vmatpush1.msra.mxu0 0.0
        %7873 = vmatprep.subr.mxu0 0.0
        %7874 = vmatpush1.msra.mxu0 0.0
        %7875 = vmatprep.subr.mxu0 0.0
        %7876 = vmatpush1.msra.mxu0 0.0
        %7877 = vmatprep.subr.mxu0 0.0
        %7878 = vmatpush1.msra.mxu0 0.0
        %7879 = vmatprep.subr.mxu0 0.0
        %7880 = vmatpush1.msra.mxu0 0.0
        %7881 = vmatprep.mubr.f32.mxu0 0.0
        %7882 = vmatmul.mubr.f32.gmra.mrb[0].mxu0 %v7509
        %v7883 = vpop.f32.mrb[0].mxu0
        %v7884 = vadd.f32 0.0, %v7883
        %v7885 = vpop.f32.mrb[0].mxu0
        %7886 = vmatprep.mubr.f32.mxu0 0.0
        %7887 = vmatmul.mubr.f32.gmra.mrb[0].mxu0 %v7515
        %v7888 = vpop.f32.mrb[0].mxu0
        %v7889 = vadd.f32 0.0, %v7888
        %v7890 = vpop.f32.mrb[0].mxu0
        %7891 = vdwg.mxu0
        %7892 = vmatprep.subr.mxu0 0.0
        %7893 = vmatpush1.msra.mxu0 %v7301
        %7894 = vmatprep.subr.mxu0 0.0
        %7895 = vmatpush1.msra.mxu0 %v7302
        %7896 = vmatprep.subr.mxu0 0.0
        %7897 = vmatpush1.msra.mxu0 %v7303
        %7898 = vmatprep.subr.mxu0 0.0
        %7899 = vmatpush1.msra.mxu0 %v7304
        %7900 = vmatprep.subr.mxu0 0.0
        %7901 = vmatpush1.msra.mxu0 %v7305
        %7902 = vmatprep.subr.mxu0 0.0
        %7903 = vmatpush1.msra.mxu0 %v7306
        %7904 = vmatprep.subr.mxu0 0.0
        %7905 = vmatpush1.msra.mxu0 %v7307
        %7906 = vmatprep.subr.mxu0 0.0
        %7907 = vmatpush1.msra.mxu0 %v7308
        %7908 = vmatprep.subr.mxu0 0.0
        %7909 = vmatpush1.msra.mxu0 %v7309
        %7910 = vmatprep.subr.mxu0 0.0
        %7911 = vmatpush1.msra.mxu0 %v7310
        %7912 = vmatprep.subr.mxu0 0.0
        %7913 = vmatpush1.msra.mxu0 %v7311
        %7914 = vmatprep.subr.mxu0 0.0
        %7915 = vmatpush1.msra.mxu0 %v7312
        %7916 = vmatprep.subr.mxu0 0.0
        %7917 = vmatpush1.msra.mxu0 %v7313
        %7918 = vmatprep.subr.mxu0 0.0
        %7919 = vmatpush1.msra.mxu0 %v7314
        %7920 = vmatprep.subr.mxu0 0.0
        %7921 = vmatpush1.msra.mxu0 %v7315
        %7922 = vmatprep.subr.mxu0 0.0
        %7923 = vmatpush1.msra.mxu0 %v7316
        %7924 = vmatprep.subr.mxu0 0.0
        %7925 = vmatpush1.msra.mxu0 0.0
        %7926 = vmatprep.subr.mxu0 0.0
        %7927 = vmatpush1.msra.mxu0 0.0
        %7928 = vmatprep.subr.mxu0 0.0
        %7929 = vmatpush1.msra.mxu0 0.0
        %7930 = vmatprep.subr.mxu0 0.0
        %7931 = vmatpush1.msra.mxu0 0.0
        %7932 = vmatprep.subr.mxu0 0.0
        %7933 = vmatpush1.msra.mxu0 0.0
        %7934 = vmatprep.subr.mxu0 0.0
        %7935 = vmatpush1.msra.mxu0 0.0
        %7936 = vmatprep.subr.mxu0 0.0
        %7937 = vmatpush1.msra.mxu0 0.0
        %7938 = vmatprep.subr.mxu0 0.0
        %7939 = vmatpush1.msra.mxu0 0.0
        %7940 = vmatprep.subr.mxu0 0.0
        %7941 = vmatpush1.msra.mxu0 0.0
        %7942 = vmatprep.subr.mxu0 0.0
        %7943 = vmatpush1.msra.mxu0 0.0
        %7944 = vmatprep.subr.mxu0 0.0
        %7945 = vmatpush1.msra.mxu0 0.0
        %7946 = vmatprep.subr.mxu0 0.0
        %7947 = vmatpush1.msra.mxu0 0.0
        %7948 = vmatprep.subr.mxu0 0.0
        %7949 = vmatpush1.msra.mxu0 0.0
        %7950 = vmatprep.subr.mxu0 0.0
        %7951 = vmatpush1.msra.mxu0 0.0
        %7952 = vmatprep.subr.mxu0 0.0
        %7953 = vmatpush1.msra.mxu0 0.0
        %7954 = vmatprep.subr.mxu0 0.0
        %7955 = vmatpush1.msra.mxu0 0.0
        %7956 = vmatprep.mubr.f32.mxu0 0.0
        %7957 = vmatmul.mubr.f32.gmra.mrb[0].mxu0 %v7584
        %v7958 = vpop.f32.mrb[0].mxu0
        %v7959 = vadd.f32 0.0, %v7958
        %v7960 = vpop.f32.mrb[0].mxu0
        %7961 = vmatprep.mubr.f32.mxu0 0.0
        %7962 = vmatmul.mubr.f32.gmra.mrb[0].mxu0 %v7589
        %v7963 = vpop.f32.mrb[0].mxu0
        %v7964 = vadd.f32 0.0, %v7963
        %v7965 = vpop.f32.mrb[0].mxu0
        %7966 = vdwg.mxu0
        %v7967 = vmul.f32 %v7659, %v7659
        %v7968 = vmul.f32 %v7664, %v7664
        %v7969 = vmul.f32 %v7734, %v7734
        %v7970 = vmul.f32 %v7739, %v7739
        %v7971 = vmul.f32 %v7659, %v7734
        %v7972 = vmul.f32 %v7664, %v7739
        %v7973 = vsub.f32 %v7809, %v7967
        %v7974 = vsub.f32 %v7814, %v7968
        %v7975 = vsub.f32 %v7884, %v7969
        %v7976 = vsub.f32 %v7889, %v7970
        %v7977 = vsub.f32 %v7959, %v7971
        %v7978 = vsub.f32 %v7964, %v7972
        %v7979 = vmul.f32 %v7977, 2.0
        %v7980 = vmul.f32 %v7978, 2.0
        %v7981 = vadd.f32 %v7979, 0.0009
        %v7982 = vadd.f32 %v7980, 0.0009
        %v7983 = vadd.f32 %v7973, %v7975
        %v7984 = vadd.f32 %v7974, %v7976
        %v7985 = vadd.f32 %v7983, 0.0009
        %v7986 = vadd.f32 %v7984, 0.0009
        %v7987 = vrcp.pop %v7985
        %v7988 = vrcp.pop %v7986
        %v7989 = vmul.f32 %v7981, %v7987
        %v7990 = vmul.f32 %v7982, %v7988
        %vm7991 = vcmask 97280
        %v7992 = vsel %vm7991, %v7989, 0.0
        %vm7993 = vcmask 93184
        %v7994 = vsel %vm7993, %v7990, 0.0
        %v7995 = vadd.f32 %v7992, %v7994
        %7996 = vadd.xlane.f32.xlu0 %v7995
        %v7997 = vpop.xlane.xlu0 %7996
        %v7998 = vrot.slane %v7997, 4
        %v7999 = vadd.f32 %v7997, %v7998
        %v8000 = vrot.slane %v7999, 2
        %v8001 = vadd.f32 %v7999, %v8000
        %v8002 = vrot.slane %v8001, 1
        %v8003 = vadd.f32 %v8001, %v8002
        %s8004 = vtos %v8003
        %s8005 = smul.f32 %s8004, 0.0069444445
        %v8006 = vld [vmem:[#allocation24] sm:$0xff]
        %v8007 = vld [vmem:[#allocation24 + $0x8] sm:$0x7]
        %v8008 = vld [vmem:[#allocation25] sm:$0xff]
        %v8009 = vld [vmem:[#allocation25 + $0x8] sm:$0xff]
        %v8010 = vld [vmem:[#allocation25 + $0x10] sm:$0xff]
        %v8011 = vld [vmem:[#allocation25 + $0x18] sm:$0xff]
        %v8012 = vld [vmem:[#allocation25 + $0x20] sm:$0xff]
        %v8013 = vld [vmem:[#allocation25 + $0x28] sm:$0xff]
        %v8014 = vld [vmem:[#allocation25 + $0x30] sm:$0xff]
        %v8015 = vld [vmem:[#allocation25 + $0x38] sm:$0xff]
        %v8016 = vld [vmem:[#allocation25 + $0x40] sm:$0xff]
        %v8017 = vld [vmem:[#allocation25 + $0x48] sm:$0xff]
        %v8018 = vld [vmem:[#allocation25 + $0x50] sm:$0xff]
        %v8019 = vld [vmem:[#allocation25 + $0x58] sm:$0xff]
        %v8020 = vld [vmem:[#allocation25 + $0x60] sm:$0xff]
        %v8021 = vld [vmem:[#allocation25 + $0x68] sm:$0xff]
        %v8022 = vld [vmem:[#allocation25 + $0x70] sm:$0xff]
        %v8023 = vld [vmem:[#allocation25 + $0x78] sm:$0xff]
        %v8025 = vsel %vm7326, %v8006, 0
        %v8028 = vsel %vm7326, %v8007, 0
        %8030 = vmatprep.subr.mxu0 %v7330
        %8031 = vmatpush1.msra.mxu0 %v7327
        %8032 = vmatprep.subr.mxu0 %v7331
        %8033 = vmatpush1.msra.mxu0 %v7328
        %8034 = vmatprep.subr.mxu0 %v7352
        %8035 = vmatpush1.msra.mxu0 %v7349
        %8036 = vmatprep.subr.mxu0 0.0
        %8037 = vmatpush1.msra.mxu0 0.0
        %8038 = vmatprep.subr.mxu0 0.0
        %8039 = vmatpush1.msra.mxu0 0.0
        %8040 = vmatprep.subr.mxu0 0.0
        %8041 = vmatpush1.msra.mxu0 0.0
        %8042 = vmatprep.subr.mxu0 0.0
        %8043 = vmatpush1.msra.mxu0 0.0
        %8044 = vmatprep.subr.mxu0 0.0
        %8045 = vmatpush1.msra.mxu0 0.0
        %8046 = vmatprep.subr.mxu0 0.0
        %8047 = vmatpush1.msra.mxu0 0.0
        %8048 = vmatprep.subr.mxu0 0.0
        %8049 = vmatpush1.msra.mxu0 0.0
        %8050 = vmatprep.subr.mxu0 0.0
        %8051 = vmatpush1.msra.mxu0 0.0
        %8052 = vmatprep.subr.mxu0 0.0
        %8053 = vmatpush1.msra.mxu0 0.0
        %8054 = vmatprep.subr.mxu0 0.0
        %8055 = vmatpush1.msra.mxu0 0.0
        %8056 = vmatprep.subr.mxu0 0.0
        %8057 = vmatpush1.msra.mxu0 0.0
        %8058 = vmatprep.subr.mxu0 0.0
        %8059 = vmatpush1.msra.mxu0 0.0
        %8060 = vmatprep.subr.mxu0 0.0
        %8061 = vmatpush1.msra.mxu0 0.0
        %8062 = vmatprep.subr.mxu0 0.0
        %8063 = vmatpush1.msra.mxu0 0.0
        %8064 = vmatprep.subr.mxu0 0.0
        %8065 = vmatpush1.msra.mxu0 0.0
        %8066 = vmatprep.subr.mxu0 0.0
        %8067 = vmatpush1.msra.mxu0 0.0
        %8068 = vmatprep.subr.mxu0 0.0
        %8069 = vmatpush1.msra.mxu0 0.0
        %8070 = vmatprep.subr.mxu0 0.0
        %8071 = vmatpush1.msra.mxu0 0.0
        %8072 = vmatprep.subr.mxu0 0.0
        %8073 = vmatpush1.msra.mxu0 0.0
        %8074 = vmatprep.subr.mxu0 0.0
        %8075 = vmatpush1.msra.mxu0 0.0
        %8076 = vmatprep.subr.mxu0 0.0
        %8077 = vmatpush1.msra.mxu0 0.0
        %8078 = vmatprep.subr.mxu0 0.0
        %8079 = vmatpush1.msra.mxu0 0.0
        %8080 = vmatprep.subr.mxu0 0.0
        %8081 = vmatpush1.msra.mxu0 0.0
        %8082 = vmatprep.subr.mxu0 0.0
        %8083 = vmatpush1.msra.mxu0 0.0
        %8084 = vmatprep.subr.mxu0 0.0
        %8085 = vmatpush1.msra.mxu0 0.0
        %8086 = vmatprep.subr.mxu0 0.0
        %8087 = vmatpush1.msra.mxu0 0.0
        %8088 = vmatprep.subr.mxu0 0.0
        %8089 = vmatpush1.msra.mxu0 0.0
        %8090 = vmatprep.subr.mxu0 0.0
        %8091 = vmatpush1.msra.mxu0 0.0
        %8092 = vmatprep.subr.mxu0 0.0
        %8093 = vmatpush1.msra.mxu0 0.0
        %8094 = vmatprep.mubr.f32.mxu0 0.0
        %8095 = vmatmul.mubr.f32.gmra.mrb[0].mxu0 %v8025
        %v8096 = vpop.f32.mrb[0].mxu0
        %v8097 = vadd.f32 0.0, %v8096
        %v8098 = vpop.f32.mrb[0].mxu0
        %v8099 = vadd.f32 0.0, %v8098
        %8100 = vmatprep.mubr.f32.mxu0 0.0
        %8101 = vmatmul.mubr.f32.gmra.mrb[0].mxu0 %v8028
        %v8102 = vpop.f32.mrb[0].mxu0
        %v8103 = vadd.f32 0.0, %v8102
        %v8104 = vpop.f32.mrb[0].mxu0
        %v8105 = vadd.f32 0.0, %v8104
        %8106 = vdwg.mxu0
        %8107 = vmatprep.subr.mxu0 0.0
        %8108 = vmatpush1.msra.mxu0 %v8008
        %8109 = vmatprep.subr.mxu0 0.0
        %8110 = vmatpush1.msra.mxu0 %v8009
        %8111 = vmatprep.subr.mxu0 0.0
        %8112 = vmatpush1.msra.mxu0 %v8010
        %8113 = vmatprep.subr.mxu0 0.0
        %8114 = vmatpush1.msra.mxu0 %v8011
        %8115 = vmatprep.subr.mxu0 0.0
        %8116 = vmatpush1.msra.mxu0 %v8012
        %8117 = vmatprep.subr.mxu0 0.0
        %8118 = vmatpush1.msra.mxu0 %v8013
        %8119 = vmatprep.subr.mxu0 0.0
        %8120 = vmatpush1.msra.mxu0 %v8014
        %8121 = vmatprep.subr.mxu0 0.0
        %8122 = vmatpush1.msra.mxu0 %v8015
        %8123 = vmatprep.subr.mxu0 0.0
        %8124 = vmatpush1.msra.mxu0 %v8016
        %8125 = vmatprep.subr.mxu0 0.0
        %8126 = vmatpush1.msra.mxu0 %v8017
        %8127 = vmatprep.subr.mxu0 0.0
        %8128 = vmatpush1.msra.mxu0 %v8018
        %8129 = vmatprep.subr.mxu0 0.0
        %8130 = vmatpush1.msra.mxu0 %v8019
        %8131 = vmatprep.subr.mxu0 0.0
        %8132 = vmatpush1.msra.mxu0 %v8020
        %8133 = vmatprep.subr.mxu0 0.0
        %8134 = vmatpush1.msra.mxu0 %v8021
        %8135 = vmatprep.subr.mxu0 0.0
        %8136 = vmatpush1.msra.mxu0 %v8022
        %8137 = vmatprep.subr.mxu0 0.0
        %8138 = vmatpush1.msra.mxu0 %v8023
        %8139 = vmatprep.subr.mxu0 0.0
        %8140 = vmatpush1.msra.mxu0 0.0
        %8141 = vmatprep.subr.mxu0 0.0
        %8142 = vmatpush1.msra.mxu0 0.0
        %8143 = vmatprep.subr.mxu0 0.0
        %8144 = vmatpush1.msra.mxu0 0.0
        %8145 = vmatprep.subr.mxu0 0.0
        %8146 = vmatpush1.msra.mxu0 0.0
        %8147 = vmatprep.subr.mxu0 0.0
        %8148 = vmatpush1.msra.mxu0 0.0
        %8149 = vmatprep.subr.mxu0 0.0
        %8150 = vmatpush1.msra.mxu0 0.0
        %8151 = vmatprep.subr.mxu0 0.0
        %8152 = vmatpush1.msra.mxu0 0.0
        %8153 = vmatprep.subr.mxu0 0.0
        %8154 = vmatpush1.msra.mxu0 0.0
        %8155 = vmatprep.subr.mxu0 0.0
        %8156 = vmatpush1.msra.mxu0 0.0
        %8157 = vmatprep.subr.mxu0 0.0
        %8158 = vmatpush1.msra.mxu0 0.0
        %8159 = vmatprep.subr.mxu0 0.0
        %8160 = vmatpush1.msra.mxu0 0.0
        %8161 = vmatprep.subr.mxu0 0.0
        %8162 = vmatpush1.msra.mxu0 0.0
        %8163 = vmatprep.subr.mxu0 0.0
        %8164 = vmatpush1.msra.mxu0 0.0
        %8165 = vmatprep.subr.mxu0 0.0
        %8166 = vmatpush1.msra.mxu0 0.0
        %8167 = vmatprep.subr.mxu0 0.0
        %8168 = vmatpush1.msra.mxu0 0.0
        %8169 = vmatprep.subr.mxu0 0.0
        %8170 = vmatpush1.msra.mxu0 0.0
        %8171 = vmatprep.mubr.f32.mxu0 0.0
        %8172 = vmatmul.mubr.f32.gmra.mrb[0].mxu0 %v8097
        %v8173 = vpop.f32.mrb[0].mxu0
        %v8174 = vadd.f32 0.0, %v8173
        %v8175 = vpop.f32.mrb[0].mxu0
        %8176 = vmatprep.mubr.f32.mxu0 0.0
        %8177 = vmatmul.mubr.f32.gmra.mrb[0].mxu0 %v8103
        %v8178 = vpop.f32.mrb[0].mxu0
        %v8179 = vadd.f32 0.0, %v8178
        %v8180 = vpop.f32.mrb[0].mxu0
        %8181 = vdwg.mxu0
        %8182 = vmatprep.subr.mxu0 0.0
        %8183 = vmatpush1.msra.mxu0 %v8008
        %8184 = vmatprep.subr.mxu0 0.0
        %8185 = vmatpush1.msra.mxu0 %v8009
        %8186 = vmatprep.subr.mxu0 0.0
        %8187 = vmatpush1.msra.mxu0 %v8010
        %8188 = vmatprep.subr.mxu0 0.0
        %8189 = vmatpush1.msra.mxu0 %v8011
        %8190 = vmatprep.subr.mxu0 0.0
        %8191 = vmatpush1.msra.mxu0 %v8012
        %8192 = vmatprep.subr.mxu0 0.0
        %8193 = vmatpush1.msra.mxu0 %v8013
        %8194 = vmatprep.subr.mxu0 0.0
        %8195 = vmatpush1.msra.mxu0 %v8014
        %8196 = vmatprep.subr.mxu0 0.0
        %8197 = vmatpush1.msra.mxu0 %v8015
        %8198 = vmatprep.subr.mxu0 0.0
        %8199 = vmatpush1.msra.mxu0 %v8016
        %8200 = vmatprep.subr.mxu0 0.0
        %8201 = vmatpush1.msra.mxu0 %v8017
        %8202 = vmatprep.subr.mxu0 0.0
        %8203 = vmatpush1.msra.mxu0 %v8018
        %8204 = vmatprep.subr.mxu0 0.0
        %8205 = vmatpush1.msra.mxu0 %v8019
        %8206 = vmatprep.subr.mxu0 0.0
        %8207 = vmatpush1.msra.mxu0 %v8020
        %8208 = vmatprep.subr.mxu0 0.0
        %8209 = vmatpush1.msra.mxu0 %v8021
        %8210 = vmatprep.subr.mxu0 0.0
        %8211 = vmatpush1.msra.mxu0 %v8022
        %8212 = vmatprep.subr.mxu0 0.0
        %8213 = vmatpush1.msra.mxu0 %v8023
        %8214 = vmatprep.subr.mxu0 0.0
        %8215 = vmatpush1.msra.mxu0 0.0
        %8216 = vmatprep.subr.mxu0 0.0
        %8217 = vmatpush1.msra.mxu0 0.0
        %8218 = vmatprep.subr.mxu0 0.0
        %8219 = vmatpush1.msra.mxu0 0.0
        %8220 = vmatprep.subr.mxu0 0.0
        %8221 = vmatpush1.msra.mxu0 0.0
        %8222 = vmatprep.subr.mxu0 0.0
        %8223 = vmatpush1.msra.mxu0 0.0
        %8224 = vmatprep.subr.mxu0 0.0
        %8225 = vmatpush1.msra.mxu0 0.0
        %8226 = vmatprep.subr.mxu0 0.0
        %8227 = vmatpush1.msra.mxu0 0.0
        %8228 = vmatprep.subr.mxu0 0.0
        %8229 = vmatpush1.msra.mxu0 0.0
        %8230 = vmatprep.subr.mxu0 0.0
        %8231 = vmatpush1.msra.mxu0 0.0
        %8232 = vmatprep.subr.mxu0 0.0
        %8233 = vmatpush1.msra.mxu0 0.0
        %8234 = vmatprep.subr.mxu0 0.0
        %8235 = vmatpush1.msra.mxu0 0.0
        %8236 = vmatprep.subr.mxu0 0.0
        %8237 = vmatpush1.msra.mxu0 0.0
        %8238 = vmatprep.subr.mxu0 0.0
        %8239 = vmatpush1.msra.mxu0 0.0
        %8240 = vmatprep.subr.mxu0 0.0
        %8241 = vmatpush1.msra.mxu0 0.0
        %8242 = vmatprep.subr.mxu0 0.0
        %8243 = vmatpush1.msra.mxu0 0.0
        %8244 = vmatprep.subr.mxu0 0.0
        %8245 = vmatpush1.msra.mxu0 0.0
        %8246 = vmatprep.mubr.f32.mxu0 0.0
        %8247 = vmatmul.mubr.f32.gmra.mrb[0].mxu0 %v8099
        %v8248 = vpop.f32.mrb[0].mxu0
        %v8249 = vadd.f32 0.0, %v8248
        %v8250 = vpop.f32.mrb[0].mxu0
        %8251 = vmatprep.mubr.f32.mxu0 0.0
        %8252 = vmatmul.mubr.f32.gmra.mrb[0].mxu0 %v8105
        %v8253 = vpop.f32.mrb[0].mxu0
        %v8254 = vadd.f32 0.0, %v8253
        %v8255 = vpop.f32.mrb[0].mxu0
        %8256 = vdwg.mxu0
        %v8257 = vld [vmem:[#allocation27] sm:$0x1]
        %v8258 = vld [vmem:[#allocation28] sm:$0xff]
        %v8259 = vld [vmem:[#allocation28 + $0x8] sm:$0xff]
        %v8260 = vld [vmem:[#allocation28 + $0x10] sm:$0xff]
        %v8261 = vld [vmem:[#allocation28 + $0x18] sm:$0xff]
        %v8262 = vld [vmem:[#allocation28 + $0x20] sm:$0xff]
        %v8263 = vld [vmem:[#allocation28 + $0x28] sm:$0xff]
        %v8264 = vld [vmem:[#allocation28 + $0x30] sm:$0xff]
        %v8265 = vld [vmem:[#allocation28 + $0x38] sm:$0xff]
        %v8266 = vld [vmem:[#allocation28 + $0x40] sm:$0xff]
        %v8267 = vld [vmem:[#allocation28 + $0x48] sm:$0xff]
        %v8268 = vld [vmem:[#allocation28 + $0x50] sm:$0xff]
        %v8269 = vld [vmem:[#allocation28 + $0x58] sm:$0xff]
        %v8270 = vld [vmem:[#allocation28 + $0x60] sm:$0xff]
        %v8271 = vld [vmem:[#allocation28 + $0x68] sm:$0xff]
        %v8272 = vld [vmem:[#allocation28 + $0x70] sm:$0xff]
        %v8273 = vld [vmem:[#allocation28 + $0x78] sm:$0xff]
        %v8274 = vmul.f32 %v8174, %v8174
        %v8275 = vmul.f32 %v8179, %v8179
        %v8276 = vmul.f32 %v8249, %v8249
        %v8277 = vmul.f32 %v8254, %v8254
        %v8278 = vmul.f32 %v8174, %v8249
        %v8279 = vmul.f32 %v8179, %v8254
        %vm8280 = vcmask 89088
        %v8281 = vsel %vm8280, %v8174, 0.0
        %v8282 = vsel %vm8280, %v8179, 0.0
        %v8283 = vsel %vm8280, %v8249, 0.0
        %v8284 = vsel %vm8280, %v8254, 0.0
        %v8285 = vsel %vm8280, %v8274, 0.0
        %v8286 = vsel %vm8280, %v8275, 0.0
        %v8287 = vsel %vm8280, %v8276, 0.0
        %v8288 = vsel %vm8280, %v8277, 0.0
        %v8289 = vsel %vm8280, %v8278, 0.0
        %v8290 = vsel %vm8280, %v8279, 0.0
        %v8292 = vsel %vm8280, %v8257, 0
        %vm8294 = vcmask 1042432
        %v8296 = vsel %vm8294, %v8282, 0
        %v8299 = vsel %vm8294, %v8284, 0
        %v8302 = vsel %vm8294, %v8286, 0
        %v8305 = vsel %vm8294, %v8288, 0
        %v8308 = vsel %vm8294, %v8290, 0
        %8310 = vmatprep.subr.mxu0 %v8283
        %8311 = vmatpush1.msra.mxu0 %v8281
        %8312 = vmatprep.subr.mxu0 %v8299
        %8313 = vmatpush1.msra.mxu0 %v8296
        %8314 = vmatprep.subr.mxu0 0.0
        %8315 = vmatpush1.msra.mxu0 0.0
        %8316 = vmatprep.subr.mxu0 0.0
        %8317 = vmatpush1.msra.mxu0 0.0
        %8318 = vmatprep.subr.mxu0 0.0
        %8319 = vmatpush1.msra.mxu0 0.0
        %8320 = vmatprep.subr.mxu0 0.0
        %8321 = vmatpush1.msra.mxu0 0.0
        %8322 = vmatprep.subr.mxu0 0.0
        %8323 = vmatpush1.msra.mxu0 0.0
        %8324 = vmatprep.subr.mxu0 0.0
        %8325 = vmatpush1.msra.mxu0 0.0
        %8326 = vmatprep.subr.mxu0 0.0
        %8327 = vmatpush1.msra.mxu0 0.0
        %8328 = vmatprep.subr.mxu0 0.0
        %8329 = vmatpush1.msra.mxu0 0.0
        %8330 = vmatprep.subr.mxu0 0.0
        %8331 = vmatpush1.msra.mxu0 0.0
        %8332 = vmatprep.subr.mxu0 0.0
        %8333 = vmatpush1.msra.mxu0 0.0
        %8334 = vmatprep.subr.mxu0 0.0
        %8335 = vmatpush1.msra.mxu0 0.0
        %8336 = vmatprep.subr.mxu0 0.0
        %8337 = vmatpush1.msra.mxu0 0.0
        %8338 = vmatprep.subr.mxu0 0.0
        %8339 = vmatpush1.msra.mxu0 0.0
        %8340 = vmatprep.subr.mxu0 0.0
        %8341 = vmatpush1.msra.mxu0 0.0
        %8342 = vmatprep.subr.mxu0 0.0
        %8343 = vmatpush1.msra.mxu0 0.0
        %8344 = vmatprep.subr.mxu0 0.0
        %8345 = vmatpush1.msra.mxu0 0.0
        %8346 = vmatprep.subr.mxu0 0.0
        %8347 = vmatpush1.msra.mxu0 0.0
        %8348 = vmatprep.subr.mxu0 0.0
        %8349 = vmatpush1.msra.mxu0 0.0
        %8350 = vmatprep.subr.mxu0 0.0
        %8351 = vmatpush1.msra.mxu0 0.0
        %8352 = vmatprep.subr.mxu0 0.0
        %8353 = vmatpush1.msra.mxu0 0.0
        %8354 = vmatprep.subr.mxu0 0.0
        %8355 = vmatpush1.msra.mxu0 0.0
        %8356 = vmatprep.subr.mxu0 0.0
        %8357 = vmatpush1.msra.mxu0 0.0
        %8358 = vmatprep.subr.mxu0 0.0
        %8359 = vmatpush1.msra.mxu0 0.0
        %8360 = vmatprep.subr.mxu0 0.0
        %8361 = vmatpush1.msra.mxu0 0.0
        %8362 = vmatprep.subr.mxu0 0.0
        %8363 = vmatpush1.msra.mxu0 0.0
        %8364 = vmatprep.subr.mxu0 0.0
        %8365 = vmatpush1.msra.mxu0 0.0
        %8366 = vmatprep.subr.mxu0 0.0
        %8367 = vmatpush1.msra.mxu0 0.0
        %8368 = vmatprep.subr.mxu0 0.0
        %8369 = vmatpush1.msra.mxu0 0.0
        %8370 = vmatprep.subr.mxu0 0.0
        %8371 = vmatpush1.msra.mxu0 0.0
        %8372 = vmatprep.subr.mxu0 0.0
        %8373 = vmatpush1.msra.mxu0 0.0
        %8374 = vmatprep.mubr.f32.mxu0 0.0
        %8375 = vmatmul.mubr.f32.gmra.mrb[0].mxu0 %v8292
        %v8376 = vpop.f32.mrb[0].mxu0
        %v8377 = vadd.f32 0.0, %v8376
        %v8378 = vpop.f32.mrb[0].mxu0
        %v8379 = vadd.f32 0.0, %v8378
        %8380 = vdwg.mxu0
        %8381 = vmatprep.subr.mxu0 %v8287
        %8382 = vmatpush1.msra.mxu0 %v8285
        %8383 = vmatprep.subr.mxu0 %v8305
        %8384 = vmatpush1.msra.mxu0 %v8302
        %8385 = vmatprep.subr.mxu0 0.0
        %8386 = vmatpush1.msra.mxu0 0.0
        %8387 = vmatprep.subr.mxu0 0.0
        %8388 = vmatpush1.msra.mxu0 0.0
        %8389 = vmatprep.subr.mxu0 0.0
        %8390 = vmatpush1.msra.mxu0 0.0
        %8391 = vmatprep.subr.mxu0 0.0
        %8392 = vmatpush1.msra.mxu0 0.0
        %8393 = vmatprep.subr.mxu0 0.0
        %8394 = vmatpush1.msra.mxu0 0.0
        %8395 = vmatprep.subr.mxu0 0.0
        %8396 = vmatpush1.msra.mxu0 0.0
        %8397 = vmatprep.subr.mxu0 0.0
        %8398 = vmatpush1.msra.mxu0 0.0
        %8399 = vmatprep.subr.mxu0 0.0
        %8400 = vmatpush1.msra.mxu0 0.0
        %8401 = vmatprep.subr.mxu0 0.0
        %8402 = vmatpush1.msra.mxu0 0.0
        %8403 = vmatprep.subr.mxu0 0.0
        %8404 = vmatpush1.msra.mxu0 0.0
        %8405 = vmatprep.subr.mxu0 0.0
        %8406 = vmatpush1.msra.mxu0 0.0
        %8407 = vmatprep.subr.mxu0 0.0
        %8408 = vmatpush1.msra.mxu0 0.0
        %8409 = vmatprep.subr.mxu0 0.0
        %8410 = vmatpush1.msra.mxu0 0.0
        %8411 = vmatprep.subr.mxu0 0.0
        %8412 = vmatpush1.msra.mxu0 0.0
        %8413 = vmatprep.subr.mxu0 0.0
        %8414 = vmatpush1.msra.mxu0 0.0
        %8415 = vmatprep.subr.mxu0 0.0
        %8416 = vmatpush1.msra.mxu0 0.0
        %8417 = vmatprep.subr.mxu0 0.0
        %8418 = vmatpush1.msra.mxu0 0.0
        %8419 = vmatprep.subr.mxu0 0.0
        %8420 = vmatpush1.msra.mxu0 0.0
        %8421 = vmatprep.subr.mxu0 0.0
        %8422 = vmatpush1.msra.mxu0 0.0
        %8423 = vmatprep.subr.mxu0 0.0
        %8424 = vmatpush1.msra.mxu0 0.0
        %8425 = vmatprep.subr.mxu0 0.0
        %8426 = vmatpush1.msra.mxu0 0.0
        %8427 = vmatprep.subr.mxu0 0.0
        %8428 = vmatpush1.msra.mxu0 0.0
        %8429 = vmatprep.subr.mxu0 0.0
        %8430 = vmatpush1.msra.mxu0 0.0
        %8431 = vmatprep.subr.mxu0 0.0
        %8432 = vmatpush1.msra.mxu0 0.0
        %8433 = vmatprep.subr.mxu0 0.0
        %8434 = vmatpush1.msra.mxu0 0.0
        %8435 = vmatprep.subr.mxu0 0.0
        %8436 = vmatpush1.msra.mxu0 0.0
        %8437 = vmatprep.subr.mxu0 0.0
        %8438 = vmatpush1.msra.mxu0 0.0
        %8439 = vmatprep.subr.mxu0 0.0
        %8440 = vmatpush1.msra.mxu0 0.0
        %8441 = vmatprep.subr.mxu0 0.0
        %8442 = vmatpush1.msra.mxu0 0.0
        %8443 = vmatprep.subr.mxu0 0.0
        %8444 = vmatpush1.msra.mxu0 0.0
        %8445 = vmatprep.mubr.f32.mxu0 0.0
        %8446 = vmatmul.mubr.f32.gmra.mrb[0].mxu0 %v8292
        %v8447 = vpop.f32.mrb[0].mxu0
        %v8448 = vadd.f32 0.0, %v8447
        %v8449 = vpop.f32.mrb[0].mxu0
        %v8450 = vadd.f32 0.0, %v8449
        %8451 = vdwg.mxu0
        %8452 = vmatprep.subr.mxu0 0.0
        %8453 = vmatpush1.msra.mxu0 %v8289
        %8454 = vmatprep.subr.mxu0 0.0
        %8455 = vmatpush1.msra.mxu0 %v8308
        %8456 = vmatprep.subr.mxu0 0.0
        %8457 = vmatpush1.msra.mxu0 0.0
        %8458 = vmatprep.subr.mxu0 0.0
        %8459 = vmatpush1.msra.mxu0 0.0
        %8460 = vmatprep.subr.mxu0 0.0
        %8461 = vmatpush1.msra.mxu0 0.0
        %8462 = vmatprep.subr.mxu0 0.0
        %8463 = vmatpush1.msra.mxu0 0.0
        %8464 = vmatprep.subr.mxu0 0.0
        %8465 = vmatpush1.msra.mxu0 0.0
        %8466 = vmatprep.subr.mxu0 0.0
        %8467 = vmatpush1.msra.mxu0 0.0
        %8468 = vmatprep.subr.mxu0 0.0
        %8469 = vmatpush1.msra.mxu0 0.0
        %8470 = vmatprep.subr.mxu0 0.0
        %8471 = vmatpush1.msra.mxu0 0.0
        %8472 = vmatprep.subr.mxu0 0.0
        %8473 = vmatpush1.msra.mxu0 0.0
        %8474 = vmatprep.subr.mxu0 0.0
        %8475 = vmatpush1.msra.mxu0 0.0
        %8476 = vmatprep.subr.mxu0 0.0
        %8477 = vmatpush1.msra.mxu0 0.0
        %8478 = vmatprep.subr.mxu0 0.0
        %8479 = vmatpush1.msra.mxu0 0.0
        %8480 = vmatprep.subr.mxu0 0.0
        %8481 = vmatpush1.msra.mxu0 0.0
        %8482 = vmatprep.subr.mxu0 0.0
        %8483 = vmatpush1.msra.mxu0 0.0
        %8484 = vmatprep.subr.mxu0 0.0
        %8485 = vmatpush1.msra.mxu0 0.0
        %8486 = vmatprep.subr.mxu0 0.0
        %8487 = vmatpush1.msra.mxu0 0.0
        %8488 = vmatprep.subr.mxu0 0.0
        %8489 = vmatpush1.msra.mxu0 0.0
        %8490 = vmatprep.subr.mxu0 0.0
        %8491 = vmatpush1.msra.mxu0 0.0
        %8492 = vmatprep.subr.mxu0 0.0
        %8493 = vmatpush1.msra.mxu0 0.0
        %8494 = vmatprep.subr.mxu0 0.0
        %8495 = vmatpush1.msra.mxu0 0.0
        %8496 = vmatprep.subr.mxu0 0.0
        %8497 = vmatpush1.msra.mxu0 0.0
        %8498 = vmatprep.subr.mxu0 0.0
        %8499 = vmatpush1.msra.mxu0 0.0
        %8500 = vmatprep.subr.mxu0 0.0
        %8501 = vmatpush1.msra.mxu0 0.0
        %8502 = vmatprep.subr.mxu0 0.0
        %8503 = vmatpush1.msra.mxu0 0.0
        %8504 = vmatprep.subr.mxu0 0.0
        %8505 = vmatpush1.msra.mxu0 0.0
        %8506 = vmatprep.subr.mxu0 0.0
        %8507 = vmatpush1.msra.mxu0 0.0
        %8508 = vmatprep.subr.mxu0 0.0
        %8509 = vmatpush1.msra.mxu0 0.0
        %8510 = vmatprep.subr.mxu0 0.0
        %8511 = vmatpush1.msra.mxu0 0.0
        %8512 = vmatprep.subr.mxu0 0.0
        %8513 = vmatpush1.msra.mxu0 0.0
        %8514 = vmatprep.subr.mxu0 0.0
        %8515 = vmatpush1.msra.mxu0 0.0
        %8516 = vmatprep.mubr.f32.mxu0 0.0
        %8517 = vmatmul.mubr.f32.gmra.mrb[0].mxu0 %v8292
        %v8518 = vpop.f32.mrb[0].mxu0
        %v8519 = vadd.f32 0.0, %v8518
        %v8520 = vpop.f32.mrb[0].mxu0
        %8521 = vdwg.mxu0
        %8522 = vmatprep.subr.mxu0 0.0
        %8523 = vmatpush1.msra.mxu0 %v8258
        %8524 = vmatprep.subr.mxu0 0.0
        %8525 = vmatpush1.msra.mxu0 %v8259
        %8526 = vmatprep.subr.mxu0 0.0
        %8527 = vmatpush1.msra.mxu0 %v8260
        %8528 = vmatprep.subr.mxu0 0.0
        %8529 = vmatpush1.msra.mxu0 %v8261
        %8530 = vmatprep.subr.mxu0 0.0
        %8531 = vmatpush1.msra.mxu0 %v8262
        %8532 = vmatprep.subr.mxu0 0.0
        %8533 = vmatpush1.msra.mxu0 %v8263
        %8534 = vmatprep.subr.mxu0 0.0
        %8535 = vmatpush1.msra.mxu0 %v8264
        %8536 = vmatprep.subr.mxu0 0.0
        %8537 = vmatpush1.msra.mxu0 %v8265
        %8538 = vmatprep.subr.mxu0 0.0
        %8539 = vmatpush1.msra.mxu0 %v8266
        %8540 = vmatprep.subr.mxu0 0.0
        %8541 = vmatpush1.msra.mxu0 %v8267
        %8542 = vmatprep.subr.mxu0 0.0
        %8543 = vmatpush1.msra.mxu0 %v8268
        %8544 = vmatprep.subr.mxu0 0.0
        %8545 = vmatpush1.msra.mxu0 %v8269
        %8546 = vmatprep.subr.mxu0 0.0
        %8547 = vmatpush1.msra.mxu0 %v8270
        %8548 = vmatprep.subr.mxu0 0.0
        %8549 = vmatpush1.msra.mxu0 %v8271
        %8550 = vmatprep.subr.mxu0 0.0
        %8551 = vmatpush1.msra.mxu0 %v8272
        %8552 = vmatprep.subr.mxu0 0.0
        %8553 = vmatpush1.msra.mxu0 %v8273
        %8554 = vmatprep.subr.mxu0 0.0
        %8555 = vmatpush1.msra.mxu0 0.0
        %8556 = vmatprep.subr.mxu0 0.0
        %8557 = vmatpush1.msra.mxu0 0.0
        %8558 = vmatprep.subr.mxu0 0.0
        %8559 = vmatpush1.msra.mxu0 0.0
        %8560 = vmatprep.subr.mxu0 0.0
        %8561 = vmatpush1.msra.mxu0 0.0
        %8562 = vmatprep.subr.mxu0 0.0
        %8563 = vmatpush1.msra.mxu0 0.0
        %8564 = vmatprep.subr.mxu0 0.0
        %8565 = vmatpush1.msra.mxu0 0.0
        %8566 = vmatprep.subr.mxu0 0.0
        %8567 = vmatpush1.msra.mxu0 0.0
        %8568 = vmatprep.subr.mxu0 0.0
        %8569 = vmatpush1.msra.mxu0 0.0
        %8570 = vmatprep.subr.mxu0 0.0
        %8571 = vmatpush1.msra.mxu0 0.0
        %8572 = vmatprep.subr.mxu0 0.0
        %8573 = vmatpush1.msra.mxu0 0.0
        %8574 = vmatprep.subr.mxu0 0.0
        %8575 = vmatpush1.msra.mxu0 0.0
        %8576 = vmatprep.subr.mxu0 0.0
        %8577 = vmatpush1.msra.mxu0 0.0
        %8578 = vmatprep.subr.mxu0 0.0
        %8579 = vmatpush1.msra.mxu0 0.0
        %8580 = vmatprep.subr.mxu0 0.0
        %8581 = vmatpush1.msra.mxu0 0.0
        %8582 = vmatprep.subr.mxu0 0.0
        %8583 = vmatpush1.msra.mxu0 0.0
        %8584 = vmatprep.subr.mxu0 0.0
        %8585 = vmatpush1.msra.mxu0 0.0
        %8586 = vmatprep.mubr.f32.mxu0 0.0
        %8587 = vmatmul.mubr.f32.gmra.mrb[0].mxu0 %v8377
        %v8588 = vpop.f32.mrb[0].mxu0
        %v8589 = vadd.f32 0.0, %v8588
        %v8590 = vpop.f32.mrb[0].mxu0
        %8591 = vdwg.mxu0
        %8592 = vmatprep.subr.mxu0 0.0
        %8593 = vmatpush1.msra.mxu0 %v8258
        %8594 = vmatprep.subr.mxu0 0.0
        %8595 = vmatpush1.msra.mxu0 %v8259
        %8596 = vmatprep.subr.mxu0 0.0
        %8597 = vmatpush1.msra.mxu0 %v8260
        %8598 = vmatprep.subr.mxu0 0.0
        %8599 = vmatpush1.msra.mxu0 %v8261
        %8600 = vmatprep.subr.mxu0 0.0
        %8601 = vmatpush1.msra.mxu0 %v8262
        %8602 = vmatprep.subr.mxu0 0.0
        %8603 = vmatpush1.msra.mxu0 %v8263
        %8604 = vmatprep.subr.mxu0 0.0
        %8605 = vmatpush1.msra.mxu0 %v8264
        %8606 = vmatprep.subr.mxu0 0.0
        %8607 = vmatpush1.msra.mxu0 %v8265
        %8608 = vmatprep.subr.mxu0 0.0
        %8609 = vmatpush1.msra.mxu0 %v8266
        %8610 = vmatprep.subr.mxu0 0.0
        %8611 = vmatpush1.msra.mxu0 %v8267
        %8612 = vmatprep.subr.mxu0 0.0
        %8613 = vmatpush1.msra.mxu0 %v8268
        %8614 = vmatprep.subr.mxu0 0.0
        %8615 = vmatpush1.msra.mxu0 %v8269
        %8616 = vmatprep.subr.mxu0 0.0
        %8617 = vmatpush1.msra.mxu0 %v8270
        %8618 = vmatprep.subr.mxu0 0.0
        %8619 = vmatpush1.msra.mxu0 %v8271
        %8620 = vmatprep.subr.mxu0 0.0
        %8621 = vmatpush1.msra.mxu0 %v8272
        %8622 = vmatprep.subr.mxu0 0.0
        %8623 = vmatpush1.msra.mxu0 %v8273
        %8624 = vmatprep.subr.mxu0 0.0
        %8625 = vmatpush1.msra.mxu0 0.0
        %8626 = vmatprep.subr.mxu0 0.0
        %8627 = vmatpush1.msra.mxu0 0.0
        %8628 = vmatprep.subr.mxu0 0.0
        %8629 = vmatpush1.msra.mxu0 0.0
        %8630 = vmatprep.subr.mxu0 0.0
        %8631 = vmatpush1.msra.mxu0 0.0
        %8632 = vmatprep.subr.mxu0 0.0
        %8633 = vmatpush1.msra.mxu0 0.0
        %8634 = vmatprep.subr.mxu0 0.0
        %8635 = vmatpush1.msra.mxu0 0.0
        %8636 = vmatprep.subr.mxu0 0.0
        %8637 = vmatpush1.msra.mxu0 0.0
        %8638 = vmatprep.subr.mxu0 0.0
        %8639 = vmatpush1.msra.mxu0 0.0
        %8640 = vmatprep.subr.mxu0 0.0
        %8641 = vmatpush1.msra.mxu0 0.0
        %8642 = vmatprep.subr.mxu0 0.0
        %8643 = vmatpush1.msra.mxu0 0.0
        %8644 = vmatprep.subr.mxu0 0.0
        %8645 = vmatpush1.msra.mxu0 0.0
        %8646 = vmatprep.subr.mxu0 0.0
        %8647 = vmatpush1.msra.mxu0 0.0
        %8648 = vmatprep.subr.mxu0 0.0
        %8649 = vmatpush1.msra.mxu0 0.0
        %8650 = vmatprep.subr.mxu0 0.0
        %8651 = vmatpush1.msra.mxu0 0.0
        %8652 = vmatprep.subr.mxu0 0.0
        %8653 = vmatpush1.msra.mxu0 0.0
        %8654 = vmatprep.subr.mxu0 0.0
        %8655 = vmatpush1.msra.mxu0 0.0
        %8656 = vmatprep.mubr.f32.mxu0 0.0
        %8657 = vmatmul.mubr.f32.gmra.mrb[0].mxu0 %v8379
        %v8658 = vpop.f32.mrb[0].mxu0
        %v8659 = vadd.f32 0.0, %v8658
        %v8660 = vpop.f32.mrb[0].mxu0
        %8661 = vdwg.mxu0
        %8662 = vmatprep.subr.mxu0 0.0
        %8663 = vmatpush1.msra.mxu0 %v8258
        %8664 = vmatprep.subr.mxu0 0.0
        %8665 = vmatpush1.msra.mxu0 %v8259
        %8666 = vmatprep.subr.mxu0 0.0
        %8667 = vmatpush1.msra.mxu0 %v8260
        %8668 = vmatprep.subr.mxu0 0.0
        %8669 = vmatpush1.msra.mxu0 %v8261
        %8670 = vmatprep.subr.mxu0 0.0
        %8671 = vmatpush1.msra.mxu0 %v8262
        %8672 = vmatprep.subr.mxu0 0.0
        %8673 = vmatpush1.msra.mxu0 %v8263
        %8674 = vmatprep.subr.mxu0 0.0
        %8675 = vmatpush1.msra.mxu0 %v8264
        %8676 = vmatprep.subr.mxu0 0.0
        %8677 = vmatpush1.msra.mxu0 %v8265
        %8678 = vmatprep.subr.mxu0 0.0
        %8679 = vmatpush1.msra.mxu0 %v8266
        %8680 = vmatprep.subr.mxu0 0.0
        %8681 = vmatpush1.msra.mxu0 %v8267
        %8682 = vmatprep.subr.mxu0 0.0
        %8683 = vmatpush1.msra.mxu0 %v8268
        %8684 = vmatprep.subr.mxu0 0.0
        %8685 = vmatpush1.msra.mxu0 %v8269
        %8686 = vmatprep.subr.mxu0 0.0
        %8687 = vmatpush1.msra.mxu0 %v8270
        %8688 = vmatprep.subr.mxu0 0.0
        %8689 = vmatpush1.msra.mxu0 %v8271
        %8690 = vmatprep.subr.mxu0 0.0
        %8691 = vmatpush1.msra.mxu0 %v8272
        %8692 = vmatprep.subr.mxu0 0.0
        %8693 = vmatpush1.msra.mxu0 %v8273
        %8694 = vmatprep.subr.mxu0 0.0
        %8695 = vmatpush1.msra.mxu0 0.0
        %8696 = vmatprep.subr.mxu0 0.0
        %8697 = vmatpush1.msra.mxu0 0.0
        %8698 = vmatprep.subr.mxu0 0.0
        %8699 = vmatpush1.msra.mxu0 0.0
        %8700 = vmatprep.subr.mxu0 0.0
        %8701 = vmatpush1.msra.mxu0 0.0
        %8702 = vmatprep.subr.mxu0 0.0
        %8703 = vmatpush1.msra.mxu0 0.0
        %8704 = vmatprep.subr.mxu0 0.0
        %8705 = vmatpush1.msra.mxu0 0.0
        %8706 = vmatprep.subr.mxu0 0.0
        %8707 = vmatpush1.msra.mxu0 0.0
        %8708 = vmatprep.subr.mxu0 0.0
        %8709 = vmatpush1.msra.mxu0 0.0
        %8710 = vmatprep.subr.mxu0 0.0
        %8711 = vmatpush1.msra.mxu0 0.0
        %8712 = vmatprep.subr.mxu0 0.0
        %8713 = vmatpush1.msra.mxu0 0.0
        %8714 = vmatprep.subr.mxu0 0.0
        %8715 = vmatpush1.msra.mxu0 0.0
        %8716 = vmatprep.subr.mxu0 0.0
        %8717 = vmatpush1.msra.mxu0 0.0
        %8718 = vmatprep.subr.mxu0 0.0
        %8719 = vmatpush1.msra.mxu0 0.0
        %8720 = vmatprep.subr.mxu0 0.0
        %8721 = vmatpush1.msra.mxu0 0.0
        %8722 = vmatprep.subr.mxu0 0.0
        %8723 = vmatpush1.msra.mxu0 0.0
        %8724 = vmatprep.subr.mxu0 0.0
        %8725 = vmatpush1.msra.mxu0 0.0
        %8726 = vmatprep.mubr.f32.mxu0 0.0
        %8727 = vmatmul.mubr.f32.gmra.mrb[0].mxu0 %v8448
        %v8728 = vpop.f32.mrb[0].mxu0
        %v8729 = vadd.f32 0.0, %v8728
        %v8730 = vpop.f32.mrb[0].mxu0
        %8731 = vdwg.mxu0
        %8732 = vmatprep.subr.mxu0 0.0
        %8733 = vmatpush1.msra.mxu0 %v8258
        %8734 = vmatprep.subr.mxu0 0.0
        %8735 = vmatpush1.msra.mxu0 %v8259
        %8736 = vmatprep.subr.mxu0 0.0
        %8737 = vmatpush1.msra.mxu0 %v8260
        %8738 = vmatprep.subr.mxu0 0.0
        %8739 = vmatpush1.msra.mxu0 %v8261
        %8740 = vmatprep.subr.mxu0 0.0
        %8741 = vmatpush1.msra.mxu0 %v8262
        %8742 = vmatprep.subr.mxu0 0.0
        %8743 = vmatpush1.msra.mxu0 %v8263
        %8744 = vmatprep.subr.mxu0 0.0
        %8745 = vmatpush1.msra.mxu0 %v8264
        %8746 = vmatprep.subr.mxu0 0.0
        %8747 = vmatpush1.msra.mxu0 %v8265
        %8748 = vmatprep.subr.mxu0 0.0
        %8749 = vmatpush1.msra.mxu0 %v8266
        %8750 = vmatprep.subr.mxu0 0.0
        %8751 = vmatpush1.msra.mxu0 %v8267
        %8752 = vmatprep.subr.mxu0 0.0
        %8753 = vmatpush1.msra.mxu0 %v8268
        %8754 = vmatprep.subr.mxu0 0.0
        %8755 = vmatpush1.msra.mxu0 %v8269
        %8756 = vmatprep.subr.mxu0 0.0
        %8757 = vmatpush1.msra.mxu0 %v8270
        %8758 = vmatprep.subr.mxu0 0.0
        %8759 = vmatpush1.msra.mxu0 %v8271
        %8760 = vmatprep.subr.mxu0 0.0
        %8761 = vmatpush1.msra.mxu0 %v8272
        %8762 = vmatprep.subr.mxu0 0.0
        %8763 = vmatpush1.msra.mxu0 %v8273
        %8764 = vmatprep.subr.mxu0 0.0
        %8765 = vmatpush1.msra.mxu0 0.0
        %8766 = vmatprep.subr.mxu0 0.0
        %8767 = vmatpush1.msra.mxu0 0.0
        %8768 = vmatprep.subr.mxu0 0.0
        %8769 = vmatpush1.msra.mxu0 0.0
        %8770 = vmatprep.subr.mxu0 0.0
        %8771 = vmatpush1.msra.mxu0 0.0
        %8772 = vmatprep.subr.mxu0 0.0
        %8773 = vmatpush1.msra.mxu0 0.0
        %8774 = vmatprep.subr.mxu0 0.0
        %8775 = vmatpush1.msra.mxu0 0.0
        %8776 = vmatprep.subr.mxu0 0.0
        %8777 = vmatpush1.msra.mxu0 0.0
        %8778 = vmatprep.subr.mxu0 0.0
        %8779 = vmatpush1.msra.mxu0 0.0
        %8780 = vmatprep.subr.mxu0 0.0
        %8781 = vmatpush1.msra.mxu0 0.0
        %8782 = vmatprep.subr.mxu0 0.0
        %8783 = vmatpush1.msra.mxu0 0.0
        %8784 = vmatprep.subr.mxu0 0.0
        %8785 = vmatpush1.msra.mxu0 0.0
        %8786 = vmatprep.subr.mxu0 0.0
        %8787 = vmatpush1.msra.mxu0 0.0
        %8788 = vmatprep.subr.mxu0 0.0
        %8789 = vmatpush1.msra.mxu0 0.0
        %8790 = vmatprep.subr.mxu0 0.0
        %8791 = vmatpush1.msra.mxu0 0.0
        %8792 = vmatprep.subr.mxu0 0.0
        %8793 = vmatpush1.msra.mxu0 0.0
        %8794 = vmatprep.subr.mxu0 0.0
        %8795 = vmatpush1.msra.mxu0 0.0
        %8796 = vmatprep.mubr.f32.mxu0 0.0
        %8797 = vmatmul.mubr.f32.gmra.mrb[0].mxu0 %v8450
        %v8798 = vpop.f32.mrb[0].mxu0
        %v8799 = vadd.f32 0.0, %v8798
        %v8800 = vpop.f32.mrb[0].mxu0
        %8801 = vdwg.mxu0
        %8802 = vmatprep.subr.mxu0 0.0
        %8803 = vmatpush1.msra.mxu0 %v8258
        %8804 = vmatprep.subr.mxu0 0.0
        %8805 = vmatpush1.msra.mxu0 %v8259
        %8806 = vmatprep.subr.mxu0 0.0
        %8807 = vmatpush1.msra.mxu0 %v8260
        %8808 = vmatprep.subr.mxu0 0.0
        %8809 = vmatpush1.msra.mxu0 %v8261
        %8810 = vmatprep.subr.mxu0 0.0
        %8811 = vmatpush1.msra.mxu0 %v8262
        %8812 = vmatprep.subr.mxu0 0.0
        %8813 = vmatpush1.msra.mxu0 %v8263
        %8814 = vmatprep.subr.mxu0 0.0
        %8815 = vmatpush1.msra.mxu0 %v8264
        %8816 = vmatprep.subr.mxu0 0.0
        %8817 = vmatpush1.msra.mxu0 %v8265
        %8818 = vmatprep.subr.mxu0 0.0
        %8819 = vmatpush1.msra.mxu0 %v8266
        %8820 = vmatprep.subr.mxu0 0.0
        %8821 = vmatpush1.msra.mxu0 %v8267
        %8822 = vmatprep.subr.mxu0 0.0
        %8823 = vmatpush1.msra.mxu0 %v8268
        %8824 = vmatprep.subr.mxu0 0.0
        %8825 = vmatpush1.msra.mxu0 %v8269
        %8826 = vmatprep.subr.mxu0 0.0
        %8827 = vmatpush1.msra.mxu0 %v8270
        %8828 = vmatprep.subr.mxu0 0.0
        %8829 = vmatpush1.msra.mxu0 %v8271
        %8830 = vmatprep.subr.mxu0 0.0
        %8831 = vmatpush1.msra.mxu0 %v8272
        %8832 = vmatprep.subr.mxu0 0.0
        %8833 = vmatpush1.msra.mxu0 %v8273
        %8834 = vmatprep.subr.mxu0 0.0
        %8835 = vmatpush1.msra.mxu0 0.0
        %8836 = vmatprep.subr.mxu0 0.0
        %8837 = vmatpush1.msra.mxu0 0.0
        %8838 = vmatprep.subr.mxu0 0.0
        %8839 = vmatpush1.msra.mxu0 0.0
        %8840 = vmatprep.subr.mxu0 0.0
        %8841 = vmatpush1.msra.mxu0 0.0
        %8842 = vmatprep.subr.mxu0 0.0
        %8843 = vmatpush1.msra.mxu0 0.0
        %8844 = vmatprep.subr.mxu0 0.0
        %8845 = vmatpush1.msra.mxu0 0.0
        %8846 = vmatprep.subr.mxu0 0.0
        %8847 = vmatpush1.msra.mxu0 0.0
        %8848 = vmatprep.subr.mxu0 0.0
        %8849 = vmatpush1.msra.mxu0 0.0
        %8850 = vmatprep.subr.mxu0 0.0
        %8851 = vmatpush1.msra.mxu0 0.0
        %8852 = vmatprep.subr.mxu0 0.0
        %8853 = vmatpush1.msra.mxu0 0.0
        %8854 = vmatprep.subr.mxu0 0.0
        %8855 = vmatpush1.msra.mxu0 0.0
        %8856 = vmatprep.subr.mxu0 0.0
        %8857 = vmatpush1.msra.mxu0 0.0
        %8858 = vmatprep.subr.mxu0 0.0
        %8859 = vmatpush1.msra.mxu0 0.0
        %8860 = vmatprep.subr.mxu0 0.0
        %8861 = vmatpush1.msra.mxu0 0.0
        %8862 = vmatprep.subr.mxu0 0.0
        %8863 = vmatpush1.msra.mxu0 0.0
        %8864 = vmatprep.subr.mxu0 0.0
        %8865 = vmatpush1.msra.mxu0 0.0
        %8866 = vmatprep.mubr.f32.mxu0 0.0
        %8867 = vmatmul.mubr.f32.gmra.mrb[0].mxu0 %v8519
        %v8868 = vpop.f32.mrb[0].mxu0
        %v8869 = vadd.f32 0.0, %v8868
        %v8870 = vpop.f32.mrb[0].mxu0
        %8871 = vdwg.mxu0
        %v8872 = vmul.f32 %v8589, %v8589
        %v8873 = vmul.f32 %v8659, %v8659
        %v8874 = vmul.f32 %v8589, %v8659
        %v8875 = vsub.f32 %v8729, %v8872
        %v8876 = vsub.f32 %v8799, %v8873
        %v8877 = vsub.f32 %v8869, %v8874
        %v8878 = vmul.f32 %v8877, 2.0
        %v8879 = vadd.f32 %v8878, 0.0009
        %v8880 = vadd.f32 %v8875, %v8876
        %v8881 = vadd.f32 %v8880, 0.0009
        %v8882 = vrcp.pop %v8881
        %v8883 = vmul.f32 %v8879, %v8882
        %v8884 = vmul.f32 %v8874, 2.0
        %v8885 = vadd.f32 %v8884, 0.0001
        %v8886 = vadd.f32 %v8872, %v8873
        %v8887 = vadd.f32 %v8886, 0.0001
        %v8888 = vrcp.pop %v8887
        %v8889 = vmul.f32 %v8885, %v8888
        %v8890 = vmul.f32 %v8889, %v8883
        %v8891 = vadd.f32 %v8890, 0.0
        %s8892 = vtos %v8891
        %v8893 = vlaneseq
        %v8894 = vand.u32 %v8893, 127
        %vm8895 = vcmp.eq.s32.totalorder %v8894, 0
        %v8896 = vstv %s3959
        %v8897 = vsel %vm8895, %v8896, 0.0
        %vm8898 = vcmp.eq.s32.totalorder %v8894, 1
        %v8899 = vstv %s5784
        %v8900 = vsel %vm8898, %v8899, %v8897
        %vm8901 = vcmp.eq.s32.totalorder %v8894, 2
        %v8902 = vstv %s7027
        %v8903 = vsel %vm8901, %v8902, %v8900
        %vm8904 = vcmp.eq.s32.totalorder %v8894, 3
        %v8905 = vstv %s8005
        %v8906 = vsel %vm8904, %v8905, %v8903
        %vm8907 = vcmp.eq.s32.totalorder %v8894, 4
        %v8908 = vstv %s8892
        %v8909 = vsel %vm8907, %v8908, %v8906
        %8910 = vst [vmem:[%s969] sm:$0x1] %v8909
        %p8911 = scmp.lt.s32.totalorder %s45, 1
        %s8912 = scalar_select %p8911, %s45, 1
        %p8913 = scmp.lt.s32.totalorder %s46, 2
        %s8914 = scalar_select %p8913, %s46, 2
        %s8915 = smul.addr %s8912, 3
        %s8916 = sadd.s32 %s8914, %s8915
        %s8917 = scalar_lea.vmem %s20, %s8916
        // Predicated region
        $region181: #{msssim_loss.1} parent=99 // pred_check
          %p8918 = pneg %p507
        $region182: #{msssim_loss.1} parent=99 // pred_check_branch
          %8920 = sbr.rel (%p8918) target = $region184
        $region183: #{msssim_loss.1} parent=99 // pred_region
          _
        $region184: #{msssim_loss.1} parent=99 // pred_fallthru
          _
      $region100: #{msssim_loss.1} parent=5 // pred_fallthru
        _
      %p8921 = scmp.le.s32.totalorder 2, %s36
      // Predicated region
      $region185: #{msssim_loss.1} parent=5 // pred_check
        %p8922 = pneg %p8921
      $region186: #{msssim_loss.1} parent=5 // pred_check_branch
        %8924 = sbr.rel (%p8922) target = $region188
      $region187: #{msssim_loss.1} parent=5 // pred_region
        %s8925 = ssub.s32 %s36, 2
        // Predicated region
        $region189: #{msssim_loss.1} parent=187 // pred_check
          %p8926 = pneg %p513
        $region190: #{msssim_loss.1} parent=187 // pred_check_branch
          %8928 = sbr.rel (%p8926) target = $region192
        $region191: #{msssim_loss.1} parent=187 // pred_region
          %p8929 = scmp.lt.s32.totalorder %s47, 1
          %s8930 = scalar_select %p8929, %s47, 1
          %p8931 = scmp.lt.s32.totalorder %s48, 2
          %s8932 = scalar_select %p8931, %s48, 2
          %s8933 = smul.addr %s8930, 3
          %s8934 = sadd.s32 %s8932, %s8933
          %s8935 = scalar_lea.vmem %s20, %s8934
        $region192: #{msssim_loss.1} parent=187 // pred_fallthru
          _
      $region188: #{msssim_loss.1} parent=5 // pred_fallthru
        _
    $region6: #{msssim_loss.1} parent=1 // loop_footer
      %s40 = sadd.s32 1, %s36
    $region7: #{msssim_loss.1} parent=1 // loop_footer_branch
      %35 = sbr.rel target = $region3
    $region8: #{msssim_loss.1} parent=1 // loop_exit
      _
    %8936 = vsyncpa [#allocation3], 1
    %s8937 = scalar_lea.sflag [#allocation3], 1
    %8938 = vsyncpa %s8937, 1
    %8939 = vsyncpa [#allocation5], 1
    %8940 = vsyncpa [#allocation8], 1
    %8941 = vsyncpa [#allocation11], 1
    %8942 = vsyncpa [#allocation14], 1
    %8943 = vsyncpa [#allocation17], 1
    %8944 = vsyncpa [#allocation20], 1
    %8945 = vsyncpa [#allocation23], 1
    %8946 = vsyncpa [#allocation26], 1
    %8947 = vsyncpa [#allocation29], 1

</llo_original>
